<compile_context>
chip_gen: v7x
topology: tpu7x:2x2x1
jax: 0.10.0
libtpu: 0.0.40
codegen_flags: <defaults>
</compile_context>

<pallas_src>
import functools
import math

import jax
import jax.numpy as jnp
from jax import lax
from jax.experimental import pallas as pl
from jax.experimental.pallas import tpu as pltpu

D = 1024   # hidden size hard-coded in the PyTorch module (rel is (R, 1024, 1024))
NEG = -1e30  # large finite negative instead of -inf: identical max when at least
             # one valid pair exists; avoids inf/NaN for fully-padded rows.
             # (Deliberate divergence from the torch -inf masking.)


def _bilinear_max_kernel(w1_ref, rel_ref, w2t_ref, bias_ref, out_ref, *, B, L1, G):
    # w1_ref  : (B*L1, D)      bf16, VMEM-resident across the whole grid
    # rel_ref : (G, D, D)      bf16, streamed (G relations per grid step)
    # w2t_ref : (D, B*L2)      f32,  VMEM-resident, already (K, N) for the MXU
    # bias_ref: (B*L1, B*L2)   f32 additive mask (0 valid same-batch pair,
    #                          NEG for padded / cross-batch pairs), resident
    # out_ref : (G, B, 128)    f32, per-batch max broadcast across lanes
    w1 = w1_ref[...]
    w2t = w2t_ref[...]
    bias = bias_ref[...]
    for g in range(G):                                      # static unroll
        tmp = jnp.dot(w1, rel_ref[g],
                      preferred_element_type=jnp.float32)   # (B*L1, D) f32
        # keep tmp in f32 for the tiny second matmul (better precision, free:
        # compute is fully hidden under the rel DMA)
        s = jnp.dot(tmp, w2t,
                    preferred_element_type=jnp.float32)     # (B*L1, B*L2)
        s = s + bias
        rows = []
        for b in range(B):                                  # B is tiny & static
            m_b = jnp.max(s[b * L1:(b + 1) * L1, :])        # scalar max, batch b
            rows.append(jnp.broadcast_to(m_b.reshape(1, 1), (1, 128)))
        out_ref[g] = jnp.concatenate(rows, axis=0)


def bilinear_max_pallas(w1_flat, rel_bf16, w2t, bias, B, L1, L2):
    """Returns (R, B): max_{l1,l2} [ w1_b @ rel_r @ w2_b^T ] with masking."""
    R = rel_bf16.shape[0]
    G = 2 if R % 2 == 0 else 1          # relations per grid step (review: G=2)
    out = pl.pallas_call(
        functools.partial(_bilinear_max_kernel, B=B, L1=L1, G=G),
        out_shape=jax.ShapeDtypeStruct((R, B, 128), jnp.float32),
        grid_spec=pltpu.PrefetchScalarGridSpec(
            num_scalar_prefetch=0,
            grid=(R // G,),
            in_specs=[
                pl.BlockSpec((B * L1, D), lambda r: (0, 0)),       # word1  (resident)
                pl.BlockSpec((G, D, D), lambda r: (r, 0, 0)),      # rel    (streamed)
                pl.BlockSpec((D, B * L2), lambda r: (0, 0)),       # word2T (resident)
                pl.BlockSpec((B * L1, B * L2), lambda r: (0, 0)),  # bias   (resident)
            ],
            out_specs=pl.BlockSpec((G, B, 128), lambda r: (r, 0, 0)),
        ),
        compiler_params=pltpu.CompilerParams(
            dimension_semantics=("parallel",),      # shard R//G steps across TCs on v7x
            vmem_limit_bytes=32 * 1024 * 1024,
        ),
    )(w1_flat, rel_bf16, w2t, bias)
    return out[:, :, 0]  # (R, B)


def _make_bias(mask_1, mask_2):
    """Additive bias (B*L1, B*L2): 0 where (same batch & both unmasked), NEG else."""
    B, L1 = mask_1.shape
    L2 = mask_2.shape[1]
    valid = mask_1[:, :, None, None] * mask_2[None, None, :, :]          # (B,L1,B,L2)
    same = (jnp.arange(B)[:, None, None, None] ==
            jnp.arange(B)[None, None, :, None])                          # (B,1,B,1)
    bias = jnp.where((valid > 0) & same, 0.0, NEG)
    return bias.reshape(B * L1, B * L2).astype(jnp.float32)


def prepare_params(params):
    """One-time, OUTSIDE the jitted forward: bf16 streaming copy of rel."""
    return {
        "weight": params["weight"],
        "rel_bf16": params["rel"].astype(jnp.bfloat16),
        "linear_w": params["linear_w"],
    }


@jax.jit
def model_forward(prepared, word_1, mask_1, word_2, mask_2):
    # softmax mixing weights over the 3 layers (torch: softmax(self.weight, dim=0))
    w = jax.nn.softmax(prepared["weight"], axis=0)[:, 0]                 # (3,)
    w1c = jnp.einsum("bkld,k->bld", word_1, w)                           # (B, L1, D)
    w2c = jnp.einsum("bkld,k->bld", word_2, w)                           # (B, L2, D)
    B, L1, _ = w1c.shape
    L2 = w2c.shape[1]

    # tiny per-call prep (word tensors are KB-scale; rel cast is pre-hoisted)
    w1_flat = w1c.reshape(B * L1, D).astype(jnp.bfloat16)                # (B*L1, D)
    w2t = w2c.reshape(B * L2, D).T.astype(jnp.float32)                   # (D, B*L2)
    bias = _make_bias(mask_1.astype(jnp.float32), mask_2.astype(jnp.float32))

    maxes = bilinear_max_pallas(w1_flat, prepared["rel_bf16"], w2t, bias,
                                B, L1, L2)                               # (R, B)
    output = maxes.T                                                     # (B, R)
    logits = output @ prepared["linear_w"].T                             # (B, 3)
    return logits


def reference_forward(params, word_1, mask_1, word_2, mask_2):
    """Pure-JAX f32 reference replicating the PyTorch forward."""
    w = jax.nn.softmax(params["weight"], axis=0)[:, 0]
    w1c = jnp.einsum("bkld,k->bld", word_1, w)
    w2c = jnp.einsum("bkld,k->bld", word_2, w)
    pair_mask = mask_1[:, :, None] * mask_2[:, None, :]
    bil = jnp.einsum("bld,rde,bme->rblm", w1c, params["rel"], w2c,
                     precision=lax.Precision.HIGHEST)                    # (R,B,L1,L2)
    bil = jnp.where(pair_mask[None] == 0.0, -jnp.inf, bil)
    R, B = bil.shape[0], bil.shape[1]
    maxes = bil.reshape(R, B, -1).max(axis=-1)                           # (R, B)
    return maxes.T @ params["linear_w"].T                                # (B, 3)


def init_params(key, R=16):
    kw, kr, kl = jax.random.split(key, 3)
    # deterministic synthetic init (shapes match the PyTorch module's __init__)
    weight = jax.random.normal(kw, (3, 1), jnp.float32) * math.sqrt(2.0 / (3 + 1))
    rel = jax.random.normal(kr, (R, D, D), jnp.float32) * math.sqrt(2.0 / (2 * D))
    linear_w = jax.random.normal(kl, (3, R), jnp.float32) * (1.0 / math.sqrt(R))
    return {"weight": weight, "rel": rel, "linear_w": linear_w}


if __name__ == "__main__":
    R, B, L1, L2 = 16, 2, 8, 8

    key = jax.random.PRNGKey(0)
    kp, k1, k2 = jax.random.split(key, 3)
    params = init_params(kp, R=R)
    prepared = prepare_params(params)          # rel -> bf16 once, outside jit

    word_1 = jax.random.normal(k1, (B, 3, L1, D), jnp.float32)
    word_2 = jax.random.normal(k2, (B, 3, L2, D), jnp.float32)
    # masks with a few padded (zero) positions
    mask_1 = jnp.ones((B, L1), jnp.float32).at[1, L1 - 2:].set(0.0)
    mask_2 = jnp.ones((B, L2), jnp.float32).at[0, L2 - 3:].set(0.0)

    logits = model_forward(prepared, word_1, mask_1, word_2, mask_2)
    logits = jax.block_until_ready(logits)
    assert logits.shape == (B, 3), logits.shape

    ref = reference_forward(params, word_1, mask_1, word_2, mask_2)
    ref = jax.block_until_ready(ref)

    # bf16 streaming of rel/word1 vs f32-HIGHEST reference -> loose tolerance
    if not jnp.allclose(logits, ref, rtol=2e-2, atol=5e-1):
        raise AssertionError(f"mismatch:\nkernel={logits}\nref={ref}")
    print("KERNEL_OK")
</pallas_src>

<mosaic_0001>
module attributes {stable_mosaic.version = 11 : i64} {
  func.func @_bilinear_max_kernel(%arg0: i32, %arg1: memref<16x1024xbf16, #tpu.memory_space<vmem>>, %arg2: memref<2x1024x1024xbf16, #tpu.memory_space<vmem>>, %arg3: memref<1024x16xf32, #tpu.memory_space<vmem>>, %arg4: memref<16x16xf32, #tpu.memory_space<vmem>>, %arg5: memref<2x2x128xf32, #tpu.memory_space<vmem>>) attributes {dimension_semantics = [#tpu.dimension_semantics<parallel>], iteration_bounds = array<i64: 8>, scalar_prefetch = 0 : i64, scratch_operands = 0 : i64, tpu.core_type = #tpu.core_type<tc>, window_params = [{pipeline_mode = #tpu.pipeline_mode<synchronous>, transform_indices = @transform_0, window_bounds = array<i64: 16, 1024>}, {transform_indices = @transform_1, window_bounds = array<i64: 2, 1024, 1024>}, {pipeline_mode = #tpu.pipeline_mode<synchronous>, transform_indices = @transform_2, window_bounds = array<i64: 1024, 16>}, {pipeline_mode = #tpu.pipeline_mode<synchronous>, transform_indices = @transform_3, window_bounds = array<i64: 16, 16>}, {transform_indices = @transform_4, window_bounds = array<i64: 2, 2, 128>}]} {
    %c0 = arith.constant 0 : index
    %c0_0 = arith.constant 0 : index
    %0 = vector.load %arg1[%c0, %c0_0] : memref<16x1024xbf16, #tpu.memory_space<vmem>>, vector<16x1024xbf16>
    %c0_1 = arith.constant 0 : index
    %c0_2 = arith.constant 0 : index
    %1 = vector.load %arg3[%c0_1, %c0_2] : memref<1024x16xf32, #tpu.memory_space<vmem>>, vector<1024x16xf32>
    %c0_3 = arith.constant 0 : index
    %c0_4 = arith.constant 0 : index
    %2 = vector.load %arg4[%c0_3, %c0_4] : memref<16x16xf32, #tpu.memory_space<vmem>>, vector<16x16xf32>
    %c0_5 = arith.constant 0 : index
    %c0_6 = arith.constant 0 : index
    %c0_7 = arith.constant 0 : index
    %3 = vector.load %arg2[%c0_5, %c0_6, %c0_7] : memref<2x1024x1024xbf16, #tpu.memory_space<vmem>>, vector<1x1024x1024xbf16>
    %4 = vector.shape_cast %3 : vector<1x1024x1024xbf16> to vector<1024x1024xbf16>
    %cst = arith.constant dense<0.000000e+00> : vector<16x1024xf32>
    %5 = tpu.matmul %0, %4, %cst {dimension_numbers = #tpu.dot_dimension_numbers<[1], [0], [0], [1], [0, 0, 1, 1], [], []>} : vector<16x1024xbf16>, vector<1024x1024xbf16>, vector<16x1024xf32> -> vector<16x1024xf32>
    %cst_8 = arith.constant dense<0.000000e+00> : vector<16x16xf32>
    %6 = tpu.matmul %5, %1, %cst_8 {dimension_numbers = #tpu.dot_dimension_numbers<[1], [0], [0], [1], [0, 0, 1, 1], [], []>} : vector<16x1024xf32>, vector<1024x16xf32>, vector<16x16xf32> -> vector<16x16xf32>
    %7 = arith.addf %6, %2 : vector<16x16xf32>
    %8 = vector.extract_strided_slice %7 {offsets = [0, 0], sizes = [8, 16], strides = [1, 1]} : vector<16x16xf32> to vector<8x16xf32>
    %9 = vector.shape_cast %8 : vector<8x16xf32> to vector<1x8x16xf32>
    %cst_9 = arith.constant dense<0xFF800000> : vector<1xf32>
    %10 = vector.multi_reduction <maximumf>, %9, %cst_9 [1, 2] : vector<1x8x16xf32> to vector<1xf32>
    %11 = vector.shape_cast %10 : vector<1xf32> to vector<1x1x1xf32>
    %12 = vector.extract %11[0, 0, 0] : f32 from vector<1x1x1xf32>
    %13 = vector.broadcast %12 : f32 to vector<1x1xf32>
    %14 = vector.shape_cast %13 : vector<1x1xf32> to vector<1x1xf32>
    %15 = vector.broadcast %14 : vector<1x1xf32> to vector<1x128xf32>
    %16 = vector.extract_strided_slice %7 {offsets = [8, 0], sizes = [8, 16], strides = [1, 1]} : vector<16x16xf32> to vector<8x16xf32>
    %17 = vector.shape_cast %16 : vector<8x16xf32> to vector<1x8x16xf32>
    %cst_10 = arith.constant dense<0xFF800000> : vector<1xf32>
    %18 = vector.multi_reduction <maximumf>, %17, %cst_10 [1, 2] : vector<1x8x16xf32> to vector<1xf32>
    %19 = vector.shape_cast %18 : vector<1xf32> to vector<1x1x1xf32>
    %20 = vector.extract %19[0, 0, 0] : f32 from vector<1x1x1xf32>
    %21 = vector.broadcast %20 : f32 to vector<1x1xf32>
    %22 = vector.shape_cast %21 : vector<1x1xf32> to vector<1x1xf32>
    %23 = vector.broadcast %22 : vector<1x1xf32> to vector<1x128xf32>
    %24 = tpu.concatenate %15, %23 in 0 : vector<1x128xf32>, vector<1x128xf32> -> vector<2x128xf32>
    %c0_11 = arith.constant 0 : index
    %c0_12 = arith.constant 0 : index
    %c0_13 = arith.constant 0 : index
    %25 = vector.load %arg5[%c0_11, %c0_12, %c0_13] : memref<2x2x128xf32, #tpu.memory_space<vmem>>, vector<1x2x128xf32>
    %26 = vector.shape_cast %25 : vector<1x2x128xf32> to vector<2x128xf32>
    %27 = vector.shape_cast %24 : vector<2x128xf32> to vector<1x2x128xf32>
    tpu.vector_store %arg5[%c0_11, %c0_12, %c0_13], %27 {strides = array<i32>} : memref<2x2x128xf32, #tpu.memory_space<vmem>>, vector<1x2x128xf32>,
    %c1 = arith.constant 1 : index
    %c0_14 = arith.constant 0 : index
    %c0_15 = arith.constant 0 : index
    %28 = vector.load %arg2[%c1, %c0_14, %c0_15] : memref<2x1024x1024xbf16, #tpu.memory_space<vmem>>, vector<1x1024x1024xbf16>
    %29 = vector.shape_cast %28 : vector<1x1024x1024xbf16> to vector<1024x1024xbf16>
    %cst_16 = arith.constant dense<0.000000e+00> : vector<16x1024xf32>
    %30 = tpu.matmul %0, %29, %cst_16 {dimension_numbers = #tpu.dot_dimension_numbers<[1], [0], [0], [1], [0, 0, 1, 1], [], []>} : vector<16x1024xbf16>, vector<1024x1024xbf16>, vector<16x1024xf32> -> vector<16x1024xf32>
    %cst_17 = arith.constant dense<0.000000e+00> : vector<16x16xf32>
    %31 = tpu.matmul %30, %1, %cst_17 {dimension_numbers = #tpu.dot_dimension_numbers<[1], [0], [0], [1], [0, 0, 1, 1], [], []>} : vector<16x1024xf32>, vector<1024x16xf32>, vector<16x16xf32> -> vector<16x16xf32>
    %32 = arith.addf %31, %2 : vector<16x16xf32>
    %33 = vector.extract_strided_slice %32 {offsets = [0, 0], sizes = [8, 16], strides = [1, 1]} : vector<16x16xf32> to vector<8x16xf32>
    %34 = vector.shape_cast %33 : vector<8x16xf32> to vector<1x8x16xf32>
    %cst_18 = arith.constant dense<0xFF800000> : vector<1xf32>
    %35 = vector.multi_reduction <maximumf>, %34, %cst_18 [1, 2] : vector<1x8x16xf32> to vector<1xf32>
    %36 = vector.shape_cast %35 : vector<1xf32> to vector<1x1x1xf32>
    %37 = vector.extract %36[0, 0, 0] : f32 from vector<1x1x1xf32>
    %38 = vector.broadcast %37 : f32 to vector<1x1xf32>
    %39 = vector.shape_cast %38 : vector<1x1xf32> to vector<1x1xf32>
    %40 = vector.broadcast %39 : vector<1x1xf32> to vector<1x128xf32>
    %41 = vector.extract_strided_slice %32 {offsets = [8, 0], sizes = [8, 16], strides = [1, 1]} : vector<16x16xf32> to vector<8x16xf32>
    %42 = vector.shape_cast %41 : vector<8x16xf32> to vector<1x8x16xf32>
    %cst_19 = arith.constant dense<0xFF800000> : vector<1xf32>
    %43 = vector.multi_reduction <maximumf>, %42, %cst_19 [1, 2] : vector<1x8x16xf32> to vector<1xf32>
    %44 = vector.shape_cast %43 : vector<1xf32> to vector<1x1x1xf32>
    %45 = vector.extract %44[0, 0, 0] : f32 from vector<1x1x1xf32>
    %46 = vector.broadcast %45 : f32 to vector<1x1xf32>
    %47 = vector.shape_cast %46 : vector<1x1xf32> to vector<1x1xf32>
    %48 = vector.broadcast %47 : vector<1x1xf32> to vector<1x128xf32>
    %49 = tpu.concatenate %40, %48 in 0 : vector<1x128xf32>, vector<1x128xf32> -> vector<2x128xf32>
    %c1_20 = arith.constant 1 : index
    %c0_21 = arith.constant 0 : index
    %c0_22 = arith.constant 0 : index
    %50 = vector.load %arg5[%c1_20, %c0_21, %c0_22] : memref<2x2x128xf32, #tpu.memory_space<vmem>>, vector<1x2x128xf32>
    %51 = vector.shape_cast %50 : vector<1x2x128xf32> to vector<2x128xf32>
    %52 = vector.shape_cast %49 : vector<2x128xf32> to vector<1x2x128xf32>
    tpu.vector_store %arg5[%c1_20, %c0_21, %c0_22], %52 {strides = array<i32>} : memref<2x2x128xf32, #tpu.memory_space<vmem>>, vector<1x2x128xf32>,
    return
  }
  func.func @transform_0(%arg0: i32) -> (i32, i32) {
    %c0_i32 = arith.constant 0 : i32
    %c0_i32_0 = arith.constant 0 : i32
    %c0_i32_1 = arith.constant 0 : i32
    return %c0_i32, %c0_i32_0 : i32, i32
  }
  func.func @transform_1(%arg0: i32) -> (i32, i32, i32) {
    %c0_i32 = arith.constant 0 : i32
    %c0_i32_0 = arith.constant 0 : i32
    %c0_i32_1 = arith.constant 0 : i32
    return %arg0, %c0_i32, %c0_i32_0 : i32, i32, i32
  }
  func.func @transform_2(%arg0: i32) -> (i32, i32) {
    %c0_i32 = arith.constant 0 : i32
    %c0_i32_0 = arith.constant 0 : i32
    %c0_i32_1 = arith.constant 0 : i32
    return %c0_i32, %c0_i32_0 : i32, i32
  }
  func.func @transform_3(%arg0: i32) -> (i32, i32) {
    %c0_i32 = arith.constant 0 : i32
    %c0_i32_0 = arith.constant 0 : i32
    %c0_i32_1 = arith.constant 0 : i32
    return %c0_i32, %c0_i32_0 : i32, i32
  }
  func.func @transform_4(%arg0: i32) -> (i32, i32, i32) {
    %c0_i32 = arith.constant 0 : i32
    %c0_i32_0 = arith.constant 0 : i32
    %c0_i32_1 = arith.constant 0 : i32
    return %arg0, %c0_i32, %c0_i32_0 : i32, i32, i32
  }
}

</mosaic_0001>

<llo_original>
// kernel: model_forward.1
$region0: #{model_forward.1}
  #allocation0 [shape = 'u32[]', space=smem, size = 0x4, offset = 0x4, fixed_abs, tag = 'smem constant byte address 0x4 - core index']
  #allocation1 [shape = 'u32[144,128]{1,0:T(1,128)}', space=vmem, size = 0x12000, scoped, tag = 'internal scratch']
  %s0 = inlined_call_operand.vmem [shape: bf16[16,1024], index: 0, kind: input, shape index: {}]
  %s1 = inlined_call_operand.hbm [shape: bf16[16,1024,1024], index: 1, kind: input, shape index: {}]
  %s2 = inlined_call_operand.vmem [shape: f32[1024,16], index: 2, kind: input, shape index: {}]
  %s3 = inlined_call_operand.vmem [shape: f32[16,16], index: 3, kind: input, shape index: {}]
  %s4 = inlined_call_operand.vmem [shape: f32[16,2,128], index: 4, kind: output, shape index: {}]
  %s5 = sld [smem:[#allocation0]]
  $region53: #{model_forward.1} parent=0
    _
  %s7 = ssub.s32 1, %s5
  %s8 = scalar_select 0, %s7, %s5
  $region1: #{model_forward.1} parent=0
    #allocation2 [shape = 'u8[8388608]{0}', space=vmem, size = 0x800000, scoped, tag = 'input window, operand 1']
    #allocation3 [shape = 's32[2]{0}', space=sflag, size = 0x8, scoped, tag = 'scoped memory for model_forward.1']
    %9 = vsyncpa [#allocation3], 0
    %s10 = scalar_lea.sflag [#allocation3], 1
    %11 = vsyncpa %s10, 0
    loop: start=0, step=1, limit=10
    $region2: #{model_forward.1} parent=1 // loop_pre_header
      _
    $region3: #{model_forward.1} parent=1 // loop_header
      %s13 = sphi 0, %s17
      %p14 = scmp.ge.s32.totalorder %s13, 10
      %s21 = sphi 0, %s21
      %s23 = sphi 0, %s21
      %s24 = sphi 0, %s23
      %s38 = sphi 0, %s24
      %s44 = sphi 0, %s46
      %s47 = sphi 0, %s44
      %s48 = sphi 0, %s47
      %s64 = sphi 0, %s48
      %s68 = sphi 0, %s68
      %s70 = sphi 0, %s68
      %s71 = sphi 0, %s70
      %s85 = sphi 0, %s71
      %s89 = sphi 0, %s89
      %s91 = sphi 0, %s89
      %s92 = sphi 0, %s91
      %s106 = sphi 0, %s92
      %s112 = sphi 0, %s114
      %s115 = sphi 0, %s112
      %s116 = sphi 0, %s115
      %s132 = sphi 0, %s116
    $region4: #{model_forward.1} parent=1 // loop_header_branch
      %16 = sbr.rel (%p14) target = $region8
    $region5: #{model_forward.1} parent=1 // loop_body
      %s18 = ssub.s32 %s13, 1
      %s19 = ssub.s32 %s13, 2
      %s20 = sadd.s32 %s13, 1
      %s22 = sadd.s32 %s21, 1
      %p25 = scmp.eq.s32.totalorder %s13, 7
      %p26 = scmp.ne.s32.totalorder %s21, %s23
      %p27 = scmp.eq.s32.totalorder %s13, 0
      %p28 = por %p26, %p27
      %p29 = scmp.ne.s32.totalorder %s21, %s23
      %p30 = scmp.eq.s32.totalorder %s18, 7
      %p31 = por %p29, %p30
      %p32 = scmp.ne.s32.totalorder %s23, %s24
      %p33 = scmp.eq.s32.totalorder %s18, 0
      %p34 = por %p32, %p33
      %p35 = scmp.ne.s32.totalorder %s23, %s24
      %p36 = scmp.eq.s32.totalorder %s19, 7
      %p37 = por %p35, %p36
      %p39 = scmp.ne.s32.totalorder %s24, %s38
      %p40 = scmp.eq.s32.totalorder %s19, 0
      %p41 = por %p39, %p40
      %s42 = ssub.s32 %s13, %s20
      %p43 = scmp.eq.s32.totalorder %s42, 0
      %s45 = sadd.s32 %s44, 1
      %s46 = scalar_select %p43, %s44, %s45
      %p49 = pneg %p43
      %p50 = scmp.eq.s32.totalorder %s13, 7
      %p51 = por %p49, %p50
      %p52 = scmp.ne.s32.totalorder %s44, %s47
      %p53 = scmp.eq.s32.totalorder %s13, 0
      %p54 = por %p52, %p53
      %p55 = scmp.ne.s32.totalorder %s44, %s47
      %p56 = scmp.eq.s32.totalorder %s18, 7
      %p57 = por %p55, %p56
      %p58 = scmp.ne.s32.totalorder %s47, %s48
      %p59 = scmp.eq.s32.totalorder %s18, 0
      %p60 = por %p58, %p59
      %p61 = scmp.ne.s32.totalorder %s47, %s48
      %p62 = scmp.eq.s32.totalorder %s19, 7
      %p63 = por %p61, %p62
      %p65 = scmp.ne.s32.totalorder %s48, %s64
      %p66 = scmp.eq.s32.totalorder %s19, 0
      %p67 = por %p65, %p66
      %s69 = sadd.s32 %s68, 1
      %p72 = scmp.eq.s32.totalorder %s13, 7
      %p73 = scmp.ne.s32.totalorder %s68, %s70
      %p74 = scmp.eq.s32.totalorder %s13, 0
      %p75 = por %p73, %p74
      %p76 = scmp.ne.s32.totalorder %s68, %s70
      %p77 = scmp.eq.s32.totalorder %s18, 7
      %p78 = por %p76, %p77
      %p79 = scmp.ne.s32.totalorder %s70, %s71
      %p80 = scmp.eq.s32.totalorder %s18, 0
      %p81 = por %p79, %p80
      %p82 = scmp.ne.s32.totalorder %s70, %s71
      %p83 = scmp.eq.s32.totalorder %s19, 7
      %p84 = por %p82, %p83
      %p86 = scmp.ne.s32.totalorder %s71, %s85
      %p87 = scmp.eq.s32.totalorder %s19, 0
      %p88 = por %p86, %p87
      %s90 = sadd.s32 %s89, 1
      %p93 = scmp.eq.s32.totalorder %s13, 7
      %p94 = scmp.ne.s32.totalorder %s89, %s91
      %p95 = scmp.eq.s32.totalorder %s13, 0
      %p96 = por %p94, %p95
      %p97 = scmp.ne.s32.totalorder %s89, %s91
      %p98 = scmp.eq.s32.totalorder %s18, 7
      %p99 = por %p97, %p98
      %p100 = scmp.ne.s32.totalorder %s91, %s92
      %p101 = scmp.eq.s32.totalorder %s18, 0
      %p102 = por %p100, %p101
      %p103 = scmp.ne.s32.totalorder %s91, %s92
      %p104 = scmp.eq.s32.totalorder %s19, 7
      %p105 = por %p103, %p104
      %p107 = scmp.ne.s32.totalorder %s92, %s106
      %p108 = scmp.eq.s32.totalorder %s19, 0
      %p109 = por %p107, %p108
      %s110 = ssub.s32 %s13, %s20
      %p111 = scmp.eq.s32.totalorder %s110, 0
      %s113 = sadd.s32 %s112, 1
      %s114 = scalar_select %p111, %s112, %s113
      %p117 = pneg %p111
      %p118 = scmp.eq.s32.totalorder %s13, 7
      %p119 = por %p117, %p118
      %p120 = scmp.ne.s32.totalorder %s112, %s115
      %p121 = scmp.eq.s32.totalorder %s13, 0
      %p122 = por %p120, %p121
      %p123 = scmp.ne.s32.totalorder %s112, %s115
      %p124 = scmp.eq.s32.totalorder %s18, 7
      %p125 = por %p123, %p124
      %p126 = scmp.ne.s32.totalorder %s115, %s116
      %p127 = scmp.eq.s32.totalorder %s18, 0
      %p128 = por %p126, %p127
      %p129 = scmp.ne.s32.totalorder %s115, %s116
      %p130 = scmp.eq.s32.totalorder %s19, 7
      %p131 = por %p129, %p130
      %p133 = scmp.ne.s32.totalorder %s116, %s132
      %p134 = scmp.eq.s32.totalorder %s19, 0
      %p135 = por %p133, %p134
      %p136 = scmp.le.s32.totalorder 1, %s13
      %p137 = scmp.lt.s32.totalorder %s13, 9
      %p138 = pnand %p136, %p137
      %p139 = pneg %p138
      // Predicated region
      $region9: #{model_forward.1} parent=5 // pred_check
        _
      $region10: #{model_forward.1} parent=5 // pred_check_branch
        %141 = sbr.rel (%p138) target = $region12
      $region11: #{model_forward.1} parent=5 // pred_region
        %s142 = ssub.s32 %s13, 1
        // Predicated region
        $region13: #{model_forward.1} parent=11 // pred_check
          %p143 = pneg %p34
        $region14: #{model_forward.1} parent=11 // pred_check_branch
          %145 = sbr.rel (%p143) target = $region16
        $region15: #{model_forward.1} parent=11 // pred_region
          _
        $region16: #{model_forward.1} parent=11 // pred_fallthru
          _
        // Predicated region
        $region17: #{model_forward.1} parent=11 // pred_check
          %p146 = pneg %p81
        $region18: #{model_forward.1} parent=11 // pred_check_branch
          %148 = sbr.rel (%p146) target = $region20
        $region19: #{model_forward.1} parent=11 // pred_region
          _
        $region20: #{model_forward.1} parent=11 // pred_fallthru
          _
        // Predicated region
        $region21: #{model_forward.1} parent=11 // pred_check
          %p149 = pneg %p102
        $region22: #{model_forward.1} parent=11 // pred_check_branch
          %151 = sbr.rel (%p149) target = $region24
        $region23: #{model_forward.1} parent=11 // pred_region
          _
        $region24: #{model_forward.1} parent=11 // pred_fallthru
          _
      $region12: #{model_forward.1} parent=5 // pred_fallthru
        _
      %p152 = scmp.lt.s32.totalorder %s13, 8
      // Predicated region
      $region25: #{model_forward.1} parent=5 // pred_check
        %p153 = pneg %p152
      $region26: #{model_forward.1} parent=5 // pred_check_branch
        %155 = sbr.rel (%p153) target = $region28
      $region27: #{model_forward.1} parent=5 // pred_region
        // Predicated region
        $region29: #{model_forward.1} parent=27 // pred_check
          %p156 = pneg %p54
        $region30: #{model_forward.1} parent=27 // pred_check_branch
          %158 = sbr.rel (%p156) target = $region32
        $region31: #{model_forward.1} parent=27 // pred_region
          %s159 = sand.u32 %s44, 1
          %s160 = scalar_lea.sflag [#allocation3], %s159
          %s161 = sand.u32 %s44, 1
          %s162 = smul.addr %s161, 8192
          %s163 = scalar_lea.vmem [#allocation2], %s162
          %s164 = smul.u32 2, %s13
          %s166 = ssub.s32 131072, 131072
          %167 = vsyncadd %s160, %s166
          %s168 = smul.addr %s164, 1024
          %s169 = smul.addr %s168, 64
          %s170 = scalar_lea.hbm %s1, %s169
          %s171 = sshll.u32 %s163, 4
          %s172 = int_to_ptr.vmem [resolvable:$true] %s171
          %177 = dma.hbm_to_vmem [thread:$0]  %s170, 131072, %s172, %s160, 512, 512, 32
        $region32: #{model_forward.1} parent=27 // pred_fallthru
          _
      $region28: #{model_forward.1} parent=5 // pred_fallthru
        _
      %p178 = scmp.le.s32.totalorder 1, %s13
      %p179 = scmp.lt.s32.totalorder %s13, 9
      %p180 = pnand %p178, %p179
      %p181 = pneg %p180
      // Predicated region
      $region33: #{model_forward.1} parent=5 // pred_check
        _
      $region34: #{model_forward.1} parent=5 // pred_check_branch
        %183 = sbr.rel (%p180) target = $region36
      $region35: #{model_forward.1} parent=5 // pred_region
        %s184 = ssub.s32 %s13, 1
        %s185 = sand.u32 %s47, 1
        %s186 = scalar_lea.sflag [#allocation3], %s185
        %s187 = sand.u32 %s47, 1
        %s188 = smul.addr %s187, 8192
        %s189 = scalar_lea.vmem [#allocation2], %s188
        // Predicated region
        $region37: #{model_forward.1} parent=35 // pred_check
          %p190 = pneg %p60
        $region38: #{model_forward.1} parent=35 // pred_check_branch
          %192 = sbr.rel (%p190) target = $region40
        $region39: #{model_forward.1} parent=35 // pred_region
          %193 = dma.done %s186, 131072
        $region40: #{model_forward.1} parent=35 // pred_fallthru
          _
        %p194 = pneg %p34
        %p195 = pneg %p31
        %s196 = sand.u32 %s47, 1
        %s197 = scalar_lea.sflag [#allocation3], %s196
        %s198 = sand.u32 %s47, 1
        %s199 = smul.addr %s198, 8192
        %s200 = scalar_lea.vmem [#allocation2], %s199
        %p201 = pneg %p60
        %p202 = pneg %p57
        %p203 = pneg %p81
        %p204 = pneg %p78
        %p205 = pneg %p102
        %p206 = pneg %p99
        %p207 = pneg %p128
        %p208 = pneg %p125
        %s209 = smul.u32 2, %s18
        %p210 = scmp.lt.s32.totalorder %s209, 15
        %s211 = scalar_select %p210, %s209, 15
        %s212 = smul.addr %s211, 2
        %s213 = scalar_lea.vmem %s4, %s212
        %s214 = smul.u32 2, %s18
        %s215 = smul.u32 2, %s18
        %p216 = scmp.lt.s32.totalorder %s215, 15
        %s217 = scalar_select %p216, %s215, 15
        %s218 = smul.addr %s217, 2
        %s219 = scalar_lea.vmem %s4, %s218
        %s220 = smul.u32 2, %s18
        %v221 = vld [vmem:[%s0] sm:$0xff]
        %v222 = vld [vmem:[%s0 + $0x8] sm:$0xff]
        %v223 = vld [vmem:[%s0 + $0x10] sm:$0xff]
        %v224 = vld [vmem:[%s0 + $0x18] sm:$0xff]
        %v225 = vld [vmem:[%s0 + $0x20] sm:$0xff]
        %v226 = vld [vmem:[%s0 + $0x28] sm:$0xff]
        %v227 = vld [vmem:[%s0 + $0x30] sm:$0xff]
        %v228 = vld [vmem:[%s0 + $0x38] sm:$0xff]
        %v229 = vld [vmem:[%s2] sm:$0xff]
        %v230 = vld [vmem:[%s2 + $0x8] sm:$0xff]
        %v231 = vld [vmem:[%s2 + $0x10] sm:$0xff]
        %v232 = vld [vmem:[%s2 + $0x18] sm:$0xff]
        %v233 = vld [vmem:[%s2 + $0x20] sm:$0xff]
        %v234 = vld [vmem:[%s2 + $0x28] sm:$0xff]
        %v235 = vld [vmem:[%s2 + $0x30] sm:$0xff]
        %v236 = vld [vmem:[%s2 + $0x38] sm:$0xff]
        %v237 = vld [vmem:[%s2 + $0x40] sm:$0xff]
        %v238 = vld [vmem:[%s2 + $0x48] sm:$0xff]
        %v239 = vld [vmem:[%s2 + $0x50] sm:$0xff]
        %v240 = vld [vmem:[%s2 + $0x58] sm:$0xff]
        %v241 = vld [vmem:[%s2 + $0x60] sm:$0xff]
        %v242 = vld [vmem:[%s2 + $0x68] sm:$0xff]
        %v243 = vld [vmem:[%s2 + $0x70] sm:$0xff]
        %v244 = vld [vmem:[%s2 + $0x78] sm:$0xff]
        %v245 = vld [vmem:[%s2 + $0x80] sm:$0xff]
        %v246 = vld [vmem:[%s2 + $0x88] sm:$0xff]
        %v247 = vld [vmem:[%s2 + $0x90] sm:$0xff]
        %v248 = vld [vmem:[%s2 + $0x98] sm:$0xff]
        %v249 = vld [vmem:[%s2 + $0xa0] sm:$0xff]
        %v250 = vld [vmem:[%s2 + $0xa8] sm:$0xff]
        %v251 = vld [vmem:[%s2 + $0xb0] sm:$0xff]
        %v252 = vld [vmem:[%s2 + $0xb8] sm:$0xff]
        %v253 = vld [vmem:[%s2 + $0xc0] sm:$0xff]
        %v254 = vld [vmem:[%s2 + $0xc8] sm:$0xff]
        %v255 = vld [vmem:[%s2 + $0xd0] sm:$0xff]
        %v256 = vld [vmem:[%s2 + $0xd8] sm:$0xff]
        %v257 = vld [vmem:[%s2 + $0xe0] sm:$0xff]
        %v258 = vld [vmem:[%s2 + $0xe8] sm:$0xff]
        %v259 = vld [vmem:[%s2 + $0xf0] sm:$0xff]
        %v260 = vld [vmem:[%s2 + $0xf8] sm:$0xff]
        %v261 = vld [vmem:[%s2 + $0x100] sm:$0xff]
        %v262 = vld [vmem:[%s2 + $0x108] sm:$0xff]
        %v263 = vld [vmem:[%s2 + $0x110] sm:$0xff]
        %v264 = vld [vmem:[%s2 + $0x118] sm:$0xff]
        %v265 = vld [vmem:[%s2 + $0x120] sm:$0xff]
        %v266 = vld [vmem:[%s2 + $0x128] sm:$0xff]
        %v267 = vld [vmem:[%s2 + $0x130] sm:$0xff]
        %v268 = vld [vmem:[%s2 + $0x138] sm:$0xff]
        %v269 = vld [vmem:[%s2 + $0x140] sm:$0xff]
        %v270 = vld [vmem:[%s2 + $0x148] sm:$0xff]
        %v271 = vld [vmem:[%s2 + $0x150] sm:$0xff]
        %v272 = vld [vmem:[%s2 + $0x158] sm:$0xff]
        %v273 = vld [vmem:[%s2 + $0x160] sm:$0xff]
        %v274 = vld [vmem:[%s2 + $0x168] sm:$0xff]
        %v275 = vld [vmem:[%s2 + $0x170] sm:$0xff]
        %v276 = vld [vmem:[%s2 + $0x178] sm:$0xff]
        %v277 = vld [vmem:[%s2 + $0x180] sm:$0xff]
        %v278 = vld [vmem:[%s2 + $0x188] sm:$0xff]
        %v279 = vld [vmem:[%s2 + $0x190] sm:$0xff]
        %v280 = vld [vmem:[%s2 + $0x198] sm:$0xff]
        %v281 = vld [vmem:[%s2 + $0x1a0] sm:$0xff]
        %v282 = vld [vmem:[%s2 + $0x1a8] sm:$0xff]
        %v283 = vld [vmem:[%s2 + $0x1b0] sm:$0xff]
        %v284 = vld [vmem:[%s2 + $0x1b8] sm:$0xff]
        %v285 = vld [vmem:[%s2 + $0x1c0] sm:$0xff]
        %v286 = vld [vmem:[%s2 + $0x1c8] sm:$0xff]
        %v287 = vld [vmem:[%s2 + $0x1d0] sm:$0xff]
        %v288 = vld [vmem:[%s2 + $0x1d8] sm:$0xff]
        %v289 = vld [vmem:[%s2 + $0x1e0] sm:$0xff]
        %v290 = vld [vmem:[%s2 + $0x1e8] sm:$0xff]
        %v291 = vld [vmem:[%s2 + $0x1f0] sm:$0xff]
        %v292 = vld [vmem:[%s2 + $0x1f8] sm:$0xff]
        %v293 = vld [vmem:[%s2 + $0x200] sm:$0xff]
        %v294 = vld [vmem:[%s2 + $0x208] sm:$0xff]
        %v295 = vld [vmem:[%s2 + $0x210] sm:$0xff]
        %v296 = vld [vmem:[%s2 + $0x218] sm:$0xff]
        %v297 = vld [vmem:[%s2 + $0x220] sm:$0xff]
        %v298 = vld [vmem:[%s2 + $0x228] sm:$0xff]
        %v299 = vld [vmem:[%s2 + $0x230] sm:$0xff]
        %v300 = vld [vmem:[%s2 + $0x238] sm:$0xff]
        %v301 = vld [vmem:[%s2 + $0x240] sm:$0xff]
        %v302 = vld [vmem:[%s2 + $0x248] sm:$0xff]
        %v303 = vld [vmem:[%s2 + $0x250] sm:$0xff]
        %v304 = vld [vmem:[%s2 + $0x258] sm:$0xff]
        %v305 = vld [vmem:[%s2 + $0x260] sm:$0xff]
        %v306 = vld [vmem:[%s2 + $0x268] sm:$0xff]
        %v307 = vld [vmem:[%s2 + $0x270] sm:$0xff]
        %v308 = vld [vmem:[%s2 + $0x278] sm:$0xff]
        %v309 = vld [vmem:[%s2 + $0x280] sm:$0xff]
        %v310 = vld [vmem:[%s2 + $0x288] sm:$0xff]
        %v311 = vld [vmem:[%s2 + $0x290] sm:$0xff]
        %v312 = vld [vmem:[%s2 + $0x298] sm:$0xff]
        %v313 = vld [vmem:[%s2 + $0x2a0] sm:$0xff]
        %v314 = vld [vmem:[%s2 + $0x2a8] sm:$0xff]
        %v315 = vld [vmem:[%s2 + $0x2b0] sm:$0xff]
        %v316 = vld [vmem:[%s2 + $0x2b8] sm:$0xff]
        %v317 = vld [vmem:[%s2 + $0x2c0] sm:$0xff]
        %v318 = vld [vmem:[%s2 + $0x2c8] sm:$0xff]
        %v319 = vld [vmem:[%s2 + $0x2d0] sm:$0xff]
        %v320 = vld [vmem:[%s2 + $0x2d8] sm:$0xff]
        %v321 = vld [vmem:[%s2 + $0x2e0] sm:$0xff]
        %v322 = vld [vmem:[%s2 + $0x2e8] sm:$0xff]
        %v323 = vld [vmem:[%s2 + $0x2f0] sm:$0xff]
        %v324 = vld [vmem:[%s2 + $0x2f8] sm:$0xff]
        %v325 = vld [vmem:[%s2 + $0x300] sm:$0xff]
        %v326 = vld [vmem:[%s2 + $0x308] sm:$0xff]
        %v327 = vld [vmem:[%s2 + $0x310] sm:$0xff]
        %v328 = vld [vmem:[%s2 + $0x318] sm:$0xff]
        %v329 = vld [vmem:[%s2 + $0x320] sm:$0xff]
        %v330 = vld [vmem:[%s2 + $0x328] sm:$0xff]
        %v331 = vld [vmem:[%s2 + $0x330] sm:$0xff]
        %v332 = vld [vmem:[%s2 + $0x338] sm:$0xff]
        %v333 = vld [vmem:[%s2 + $0x340] sm:$0xff]
        %v334 = vld [vmem:[%s2 + $0x348] sm:$0xff]
        %v335 = vld [vmem:[%s2 + $0x350] sm:$0xff]
        %v336 = vld [vmem:[%s2 + $0x358] sm:$0xff]
        %v337 = vld [vmem:[%s2 + $0x360] sm:$0xff]
        %v338 = vld [vmem:[%s2 + $0x368] sm:$0xff]
        %v339 = vld [vmem:[%s2 + $0x370] sm:$0xff]
        %v340 = vld [vmem:[%s2 + $0x378] sm:$0xff]
        %v341 = vld [vmem:[%s2 + $0x380] sm:$0xff]
        %v342 = vld [vmem:[%s2 + $0x388] sm:$0xff]
        %v343 = vld [vmem:[%s2 + $0x390] sm:$0xff]
        %v344 = vld [vmem:[%s2 + $0x398] sm:$0xff]
        %v345 = vld [vmem:[%s2 + $0x3a0] sm:$0xff]
        %v346 = vld [vmem:[%s2 + $0x3a8] sm:$0xff]
        %v347 = vld [vmem:[%s2 + $0x3b0] sm:$0xff]
        %v348 = vld [vmem:[%s2 + $0x3b8] sm:$0xff]
        %v349 = vld [vmem:[%s2 + $0x3c0] sm:$0xff]
        %v350 = vld [vmem:[%s2 + $0x3c8] sm:$0xff]
        %v351 = vld [vmem:[%s2 + $0x3d0] sm:$0xff]
        %v352 = vld [vmem:[%s2 + $0x3d8] sm:$0xff]
        %v353 = vld [vmem:[%s2 + $0x3e0] sm:$0xff]
        %v354 = vld [vmem:[%s2 + $0x3e8] sm:$0xff]
        %v355 = vld [vmem:[%s2 + $0x3f0] sm:$0xff]
        %v356 = vld [vmem:[%s2 + $0x3f8] sm:$0xff]
        %v357 = vld [vmem:[%s3] sm:$0xff]
        %v358 = vld [vmem:[%s3 + $0x8] sm:$0xff]
        %v359 = vld [vmem:[%s189] sm:$0xff]
        %v360 = vld [vmem:[%s189 + $0x8] sm:$0xff]
        %v361 = vld [vmem:[%s189 + $0x10] sm:$0xff]
        %v362 = vld [vmem:[%s189 + $0x18] sm:$0xff]
        %v363 = vld [vmem:[%s189 + $0x20] sm:$0xff]
        %v364 = vld [vmem:[%s189 + $0x28] sm:$0xff]
        %v365 = vld [vmem:[%s189 + $0x30] sm:$0xff]
        %v366 = vld [vmem:[%s189 + $0x38] sm:$0xff]
        %v367 = vld [vmem:[%s189 + $0x40] sm:$0xff]
        %v368 = vld [vmem:[%s189 + $0x48] sm:$0xff]
        %v369 = vld [vmem:[%s189 + $0x50] sm:$0xff]
        %v370 = vld [vmem:[%s189 + $0x58] sm:$0xff]
        %v371 = vld [vmem:[%s189 + $0x60] sm:$0xff]
        %v372 = vld [vmem:[%s189 + $0x68] sm:$0xff]
        %v373 = vld [vmem:[%s189 + $0x70] sm:$0xff]
        %v374 = vld [vmem:[%s189 + $0x78] sm:$0xff]
        %v375 = vld [vmem:[%s189 + $0x80] sm:$0xff]
        %v376 = vld [vmem:[%s189 + $0x88] sm:$0xff]
        %v377 = vld [vmem:[%s189 + $0x90] sm:$0xff]
        %v378 = vld [vmem:[%s189 + $0x98] sm:$0xff]
        %v379 = vld [vmem:[%s189 + $0xa0] sm:$0xff]
        %v380 = vld [vmem:[%s189 + $0xa8] sm:$0xff]
        %v381 = vld [vmem:[%s189 + $0xb0] sm:$0xff]
        %v382 = vld [vmem:[%s189 + $0xb8] sm:$0xff]
        %v383 = vld [vmem:[%s189 + $0xc0] sm:$0xff]
        %v384 = vld [vmem:[%s189 + $0xc8] sm:$0xff]
        %v385 = vld [vmem:[%s189 + $0xd0] sm:$0xff]
        %v386 = vld [vmem:[%s189 + $0xd8] sm:$0xff]
        %v387 = vld [vmem:[%s189 + $0xe0] sm:$0xff]
        %v388 = vld [vmem:[%s189 + $0xe8] sm:$0xff]
        %v389 = vld [vmem:[%s189 + $0xf0] sm:$0xff]
        %v390 = vld [vmem:[%s189 + $0xf8] sm:$0xff]
        %v391 = vld [vmem:[%s189 + $0x100] sm:$0xff]
        %v392 = vld [vmem:[%s189 + $0x108] sm:$0xff]
        %v393 = vld [vmem:[%s189 + $0x110] sm:$0xff]
        %v394 = vld [vmem:[%s189 + $0x118] sm:$0xff]
        %v395 = vld [vmem:[%s189 + $0x120] sm:$0xff]
        %v396 = vld [vmem:[%s189 + $0x128] sm:$0xff]
        %v397 = vld [vmem:[%s189 + $0x130] sm:$0xff]
        %v398 = vld [vmem:[%s189 + $0x138] sm:$0xff]
        %v399 = vld [vmem:[%s189 + $0x140] sm:$0xff]
        %v400 = vld [vmem:[%s189 + $0x148] sm:$0xff]
        %v401 = vld [vmem:[%s189 + $0x150] sm:$0xff]
        %v402 = vld [vmem:[%s189 + $0x158] sm:$0xff]
        %v403 = vld [vmem:[%s189 + $0x160] sm:$0xff]
        %v404 = vld [vmem:[%s189 + $0x168] sm:$0xff]
        %v405 = vld [vmem:[%s189 + $0x170] sm:$0xff]
        %v406 = vld [vmem:[%s189 + $0x178] sm:$0xff]
        %v407 = vld [vmem:[%s189 + $0x180] sm:$0xff]
        %v408 = vld [vmem:[%s189 + $0x188] sm:$0xff]
        %v409 = vld [vmem:[%s189 + $0x190] sm:$0xff]
        %v410 = vld [vmem:[%s189 + $0x198] sm:$0xff]
        %v411 = vld [vmem:[%s189 + $0x1a0] sm:$0xff]
        %v412 = vld [vmem:[%s189 + $0x1a8] sm:$0xff]
        %v413 = vld [vmem:[%s189 + $0x1b0] sm:$0xff]
        %v414 = vld [vmem:[%s189 + $0x1b8] sm:$0xff]
        %v415 = vld [vmem:[%s189 + $0x1c0] sm:$0xff]
        %v416 = vld [vmem:[%s189 + $0x1c8] sm:$0xff]
        %v417 = vld [vmem:[%s189 + $0x1d0] sm:$0xff]
        %v418 = vld [vmem:[%s189 + $0x1d8] sm:$0xff]
        %v419 = vld [vmem:[%s189 + $0x1e0] sm:$0xff]
        %v420 = vld [vmem:[%s189 + $0x1e8] sm:$0xff]
        %v421 = vld [vmem:[%s189 + $0x1f0] sm:$0xff]
        %v422 = vld [vmem:[%s189 + $0x1f8] sm:$0xff]
        %v423 = vld [vmem:[%s189 + $0x200] sm:$0xff]
        %v424 = vld [vmem:[%s189 + $0x208] sm:$0xff]
        %v425 = vld [vmem:[%s189 + $0x210] sm:$0xff]
        %v426 = vld [vmem:[%s189 + $0x218] sm:$0xff]
        %v427 = vld [vmem:[%s189 + $0x220] sm:$0xff]
        %v428 = vld [vmem:[%s189 + $0x228] sm:$0xff]
        %v429 = vld [vmem:[%s189 + $0x230] sm:$0xff]
        %v430 = vld [vmem:[%s189 + $0x238] sm:$0xff]
        %v431 = vld [vmem:[%s189 + $0x240] sm:$0xff]
        %v432 = vld [vmem:[%s189 + $0x248] sm:$0xff]
        %v433 = vld [vmem:[%s189 + $0x250] sm:$0xff]
        %v434 = vld [vmem:[%s189 + $0x258] sm:$0xff]
        %v435 = vld [vmem:[%s189 + $0x260] sm:$0xff]
        %v436 = vld [vmem:[%s189 + $0x268] sm:$0xff]
        %v437 = vld [vmem:[%s189 + $0x270] sm:$0xff]
        %v438 = vld [vmem:[%s189 + $0x278] sm:$0xff]
        %v439 = vld [vmem:[%s189 + $0x280] sm:$0xff]
        %v440 = vld [vmem:[%s189 + $0x288] sm:$0xff]
        %v441 = vld [vmem:[%s189 + $0x290] sm:$0xff]
        %v442 = vld [vmem:[%s189 + $0x298] sm:$0xff]
        %v443 = vld [vmem:[%s189 + $0x2a0] sm:$0xff]
        %v444 = vld [vmem:[%s189 + $0x2a8] sm:$0xff]
        %v445 = vld [vmem:[%s189 + $0x2b0] sm:$0xff]
        %v446 = vld [vmem:[%s189 + $0x2b8] sm:$0xff]
        %v447 = vld [vmem:[%s189 + $0x2c0] sm:$0xff]
        %v448 = vld [vmem:[%s189 + $0x2c8] sm:$0xff]
        %v449 = vld [vmem:[%s189 + $0x2d0] sm:$0xff]
        %v450 = vld [vmem:[%s189 + $0x2d8] sm:$0xff]
        %v451 = vld [vmem:[%s189 + $0x2e0] sm:$0xff]
        %v452 = vld [vmem:[%s189 + $0x2e8] sm:$0xff]
        %v453 = vld [vmem:[%s189 + $0x2f0] sm:$0xff]
        %v454 = vld [vmem:[%s189 + $0x2f8] sm:$0xff]
        %v455 = vld [vmem:[%s189 + $0x300] sm:$0xff]
        %v456 = vld [vmem:[%s189 + $0x308] sm:$0xff]
        %v457 = vld [vmem:[%s189 + $0x310] sm:$0xff]
        %v458 = vld [vmem:[%s189 + $0x318] sm:$0xff]
        %v459 = vld [vmem:[%s189 + $0x320] sm:$0xff]
        %v460 = vld [vmem:[%s189 + $0x328] sm:$0xff]
        %v461 = vld [vmem:[%s189 + $0x330] sm:$0xff]
        %v462 = vld [vmem:[%s189 + $0x338] sm:$0xff]
        %v463 = vld [vmem:[%s189 + $0x340] sm:$0xff]
        %v464 = vld [vmem:[%s189 + $0x348] sm:$0xff]
        %v465 = vld [vmem:[%s189 + $0x350] sm:$0xff]
        %v466 = vld [vmem:[%s189 + $0x358] sm:$0xff]
        %v467 = vld [vmem:[%s189 + $0x360] sm:$0xff]
        %v468 = vld [vmem:[%s189 + $0x368] sm:$0xff]
        %v469 = vld [vmem:[%s189 + $0x370] sm:$0xff]
        %v470 = vld [vmem:[%s189 + $0x378] sm:$0xff]
        %v471 = vld [vmem:[%s189 + $0x380] sm:$0xff]
        %v472 = vld [vmem:[%s189 + $0x388] sm:$0xff]
        %v473 = vld [vmem:[%s189 + $0x390] sm:$0xff]
        %v474 = vld [vmem:[%s189 + $0x398] sm:$0xff]
        %v475 = vld [vmem:[%s189 + $0x3a0] sm:$0xff]
        %v476 = vld [vmem:[%s189 + $0x3a8] sm:$0xff]
        %v477 = vld [vmem:[%s189 + $0x3b0] sm:$0xff]
        %v478 = vld [vmem:[%s189 + $0x3b8] sm:$0xff]
        %v479 = vld [vmem:[%s189 + $0x3c0] sm:$0xff]
        %v480 = vld [vmem:[%s189 + $0x3c8] sm:$0xff]
        %v481 = vld [vmem:[%s189 + $0x3d0] sm:$0xff]
        %v482 = vld [vmem:[%s189 + $0x3d8] sm:$0xff]
        %v483 = vld [vmem:[%s189 + $0x3e0] sm:$0xff]
        %v484 = vld [vmem:[%s189 + $0x3e8] sm:$0xff]
        %v485 = vld [vmem:[%s189 + $0x3f0] sm:$0xff]
        %v486 = vld [vmem:[%s189 + $0x3f8] sm:$0xff]
        %v487 = vld [vmem:[%s189 + $0x400] sm:$0xff]
        %v488 = vld [vmem:[%s189 + $0x408] sm:$0xff]
        %v489 = vld [vmem:[%s189 + $0x410] sm:$0xff]
        %v490 = vld [vmem:[%s189 + $0x418] sm:$0xff]
        %v491 = vld [vmem:[%s189 + $0x420] sm:$0xff]
        %v492 = vld [vmem:[%s189 + $0x428] sm:$0xff]
        %v493 = vld [vmem:[%s189 + $0x430] sm:$0xff]
        %v494 = vld [vmem:[%s189 + $0x438] sm:$0xff]
        %v495 = vld [vmem:[%s189 + $0x440] sm:$0xff]
        %v496 = vld [vmem:[%s189 + $0x448] sm:$0xff]
        %v497 = vld [vmem:[%s189 + $0x450] sm:$0xff]
        %v498 = vld [vmem:[%s189 + $0x458] sm:$0xff]
        %v499 = vld [vmem:[%s189 + $0x460] sm:$0xff]
        %v500 = vld [vmem:[%s189 + $0x468] sm:$0xff]
        %v501 = vld [vmem:[%s189 + $0x470] sm:$0xff]
        %v502 = vld [vmem:[%s189 + $0x478] sm:$0xff]
        %v503 = vld [vmem:[%s189 + $0x480] sm:$0xff]
        %v504 = vld [vmem:[%s189 + $0x488] sm:$0xff]
        %v505 = vld [vmem:[%s189 + $0x490] sm:$0xff]
        %v506 = vld [vmem:[%s189 + $0x498] sm:$0xff]
        %v507 = vld [vmem:[%s189 + $0x4a0] sm:$0xff]
        %v508 = vld [vmem:[%s189 + $0x4a8] sm:$0xff]
        %v509 = vld [vmem:[%s189 + $0x4b0] sm:$0xff]
        %v510 = vld [vmem:[%s189 + $0x4b8] sm:$0xff]
        %v511 = vld [vmem:[%s189 + $0x4c0] sm:$0xff]
        %v512 = vld [vmem:[%s189 + $0x4c8] sm:$0xff]
        %v513 = vld [vmem:[%s189 + $0x4d0] sm:$0xff]
        %v514 = vld [vmem:[%s189 + $0x4d8] sm:$0xff]
        %v515 = vld [vmem:[%s189 + $0x4e0] sm:$0xff]
        %v516 = vld [vmem:[%s189 + $0x4e8] sm:$0xff]
        %v517 = vld [vmem:[%s189 + $0x4f0] sm:$0xff]
        %v518 = vld [vmem:[%s189 + $0x4f8] sm:$0xff]
        %v519 = vld [vmem:[%s189 + $0x500] sm:$0xff]
        %v520 = vld [vmem:[%s189 + $0x508] sm:$0xff]
        %v521 = vld [vmem:[%s189 + $0x510] sm:$0xff]
        %v522 = vld [vmem:[%s189 + $0x518] sm:$0xff]
        %v523 = vld [vmem:[%s189 + $0x520] sm:$0xff]
        %v524 = vld [vmem:[%s189 + $0x528] sm:$0xff]
        %v525 = vld [vmem:[%s189 + $0x530] sm:$0xff]
        %v526 = vld [vmem:[%s189 + $0x538] sm:$0xff]
        %v527 = vld [vmem:[%s189 + $0x540] sm:$0xff]
        %v528 = vld [vmem:[%s189 + $0x548] sm:$0xff]
        %v529 = vld [vmem:[%s189 + $0x550] sm:$0xff]
        %v530 = vld [vmem:[%s189 + $0x558] sm:$0xff]
        %v531 = vld [vmem:[%s189 + $0x560] sm:$0xff]
        %v532 = vld [vmem:[%s189 + $0x568] sm:$0xff]
        %v533 = vld [vmem:[%s189 + $0x570] sm:$0xff]
        %v534 = vld [vmem:[%s189 + $0x578] sm:$0xff]
        %v535 = vld [vmem:[%s189 + $0x580] sm:$0xff]
        %v536 = vld [vmem:[%s189 + $0x588] sm:$0xff]
        %v537 = vld [vmem:[%s189 + $0x590] sm:$0xff]
        %v538 = vld [vmem:[%s189 + $0x598] sm:$0xff]
        %v539 = vld [vmem:[%s189 + $0x5a0] sm:$0xff]
        %v540 = vld [vmem:[%s189 + $0x5a8] sm:$0xff]
        %v541 = vld [vmem:[%s189 + $0x5b0] sm:$0xff]
        %v542 = vld [vmem:[%s189 + $0x5b8] sm:$0xff]
        %v543 = vld [vmem:[%s189 + $0x5c0] sm:$0xff]
        %v544 = vld [vmem:[%s189 + $0x5c8] sm:$0xff]
        %v545 = vld [vmem:[%s189 + $0x5d0] sm:$0xff]
        %v546 = vld [vmem:[%s189 + $0x5d8] sm:$0xff]
        %v547 = vld [vmem:[%s189 + $0x5e0] sm:$0xff]
        %v548 = vld [vmem:[%s189 + $0x5e8] sm:$0xff]
        %v549 = vld [vmem:[%s189 + $0x5f0] sm:$0xff]
        %v550 = vld [vmem:[%s189 + $0x5f8] sm:$0xff]
        %v551 = vld [vmem:[%s189 + $0x600] sm:$0xff]
        %v552 = vld [vmem:[%s189 + $0x608] sm:$0xff]
        %v553 = vld [vmem:[%s189 + $0x610] sm:$0xff]
        %v554 = vld [vmem:[%s189 + $0x618] sm:$0xff]
        %v555 = vld [vmem:[%s189 + $0x620] sm:$0xff]
        %v556 = vld [vmem:[%s189 + $0x628] sm:$0xff]
        %v557 = vld [vmem:[%s189 + $0x630] sm:$0xff]
        %v558 = vld [vmem:[%s189 + $0x638] sm:$0xff]
        %v559 = vld [vmem:[%s189 + $0x640] sm:$0xff]
        %v560 = vld [vmem:[%s189 + $0x648] sm:$0xff]
        %v561 = vld [vmem:[%s189 + $0x650] sm:$0xff]
        %v562 = vld [vmem:[%s189 + $0x658] sm:$0xff]
        %v563 = vld [vmem:[%s189 + $0x660] sm:$0xff]
        %v564 = vld [vmem:[%s189 + $0x668] sm:$0xff]
        %v565 = vld [vmem:[%s189 + $0x670] sm:$0xff]
        %v566 = vld [vmem:[%s189 + $0x678] sm:$0xff]
        %v567 = vld [vmem:[%s189 + $0x680] sm:$0xff]
        %v568 = vld [vmem:[%s189 + $0x688] sm:$0xff]
        %v569 = vld [vmem:[%s189 + $0x690] sm:$0xff]
        %v570 = vld [vmem:[%s189 + $0x698] sm:$0xff]
        %v571 = vld [vmem:[%s189 + $0x6a0] sm:$0xff]
        %v572 = vld [vmem:[%s189 + $0x6a8] sm:$0xff]
        %v573 = vld [vmem:[%s189 + $0x6b0] sm:$0xff]
        %v574 = vld [vmem:[%s189 + $0x6b8] sm:$0xff]
        %v575 = vld [vmem:[%s189 + $0x6c0] sm:$0xff]
        %v576 = vld [vmem:[%s189 + $0x6c8] sm:$0xff]
        %v577 = vld [vmem:[%s189 + $0x6d0] sm:$0xff]
        %v578 = vld [vmem:[%s189 + $0x6d8] sm:$0xff]
        %v579 = vld [vmem:[%s189 + $0x6e0] sm:$0xff]
        %v580 = vld [vmem:[%s189 + $0x6e8] sm:$0xff]
        %v581 = vld [vmem:[%s189 + $0x6f0] sm:$0xff]
        %v582 = vld [vmem:[%s189 + $0x6f8] sm:$0xff]
        %v583 = vld [vmem:[%s189 + $0x700] sm:$0xff]
        %v584 = vld [vmem:[%s189 + $0x708] sm:$0xff]
        %v585 = vld [vmem:[%s189 + $0x710] sm:$0xff]
        %v586 = vld [vmem:[%s189 + $0x718] sm:$0xff]
        %v587 = vld [vmem:[%s189 + $0x720] sm:$0xff]
        %v588 = vld [vmem:[%s189 + $0x728] sm:$0xff]
        %v589 = vld [vmem:[%s189 + $0x730] sm:$0xff]
        %v590 = vld [vmem:[%s189 + $0x738] sm:$0xff]
        %v591 = vld [vmem:[%s189 + $0x740] sm:$0xff]
        %v592 = vld [vmem:[%s189 + $0x748] sm:$0xff]
        %v593 = vld [vmem:[%s189 + $0x750] sm:$0xff]
        %v594 = vld [vmem:[%s189 + $0x758] sm:$0xff]
        %v595 = vld [vmem:[%s189 + $0x760] sm:$0xff]
        %v596 = vld [vmem:[%s189 + $0x768] sm:$0xff]
        %v597 = vld [vmem:[%s189 + $0x770] sm:$0xff]
        %v598 = vld [vmem:[%s189 + $0x778] sm:$0xff]
        %v599 = vld [vmem:[%s189 + $0x780] sm:$0xff]
        %v600 = vld [vmem:[%s189 + $0x788] sm:$0xff]
        %v601 = vld [vmem:[%s189 + $0x790] sm:$0xff]
        %v602 = vld [vmem:[%s189 + $0x798] sm:$0xff]
        %v603 = vld [vmem:[%s189 + $0x7a0] sm:$0xff]
        %v604 = vld [vmem:[%s189 + $0x7a8] sm:$0xff]
        %v605 = vld [vmem:[%s189 + $0x7b0] sm:$0xff]
        %v606 = vld [vmem:[%s189 + $0x7b8] sm:$0xff]
        %v607 = vld [vmem:[%s189 + $0x7c0] sm:$0xff]
        %v608 = vld [vmem:[%s189 + $0x7c8] sm:$0xff]
        %v609 = vld [vmem:[%s189 + $0x7d0] sm:$0xff]
        %v610 = vld [vmem:[%s189 + $0x7d8] sm:$0xff]
        %v611 = vld [vmem:[%s189 + $0x7e0] sm:$0xff]
        %v612 = vld [vmem:[%s189 + $0x7e8] sm:$0xff]
        %v613 = vld [vmem:[%s189 + $0x7f0] sm:$0xff]
        %v614 = vld [vmem:[%s189 + $0x7f8] sm:$0xff]
        %v615 = vld [vmem:[%s189 + $0x800] sm:$0xff]
        %v616 = vld [vmem:[%s189 + $0x808] sm:$0xff]
        %v617 = vld [vmem:[%s189 + $0x810] sm:$0xff]
        %v618 = vld [vmem:[%s189 + $0x818] sm:$0xff]
        %v619 = vld [vmem:[%s189 + $0x820] sm:$0xff]
        %v620 = vld [vmem:[%s189 + $0x828] sm:$0xff]
        %v621 = vld [vmem:[%s189 + $0x830] sm:$0xff]
        %v622 = vld [vmem:[%s189 + $0x838] sm:$0xff]
        %v623 = vld [vmem:[%s189 + $0x840] sm:$0xff]
        %v624 = vld [vmem:[%s189 + $0x848] sm:$0xff]
        %v625 = vld [vmem:[%s189 + $0x850] sm:$0xff]
        %v626 = vld [vmem:[%s189 + $0x858] sm:$0xff]
        %v627 = vld [vmem:[%s189 + $0x860] sm:$0xff]
        %v628 = vld [vmem:[%s189 + $0x868] sm:$0xff]
        %v629 = vld [vmem:[%s189 + $0x870] sm:$0xff]
        %v630 = vld [vmem:[%s189 + $0x878] sm:$0xff]
        %v631 = vld [vmem:[%s189 + $0x880] sm:$0xff]
        %v632 = vld [vmem:[%s189 + $0x888] sm:$0xff]
        %v633 = vld [vmem:[%s189 + $0x890] sm:$0xff]
        %v634 = vld [vmem:[%s189 + $0x898] sm:$0xff]
        %v635 = vld [vmem:[%s189 + $0x8a0] sm:$0xff]
        %v636 = vld [vmem:[%s189 + $0x8a8] sm:$0xff]
        %v637 = vld [vmem:[%s189 + $0x8b0] sm:$0xff]
        %v638 = vld [vmem:[%s189 + $0x8b8] sm:$0xff]
        %v639 = vld [vmem:[%s189 + $0x8c0] sm:$0xff]
        %v640 = vld [vmem:[%s189 + $0x8c8] sm:$0xff]
        %v641 = vld [vmem:[%s189 + $0x8d0] sm:$0xff]
        %v642 = vld [vmem:[%s189 + $0x8d8] sm:$0xff]
        %v643 = vld [vmem:[%s189 + $0x8e0] sm:$0xff]
        %v644 = vld [vmem:[%s189 + $0x8e8] sm:$0xff]
        %v645 = vld [vmem:[%s189 + $0x8f0] sm:$0xff]
        %v646 = vld [vmem:[%s189 + $0x8f8] sm:$0xff]
        %v647 = vld [vmem:[%s189 + $0x900] sm:$0xff]
        %v648 = vld [vmem:[%s189 + $0x908] sm:$0xff]
        %v649 = vld [vmem:[%s189 + $0x910] sm:$0xff]
        %v650 = vld [vmem:[%s189 + $0x918] sm:$0xff]
        %v651 = vld [vmem:[%s189 + $0x920] sm:$0xff]
        %v652 = vld [vmem:[%s189 + $0x928] sm:$0xff]
        %v653 = vld [vmem:[%s189 + $0x930] sm:$0xff]
        %v654 = vld [vmem:[%s189 + $0x938] sm:$0xff]
        %v655 = vld [vmem:[%s189 + $0x940] sm:$0xff]
        %v656 = vld [vmem:[%s189 + $0x948] sm:$0xff]
        %v657 = vld [vmem:[%s189 + $0x950] sm:$0xff]
        %v658 = vld [vmem:[%s189 + $0x958] sm:$0xff]
        %v659 = vld [vmem:[%s189 + $0x960] sm:$0xff]
        %v660 = vld [vmem:[%s189 + $0x968] sm:$0xff]
        %v661 = vld [vmem:[%s189 + $0x970] sm:$0xff]
        %v662 = vld [vmem:[%s189 + $0x978] sm:$0xff]
        %v663 = vld [vmem:[%s189 + $0x980] sm:$0xff]
        %v664 = vld [vmem:[%s189 + $0x988] sm:$0xff]
        %v665 = vld [vmem:[%s189 + $0x990] sm:$0xff]
        %v666 = vld [vmem:[%s189 + $0x998] sm:$0xff]
        %v667 = vld [vmem:[%s189 + $0x9a0] sm:$0xff]
        %v668 = vld [vmem:[%s189 + $0x9a8] sm:$0xff]
        %v669 = vld [vmem:[%s189 + $0x9b0] sm:$0xff]
        %v670 = vld [vmem:[%s189 + $0x9b8] sm:$0xff]
        %v671 = vld [vmem:[%s189 + $0x9c0] sm:$0xff]
        %v672 = vld [vmem:[%s189 + $0x9c8] sm:$0xff]
        %v673 = vld [vmem:[%s189 + $0x9d0] sm:$0xff]
        %v674 = vld [vmem:[%s189 + $0x9d8] sm:$0xff]
        %v675 = vld [vmem:[%s189 + $0x9e0] sm:$0xff]
        %v676 = vld [vmem:[%s189 + $0x9e8] sm:$0xff]
        %v677 = vld [vmem:[%s189 + $0x9f0] sm:$0xff]
        %v678 = vld [vmem:[%s189 + $0x9f8] sm:$0xff]
        %v679 = vld [vmem:[%s189 + $0xa00] sm:$0xff]
        %v680 = vld [vmem:[%s189 + $0xa08] sm:$0xff]
        %v681 = vld [vmem:[%s189 + $0xa10] sm:$0xff]
        %v682 = vld [vmem:[%s189 + $0xa18] sm:$0xff]
        %v683 = vld [vmem:[%s189 + $0xa20] sm:$0xff]
        %v684 = vld [vmem:[%s189 + $0xa28] sm:$0xff]
        %v685 = vld [vmem:[%s189 + $0xa30] sm:$0xff]
        %v686 = vld [vmem:[%s189 + $0xa38] sm:$0xff]
        %v687 = vld [vmem:[%s189 + $0xa40] sm:$0xff]
        %v688 = vld [vmem:[%s189 + $0xa48] sm:$0xff]
        %v689 = vld [vmem:[%s189 + $0xa50] sm:$0xff]
        %v690 = vld [vmem:[%s189 + $0xa58] sm:$0xff]
        %v691 = vld [vmem:[%s189 + $0xa60] sm:$0xff]
        %v692 = vld [vmem:[%s189 + $0xa68] sm:$0xff]
        %v693 = vld [vmem:[%s189 + $0xa70] sm:$0xff]
        %v694 = vld [vmem:[%s189 + $0xa78] sm:$0xff]
        %v695 = vld [vmem:[%s189 + $0xa80] sm:$0xff]
        %v696 = vld [vmem:[%s189 + $0xa88] sm:$0xff]
        %v697 = vld [vmem:[%s189 + $0xa90] sm:$0xff]
        %v698 = vld [vmem:[%s189 + $0xa98] sm:$0xff]
        %v699 = vld [vmem:[%s189 + $0xaa0] sm:$0xff]
        %v700 = vld [vmem:[%s189 + $0xaa8] sm:$0xff]
        %v701 = vld [vmem:[%s189 + $0xab0] sm:$0xff]
        %v702 = vld [vmem:[%s189 + $0xab8] sm:$0xff]
        %v703 = vld [vmem:[%s189 + $0xac0] sm:$0xff]
        %v704 = vld [vmem:[%s189 + $0xac8] sm:$0xff]
        %v705 = vld [vmem:[%s189 + $0xad0] sm:$0xff]
        %v706 = vld [vmem:[%s189 + $0xad8] sm:$0xff]
        %v707 = vld [vmem:[%s189 + $0xae0] sm:$0xff]
        %v708 = vld [vmem:[%s189 + $0xae8] sm:$0xff]
        %v709 = vld [vmem:[%s189 + $0xaf0] sm:$0xff]
        %v710 = vld [vmem:[%s189 + $0xaf8] sm:$0xff]
        %v711 = vld [vmem:[%s189 + $0xb00] sm:$0xff]
        %v712 = vld [vmem:[%s189 + $0xb08] sm:$0xff]
        %v713 = vld [vmem:[%s189 + $0xb10] sm:$0xff]
        %v714 = vld [vmem:[%s189 + $0xb18] sm:$0xff]
        %v715 = vld [vmem:[%s189 + $0xb20] sm:$0xff]
        %v716 = vld [vmem:[%s189 + $0xb28] sm:$0xff]
        %v717 = vld [vmem:[%s189 + $0xb30] sm:$0xff]
        %v718 = vld [vmem:[%s189 + $0xb38] sm:$0xff]
        %v719 = vld [vmem:[%s189 + $0xb40] sm:$0xff]
        %v720 = vld [vmem:[%s189 + $0xb48] sm:$0xff]
        %v721 = vld [vmem:[%s189 + $0xb50] sm:$0xff]
        %v722 = vld [vmem:[%s189 + $0xb58] sm:$0xff]
        %v723 = vld [vmem:[%s189 + $0xb60] sm:$0xff]
        %v724 = vld [vmem:[%s189 + $0xb68] sm:$0xff]
        %v725 = vld [vmem:[%s189 + $0xb70] sm:$0xff]
        %v726 = vld [vmem:[%s189 + $0xb78] sm:$0xff]
        %v727 = vld [vmem:[%s189 + $0xb80] sm:$0xff]
        %v728 = vld [vmem:[%s189 + $0xb88] sm:$0xff]
        %v729 = vld [vmem:[%s189 + $0xb90] sm:$0xff]
        %v730 = vld [vmem:[%s189 + $0xb98] sm:$0xff]
        %v731 = vld [vmem:[%s189 + $0xba0] sm:$0xff]
        %v732 = vld [vmem:[%s189 + $0xba8] sm:$0xff]
        %v733 = vld [vmem:[%s189 + $0xbb0] sm:$0xff]
        %v734 = vld [vmem:[%s189 + $0xbb8] sm:$0xff]
        %v735 = vld [vmem:[%s189 + $0xbc0] sm:$0xff]
        %v736 = vld [vmem:[%s189 + $0xbc8] sm:$0xff]
        %v737 = vld [vmem:[%s189 + $0xbd0] sm:$0xff]
        %v738 = vld [vmem:[%s189 + $0xbd8] sm:$0xff]
        %v739 = vld [vmem:[%s189 + $0xbe0] sm:$0xff]
        %v740 = vld [vmem:[%s189 + $0xbe8] sm:$0xff]
        %v741 = vld [vmem:[%s189 + $0xbf0] sm:$0xff]
        %v742 = vld [vmem:[%s189 + $0xbf8] sm:$0xff]
        %v743 = vld [vmem:[%s189 + $0xc00] sm:$0xff]
        %v744 = vld [vmem:[%s189 + $0xc08] sm:$0xff]
        %v745 = vld [vmem:[%s189 + $0xc10] sm:$0xff]
        %v746 = vld [vmem:[%s189 + $0xc18] sm:$0xff]
        %v747 = vld [vmem:[%s189 + $0xc20] sm:$0xff]
        %v748 = vld [vmem:[%s189 + $0xc28] sm:$0xff]
        %v749 = vld [vmem:[%s189 + $0xc30] sm:$0xff]
        %v750 = vld [vmem:[%s189 + $0xc38] sm:$0xff]
        %v751 = vld [vmem:[%s189 + $0xc40] sm:$0xff]
        %v752 = vld [vmem:[%s189 + $0xc48] sm:$0xff]
        %v753 = vld [vmem:[%s189 + $0xc50] sm:$0xff]
        %v754 = vld [vmem:[%s189 + $0xc58] sm:$0xff]
        %v755 = vld [vmem:[%s189 + $0xc60] sm:$0xff]
        %v756 = vld [vmem:[%s189 + $0xc68] sm:$0xff]
        %v757 = vld [vmem:[%s189 + $0xc70] sm:$0xff]
        %v758 = vld [vmem:[%s189 + $0xc78] sm:$0xff]
        %v759 = vld [vmem:[%s189 + $0xc80] sm:$0xff]
        %v760 = vld [vmem:[%s189 + $0xc88] sm:$0xff]
        %v761 = vld [vmem:[%s189 + $0xc90] sm:$0xff]
        %v762 = vld [vmem:[%s189 + $0xc98] sm:$0xff]
        %v763 = vld [vmem:[%s189 + $0xca0] sm:$0xff]
        %v764 = vld [vmem:[%s189 + $0xca8] sm:$0xff]
        %v765 = vld [vmem:[%s189 + $0xcb0] sm:$0xff]
        %v766 = vld [vmem:[%s189 + $0xcb8] sm:$0xff]
        %v767 = vld [vmem:[%s189 + $0xcc0] sm:$0xff]
        %v768 = vld [vmem:[%s189 + $0xcc8] sm:$0xff]
        %v769 = vld [vmem:[%s189 + $0xcd0] sm:$0xff]
        %v770 = vld [vmem:[%s189 + $0xcd8] sm:$0xff]
        %v771 = vld [vmem:[%s189 + $0xce0] sm:$0xff]
        %v772 = vld [vmem:[%s189 + $0xce8] sm:$0xff]
        %v773 = vld [vmem:[%s189 + $0xcf0] sm:$0xff]
        %v774 = vld [vmem:[%s189 + $0xcf8] sm:$0xff]
        %v775 = vld [vmem:[%s189 + $0xd00] sm:$0xff]
        %v776 = vld [vmem:[%s189 + $0xd08] sm:$0xff]
        %v777 = vld [vmem:[%s189 + $0xd10] sm:$0xff]
        %v778 = vld [vmem:[%s189 + $0xd18] sm:$0xff]
        %v779 = vld [vmem:[%s189 + $0xd20] sm:$0xff]
        %v780 = vld [vmem:[%s189 + $0xd28] sm:$0xff]
        %v781 = vld [vmem:[%s189 + $0xd30] sm:$0xff]
        %v782 = vld [vmem:[%s189 + $0xd38] sm:$0xff]
        %v783 = vld [vmem:[%s189 + $0xd40] sm:$0xff]
        %v784 = vld [vmem:[%s189 + $0xd48] sm:$0xff]
        %v785 = vld [vmem:[%s189 + $0xd50] sm:$0xff]
        %v786 = vld [vmem:[%s189 + $0xd58] sm:$0xff]
        %v787 = vld [vmem:[%s189 + $0xd60] sm:$0xff]
        %v788 = vld [vmem:[%s189 + $0xd68] sm:$0xff]
        %v789 = vld [vmem:[%s189 + $0xd70] sm:$0xff]
        %v790 = vld [vmem:[%s189 + $0xd78] sm:$0xff]
        %v791 = vld [vmem:[%s189 + $0xd80] sm:$0xff]
        %v792 = vld [vmem:[%s189 + $0xd88] sm:$0xff]
        %v793 = vld [vmem:[%s189 + $0xd90] sm:$0xff]
        %v794 = vld [vmem:[%s189 + $0xd98] sm:$0xff]
        %v795 = vld [vmem:[%s189 + $0xda0] sm:$0xff]
        %v796 = vld [vmem:[%s189 + $0xda8] sm:$0xff]
        %v797 = vld [vmem:[%s189 + $0xdb0] sm:$0xff]
        %v798 = vld [vmem:[%s189 + $0xdb8] sm:$0xff]
        %v799 = vld [vmem:[%s189 + $0xdc0] sm:$0xff]
        %v800 = vld [vmem:[%s189 + $0xdc8] sm:$0xff]
        %v801 = vld [vmem:[%s189 + $0xdd0] sm:$0xff]
        %v802 = vld [vmem:[%s189 + $0xdd8] sm:$0xff]
        %v803 = vld [vmem:[%s189 + $0xde0] sm:$0xff]
        %v804 = vld [vmem:[%s189 + $0xde8] sm:$0xff]
        %v805 = vld [vmem:[%s189 + $0xdf0] sm:$0xff]
        %v806 = vld [vmem:[%s189 + $0xdf8] sm:$0xff]
        %v807 = vld [vmem:[%s189 + $0xe00] sm:$0xff]
        %v808 = vld [vmem:[%s189 + $0xe08] sm:$0xff]
        %v809 = vld [vmem:[%s189 + $0xe10] sm:$0xff]
        %v810 = vld [vmem:[%s189 + $0xe18] sm:$0xff]
        %v811 = vld [vmem:[%s189 + $0xe20] sm:$0xff]
        %v812 = vld [vmem:[%s189 + $0xe28] sm:$0xff]
        %v813 = vld [vmem:[%s189 + $0xe30] sm:$0xff]
        %v814 = vld [vmem:[%s189 + $0xe38] sm:$0xff]
        %v815 = vld [vmem:[%s189 + $0xe40] sm:$0xff]
        %v816 = vld [vmem:[%s189 + $0xe48] sm:$0xff]
        %v817 = vld [vmem:[%s189 + $0xe50] sm:$0xff]
        %v818 = vld [vmem:[%s189 + $0xe58] sm:$0xff]
        %v819 = vld [vmem:[%s189 + $0xe60] sm:$0xff]
        %v820 = vld [vmem:[%s189 + $0xe68] sm:$0xff]
        %v821 = vld [vmem:[%s189 + $0xe70] sm:$0xff]
        %v822 = vld [vmem:[%s189 + $0xe78] sm:$0xff]
        %v823 = vld [vmem:[%s189 + $0xe80] sm:$0xff]
        %v824 = vld [vmem:[%s189 + $0xe88] sm:$0xff]
        %v825 = vld [vmem:[%s189 + $0xe90] sm:$0xff]
        %v826 = vld [vmem:[%s189 + $0xe98] sm:$0xff]
        %v827 = vld [vmem:[%s189 + $0xea0] sm:$0xff]
        %v828 = vld [vmem:[%s189 + $0xea8] sm:$0xff]
        %v829 = vld [vmem:[%s189 + $0xeb0] sm:$0xff]
        %v830 = vld [vmem:[%s189 + $0xeb8] sm:$0xff]
        %v831 = vld [vmem:[%s189 + $0xec0] sm:$0xff]
        %v832 = vld [vmem:[%s189 + $0xec8] sm:$0xff]
        %v833 = vld [vmem:[%s189 + $0xed0] sm:$0xff]
        %v834 = vld [vmem:[%s189 + $0xed8] sm:$0xff]
        %v835 = vld [vmem:[%s189 + $0xee0] sm:$0xff]
        %v836 = vld [vmem:[%s189 + $0xee8] sm:$0xff]
        %v837 = vld [vmem:[%s189 + $0xef0] sm:$0xff]
        %v838 = vld [vmem:[%s189 + $0xef8] sm:$0xff]
        %v839 = vld [vmem:[%s189 + $0xf00] sm:$0xff]
        %v840 = vld [vmem:[%s189 + $0xf08] sm:$0xff]
        %v841 = vld [vmem:[%s189 + $0xf10] sm:$0xff]
        %v842 = vld [vmem:[%s189 + $0xf18] sm:$0xff]
        %v843 = vld [vmem:[%s189 + $0xf20] sm:$0xff]
        %v844 = vld [vmem:[%s189 + $0xf28] sm:$0xff]
        %v845 = vld [vmem:[%s189 + $0xf30] sm:$0xff]
        %v846 = vld [vmem:[%s189 + $0xf38] sm:$0xff]
        %v847 = vld [vmem:[%s189 + $0xf40] sm:$0xff]
        %v848 = vld [vmem:[%s189 + $0xf48] sm:$0xff]
        %v849 = vld [vmem:[%s189 + $0xf50] sm:$0xff]
        %v850 = vld [vmem:[%s189 + $0xf58] sm:$0xff]
        %v851 = vld [vmem:[%s189 + $0xf60] sm:$0xff]
        %v852 = vld [vmem:[%s189 + $0xf68] sm:$0xff]
        %v853 = vld [vmem:[%s189 + $0xf70] sm:$0xff]
        %v854 = vld [vmem:[%s189 + $0xf78] sm:$0xff]
        %v855 = vld [vmem:[%s189 + $0xf80] sm:$0xff]
        %v856 = vld [vmem:[%s189 + $0xf88] sm:$0xff]
        %v857 = vld [vmem:[%s189 + $0xf90] sm:$0xff]
        %v858 = vld [vmem:[%s189 + $0xf98] sm:$0xff]
        %v859 = vld [vmem:[%s189 + $0xfa0] sm:$0xff]
        %v860 = vld [vmem:[%s189 + $0xfa8] sm:$0xff]
        %v861 = vld [vmem:[%s189 + $0xfb0] sm:$0xff]
        %v862 = vld [vmem:[%s189 + $0xfb8] sm:$0xff]
        %v863 = vld [vmem:[%s189 + $0xfc0] sm:$0xff]
        %v864 = vld [vmem:[%s189 + $0xfc8] sm:$0xff]
        %v865 = vld [vmem:[%s189 + $0xfd0] sm:$0xff]
        %v866 = vld [vmem:[%s189 + $0xfd8] sm:$0xff]
        %v867 = vld [vmem:[%s189 + $0xfe0] sm:$0xff]
        %v868 = vld [vmem:[%s189 + $0xfe8] sm:$0xff]
        %v869 = vld [vmem:[%s189 + $0xff0] sm:$0xff]
        %v870 = vld [vmem:[%s189 + $0xff8] sm:$0xff]
        %v879 = vunpack.c.l.b16 %v221
        %v880 = vunpack.c.h.b16 %v221
        %v881 = vunpack.c.l.b16 %v222
        %v882 = vunpack.c.h.b16 %v222
        %v883 = vunpack.c.l.b16 %v223
        %v884 = vunpack.c.h.b16 %v223
        %v885 = vunpack.c.l.b16 %v224
        %v886 = vunpack.c.h.b16 %v224
        %v887 = vunpack.c.l.b16 %v225
        %v888 = vunpack.c.h.b16 %v225
        %v889 = vunpack.c.l.b16 %v226
        %v890 = vunpack.c.h.b16 %v226
        %v891 = vunpack.c.l.b16 %v227
        %v892 = vunpack.c.h.b16 %v227
        %v893 = vunpack.c.l.b16 %v228
        %v894 = vunpack.c.h.b16 %v228
        %v895 = vpack.c.b16 %v887, %v879
        %v896 = vpack.c.b16 %v888, %v880
        %v897 = vpack.c.b16 %v889, %v881
        %v898 = vpack.c.b16 %v890, %v882
        %v899 = vpack.c.b16 %v891, %v883
        %v900 = vpack.c.b16 %v892, %v884
        %v901 = vpack.c.b16 %v893, %v885
        %v902 = vpack.c.b16 %v894, %v886
        %v1423 = vunpack.c.l.b16 %v359
        %v1424 = vunpack.c.h.b16 %v359
        %v1425 = vunpack.c.l.b16 %v360
        %v1426 = vunpack.c.h.b16 %v360
        %v1427 = vunpack.c.l.b16 %v361
        %v1428 = vunpack.c.h.b16 %v361
        %v1429 = vunpack.c.l.b16 %v362
        %v1430 = vunpack.c.h.b16 %v362
        %v1431 = vunpack.c.l.b16 %v363
        %v1432 = vunpack.c.h.b16 %v363
        %v1433 = vunpack.c.l.b16 %v364
        %v1434 = vunpack.c.h.b16 %v364
        %v1435 = vunpack.c.l.b16 %v365
        %v1436 = vunpack.c.h.b16 %v365
        %v1437 = vunpack.c.l.b16 %v366
        %v1438 = vunpack.c.h.b16 %v366
        %v1439 = vunpack.c.l.b16 %v367
        %v1440 = vunpack.c.h.b16 %v367
        %v1441 = vunpack.c.l.b16 %v368
        %v1442 = vunpack.c.h.b16 %v368
        %v1443 = vunpack.c.l.b16 %v369
        %v1444 = vunpack.c.h.b16 %v369
        %v1445 = vunpack.c.l.b16 %v370
        %v1446 = vunpack.c.h.b16 %v370
        %v1447 = vunpack.c.l.b16 %v371
        %v1448 = vunpack.c.h.b16 %v371
        %v1449 = vunpack.c.l.b16 %v372
        %v1450 = vunpack.c.h.b16 %v372
        %v1451 = vunpack.c.l.b16 %v373
        %v1452 = vunpack.c.h.b16 %v373
        %v1453 = vunpack.c.l.b16 %v374
        %v1454 = vunpack.c.h.b16 %v374
        %v1455 = vunpack.c.l.b16 %v375
        %v1456 = vunpack.c.h.b16 %v375
        %v1457 = vunpack.c.l.b16 %v376
        %v1458 = vunpack.c.h.b16 %v376
        %v1459 = vunpack.c.l.b16 %v377
        %v1460 = vunpack.c.h.b16 %v377
        %v1461 = vunpack.c.l.b16 %v378
        %v1462 = vunpack.c.h.b16 %v378
        %v1463 = vunpack.c.l.b16 %v379
        %v1464 = vunpack.c.h.b16 %v379
        %v1465 = vunpack.c.l.b16 %v380
        %v1466 = vunpack.c.h.b16 %v380
        %v1467 = vunpack.c.l.b16 %v381
        %v1468 = vunpack.c.h.b16 %v381
        %v1469 = vunpack.c.l.b16 %v382
        %v1470 = vunpack.c.h.b16 %v382
        %v1471 = vunpack.c.l.b16 %v383
        %v1472 = vunpack.c.h.b16 %v383
        %v1473 = vunpack.c.l.b16 %v384
        %v1474 = vunpack.c.h.b16 %v384
        %v1475 = vunpack.c.l.b16 %v385
        %v1476 = vunpack.c.h.b16 %v385
        %v1477 = vunpack.c.l.b16 %v386
        %v1478 = vunpack.c.h.b16 %v386
        %v1479 = vunpack.c.l.b16 %v387
        %v1480 = vunpack.c.h.b16 %v387
        %v1481 = vunpack.c.l.b16 %v388
        %v1482 = vunpack.c.h.b16 %v388
        %v1483 = vunpack.c.l.b16 %v389
        %v1484 = vunpack.c.h.b16 %v389
        %v1485 = vunpack.c.l.b16 %v390
        %v1486 = vunpack.c.h.b16 %v390
        %v1487 = vunpack.c.l.b16 %v391
        %v1488 = vunpack.c.h.b16 %v391
        %v1489 = vunpack.c.l.b16 %v392
        %v1490 = vunpack.c.h.b16 %v392
        %v1491 = vunpack.c.l.b16 %v393
        %v1492 = vunpack.c.h.b16 %v393
        %v1493 = vunpack.c.l.b16 %v394
        %v1494 = vunpack.c.h.b16 %v394
        %v1495 = vunpack.c.l.b16 %v395
        %v1496 = vunpack.c.h.b16 %v395
        %v1497 = vunpack.c.l.b16 %v396
        %v1498 = vunpack.c.h.b16 %v396
        %v1499 = vunpack.c.l.b16 %v397
        %v1500 = vunpack.c.h.b16 %v397
        %v1501 = vunpack.c.l.b16 %v398
        %v1502 = vunpack.c.h.b16 %v398
        %v1503 = vunpack.c.l.b16 %v399
        %v1504 = vunpack.c.h.b16 %v399
        %v1505 = vunpack.c.l.b16 %v400
        %v1506 = vunpack.c.h.b16 %v400
        %v1507 = vunpack.c.l.b16 %v401
        %v1508 = vunpack.c.h.b16 %v401
        %v1509 = vunpack.c.l.b16 %v402
        %v1510 = vunpack.c.h.b16 %v402
        %v1511 = vunpack.c.l.b16 %v403
        %v1512 = vunpack.c.h.b16 %v403
        %v1513 = vunpack.c.l.b16 %v404
        %v1514 = vunpack.c.h.b16 %v404
        %v1515 = vunpack.c.l.b16 %v405
        %v1516 = vunpack.c.h.b16 %v405
        %v1517 = vunpack.c.l.b16 %v406
        %v1518 = vunpack.c.h.b16 %v406
        %v1519 = vunpack.c.l.b16 %v407
        %v1520 = vunpack.c.h.b16 %v407
        %v1521 = vunpack.c.l.b16 %v408
        %v1522 = vunpack.c.h.b16 %v408
        %v1523 = vunpack.c.l.b16 %v409
        %v1524 = vunpack.c.h.b16 %v409
        %v1525 = vunpack.c.l.b16 %v410
        %v1526 = vunpack.c.h.b16 %v410
        %v1527 = vunpack.c.l.b16 %v411
        %v1528 = vunpack.c.h.b16 %v411
        %v1529 = vunpack.c.l.b16 %v412
        %v1530 = vunpack.c.h.b16 %v412
        %v1531 = vunpack.c.l.b16 %v413
        %v1532 = vunpack.c.h.b16 %v413
        %v1533 = vunpack.c.l.b16 %v414
        %v1534 = vunpack.c.h.b16 %v414
        %v1535 = vunpack.c.l.b16 %v415
        %v1536 = vunpack.c.h.b16 %v415
        %v1537 = vunpack.c.l.b16 %v416
        %v1538 = vunpack.c.h.b16 %v416
        %v1539 = vunpack.c.l.b16 %v417
        %v1540 = vunpack.c.h.b16 %v417
        %v1541 = vunpack.c.l.b16 %v418
        %v1542 = vunpack.c.h.b16 %v418
        %v1543 = vunpack.c.l.b16 %v419
        %v1544 = vunpack.c.h.b16 %v419
        %v1545 = vunpack.c.l.b16 %v420
        %v1546 = vunpack.c.h.b16 %v420
        %v1547 = vunpack.c.l.b16 %v421
        %v1548 = vunpack.c.h.b16 %v421
        %v1549 = vunpack.c.l.b16 %v422
        %v1550 = vunpack.c.h.b16 %v422
        %v1551 = vunpack.c.l.b16 %v423
        %v1552 = vunpack.c.h.b16 %v423
        %v1553 = vunpack.c.l.b16 %v424
        %v1554 = vunpack.c.h.b16 %v424
        %v1555 = vunpack.c.l.b16 %v425
        %v1556 = vunpack.c.h.b16 %v425
        %v1557 = vunpack.c.l.b16 %v426
        %v1558 = vunpack.c.h.b16 %v426
        %v1559 = vunpack.c.l.b16 %v427
        %v1560 = vunpack.c.h.b16 %v427
        %v1561 = vunpack.c.l.b16 %v428
        %v1562 = vunpack.c.h.b16 %v428
        %v1563 = vunpack.c.l.b16 %v429
        %v1564 = vunpack.c.h.b16 %v429
        %v1565 = vunpack.c.l.b16 %v430
        %v1566 = vunpack.c.h.b16 %v430
        %v1567 = vunpack.c.l.b16 %v431
        %v1568 = vunpack.c.h.b16 %v431
        %v1569 = vunpack.c.l.b16 %v432
        %v1570 = vunpack.c.h.b16 %v432
        %v1571 = vunpack.c.l.b16 %v433
        %v1572 = vunpack.c.h.b16 %v433
        %v1573 = vunpack.c.l.b16 %v434
        %v1574 = vunpack.c.h.b16 %v434
        %v1575 = vunpack.c.l.b16 %v435
        %v1576 = vunpack.c.h.b16 %v435
        %v1577 = vunpack.c.l.b16 %v436
        %v1578 = vunpack.c.h.b16 %v436
        %v1579 = vunpack.c.l.b16 %v437
        %v1580 = vunpack.c.h.b16 %v437
        %v1581 = vunpack.c.l.b16 %v438
        %v1582 = vunpack.c.h.b16 %v438
        %v1583 = vunpack.c.l.b16 %v439
        %v1584 = vunpack.c.h.b16 %v439
        %v1585 = vunpack.c.l.b16 %v440
        %v1586 = vunpack.c.h.b16 %v440
        %v1587 = vunpack.c.l.b16 %v441
        %v1588 = vunpack.c.h.b16 %v441
        %v1589 = vunpack.c.l.b16 %v442
        %v1590 = vunpack.c.h.b16 %v442
        %v1591 = vunpack.c.l.b16 %v443
        %v1592 = vunpack.c.h.b16 %v443
        %v1593 = vunpack.c.l.b16 %v444
        %v1594 = vunpack.c.h.b16 %v444
        %v1595 = vunpack.c.l.b16 %v445
        %v1596 = vunpack.c.h.b16 %v445
        %v1597 = vunpack.c.l.b16 %v446
        %v1598 = vunpack.c.h.b16 %v446
        %v1599 = vunpack.c.l.b16 %v447
        %v1600 = vunpack.c.h.b16 %v447
        %v1601 = vunpack.c.l.b16 %v448
        %v1602 = vunpack.c.h.b16 %v448
        %v1603 = vunpack.c.l.b16 %v449
        %v1604 = vunpack.c.h.b16 %v449
        %v1605 = vunpack.c.l.b16 %v450
        %v1606 = vunpack.c.h.b16 %v450
        %v1607 = vunpack.c.l.b16 %v451
        %v1608 = vunpack.c.h.b16 %v451
        %v1609 = vunpack.c.l.b16 %v452
        %v1610 = vunpack.c.h.b16 %v452
        %v1611 = vunpack.c.l.b16 %v453
        %v1612 = vunpack.c.h.b16 %v453
        %v1613 = vunpack.c.l.b16 %v454
        %v1614 = vunpack.c.h.b16 %v454
        %v1615 = vunpack.c.l.b16 %v455
        %v1616 = vunpack.c.h.b16 %v455
        %v1617 = vunpack.c.l.b16 %v456
        %v1618 = vunpack.c.h.b16 %v456
        %v1619 = vunpack.c.l.b16 %v457
        %v1620 = vunpack.c.h.b16 %v457
        %v1621 = vunpack.c.l.b16 %v458
        %v1622 = vunpack.c.h.b16 %v458
        %v1623 = vunpack.c.l.b16 %v459
        %v1624 = vunpack.c.h.b16 %v459
        %v1625 = vunpack.c.l.b16 %v460
        %v1626 = vunpack.c.h.b16 %v460
        %v1627 = vunpack.c.l.b16 %v461
        %v1628 = vunpack.c.h.b16 %v461
        %v1629 = vunpack.c.l.b16 %v462
        %v1630 = vunpack.c.h.b16 %v462
        %v1631 = vunpack.c.l.b16 %v463
        %v1632 = vunpack.c.h.b16 %v463
        %v1633 = vunpack.c.l.b16 %v464
        %v1634 = vunpack.c.h.b16 %v464
        %v1635 = vunpack.c.l.b16 %v465
        %v1636 = vunpack.c.h.b16 %v465
        %v1637 = vunpack.c.l.b16 %v466
        %v1638 = vunpack.c.h.b16 %v466
        %v1639 = vunpack.c.l.b16 %v467
        %v1640 = vunpack.c.h.b16 %v467
        %v1641 = vunpack.c.l.b16 %v468
        %v1642 = vunpack.c.h.b16 %v468
        %v1643 = vunpack.c.l.b16 %v469
        %v1644 = vunpack.c.h.b16 %v469
        %v1645 = vunpack.c.l.b16 %v470
        %v1646 = vunpack.c.h.b16 %v470
        %v1647 = vunpack.c.l.b16 %v471
        %v1648 = vunpack.c.h.b16 %v471
        %v1649 = vunpack.c.l.b16 %v472
        %v1650 = vunpack.c.h.b16 %v472
        %v1651 = vunpack.c.l.b16 %v473
        %v1652 = vunpack.c.h.b16 %v473
        %v1653 = vunpack.c.l.b16 %v474
        %v1654 = vunpack.c.h.b16 %v474
        %v1655 = vunpack.c.l.b16 %v475
        %v1656 = vunpack.c.h.b16 %v475
        %v1657 = vunpack.c.l.b16 %v476
        %v1658 = vunpack.c.h.b16 %v476
        %v1659 = vunpack.c.l.b16 %v477
        %v1660 = vunpack.c.h.b16 %v477
        %v1661 = vunpack.c.l.b16 %v478
        %v1662 = vunpack.c.h.b16 %v478
        %v1663 = vunpack.c.l.b16 %v479
        %v1664 = vunpack.c.h.b16 %v479
        %v1665 = vunpack.c.l.b16 %v480
        %v1666 = vunpack.c.h.b16 %v480
        %v1667 = vunpack.c.l.b16 %v481
        %v1668 = vunpack.c.h.b16 %v481
        %v1669 = vunpack.c.l.b16 %v482
        %v1670 = vunpack.c.h.b16 %v482
        %v1671 = vunpack.c.l.b16 %v483
        %v1672 = vunpack.c.h.b16 %v483
        %v1673 = vunpack.c.l.b16 %v484
        %v1674 = vunpack.c.h.b16 %v484
        %v1675 = vunpack.c.l.b16 %v485
        %v1676 = vunpack.c.h.b16 %v485
        %v1677 = vunpack.c.l.b16 %v486
        %v1678 = vunpack.c.h.b16 %v486
        %v1679 = vunpack.c.l.b16 %v487
        %v1680 = vunpack.c.h.b16 %v487
        %v1681 = vunpack.c.l.b16 %v488
        %v1682 = vunpack.c.h.b16 %v488
        %v1683 = vunpack.c.l.b16 %v489
        %v1684 = vunpack.c.h.b16 %v489
        %v1685 = vunpack.c.l.b16 %v490
        %v1686 = vunpack.c.h.b16 %v490
        %v1687 = vunpack.c.l.b16 %v491
        %v1688 = vunpack.c.h.b16 %v491
        %v1689 = vunpack.c.l.b16 %v492
        %v1690 = vunpack.c.h.b16 %v492
        %v1691 = vunpack.c.l.b16 %v493
        %v1692 = vunpack.c.h.b16 %v493
        %v1693 = vunpack.c.l.b16 %v494
        %v1694 = vunpack.c.h.b16 %v494
        %v1695 = vunpack.c.l.b16 %v495
        %v1696 = vunpack.c.h.b16 %v495
        %v1697 = vunpack.c.l.b16 %v496
        %v1698 = vunpack.c.h.b16 %v496
        %v1699 = vunpack.c.l.b16 %v497
        %v1700 = vunpack.c.h.b16 %v497
        %v1701 = vunpack.c.l.b16 %v498
        %v1702 = vunpack.c.h.b16 %v498
        %v1703 = vunpack.c.l.b16 %v499
        %v1704 = vunpack.c.h.b16 %v499
        %v1705 = vunpack.c.l.b16 %v500
        %v1706 = vunpack.c.h.b16 %v500
        %v1707 = vunpack.c.l.b16 %v501
        %v1708 = vunpack.c.h.b16 %v501
        %v1709 = vunpack.c.l.b16 %v502
        %v1710 = vunpack.c.h.b16 %v502
        %v1711 = vunpack.c.l.b16 %v503
        %v1712 = vunpack.c.h.b16 %v503
        %v1713 = vunpack.c.l.b16 %v504
        %v1714 = vunpack.c.h.b16 %v504
        %v1715 = vunpack.c.l.b16 %v505
        %v1716 = vunpack.c.h.b16 %v505
        %v1717 = vunpack.c.l.b16 %v506
        %v1718 = vunpack.c.h.b16 %v506
        %v1719 = vunpack.c.l.b16 %v507
        %v1720 = vunpack.c.h.b16 %v507
        %v1721 = vunpack.c.l.b16 %v508
        %v1722 = vunpack.c.h.b16 %v508
        %v1723 = vunpack.c.l.b16 %v509
        %v1724 = vunpack.c.h.b16 %v509
        %v1725 = vunpack.c.l.b16 %v510
        %v1726 = vunpack.c.h.b16 %v510
        %v1727 = vunpack.c.l.b16 %v511
        %v1728 = vunpack.c.h.b16 %v511
        %v1729 = vunpack.c.l.b16 %v512
        %v1730 = vunpack.c.h.b16 %v512
        %v1731 = vunpack.c.l.b16 %v513
        %v1732 = vunpack.c.h.b16 %v513
        %v1733 = vunpack.c.l.b16 %v514
        %v1734 = vunpack.c.h.b16 %v514
        %v1735 = vunpack.c.l.b16 %v515
        %v1736 = vunpack.c.h.b16 %v515
        %v1737 = vunpack.c.l.b16 %v516
        %v1738 = vunpack.c.h.b16 %v516
        %v1739 = vunpack.c.l.b16 %v517
        %v1740 = vunpack.c.h.b16 %v517
        %v1741 = vunpack.c.l.b16 %v518
        %v1742 = vunpack.c.h.b16 %v518
        %v1743 = vunpack.c.l.b16 %v519
        %v1744 = vunpack.c.h.b16 %v519
        %v1745 = vunpack.c.l.b16 %v520
        %v1746 = vunpack.c.h.b16 %v520
        %v1747 = vunpack.c.l.b16 %v521
        %v1748 = vunpack.c.h.b16 %v521
        %v1749 = vunpack.c.l.b16 %v522
        %v1750 = vunpack.c.h.b16 %v522
        %v1751 = vunpack.c.l.b16 %v523
        %v1752 = vunpack.c.h.b16 %v523
        %v1753 = vunpack.c.l.b16 %v524
        %v1754 = vunpack.c.h.b16 %v524
        %v1755 = vunpack.c.l.b16 %v525
        %v1756 = vunpack.c.h.b16 %v525
        %v1757 = vunpack.c.l.b16 %v526
        %v1758 = vunpack.c.h.b16 %v526
        %v1759 = vunpack.c.l.b16 %v527
        %v1760 = vunpack.c.h.b16 %v527
        %v1761 = vunpack.c.l.b16 %v528
        %v1762 = vunpack.c.h.b16 %v528
        %v1763 = vunpack.c.l.b16 %v529
        %v1764 = vunpack.c.h.b16 %v529
        %v1765 = vunpack.c.l.b16 %v530
        %v1766 = vunpack.c.h.b16 %v530
        %v1767 = vunpack.c.l.b16 %v531
        %v1768 = vunpack.c.h.b16 %v531
        %v1769 = vunpack.c.l.b16 %v532
        %v1770 = vunpack.c.h.b16 %v532
        %v1771 = vunpack.c.l.b16 %v533
        %v1772 = vunpack.c.h.b16 %v533
        %v1773 = vunpack.c.l.b16 %v534
        %v1774 = vunpack.c.h.b16 %v534
        %v1775 = vunpack.c.l.b16 %v535
        %v1776 = vunpack.c.h.b16 %v535
        %v1777 = vunpack.c.l.b16 %v536
        %v1778 = vunpack.c.h.b16 %v536
        %v1779 = vunpack.c.l.b16 %v537
        %v1780 = vunpack.c.h.b16 %v537
        %v1781 = vunpack.c.l.b16 %v538
        %v1782 = vunpack.c.h.b16 %v538
        %v1783 = vunpack.c.l.b16 %v539
        %v1784 = vunpack.c.h.b16 %v539
        %v1785 = vunpack.c.l.b16 %v540
        %v1786 = vunpack.c.h.b16 %v540
        %v1787 = vunpack.c.l.b16 %v541
        %v1788 = vunpack.c.h.b16 %v541
        %v1789 = vunpack.c.l.b16 %v542
        %v1790 = vunpack.c.h.b16 %v542
        %v1791 = vunpack.c.l.b16 %v543
        %v1792 = vunpack.c.h.b16 %v543
        %v1793 = vunpack.c.l.b16 %v544
        %v1794 = vunpack.c.h.b16 %v544
        %v1795 = vunpack.c.l.b16 %v545
        %v1796 = vunpack.c.h.b16 %v545
        %v1797 = vunpack.c.l.b16 %v546
        %v1798 = vunpack.c.h.b16 %v546
        %v1799 = vunpack.c.l.b16 %v547
        %v1800 = vunpack.c.h.b16 %v547
        %v1801 = vunpack.c.l.b16 %v548
        %v1802 = vunpack.c.h.b16 %v548
        %v1803 = vunpack.c.l.b16 %v549
        %v1804 = vunpack.c.h.b16 %v549
        %v1805 = vunpack.c.l.b16 %v550
        %v1806 = vunpack.c.h.b16 %v550
        %v1807 = vunpack.c.l.b16 %v551
        %v1808 = vunpack.c.h.b16 %v551
        %v1809 = vunpack.c.l.b16 %v552
        %v1810 = vunpack.c.h.b16 %v552
        %v1811 = vunpack.c.l.b16 %v553
        %v1812 = vunpack.c.h.b16 %v553
        %v1813 = vunpack.c.l.b16 %v554
        %v1814 = vunpack.c.h.b16 %v554
        %v1815 = vunpack.c.l.b16 %v555
        %v1816 = vunpack.c.h.b16 %v555
        %v1817 = vunpack.c.l.b16 %v556
        %v1818 = vunpack.c.h.b16 %v556
        %v1819 = vunpack.c.l.b16 %v557
        %v1820 = vunpack.c.h.b16 %v557
        %v1821 = vunpack.c.l.b16 %v558
        %v1822 = vunpack.c.h.b16 %v558
        %v1823 = vunpack.c.l.b16 %v559
        %v1824 = vunpack.c.h.b16 %v559
        %v1825 = vunpack.c.l.b16 %v560
        %v1826 = vunpack.c.h.b16 %v560
        %v1827 = vunpack.c.l.b16 %v561
        %v1828 = vunpack.c.h.b16 %v561
        %v1829 = vunpack.c.l.b16 %v562
        %v1830 = vunpack.c.h.b16 %v562
        %v1831 = vunpack.c.l.b16 %v563
        %v1832 = vunpack.c.h.b16 %v563
        %v1833 = vunpack.c.l.b16 %v564
        %v1834 = vunpack.c.h.b16 %v564
        %v1835 = vunpack.c.l.b16 %v565
        %v1836 = vunpack.c.h.b16 %v565
        %v1837 = vunpack.c.l.b16 %v566
        %v1838 = vunpack.c.h.b16 %v566
        %v1839 = vunpack.c.l.b16 %v567
        %v1840 = vunpack.c.h.b16 %v567
        %v1841 = vunpack.c.l.b16 %v568
        %v1842 = vunpack.c.h.b16 %v568
        %v1843 = vunpack.c.l.b16 %v569
        %v1844 = vunpack.c.h.b16 %v569
        %v1845 = vunpack.c.l.b16 %v570
        %v1846 = vunpack.c.h.b16 %v570
        %v1847 = vunpack.c.l.b16 %v571
        %v1848 = vunpack.c.h.b16 %v571
        %v1849 = vunpack.c.l.b16 %v572
        %v1850 = vunpack.c.h.b16 %v572
        %v1851 = vunpack.c.l.b16 %v573
        %v1852 = vunpack.c.h.b16 %v573
        %v1853 = vunpack.c.l.b16 %v574
        %v1854 = vunpack.c.h.b16 %v574
        %v1855 = vunpack.c.l.b16 %v575
        %v1856 = vunpack.c.h.b16 %v575
        %v1857 = vunpack.c.l.b16 %v576
        %v1858 = vunpack.c.h.b16 %v576
        %v1859 = vunpack.c.l.b16 %v577
        %v1860 = vunpack.c.h.b16 %v577
        %v1861 = vunpack.c.l.b16 %v578
        %v1862 = vunpack.c.h.b16 %v578
        %v1863 = vunpack.c.l.b16 %v579
        %v1864 = vunpack.c.h.b16 %v579
        %v1865 = vunpack.c.l.b16 %v580
        %v1866 = vunpack.c.h.b16 %v580
        %v1867 = vunpack.c.l.b16 %v581
        %v1868 = vunpack.c.h.b16 %v581
        %v1869 = vunpack.c.l.b16 %v582
        %v1870 = vunpack.c.h.b16 %v582
        %v1871 = vunpack.c.l.b16 %v583
        %v1872 = vunpack.c.h.b16 %v583
        %v1873 = vunpack.c.l.b16 %v584
        %v1874 = vunpack.c.h.b16 %v584
        %v1875 = vunpack.c.l.b16 %v585
        %v1876 = vunpack.c.h.b16 %v585
        %v1877 = vunpack.c.l.b16 %v586
        %v1878 = vunpack.c.h.b16 %v586
        %v1879 = vunpack.c.l.b16 %v587
        %v1880 = vunpack.c.h.b16 %v587
        %v1881 = vunpack.c.l.b16 %v588
        %v1882 = vunpack.c.h.b16 %v588
        %v1883 = vunpack.c.l.b16 %v589
        %v1884 = vunpack.c.h.b16 %v589
        %v1885 = vunpack.c.l.b16 %v590
        %v1886 = vunpack.c.h.b16 %v590
        %v1887 = vunpack.c.l.b16 %v591
        %v1888 = vunpack.c.h.b16 %v591
        %v1889 = vunpack.c.l.b16 %v592
        %v1890 = vunpack.c.h.b16 %v592
        %v1891 = vunpack.c.l.b16 %v593
        %v1892 = vunpack.c.h.b16 %v593
        %v1893 = vunpack.c.l.b16 %v594
        %v1894 = vunpack.c.h.b16 %v594
        %v1895 = vunpack.c.l.b16 %v595
        %v1896 = vunpack.c.h.b16 %v595
        %v1897 = vunpack.c.l.b16 %v596
        %v1898 = vunpack.c.h.b16 %v596
        %v1899 = vunpack.c.l.b16 %v597
        %v1900 = vunpack.c.h.b16 %v597
        %v1901 = vunpack.c.l.b16 %v598
        %v1902 = vunpack.c.h.b16 %v598
        %v1903 = vunpack.c.l.b16 %v599
        %v1904 = vunpack.c.h.b16 %v599
        %v1905 = vunpack.c.l.b16 %v600
        %v1906 = vunpack.c.h.b16 %v600
        %v1907 = vunpack.c.l.b16 %v601
        %v1908 = vunpack.c.h.b16 %v601
        %v1909 = vunpack.c.l.b16 %v602
        %v1910 = vunpack.c.h.b16 %v602
        %v1911 = vunpack.c.l.b16 %v603
        %v1912 = vunpack.c.h.b16 %v603
        %v1913 = vunpack.c.l.b16 %v604
        %v1914 = vunpack.c.h.b16 %v604
        %v1915 = vunpack.c.l.b16 %v605
        %v1916 = vunpack.c.h.b16 %v605
        %v1917 = vunpack.c.l.b16 %v606
        %v1918 = vunpack.c.h.b16 %v606
        %v1919 = vunpack.c.l.b16 %v607
        %v1920 = vunpack.c.h.b16 %v607
        %v1921 = vunpack.c.l.b16 %v608
        %v1922 = vunpack.c.h.b16 %v608
        %v1923 = vunpack.c.l.b16 %v609
        %v1924 = vunpack.c.h.b16 %v609
        %v1925 = vunpack.c.l.b16 %v610
        %v1926 = vunpack.c.h.b16 %v610
        %v1927 = vunpack.c.l.b16 %v611
        %v1928 = vunpack.c.h.b16 %v611
        %v1929 = vunpack.c.l.b16 %v612
        %v1930 = vunpack.c.h.b16 %v612
        %v1931 = vunpack.c.l.b16 %v613
        %v1932 = vunpack.c.h.b16 %v613
        %v1933 = vunpack.c.l.b16 %v614
        %v1934 = vunpack.c.h.b16 %v614
        %v1935 = vunpack.c.l.b16 %v615
        %v1936 = vunpack.c.h.b16 %v615
        %v1937 = vunpack.c.l.b16 %v616
        %v1938 = vunpack.c.h.b16 %v616
        %v1939 = vunpack.c.l.b16 %v617
        %v1940 = vunpack.c.h.b16 %v617
        %v1941 = vunpack.c.l.b16 %v618
        %v1942 = vunpack.c.h.b16 %v618
        %v1943 = vunpack.c.l.b16 %v619
        %v1944 = vunpack.c.h.b16 %v619
        %v1945 = vunpack.c.l.b16 %v620
        %v1946 = vunpack.c.h.b16 %v620
        %v1947 = vunpack.c.l.b16 %v621
        %v1948 = vunpack.c.h.b16 %v621
        %v1949 = vunpack.c.l.b16 %v622
        %v1950 = vunpack.c.h.b16 %v622
        %v1951 = vunpack.c.l.b16 %v623
        %v1952 = vunpack.c.h.b16 %v623
        %v1953 = vunpack.c.l.b16 %v624
        %v1954 = vunpack.c.h.b16 %v624
        %v1955 = vunpack.c.l.b16 %v625
        %v1956 = vunpack.c.h.b16 %v625
        %v1957 = vunpack.c.l.b16 %v626
        %v1958 = vunpack.c.h.b16 %v626
        %v1959 = vunpack.c.l.b16 %v627
        %v1960 = vunpack.c.h.b16 %v627
        %v1961 = vunpack.c.l.b16 %v628
        %v1962 = vunpack.c.h.b16 %v628
        %v1963 = vunpack.c.l.b16 %v629
        %v1964 = vunpack.c.h.b16 %v629
        %v1965 = vunpack.c.l.b16 %v630
        %v1966 = vunpack.c.h.b16 %v630
        %v1967 = vunpack.c.l.b16 %v631
        %v1968 = vunpack.c.h.b16 %v631
        %v1969 = vunpack.c.l.b16 %v632
        %v1970 = vunpack.c.h.b16 %v632
        %v1971 = vunpack.c.l.b16 %v633
        %v1972 = vunpack.c.h.b16 %v633
        %v1973 = vunpack.c.l.b16 %v634
        %v1974 = vunpack.c.h.b16 %v634
        %v1975 = vunpack.c.l.b16 %v635
        %v1976 = vunpack.c.h.b16 %v635
        %v1977 = vunpack.c.l.b16 %v636
        %v1978 = vunpack.c.h.b16 %v636
        %v1979 = vunpack.c.l.b16 %v637
        %v1980 = vunpack.c.h.b16 %v637
        %v1981 = vunpack.c.l.b16 %v638
        %v1982 = vunpack.c.h.b16 %v638
        %v1983 = vunpack.c.l.b16 %v639
        %v1984 = vunpack.c.h.b16 %v639
        %v1985 = vunpack.c.l.b16 %v640
        %v1986 = vunpack.c.h.b16 %v640
        %v1987 = vunpack.c.l.b16 %v641
        %v1988 = vunpack.c.h.b16 %v641
        %v1989 = vunpack.c.l.b16 %v642
        %v1990 = vunpack.c.h.b16 %v642
        %v1991 = vunpack.c.l.b16 %v643
        %v1992 = vunpack.c.h.b16 %v643
        %v1993 = vunpack.c.l.b16 %v644
        %v1994 = vunpack.c.h.b16 %v644
        %v1995 = vunpack.c.l.b16 %v645
        %v1996 = vunpack.c.h.b16 %v645
        %v1997 = vunpack.c.l.b16 %v646
        %v1998 = vunpack.c.h.b16 %v646
        %v1999 = vunpack.c.l.b16 %v647
        %v2000 = vunpack.c.h.b16 %v647
        %v2001 = vunpack.c.l.b16 %v648
        %v2002 = vunpack.c.h.b16 %v648
        %v2003 = vunpack.c.l.b16 %v649
        %v2004 = vunpack.c.h.b16 %v649
        %v2005 = vunpack.c.l.b16 %v650
        %v2006 = vunpack.c.h.b16 %v650
        %v2007 = vunpack.c.l.b16 %v651
        %v2008 = vunpack.c.h.b16 %v651
        %v2009 = vunpack.c.l.b16 %v652
        %v2010 = vunpack.c.h.b16 %v652
        %v2011 = vunpack.c.l.b16 %v653
        %v2012 = vunpack.c.h.b16 %v653
        %v2013 = vunpack.c.l.b16 %v654
        %v2014 = vunpack.c.h.b16 %v654
        %v2015 = vunpack.c.l.b16 %v655
        %v2016 = vunpack.c.h.b16 %v655
        %v2017 = vunpack.c.l.b16 %v656
        %v2018 = vunpack.c.h.b16 %v656
        %v2019 = vunpack.c.l.b16 %v657
        %v2020 = vunpack.c.h.b16 %v657
        %v2021 = vunpack.c.l.b16 %v658
        %v2022 = vunpack.c.h.b16 %v658
        %v2023 = vunpack.c.l.b16 %v659
        %v2024 = vunpack.c.h.b16 %v659
        %v2025 = vunpack.c.l.b16 %v660
        %v2026 = vunpack.c.h.b16 %v660
        %v2027 = vunpack.c.l.b16 %v661
        %v2028 = vunpack.c.h.b16 %v661
        %v2029 = vunpack.c.l.b16 %v662
        %v2030 = vunpack.c.h.b16 %v662
        %v2031 = vunpack.c.l.b16 %v663
        %v2032 = vunpack.c.h.b16 %v663
        %v2033 = vunpack.c.l.b16 %v664
        %v2034 = vunpack.c.h.b16 %v664
        %v2035 = vunpack.c.l.b16 %v665
        %v2036 = vunpack.c.h.b16 %v665
        %v2037 = vunpack.c.l.b16 %v666
        %v2038 = vunpack.c.h.b16 %v666
        %v2039 = vunpack.c.l.b16 %v667
        %v2040 = vunpack.c.h.b16 %v667
        %v2041 = vunpack.c.l.b16 %v668
        %v2042 = vunpack.c.h.b16 %v668
        %v2043 = vunpack.c.l.b16 %v669
        %v2044 = vunpack.c.h.b16 %v669
        %v2045 = vunpack.c.l.b16 %v670
        %v2046 = vunpack.c.h.b16 %v670
        %v2047 = vunpack.c.l.b16 %v671
        %v2048 = vunpack.c.h.b16 %v671
        %v2049 = vunpack.c.l.b16 %v672
        %v2050 = vunpack.c.h.b16 %v672
        %v2051 = vunpack.c.l.b16 %v673
        %v2052 = vunpack.c.h.b16 %v673
        %v2053 = vunpack.c.l.b16 %v674
        %v2054 = vunpack.c.h.b16 %v674
        %v2055 = vunpack.c.l.b16 %v675
        %v2056 = vunpack.c.h.b16 %v675
        %v2057 = vunpack.c.l.b16 %v676
        %v2058 = vunpack.c.h.b16 %v676
        %v2059 = vunpack.c.l.b16 %v677
        %v2060 = vunpack.c.h.b16 %v677
        %v2061 = vunpack.c.l.b16 %v678
        %v2062 = vunpack.c.h.b16 %v678
        %v2063 = vunpack.c.l.b16 %v679
        %v2064 = vunpack.c.h.b16 %v679
        %v2065 = vunpack.c.l.b16 %v680
        %v2066 = vunpack.c.h.b16 %v680
        %v2067 = vunpack.c.l.b16 %v681
        %v2068 = vunpack.c.h.b16 %v681
        %v2069 = vunpack.c.l.b16 %v682
        %v2070 = vunpack.c.h.b16 %v682
        %v2071 = vunpack.c.l.b16 %v683
        %v2072 = vunpack.c.h.b16 %v683
        %v2073 = vunpack.c.l.b16 %v684
        %v2074 = vunpack.c.h.b16 %v684
        %v2075 = vunpack.c.l.b16 %v685
        %v2076 = vunpack.c.h.b16 %v685
        %v2077 = vunpack.c.l.b16 %v686
        %v2078 = vunpack.c.h.b16 %v686
        %v2079 = vunpack.c.l.b16 %v687
        %v2080 = vunpack.c.h.b16 %v687
        %v2081 = vunpack.c.l.b16 %v688
        %v2082 = vunpack.c.h.b16 %v688
        %v2083 = vunpack.c.l.b16 %v689
        %v2084 = vunpack.c.h.b16 %v689
        %v2085 = vunpack.c.l.b16 %v690
        %v2086 = vunpack.c.h.b16 %v690
        %v2087 = vunpack.c.l.b16 %v691
        %v2088 = vunpack.c.h.b16 %v691
        %v2089 = vunpack.c.l.b16 %v692
        %v2090 = vunpack.c.h.b16 %v692
        %v2091 = vunpack.c.l.b16 %v693
        %v2092 = vunpack.c.h.b16 %v693
        %v2093 = vunpack.c.l.b16 %v694
        %v2094 = vunpack.c.h.b16 %v694
        %v2095 = vunpack.c.l.b16 %v695
        %v2096 = vunpack.c.h.b16 %v695
        %v2097 = vunpack.c.l.b16 %v696
        %v2098 = vunpack.c.h.b16 %v696
        %v2099 = vunpack.c.l.b16 %v697
        %v2100 = vunpack.c.h.b16 %v697
        %v2101 = vunpack.c.l.b16 %v698
        %v2102 = vunpack.c.h.b16 %v698
        %v2103 = vunpack.c.l.b16 %v699
        %v2104 = vunpack.c.h.b16 %v699
        %v2105 = vunpack.c.l.b16 %v700
        %v2106 = vunpack.c.h.b16 %v700
        %v2107 = vunpack.c.l.b16 %v701
        %v2108 = vunpack.c.h.b16 %v701
        %v2109 = vunpack.c.l.b16 %v702
        %v2110 = vunpack.c.h.b16 %v702
        %v2111 = vunpack.c.l.b16 %v703
        %v2112 = vunpack.c.h.b16 %v703
        %v2113 = vunpack.c.l.b16 %v704
        %v2114 = vunpack.c.h.b16 %v704
        %v2115 = vunpack.c.l.b16 %v705
        %v2116 = vunpack.c.h.b16 %v705
        %v2117 = vunpack.c.l.b16 %v706
        %v2118 = vunpack.c.h.b16 %v706
        %v2119 = vunpack.c.l.b16 %v707
        %v2120 = vunpack.c.h.b16 %v707
        %v2121 = vunpack.c.l.b16 %v708
        %v2122 = vunpack.c.h.b16 %v708
        %v2123 = vunpack.c.l.b16 %v709
        %v2124 = vunpack.c.h.b16 %v709
        %v2125 = vunpack.c.l.b16 %v710
        %v2126 = vunpack.c.h.b16 %v710
        %v2127 = vunpack.c.l.b16 %v711
        %v2128 = vunpack.c.h.b16 %v711
        %v2129 = vunpack.c.l.b16 %v712
        %v2130 = vunpack.c.h.b16 %v712
        %v2131 = vunpack.c.l.b16 %v713
        %v2132 = vunpack.c.h.b16 %v713
        %v2133 = vunpack.c.l.b16 %v714
        %v2134 = vunpack.c.h.b16 %v714
        %v2135 = vunpack.c.l.b16 %v715
        %v2136 = vunpack.c.h.b16 %v715
        %v2137 = vunpack.c.l.b16 %v716
        %v2138 = vunpack.c.h.b16 %v716
        %v2139 = vunpack.c.l.b16 %v717
        %v2140 = vunpack.c.h.b16 %v717
        %v2141 = vunpack.c.l.b16 %v718
        %v2142 = vunpack.c.h.b16 %v718
        %v2143 = vunpack.c.l.b16 %v719
        %v2144 = vunpack.c.h.b16 %v719
        %v2145 = vunpack.c.l.b16 %v720
        %v2146 = vunpack.c.h.b16 %v720
        %v2147 = vunpack.c.l.b16 %v721
        %v2148 = vunpack.c.h.b16 %v721
        %v2149 = vunpack.c.l.b16 %v722
        %v2150 = vunpack.c.h.b16 %v722
        %v2151 = vunpack.c.l.b16 %v723
        %v2152 = vunpack.c.h.b16 %v723
        %v2153 = vunpack.c.l.b16 %v724
        %v2154 = vunpack.c.h.b16 %v724
        %v2155 = vunpack.c.l.b16 %v725
        %v2156 = vunpack.c.h.b16 %v725
        %v2157 = vunpack.c.l.b16 %v726
        %v2158 = vunpack.c.h.b16 %v726
        %v2159 = vunpack.c.l.b16 %v727
        %v2160 = vunpack.c.h.b16 %v727
        %v2161 = vunpack.c.l.b16 %v728
        %v2162 = vunpack.c.h.b16 %v728
        %v2163 = vunpack.c.l.b16 %v729
        %v2164 = vunpack.c.h.b16 %v729
        %v2165 = vunpack.c.l.b16 %v730
        %v2166 = vunpack.c.h.b16 %v730
        %v2167 = vunpack.c.l.b16 %v731
        %v2168 = vunpack.c.h.b16 %v731
        %v2169 = vunpack.c.l.b16 %v732
        %v2170 = vunpack.c.h.b16 %v732
        %v2171 = vunpack.c.l.b16 %v733
        %v2172 = vunpack.c.h.b16 %v733
        %v2173 = vunpack.c.l.b16 %v734
        %v2174 = vunpack.c.h.b16 %v734
        %v2175 = vunpack.c.l.b16 %v735
        %v2176 = vunpack.c.h.b16 %v735
        %v2177 = vunpack.c.l.b16 %v736
        %v2178 = vunpack.c.h.b16 %v736
        %v2179 = vunpack.c.l.b16 %v737
        %v2180 = vunpack.c.h.b16 %v737
        %v2181 = vunpack.c.l.b16 %v738
        %v2182 = vunpack.c.h.b16 %v738
        %v2183 = vunpack.c.l.b16 %v739
        %v2184 = vunpack.c.h.b16 %v739
        %v2185 = vunpack.c.l.b16 %v740
        %v2186 = vunpack.c.h.b16 %v740
        %v2187 = vunpack.c.l.b16 %v741
        %v2188 = vunpack.c.h.b16 %v741
        %v2189 = vunpack.c.l.b16 %v742
        %v2190 = vunpack.c.h.b16 %v742
        %v2191 = vunpack.c.l.b16 %v743
        %v2192 = vunpack.c.h.b16 %v743
        %v2193 = vunpack.c.l.b16 %v744
        %v2194 = vunpack.c.h.b16 %v744
        %v2195 = vunpack.c.l.b16 %v745
        %v2196 = vunpack.c.h.b16 %v745
        %v2197 = vunpack.c.l.b16 %v746
        %v2198 = vunpack.c.h.b16 %v746
        %v2199 = vunpack.c.l.b16 %v747
        %v2200 = vunpack.c.h.b16 %v747
        %v2201 = vunpack.c.l.b16 %v748
        %v2202 = vunpack.c.h.b16 %v748
        %v2203 = vunpack.c.l.b16 %v749
        %v2204 = vunpack.c.h.b16 %v749
        %v2205 = vunpack.c.l.b16 %v750
        %v2206 = vunpack.c.h.b16 %v750
        %v2207 = vunpack.c.l.b16 %v751
        %v2208 = vunpack.c.h.b16 %v751
        %v2209 = vunpack.c.l.b16 %v752
        %v2210 = vunpack.c.h.b16 %v752
        %v2211 = vunpack.c.l.b16 %v753
        %v2212 = vunpack.c.h.b16 %v753
        %v2213 = vunpack.c.l.b16 %v754
        %v2214 = vunpack.c.h.b16 %v754
        %v2215 = vunpack.c.l.b16 %v755
        %v2216 = vunpack.c.h.b16 %v755
        %v2217 = vunpack.c.l.b16 %v756
        %v2218 = vunpack.c.h.b16 %v756
        %v2219 = vunpack.c.l.b16 %v757
        %v2220 = vunpack.c.h.b16 %v757
        %v2221 = vunpack.c.l.b16 %v758
        %v2222 = vunpack.c.h.b16 %v758
        %v2223 = vunpack.c.l.b16 %v759
        %v2224 = vunpack.c.h.b16 %v759
        %v2225 = vunpack.c.l.b16 %v760
        %v2226 = vunpack.c.h.b16 %v760
        %v2227 = vunpack.c.l.b16 %v761
        %v2228 = vunpack.c.h.b16 %v761
        %v2229 = vunpack.c.l.b16 %v762
        %v2230 = vunpack.c.h.b16 %v762
        %v2231 = vunpack.c.l.b16 %v763
        %v2232 = vunpack.c.h.b16 %v763
        %v2233 = vunpack.c.l.b16 %v764
        %v2234 = vunpack.c.h.b16 %v764
        %v2235 = vunpack.c.l.b16 %v765
        %v2236 = vunpack.c.h.b16 %v765
        %v2237 = vunpack.c.l.b16 %v766
        %v2238 = vunpack.c.h.b16 %v766
        %v2239 = vunpack.c.l.b16 %v767
        %v2240 = vunpack.c.h.b16 %v767
        %v2241 = vunpack.c.l.b16 %v768
        %v2242 = vunpack.c.h.b16 %v768
        %v2243 = vunpack.c.l.b16 %v769
        %v2244 = vunpack.c.h.b16 %v769
        %v2245 = vunpack.c.l.b16 %v770
        %v2246 = vunpack.c.h.b16 %v770
        %v2247 = vunpack.c.l.b16 %v771
        %v2248 = vunpack.c.h.b16 %v771
        %v2249 = vunpack.c.l.b16 %v772
        %v2250 = vunpack.c.h.b16 %v772
        %v2251 = vunpack.c.l.b16 %v773
        %v2252 = vunpack.c.h.b16 %v773
        %v2253 = vunpack.c.l.b16 %v774
        %v2254 = vunpack.c.h.b16 %v774
        %v2255 = vunpack.c.l.b16 %v775
        %v2256 = vunpack.c.h.b16 %v775
        %v2257 = vunpack.c.l.b16 %v776
        %v2258 = vunpack.c.h.b16 %v776
        %v2259 = vunpack.c.l.b16 %v777
        %v2260 = vunpack.c.h.b16 %v777
        %v2261 = vunpack.c.l.b16 %v778
        %v2262 = vunpack.c.h.b16 %v778
        %v2263 = vunpack.c.l.b16 %v779
        %v2264 = vunpack.c.h.b16 %v779
        %v2265 = vunpack.c.l.b16 %v780
        %v2266 = vunpack.c.h.b16 %v780
        %v2267 = vunpack.c.l.b16 %v781
        %v2268 = vunpack.c.h.b16 %v781
        %v2269 = vunpack.c.l.b16 %v782
        %v2270 = vunpack.c.h.b16 %v782
        %v2271 = vunpack.c.l.b16 %v783
        %v2272 = vunpack.c.h.b16 %v783
        %v2273 = vunpack.c.l.b16 %v784
        %v2274 = vunpack.c.h.b16 %v784
        %v2275 = vunpack.c.l.b16 %v785
        %v2276 = vunpack.c.h.b16 %v785
        %v2277 = vunpack.c.l.b16 %v786
        %v2278 = vunpack.c.h.b16 %v786
        %v2279 = vunpack.c.l.b16 %v787
        %v2280 = vunpack.c.h.b16 %v787
        %v2281 = vunpack.c.l.b16 %v788
        %v2282 = vunpack.c.h.b16 %v788
        %v2283 = vunpack.c.l.b16 %v789
        %v2284 = vunpack.c.h.b16 %v789
        %v2285 = vunpack.c.l.b16 %v790
        %v2286 = vunpack.c.h.b16 %v790
        %v2287 = vunpack.c.l.b16 %v791
        %v2288 = vunpack.c.h.b16 %v791
        %v2289 = vunpack.c.l.b16 %v792
        %v2290 = vunpack.c.h.b16 %v792
        %v2291 = vunpack.c.l.b16 %v793
        %v2292 = vunpack.c.h.b16 %v793
        %v2293 = vunpack.c.l.b16 %v794
        %v2294 = vunpack.c.h.b16 %v794
        %v2295 = vunpack.c.l.b16 %v795
        %v2296 = vunpack.c.h.b16 %v795
        %v2297 = vunpack.c.l.b16 %v796
        %v2298 = vunpack.c.h.b16 %v796
        %v2299 = vunpack.c.l.b16 %v797
        %v2300 = vunpack.c.h.b16 %v797
        %v2301 = vunpack.c.l.b16 %v798
        %v2302 = vunpack.c.h.b16 %v798
        %v2303 = vunpack.c.l.b16 %v799
        %v2304 = vunpack.c.h.b16 %v799
        %v2305 = vunpack.c.l.b16 %v800
        %v2306 = vunpack.c.h.b16 %v800
        %v2307 = vunpack.c.l.b16 %v801
        %v2308 = vunpack.c.h.b16 %v801
        %v2309 = vunpack.c.l.b16 %v802
        %v2310 = vunpack.c.h.b16 %v802
        %v2311 = vunpack.c.l.b16 %v803
        %v2312 = vunpack.c.h.b16 %v803
        %v2313 = vunpack.c.l.b16 %v804
        %v2314 = vunpack.c.h.b16 %v804
        %v2315 = vunpack.c.l.b16 %v805
        %v2316 = vunpack.c.h.b16 %v805
        %v2317 = vunpack.c.l.b16 %v806
        %v2318 = vunpack.c.h.b16 %v806
        %v2319 = vunpack.c.l.b16 %v807
        %v2320 = vunpack.c.h.b16 %v807
        %v2321 = vunpack.c.l.b16 %v808
        %v2322 = vunpack.c.h.b16 %v808
        %v2323 = vunpack.c.l.b16 %v809
        %v2324 = vunpack.c.h.b16 %v809
        %v2325 = vunpack.c.l.b16 %v810
        %v2326 = vunpack.c.h.b16 %v810
        %v2327 = vunpack.c.l.b16 %v811
        %v2328 = vunpack.c.h.b16 %v811
        %v2329 = vunpack.c.l.b16 %v812
        %v2330 = vunpack.c.h.b16 %v812
        %v2331 = vunpack.c.l.b16 %v813
        %v2332 = vunpack.c.h.b16 %v813
        %v2333 = vunpack.c.l.b16 %v814
        %v2334 = vunpack.c.h.b16 %v814
        %v2335 = vunpack.c.l.b16 %v815
        %v2336 = vunpack.c.h.b16 %v815
        %v2337 = vunpack.c.l.b16 %v816
        %v2338 = vunpack.c.h.b16 %v816
        %v2339 = vunpack.c.l.b16 %v817
        %v2340 = vunpack.c.h.b16 %v817
        %v2341 = vunpack.c.l.b16 %v818
        %v2342 = vunpack.c.h.b16 %v818
        %v2343 = vunpack.c.l.b16 %v819
        %v2344 = vunpack.c.h.b16 %v819
        %v2345 = vunpack.c.l.b16 %v820
        %v2346 = vunpack.c.h.b16 %v820
        %v2347 = vunpack.c.l.b16 %v821
        %v2348 = vunpack.c.h.b16 %v821
        %v2349 = vunpack.c.l.b16 %v822
        %v2350 = vunpack.c.h.b16 %v822
        %v2351 = vunpack.c.l.b16 %v823
        %v2352 = vunpack.c.h.b16 %v823
        %v2353 = vunpack.c.l.b16 %v824
        %v2354 = vunpack.c.h.b16 %v824
        %v2355 = vunpack.c.l.b16 %v825
        %v2356 = vunpack.c.h.b16 %v825
        %v2357 = vunpack.c.l.b16 %v826
        %v2358 = vunpack.c.h.b16 %v826
        %v2359 = vunpack.c.l.b16 %v827
        %v2360 = vunpack.c.h.b16 %v827
        %v2361 = vunpack.c.l.b16 %v828
        %v2362 = vunpack.c.h.b16 %v828
        %v2363 = vunpack.c.l.b16 %v829
        %v2364 = vunpack.c.h.b16 %v829
        %v2365 = vunpack.c.l.b16 %v830
        %v2366 = vunpack.c.h.b16 %v830
        %v2367 = vunpack.c.l.b16 %v831
        %v2368 = vunpack.c.h.b16 %v831
        %v2369 = vunpack.c.l.b16 %v832
        %v2370 = vunpack.c.h.b16 %v832
        %v2371 = vunpack.c.l.b16 %v833
        %v2372 = vunpack.c.h.b16 %v833
        %v2373 = vunpack.c.l.b16 %v834
        %v2374 = vunpack.c.h.b16 %v834
        %v2375 = vunpack.c.l.b16 %v835
        %v2376 = vunpack.c.h.b16 %v835
        %v2377 = vunpack.c.l.b16 %v836
        %v2378 = vunpack.c.h.b16 %v836
        %v2379 = vunpack.c.l.b16 %v837
        %v2380 = vunpack.c.h.b16 %v837
        %v2381 = vunpack.c.l.b16 %v838
        %v2382 = vunpack.c.h.b16 %v838
        %v2383 = vunpack.c.l.b16 %v839
        %v2384 = vunpack.c.h.b16 %v839
        %v2385 = vunpack.c.l.b16 %v840
        %v2386 = vunpack.c.h.b16 %v840
        %v2387 = vunpack.c.l.b16 %v841
        %v2388 = vunpack.c.h.b16 %v841
        %v2389 = vunpack.c.l.b16 %v842
        %v2390 = vunpack.c.h.b16 %v842
        %v2391 = vunpack.c.l.b16 %v843
        %v2392 = vunpack.c.h.b16 %v843
        %v2393 = vunpack.c.l.b16 %v844
        %v2394 = vunpack.c.h.b16 %v844
        %v2395 = vunpack.c.l.b16 %v845
        %v2396 = vunpack.c.h.b16 %v845
        %v2397 = vunpack.c.l.b16 %v846
        %v2398 = vunpack.c.h.b16 %v846
        %v2399 = vunpack.c.l.b16 %v847
        %v2400 = vunpack.c.h.b16 %v847
        %v2401 = vunpack.c.l.b16 %v848
        %v2402 = vunpack.c.h.b16 %v848
        %v2403 = vunpack.c.l.b16 %v849
        %v2404 = vunpack.c.h.b16 %v849
        %v2405 = vunpack.c.l.b16 %v850
        %v2406 = vunpack.c.h.b16 %v850
        %v2407 = vunpack.c.l.b16 %v851
        %v2408 = vunpack.c.h.b16 %v851
        %v2409 = vunpack.c.l.b16 %v852
        %v2410 = vunpack.c.h.b16 %v852
        %v2411 = vunpack.c.l.b16 %v853
        %v2412 = vunpack.c.h.b16 %v853
        %v2413 = vunpack.c.l.b16 %v854
        %v2414 = vunpack.c.h.b16 %v854
        %v2415 = vunpack.c.l.b16 %v855
        %v2416 = vunpack.c.h.b16 %v855
        %v2417 = vunpack.c.l.b16 %v856
        %v2418 = vunpack.c.h.b16 %v856
        %v2419 = vunpack.c.l.b16 %v857
        %v2420 = vunpack.c.h.b16 %v857
        %v2421 = vunpack.c.l.b16 %v858
        %v2422 = vunpack.c.h.b16 %v858
        %v2423 = vunpack.c.l.b16 %v859
        %v2424 = vunpack.c.h.b16 %v859
        %v2425 = vunpack.c.l.b16 %v860
        %v2426 = vunpack.c.h.b16 %v860
        %v2427 = vunpack.c.l.b16 %v861
        %v2428 = vunpack.c.h.b16 %v861
        %v2429 = vunpack.c.l.b16 %v862
        %v2430 = vunpack.c.h.b16 %v862
        %v2431 = vunpack.c.l.b16 %v863
        %v2432 = vunpack.c.h.b16 %v863
        %v2433 = vunpack.c.l.b16 %v864
        %v2434 = vunpack.c.h.b16 %v864
        %v2435 = vunpack.c.l.b16 %v865
        %v2436 = vunpack.c.h.b16 %v865
        %v2437 = vunpack.c.l.b16 %v866
        %v2438 = vunpack.c.h.b16 %v866
        %v2439 = vunpack.c.l.b16 %v867
        %v2440 = vunpack.c.h.b16 %v867
        %v2441 = vunpack.c.l.b16 %v868
        %v2442 = vunpack.c.h.b16 %v868
        %v2443 = vunpack.c.l.b16 %v869
        %v2444 = vunpack.c.h.b16 %v869
        %v2445 = vunpack.c.l.b16 %v870
        %v2446 = vunpack.c.h.b16 %v870
        %v2447 = vpack.c.b16 %v1431, %v1423
        %v2448 = vpack.c.b16 %v1432, %v1424
        %v2449 = vpack.c.b16 %v1433, %v1425
        %v2450 = vpack.c.b16 %v1434, %v1426
        %v2451 = vpack.c.b16 %v1435, %v1427
        %v2452 = vpack.c.b16 %v1436, %v1428
        %v2453 = vpack.c.b16 %v1437, %v1429
        %v2454 = vpack.c.b16 %v1438, %v1430
        %v2455 = vpack.c.b16 %v1447, %v1439
        %v2456 = vpack.c.b16 %v1448, %v1440
        %v2457 = vpack.c.b16 %v1449, %v1441
        %v2458 = vpack.c.b16 %v1450, %v1442
        %v2459 = vpack.c.b16 %v1451, %v1443
        %v2460 = vpack.c.b16 %v1452, %v1444
        %v2461 = vpack.c.b16 %v1453, %v1445
        %v2462 = vpack.c.b16 %v1454, %v1446
        %v2463 = vpack.c.b16 %v1463, %v1455
        %v2464 = vpack.c.b16 %v1464, %v1456
        %v2465 = vpack.c.b16 %v1465, %v1457
        %v2466 = vpack.c.b16 %v1466, %v1458
        %v2467 = vpack.c.b16 %v1467, %v1459
        %v2468 = vpack.c.b16 %v1468, %v1460
        %v2469 = vpack.c.b16 %v1469, %v1461
        %v2470 = vpack.c.b16 %v1470, %v1462
        %v2471 = vpack.c.b16 %v1479, %v1471
        %v2472 = vpack.c.b16 %v1480, %v1472
        %v2473 = vpack.c.b16 %v1481, %v1473
        %v2474 = vpack.c.b16 %v1482, %v1474
        %v2475 = vpack.c.b16 %v1483, %v1475
        %v2476 = vpack.c.b16 %v1484, %v1476
        %v2477 = vpack.c.b16 %v1485, %v1477
        %v2478 = vpack.c.b16 %v1486, %v1478
        %v2479 = vpack.c.b16 %v1495, %v1487
        %v2480 = vpack.c.b16 %v1496, %v1488
        %v2481 = vpack.c.b16 %v1497, %v1489
        %v2482 = vpack.c.b16 %v1498, %v1490
        %v2483 = vpack.c.b16 %v1499, %v1491
        %v2484 = vpack.c.b16 %v1500, %v1492
        %v2485 = vpack.c.b16 %v1501, %v1493
        %v2486 = vpack.c.b16 %v1502, %v1494
        %v2487 = vpack.c.b16 %v1511, %v1503
        %v2488 = vpack.c.b16 %v1512, %v1504
        %v2489 = vpack.c.b16 %v1513, %v1505
        %v2490 = vpack.c.b16 %v1514, %v1506
        %v2491 = vpack.c.b16 %v1515, %v1507
        %v2492 = vpack.c.b16 %v1516, %v1508
        %v2493 = vpack.c.b16 %v1517, %v1509
        %v2494 = vpack.c.b16 %v1518, %v1510
        %v2495 = vpack.c.b16 %v1527, %v1519
        %v2496 = vpack.c.b16 %v1528, %v1520
        %v2497 = vpack.c.b16 %v1529, %v1521
        %v2498 = vpack.c.b16 %v1530, %v1522
        %v2499 = vpack.c.b16 %v1531, %v1523
        %v2500 = vpack.c.b16 %v1532, %v1524
        %v2501 = vpack.c.b16 %v1533, %v1525
        %v2502 = vpack.c.b16 %v1534, %v1526
        %v2503 = vpack.c.b16 %v1543, %v1535
        %v2504 = vpack.c.b16 %v1544, %v1536
        %v2505 = vpack.c.b16 %v1545, %v1537
        %v2506 = vpack.c.b16 %v1546, %v1538
        %v2507 = vpack.c.b16 %v1547, %v1539
        %v2508 = vpack.c.b16 %v1548, %v1540
        %v2509 = vpack.c.b16 %v1549, %v1541
        %v2510 = vpack.c.b16 %v1550, %v1542
        %v2511 = vpack.c.b16 %v1559, %v1551
        %v2512 = vpack.c.b16 %v1560, %v1552
        %v2513 = vpack.c.b16 %v1561, %v1553
        %v2514 = vpack.c.b16 %v1562, %v1554
        %v2515 = vpack.c.b16 %v1563, %v1555
        %v2516 = vpack.c.b16 %v1564, %v1556
        %v2517 = vpack.c.b16 %v1565, %v1557
        %v2518 = vpack.c.b16 %v1566, %v1558
        %v2519 = vpack.c.b16 %v1575, %v1567
        %v2520 = vpack.c.b16 %v1576, %v1568
        %v2521 = vpack.c.b16 %v1577, %v1569
        %v2522 = vpack.c.b16 %v1578, %v1570
        %v2523 = vpack.c.b16 %v1579, %v1571
        %v2524 = vpack.c.b16 %v1580, %v1572
        %v2525 = vpack.c.b16 %v1581, %v1573
        %v2526 = vpack.c.b16 %v1582, %v1574
        %v2527 = vpack.c.b16 %v1591, %v1583
        %v2528 = vpack.c.b16 %v1592, %v1584
        %v2529 = vpack.c.b16 %v1593, %v1585
        %v2530 = vpack.c.b16 %v1594, %v1586
        %v2531 = vpack.c.b16 %v1595, %v1587
        %v2532 = vpack.c.b16 %v1596, %v1588
        %v2533 = vpack.c.b16 %v1597, %v1589
        %v2534 = vpack.c.b16 %v1598, %v1590
        %v2535 = vpack.c.b16 %v1607, %v1599
        %v2536 = vpack.c.b16 %v1608, %v1600
        %v2537 = vpack.c.b16 %v1609, %v1601
        %v2538 = vpack.c.b16 %v1610, %v1602
        %v2539 = vpack.c.b16 %v1611, %v1603
        %v2540 = vpack.c.b16 %v1612, %v1604
        %v2541 = vpack.c.b16 %v1613, %v1605
        %v2542 = vpack.c.b16 %v1614, %v1606
        %v2543 = vpack.c.b16 %v1623, %v1615
        %v2544 = vpack.c.b16 %v1624, %v1616
        %v2545 = vpack.c.b16 %v1625, %v1617
        %v2546 = vpack.c.b16 %v1626, %v1618
        %v2547 = vpack.c.b16 %v1627, %v1619
        %v2548 = vpack.c.b16 %v1628, %v1620
        %v2549 = vpack.c.b16 %v1629, %v1621
        %v2550 = vpack.c.b16 %v1630, %v1622
        %v2551 = vpack.c.b16 %v1639, %v1631
        %v2552 = vpack.c.b16 %v1640, %v1632
        %v2553 = vpack.c.b16 %v1641, %v1633
        %v2554 = vpack.c.b16 %v1642, %v1634
        %v2555 = vpack.c.b16 %v1643, %v1635
        %v2556 = vpack.c.b16 %v1644, %v1636
        %v2557 = vpack.c.b16 %v1645, %v1637
        %v2558 = vpack.c.b16 %v1646, %v1638
        %v2559 = vpack.c.b16 %v1655, %v1647
        %v2560 = vpack.c.b16 %v1656, %v1648
        %v2561 = vpack.c.b16 %v1657, %v1649
        %v2562 = vpack.c.b16 %v1658, %v1650
        %v2563 = vpack.c.b16 %v1659, %v1651
        %v2564 = vpack.c.b16 %v1660, %v1652
        %v2565 = vpack.c.b16 %v1661, %v1653
        %v2566 = vpack.c.b16 %v1662, %v1654
        %v2567 = vpack.c.b16 %v1671, %v1663
        %v2568 = vpack.c.b16 %v1672, %v1664
        %v2569 = vpack.c.b16 %v1673, %v1665
        %v2570 = vpack.c.b16 %v1674, %v1666
        %v2571 = vpack.c.b16 %v1675, %v1667
        %v2572 = vpack.c.b16 %v1676, %v1668
        %v2573 = vpack.c.b16 %v1677, %v1669
        %v2574 = vpack.c.b16 %v1678, %v1670
        %v2575 = vpack.c.b16 %v1687, %v1679
        %v2576 = vpack.c.b16 %v1688, %v1680
        %v2577 = vpack.c.b16 %v1689, %v1681
        %v2578 = vpack.c.b16 %v1690, %v1682
        %v2579 = vpack.c.b16 %v1691, %v1683
        %v2580 = vpack.c.b16 %v1692, %v1684
        %v2581 = vpack.c.b16 %v1693, %v1685
        %v2582 = vpack.c.b16 %v1694, %v1686
        %v2583 = vpack.c.b16 %v1703, %v1695
        %v2584 = vpack.c.b16 %v1704, %v1696
        %v2585 = vpack.c.b16 %v1705, %v1697
        %v2586 = vpack.c.b16 %v1706, %v1698
        %v2587 = vpack.c.b16 %v1707, %v1699
        %v2588 = vpack.c.b16 %v1708, %v1700
        %v2589 = vpack.c.b16 %v1709, %v1701
        %v2590 = vpack.c.b16 %v1710, %v1702
        %v2591 = vpack.c.b16 %v1719, %v1711
        %v2592 = vpack.c.b16 %v1720, %v1712
        %v2593 = vpack.c.b16 %v1721, %v1713
        %v2594 = vpack.c.b16 %v1722, %v1714
        %v2595 = vpack.c.b16 %v1723, %v1715
        %v2596 = vpack.c.b16 %v1724, %v1716
        %v2597 = vpack.c.b16 %v1725, %v1717
        %v2598 = vpack.c.b16 %v1726, %v1718
        %v2599 = vpack.c.b16 %v1735, %v1727
        %v2600 = vpack.c.b16 %v1736, %v1728
        %v2601 = vpack.c.b16 %v1737, %v1729
        %v2602 = vpack.c.b16 %v1738, %v1730
        %v2603 = vpack.c.b16 %v1739, %v1731
        %v2604 = vpack.c.b16 %v1740, %v1732
        %v2605 = vpack.c.b16 %v1741, %v1733
        %v2606 = vpack.c.b16 %v1742, %v1734
        %v2607 = vpack.c.b16 %v1751, %v1743
        %v2608 = vpack.c.b16 %v1752, %v1744
        %v2609 = vpack.c.b16 %v1753, %v1745
        %v2610 = vpack.c.b16 %v1754, %v1746
        %v2611 = vpack.c.b16 %v1755, %v1747
        %v2612 = vpack.c.b16 %v1756, %v1748
        %v2613 = vpack.c.b16 %v1757, %v1749
        %v2614 = vpack.c.b16 %v1758, %v1750
        %v2615 = vpack.c.b16 %v1767, %v1759
        %v2616 = vpack.c.b16 %v1768, %v1760
        %v2617 = vpack.c.b16 %v1769, %v1761
        %v2618 = vpack.c.b16 %v1770, %v1762
        %v2619 = vpack.c.b16 %v1771, %v1763
        %v2620 = vpack.c.b16 %v1772, %v1764
        %v2621 = vpack.c.b16 %v1773, %v1765
        %v2622 = vpack.c.b16 %v1774, %v1766
        %v2623 = vpack.c.b16 %v1783, %v1775
        %v2624 = vpack.c.b16 %v1784, %v1776
        %v2625 = vpack.c.b16 %v1785, %v1777
        %v2626 = vpack.c.b16 %v1786, %v1778
        %v2627 = vpack.c.b16 %v1787, %v1779
        %v2628 = vpack.c.b16 %v1788, %v1780
        %v2629 = vpack.c.b16 %v1789, %v1781
        %v2630 = vpack.c.b16 %v1790, %v1782
        %v2631 = vpack.c.b16 %v1799, %v1791
        %v2632 = vpack.c.b16 %v1800, %v1792
        %v2633 = vpack.c.b16 %v1801, %v1793
        %v2634 = vpack.c.b16 %v1802, %v1794
        %v2635 = vpack.c.b16 %v1803, %v1795
        %v2636 = vpack.c.b16 %v1804, %v1796
        %v2637 = vpack.c.b16 %v1805, %v1797
        %v2638 = vpack.c.b16 %v1806, %v1798
        %v2639 = vpack.c.b16 %v1815, %v1807
        %v2640 = vpack.c.b16 %v1816, %v1808
        %v2641 = vpack.c.b16 %v1817, %v1809
        %v2642 = vpack.c.b16 %v1818, %v1810
        %v2643 = vpack.c.b16 %v1819, %v1811
        %v2644 = vpack.c.b16 %v1820, %v1812
        %v2645 = vpack.c.b16 %v1821, %v1813
        %v2646 = vpack.c.b16 %v1822, %v1814
        %v2647 = vpack.c.b16 %v1831, %v1823
        %v2648 = vpack.c.b16 %v1832, %v1824
        %v2649 = vpack.c.b16 %v1833, %v1825
        %v2650 = vpack.c.b16 %v1834, %v1826
        %v2651 = vpack.c.b16 %v1835, %v1827
        %v2652 = vpack.c.b16 %v1836, %v1828
        %v2653 = vpack.c.b16 %v1837, %v1829
        %v2654 = vpack.c.b16 %v1838, %v1830
        %v2655 = vpack.c.b16 %v1847, %v1839
        %v2656 = vpack.c.b16 %v1848, %v1840
        %v2657 = vpack.c.b16 %v1849, %v1841
        %v2658 = vpack.c.b16 %v1850, %v1842
        %v2659 = vpack.c.b16 %v1851, %v1843
        %v2660 = vpack.c.b16 %v1852, %v1844
        %v2661 = vpack.c.b16 %v1853, %v1845
        %v2662 = vpack.c.b16 %v1854, %v1846
        %v2663 = vpack.c.b16 %v1863, %v1855
        %v2664 = vpack.c.b16 %v1864, %v1856
        %v2665 = vpack.c.b16 %v1865, %v1857
        %v2666 = vpack.c.b16 %v1866, %v1858
        %v2667 = vpack.c.b16 %v1867, %v1859
        %v2668 = vpack.c.b16 %v1868, %v1860
        %v2669 = vpack.c.b16 %v1869, %v1861
        %v2670 = vpack.c.b16 %v1870, %v1862
        %v2671 = vpack.c.b16 %v1879, %v1871
        %v2672 = vpack.c.b16 %v1880, %v1872
        %v2673 = vpack.c.b16 %v1881, %v1873
        %v2674 = vpack.c.b16 %v1882, %v1874
        %v2675 = vpack.c.b16 %v1883, %v1875
        %v2676 = vpack.c.b16 %v1884, %v1876
        %v2677 = vpack.c.b16 %v1885, %v1877
        %v2678 = vpack.c.b16 %v1886, %v1878
        %v2679 = vpack.c.b16 %v1895, %v1887
        %v2680 = vpack.c.b16 %v1896, %v1888
        %v2681 = vpack.c.b16 %v1897, %v1889
        %v2682 = vpack.c.b16 %v1898, %v1890
        %v2683 = vpack.c.b16 %v1899, %v1891
        %v2684 = vpack.c.b16 %v1900, %v1892
        %v2685 = vpack.c.b16 %v1901, %v1893
        %v2686 = vpack.c.b16 %v1902, %v1894
        %v2687 = vpack.c.b16 %v1911, %v1903
        %v2688 = vpack.c.b16 %v1912, %v1904
        %v2689 = vpack.c.b16 %v1913, %v1905
        %v2690 = vpack.c.b16 %v1914, %v1906
        %v2691 = vpack.c.b16 %v1915, %v1907
        %v2692 = vpack.c.b16 %v1916, %v1908
        %v2693 = vpack.c.b16 %v1917, %v1909
        %v2694 = vpack.c.b16 %v1918, %v1910
        %v2695 = vpack.c.b16 %v1927, %v1919
        %v2696 = vpack.c.b16 %v1928, %v1920
        %v2697 = vpack.c.b16 %v1929, %v1921
        %v2698 = vpack.c.b16 %v1930, %v1922
        %v2699 = vpack.c.b16 %v1931, %v1923
        %v2700 = vpack.c.b16 %v1932, %v1924
        %v2701 = vpack.c.b16 %v1933, %v1925
        %v2702 = vpack.c.b16 %v1934, %v1926
        %v2703 = vpack.c.b16 %v1943, %v1935
        %v2704 = vpack.c.b16 %v1944, %v1936
        %v2705 = vpack.c.b16 %v1945, %v1937
        %v2706 = vpack.c.b16 %v1946, %v1938
        %v2707 = vpack.c.b16 %v1947, %v1939
        %v2708 = vpack.c.b16 %v1948, %v1940
        %v2709 = vpack.c.b16 %v1949, %v1941
        %v2710 = vpack.c.b16 %v1950, %v1942
        %v2711 = vpack.c.b16 %v1959, %v1951
        %v2712 = vpack.c.b16 %v1960, %v1952
        %v2713 = vpack.c.b16 %v1961, %v1953
        %v2714 = vpack.c.b16 %v1962, %v1954
        %v2715 = vpack.c.b16 %v1963, %v1955
        %v2716 = vpack.c.b16 %v1964, %v1956
        %v2717 = vpack.c.b16 %v1965, %v1957
        %v2718 = vpack.c.b16 %v1966, %v1958
        %v2719 = vpack.c.b16 %v1975, %v1967
        %v2720 = vpack.c.b16 %v1976, %v1968
        %v2721 = vpack.c.b16 %v1977, %v1969
        %v2722 = vpack.c.b16 %v1978, %v1970
        %v2723 = vpack.c.b16 %v1979, %v1971
        %v2724 = vpack.c.b16 %v1980, %v1972
        %v2725 = vpack.c.b16 %v1981, %v1973
        %v2726 = vpack.c.b16 %v1982, %v1974
        %v2727 = vpack.c.b16 %v1991, %v1983
        %v2728 = vpack.c.b16 %v1992, %v1984
        %v2729 = vpack.c.b16 %v1993, %v1985
        %v2730 = vpack.c.b16 %v1994, %v1986
        %v2731 = vpack.c.b16 %v1995, %v1987
        %v2732 = vpack.c.b16 %v1996, %v1988
        %v2733 = vpack.c.b16 %v1997, %v1989
        %v2734 = vpack.c.b16 %v1998, %v1990
        %v2735 = vpack.c.b16 %v2007, %v1999
        %v2736 = vpack.c.b16 %v2008, %v2000
        %v2737 = vpack.c.b16 %v2009, %v2001
        %v2738 = vpack.c.b16 %v2010, %v2002
        %v2739 = vpack.c.b16 %v2011, %v2003
        %v2740 = vpack.c.b16 %v2012, %v2004
        %v2741 = vpack.c.b16 %v2013, %v2005
        %v2742 = vpack.c.b16 %v2014, %v2006
        %v2743 = vpack.c.b16 %v2023, %v2015
        %v2744 = vpack.c.b16 %v2024, %v2016
        %v2745 = vpack.c.b16 %v2025, %v2017
        %v2746 = vpack.c.b16 %v2026, %v2018
        %v2747 = vpack.c.b16 %v2027, %v2019
        %v2748 = vpack.c.b16 %v2028, %v2020
        %v2749 = vpack.c.b16 %v2029, %v2021
        %v2750 = vpack.c.b16 %v2030, %v2022
        %v2751 = vpack.c.b16 %v2039, %v2031
        %v2752 = vpack.c.b16 %v2040, %v2032
        %v2753 = vpack.c.b16 %v2041, %v2033
        %v2754 = vpack.c.b16 %v2042, %v2034
        %v2755 = vpack.c.b16 %v2043, %v2035
        %v2756 = vpack.c.b16 %v2044, %v2036
        %v2757 = vpack.c.b16 %v2045, %v2037
        %v2758 = vpack.c.b16 %v2046, %v2038
        %v2759 = vpack.c.b16 %v2055, %v2047
        %v2760 = vpack.c.b16 %v2056, %v2048
        %v2761 = vpack.c.b16 %v2057, %v2049
        %v2762 = vpack.c.b16 %v2058, %v2050
        %v2763 = vpack.c.b16 %v2059, %v2051
        %v2764 = vpack.c.b16 %v2060, %v2052
        %v2765 = vpack.c.b16 %v2061, %v2053
        %v2766 = vpack.c.b16 %v2062, %v2054
        %v2767 = vpack.c.b16 %v2071, %v2063
        %v2768 = vpack.c.b16 %v2072, %v2064
        %v2769 = vpack.c.b16 %v2073, %v2065
        %v2770 = vpack.c.b16 %v2074, %v2066
        %v2771 = vpack.c.b16 %v2075, %v2067
        %v2772 = vpack.c.b16 %v2076, %v2068
        %v2773 = vpack.c.b16 %v2077, %v2069
        %v2774 = vpack.c.b16 %v2078, %v2070
        %v2775 = vpack.c.b16 %v2087, %v2079
        %v2776 = vpack.c.b16 %v2088, %v2080
        %v2777 = vpack.c.b16 %v2089, %v2081
        %v2778 = vpack.c.b16 %v2090, %v2082
        %v2779 = vpack.c.b16 %v2091, %v2083
        %v2780 = vpack.c.b16 %v2092, %v2084
        %v2781 = vpack.c.b16 %v2093, %v2085
        %v2782 = vpack.c.b16 %v2094, %v2086
        %v2783 = vpack.c.b16 %v2103, %v2095
        %v2784 = vpack.c.b16 %v2104, %v2096
        %v2785 = vpack.c.b16 %v2105, %v2097
        %v2786 = vpack.c.b16 %v2106, %v2098
        %v2787 = vpack.c.b16 %v2107, %v2099
        %v2788 = vpack.c.b16 %v2108, %v2100
        %v2789 = vpack.c.b16 %v2109, %v2101
        %v2790 = vpack.c.b16 %v2110, %v2102
        %v2791 = vpack.c.b16 %v2119, %v2111
        %v2792 = vpack.c.b16 %v2120, %v2112
        %v2793 = vpack.c.b16 %v2121, %v2113
        %v2794 = vpack.c.b16 %v2122, %v2114
        %v2795 = vpack.c.b16 %v2123, %v2115
        %v2796 = vpack.c.b16 %v2124, %v2116
        %v2797 = vpack.c.b16 %v2125, %v2117
        %v2798 = vpack.c.b16 %v2126, %v2118
        %v2799 = vpack.c.b16 %v2135, %v2127
        %v2800 = vpack.c.b16 %v2136, %v2128
        %v2801 = vpack.c.b16 %v2137, %v2129
        %v2802 = vpack.c.b16 %v2138, %v2130
        %v2803 = vpack.c.b16 %v2139, %v2131
        %v2804 = vpack.c.b16 %v2140, %v2132
        %v2805 = vpack.c.b16 %v2141, %v2133
        %v2806 = vpack.c.b16 %v2142, %v2134
        %v2807 = vpack.c.b16 %v2151, %v2143
        %v2808 = vpack.c.b16 %v2152, %v2144
        %v2809 = vpack.c.b16 %v2153, %v2145
        %v2810 = vpack.c.b16 %v2154, %v2146
        %v2811 = vpack.c.b16 %v2155, %v2147
        %v2812 = vpack.c.b16 %v2156, %v2148
        %v2813 = vpack.c.b16 %v2157, %v2149
        %v2814 = vpack.c.b16 %v2158, %v2150
        %v2815 = vpack.c.b16 %v2167, %v2159
        %v2816 = vpack.c.b16 %v2168, %v2160
        %v2817 = vpack.c.b16 %v2169, %v2161
        %v2818 = vpack.c.b16 %v2170, %v2162
        %v2819 = vpack.c.b16 %v2171, %v2163
        %v2820 = vpack.c.b16 %v2172, %v2164
        %v2821 = vpack.c.b16 %v2173, %v2165
        %v2822 = vpack.c.b16 %v2174, %v2166
        %v2823 = vpack.c.b16 %v2183, %v2175
        %v2824 = vpack.c.b16 %v2184, %v2176
        %v2825 = vpack.c.b16 %v2185, %v2177
        %v2826 = vpack.c.b16 %v2186, %v2178
        %v2827 = vpack.c.b16 %v2187, %v2179
        %v2828 = vpack.c.b16 %v2188, %v2180
        %v2829 = vpack.c.b16 %v2189, %v2181
        %v2830 = vpack.c.b16 %v2190, %v2182
        %v2831 = vpack.c.b16 %v2199, %v2191
        %v2832 = vpack.c.b16 %v2200, %v2192
        %v2833 = vpack.c.b16 %v2201, %v2193
        %v2834 = vpack.c.b16 %v2202, %v2194
        %v2835 = vpack.c.b16 %v2203, %v2195
        %v2836 = vpack.c.b16 %v2204, %v2196
        %v2837 = vpack.c.b16 %v2205, %v2197
        %v2838 = vpack.c.b16 %v2206, %v2198
        %v2839 = vpack.c.b16 %v2215, %v2207
        %v2840 = vpack.c.b16 %v2216, %v2208
        %v2841 = vpack.c.b16 %v2217, %v2209
        %v2842 = vpack.c.b16 %v2218, %v2210
        %v2843 = vpack.c.b16 %v2219, %v2211
        %v2844 = vpack.c.b16 %v2220, %v2212
        %v2845 = vpack.c.b16 %v2221, %v2213
        %v2846 = vpack.c.b16 %v2222, %v2214
        %v2847 = vpack.c.b16 %v2231, %v2223
        %v2848 = vpack.c.b16 %v2232, %v2224
        %v2849 = vpack.c.b16 %v2233, %v2225
        %v2850 = vpack.c.b16 %v2234, %v2226
        %v2851 = vpack.c.b16 %v2235, %v2227
        %v2852 = vpack.c.b16 %v2236, %v2228
        %v2853 = vpack.c.b16 %v2237, %v2229
        %v2854 = vpack.c.b16 %v2238, %v2230
        %v2855 = vpack.c.b16 %v2247, %v2239
        %v2856 = vpack.c.b16 %v2248, %v2240
        %v2857 = vpack.c.b16 %v2249, %v2241
        %v2858 = vpack.c.b16 %v2250, %v2242
        %v2859 = vpack.c.b16 %v2251, %v2243
        %v2860 = vpack.c.b16 %v2252, %v2244
        %v2861 = vpack.c.b16 %v2253, %v2245
        %v2862 = vpack.c.b16 %v2254, %v2246
        %v2863 = vpack.c.b16 %v2263, %v2255
        %v2864 = vpack.c.b16 %v2264, %v2256
        %v2865 = vpack.c.b16 %v2265, %v2257
        %v2866 = vpack.c.b16 %v2266, %v2258
        %v2867 = vpack.c.b16 %v2267, %v2259
        %v2868 = vpack.c.b16 %v2268, %v2260
        %v2869 = vpack.c.b16 %v2269, %v2261
        %v2870 = vpack.c.b16 %v2270, %v2262
        %v2871 = vpack.c.b16 %v2279, %v2271
        %v2872 = vpack.c.b16 %v2280, %v2272
        %v2873 = vpack.c.b16 %v2281, %v2273
        %v2874 = vpack.c.b16 %v2282, %v2274
        %v2875 = vpack.c.b16 %v2283, %v2275
        %v2876 = vpack.c.b16 %v2284, %v2276
        %v2877 = vpack.c.b16 %v2285, %v2277
        %v2878 = vpack.c.b16 %v2286, %v2278
        %v2879 = vpack.c.b16 %v2295, %v2287
        %v2880 = vpack.c.b16 %v2296, %v2288
        %v2881 = vpack.c.b16 %v2297, %v2289
        %v2882 = vpack.c.b16 %v2298, %v2290
        %v2883 = vpack.c.b16 %v2299, %v2291
        %v2884 = vpack.c.b16 %v2300, %v2292
        %v2885 = vpack.c.b16 %v2301, %v2293
        %v2886 = vpack.c.b16 %v2302, %v2294
        %v2887 = vpack.c.b16 %v2311, %v2303
        %v2888 = vpack.c.b16 %v2312, %v2304
        %v2889 = vpack.c.b16 %v2313, %v2305
        %v2890 = vpack.c.b16 %v2314, %v2306
        %v2891 = vpack.c.b16 %v2315, %v2307
        %v2892 = vpack.c.b16 %v2316, %v2308
        %v2893 = vpack.c.b16 %v2317, %v2309
        %v2894 = vpack.c.b16 %v2318, %v2310
        %v2895 = vpack.c.b16 %v2327, %v2319
        %v2896 = vpack.c.b16 %v2328, %v2320
        %v2897 = vpack.c.b16 %v2329, %v2321
        %v2898 = vpack.c.b16 %v2330, %v2322
        %v2899 = vpack.c.b16 %v2331, %v2323
        %v2900 = vpack.c.b16 %v2332, %v2324
        %v2901 = vpack.c.b16 %v2333, %v2325
        %v2902 = vpack.c.b16 %v2334, %v2326
        %v2903 = vpack.c.b16 %v2343, %v2335
        %v2904 = vpack.c.b16 %v2344, %v2336
        %v2905 = vpack.c.b16 %v2345, %v2337
        %v2906 = vpack.c.b16 %v2346, %v2338
        %v2907 = vpack.c.b16 %v2347, %v2339
        %v2908 = vpack.c.b16 %v2348, %v2340
        %v2909 = vpack.c.b16 %v2349, %v2341
        %v2910 = vpack.c.b16 %v2350, %v2342
        %v2911 = vpack.c.b16 %v2359, %v2351
        %v2912 = vpack.c.b16 %v2360, %v2352
        %v2913 = vpack.c.b16 %v2361, %v2353
        %v2914 = vpack.c.b16 %v2362, %v2354
        %v2915 = vpack.c.b16 %v2363, %v2355
        %v2916 = vpack.c.b16 %v2364, %v2356
        %v2917 = vpack.c.b16 %v2365, %v2357
        %v2918 = vpack.c.b16 %v2366, %v2358
        %v2919 = vpack.c.b16 %v2375, %v2367
        %v2920 = vpack.c.b16 %v2376, %v2368
        %v2921 = vpack.c.b16 %v2377, %v2369
        %v2922 = vpack.c.b16 %v2378, %v2370
        %v2923 = vpack.c.b16 %v2379, %v2371
        %v2924 = vpack.c.b16 %v2380, %v2372
        %v2925 = vpack.c.b16 %v2381, %v2373
        %v2926 = vpack.c.b16 %v2382, %v2374
        %v2927 = vpack.c.b16 %v2391, %v2383
        %v2928 = vpack.c.b16 %v2392, %v2384
        %v2929 = vpack.c.b16 %v2393, %v2385
        %v2930 = vpack.c.b16 %v2394, %v2386
        %v2931 = vpack.c.b16 %v2395, %v2387
        %v2932 = vpack.c.b16 %v2396, %v2388
        %v2933 = vpack.c.b16 %v2397, %v2389
        %v2934 = vpack.c.b16 %v2398, %v2390
        %v2935 = vpack.c.b16 %v2407, %v2399
        %v2936 = vpack.c.b16 %v2408, %v2400
        %v2937 = vpack.c.b16 %v2409, %v2401
        %v2938 = vpack.c.b16 %v2410, %v2402
        %v2939 = vpack.c.b16 %v2411, %v2403
        %v2940 = vpack.c.b16 %v2412, %v2404
        %v2941 = vpack.c.b16 %v2413, %v2405
        %v2942 = vpack.c.b16 %v2414, %v2406
        %v2943 = vpack.c.b16 %v2423, %v2415
        %v2944 = vpack.c.b16 %v2424, %v2416
        %v2945 = vpack.c.b16 %v2425, %v2417
        %v2946 = vpack.c.b16 %v2426, %v2418
        %v2947 = vpack.c.b16 %v2427, %v2419
        %v2948 = vpack.c.b16 %v2428, %v2420
        %v2949 = vpack.c.b16 %v2429, %v2421
        %v2950 = vpack.c.b16 %v2430, %v2422
        %v2951 = vpack.c.b16 %v2439, %v2431
        %v2952 = vpack.c.b16 %v2440, %v2432
        %v2953 = vpack.c.b16 %v2441, %v2433
        %v2954 = vpack.c.b16 %v2442, %v2434
        %v2955 = vpack.c.b16 %v2443, %v2435
        %v2956 = vpack.c.b16 %v2444, %v2436
        %v2957 = vpack.c.b16 %v2445, %v2437
        %v2958 = vpack.c.b16 %v2446, %v2438
        %3471 = vmatprep.subr.bf16.mxu0 %v2448
        %3472 = vmatpush1.bf16.msra.mxu0 %v2447
        %3473 = vmatprep.subr.bf16.mxu0 %v2456
        %3474 = vmatpush1.bf16.msra.mxu0 %v2455
        %3475 = vmatprep.subr.bf16.mxu0 %v2464
        %3476 = vmatpush1.bf16.msra.mxu0 %v2463
        %3477 = vmatprep.subr.bf16.mxu0 %v2472
        %3478 = vmatpush1.bf16.msra.mxu0 %v2471
        %3479 = vmatprep.subr.bf16.mxu0 %v2480
        %3480 = vmatpush1.bf16.msra.mxu0 %v2479
        %3481 = vmatprep.subr.bf16.mxu0 %v2488
        %3482 = vmatpush1.bf16.msra.mxu0 %v2487
        %3483 = vmatprep.subr.bf16.mxu0 %v2496
        %3484 = vmatpush1.bf16.msra.mxu0 %v2495
        %3485 = vmatprep.subr.bf16.mxu0 %v2504
        %3486 = vmatpush1.bf16.msra.mxu0 %v2503
        %3487 = vmatprep.subr.bf16.mxu0 %v2512
        %3488 = vmatpush1.bf16.msra.mxu0 %v2511
        %3489 = vmatprep.subr.bf16.mxu0 %v2520
        %3490 = vmatpush1.bf16.msra.mxu0 %v2519
        %3491 = vmatprep.subr.bf16.mxu0 %v2528
        %3492 = vmatpush1.bf16.msra.mxu0 %v2527
        %3493 = vmatprep.subr.bf16.mxu0 %v2536
        %3494 = vmatpush1.bf16.msra.mxu0 %v2535
        %3495 = vmatprep.subr.bf16.mxu0 %v2544
        %3496 = vmatpush1.bf16.msra.mxu0 %v2543
        %3497 = vmatprep.subr.bf16.mxu0 %v2552
        %3498 = vmatpush1.bf16.msra.mxu0 %v2551
        %3499 = vmatprep.subr.bf16.mxu0 %v2560
        %3500 = vmatpush1.bf16.msra.mxu0 %v2559
        %3501 = vmatprep.subr.bf16.mxu0 %v2568
        %3502 = vmatpush1.bf16.msra.mxu0 %v2567
        %3503 = vmatprep.mubr.bf16.mxu0 %v896
        %3504 = vmatmul.mubr.bf16.gmra.mrb[0].mxu0 %v895
        %v3505 = vpop.f32.mrb[0].mxu0
        %v3506 = vadd.f32 0.0, %v3505
        %v3507 = vpop.f32.mrb[0].mxu0
        %v3508 = vadd.f32 0.0, %v3507
        %v3509 = vpop.f32.mrb[0].mxu0
        %v3510 = vadd.f32 0.0, %v3509
        %v3511 = vpop.f32.mrb[0].mxu0
        %v3512 = vadd.f32 0.0, %v3511
        %3513 = vdwg.mxu0
        %3514 = vmatprep.subr.bf16.mxu0 %v2576
        %3515 = vmatpush1.bf16.msra.mxu0 %v2575
        %3516 = vmatprep.subr.bf16.mxu0 %v2584
        %3517 = vmatpush1.bf16.msra.mxu0 %v2583
        %3518 = vmatprep.subr.bf16.mxu0 %v2592
        %3519 = vmatpush1.bf16.msra.mxu0 %v2591
        %3520 = vmatprep.subr.bf16.mxu0 %v2600
        %3521 = vmatpush1.bf16.msra.mxu0 %v2599
        %3522 = vmatprep.subr.bf16.mxu0 %v2608
        %3523 = vmatpush1.bf16.msra.mxu0 %v2607
        %3524 = vmatprep.subr.bf16.mxu0 %v2616
        %3525 = vmatpush1.bf16.msra.mxu0 %v2615
        %3526 = vmatprep.subr.bf16.mxu0 %v2624
        %3527 = vmatpush1.bf16.msra.mxu0 %v2623
        %3528 = vmatprep.subr.bf16.mxu0 %v2632
        %3529 = vmatpush1.bf16.msra.mxu0 %v2631
        %3530 = vmatprep.subr.bf16.mxu0 %v2640
        %3531 = vmatpush1.bf16.msra.mxu0 %v2639
        %3532 = vmatprep.subr.bf16.mxu0 %v2648
        %3533 = vmatpush1.bf16.msra.mxu0 %v2647
        %3534 = vmatprep.subr.bf16.mxu0 %v2656
        %3535 = vmatpush1.bf16.msra.mxu0 %v2655
        %3536 = vmatprep.subr.bf16.mxu0 %v2664
        %3537 = vmatpush1.bf16.msra.mxu0 %v2663
        %3538 = vmatprep.subr.bf16.mxu0 %v2672
        %3539 = vmatpush1.bf16.msra.mxu0 %v2671
        %3540 = vmatprep.subr.bf16.mxu0 %v2680
        %3541 = vmatpush1.bf16.msra.mxu0 %v2679
        %3542 = vmatprep.subr.bf16.mxu0 %v2688
        %3543 = vmatpush1.bf16.msra.mxu0 %v2687
        %3544 = vmatprep.subr.bf16.mxu0 %v2696
        %3545 = vmatpush1.bf16.msra.mxu0 %v2695
        %3546 = vmatprep.mubr.bf16.mxu0 %v898
        %3547 = vmatmul.mubr.bf16.gmra.mrb[0].mxu0 %v897
        %v3548 = vpop.f32.mrb[0].mxu0
        %v3549 = vadd.f32 %v3506, %v3548
        %v3550 = vpop.f32.mrb[0].mxu0
        %v3551 = vadd.f32 %v3508, %v3550
        %v3552 = vpop.f32.mrb[0].mxu0
        %v3553 = vadd.f32 %v3510, %v3552
        %v3554 = vpop.f32.mrb[0].mxu0
        %v3555 = vadd.f32 %v3512, %v3554
        %3556 = vdwg.mxu0
        %3557 = vmatprep.subr.bf16.mxu0 %v2704
        %3558 = vmatpush1.bf16.msra.mxu0 %v2703
        %3559 = vmatprep.subr.bf16.mxu0 %v2712
        %3560 = vmatpush1.bf16.msra.mxu0 %v2711
        %3561 = vmatprep.subr.bf16.mxu0 %v2720
        %3562 = vmatpush1.bf16.msra.mxu0 %v2719
        %3563 = vmatprep.subr.bf16.mxu0 %v2728
        %3564 = vmatpush1.bf16.msra.mxu0 %v2727
        %3565 = vmatprep.subr.bf16.mxu0 %v2736
        %3566 = vmatpush1.bf16.msra.mxu0 %v2735
        %3567 = vmatprep.subr.bf16.mxu0 %v2744
        %3568 = vmatpush1.bf16.msra.mxu0 %v2743
        %3569 = vmatprep.subr.bf16.mxu0 %v2752
        %3570 = vmatpush1.bf16.msra.mxu0 %v2751
        %3571 = vmatprep.subr.bf16.mxu0 %v2760
        %3572 = vmatpush1.bf16.msra.mxu0 %v2759
        %3573 = vmatprep.subr.bf16.mxu0 %v2768
        %3574 = vmatpush1.bf16.msra.mxu0 %v2767
        %3575 = vmatprep.subr.bf16.mxu0 %v2776
        %3576 = vmatpush1.bf16.msra.mxu0 %v2775
        %3577 = vmatprep.subr.bf16.mxu0 %v2784
        %3578 = vmatpush1.bf16.msra.mxu0 %v2783
        %3579 = vmatprep.subr.bf16.mxu0 %v2792
        %3580 = vmatpush1.bf16.msra.mxu0 %v2791
        %3581 = vmatprep.subr.bf16.mxu0 %v2800
        %3582 = vmatpush1.bf16.msra.mxu0 %v2799
        %3583 = vmatprep.subr.bf16.mxu0 %v2808
        %3584 = vmatpush1.bf16.msra.mxu0 %v2807
        %3585 = vmatprep.subr.bf16.mxu0 %v2816
        %3586 = vmatpush1.bf16.msra.mxu0 %v2815
        %3587 = vmatprep.subr.bf16.mxu0 %v2824
        %3588 = vmatpush1.bf16.msra.mxu0 %v2823
        %3589 = vmatprep.mubr.bf16.mxu0 %v900
        %3590 = vmatmul.mubr.bf16.gmra.mrb[0].mxu0 %v899
        %v3591 = vpop.f32.mrb[0].mxu0
        %v3592 = vadd.f32 %v3549, %v3591
        %v3593 = vpop.f32.mrb[0].mxu0
        %v3594 = vadd.f32 %v3551, %v3593
        %v3595 = vpop.f32.mrb[0].mxu0
        %v3596 = vadd.f32 %v3553, %v3595
        %v3597 = vpop.f32.mrb[0].mxu0
        %v3598 = vadd.f32 %v3555, %v3597
        %3599 = vdwg.mxu0
        %3600 = vmatprep.subr.bf16.mxu0 %v2832
        %3601 = vmatpush1.bf16.msra.mxu0 %v2831
        %3602 = vmatprep.subr.bf16.mxu0 %v2840
        %3603 = vmatpush1.bf16.msra.mxu0 %v2839
        %3604 = vmatprep.subr.bf16.mxu0 %v2848
        %3605 = vmatpush1.bf16.msra.mxu0 %v2847
        %3606 = vmatprep.subr.bf16.mxu0 %v2856
        %3607 = vmatpush1.bf16.msra.mxu0 %v2855
        %3608 = vmatprep.subr.bf16.mxu0 %v2864
        %3609 = vmatpush1.bf16.msra.mxu0 %v2863
        %3610 = vmatprep.subr.bf16.mxu0 %v2872
        %3611 = vmatpush1.bf16.msra.mxu0 %v2871
        %3612 = vmatprep.subr.bf16.mxu0 %v2880
        %3613 = vmatpush1.bf16.msra.mxu0 %v2879
        %3614 = vmatprep.subr.bf16.mxu0 %v2888
        %3615 = vmatpush1.bf16.msra.mxu0 %v2887
        %3616 = vmatprep.subr.bf16.mxu0 %v2896
        %3617 = vmatpush1.bf16.msra.mxu0 %v2895
        %3618 = vmatprep.subr.bf16.mxu0 %v2904
        %3619 = vmatpush1.bf16.msra.mxu0 %v2903
        %3620 = vmatprep.subr.bf16.mxu0 %v2912
        %3621 = vmatpush1.bf16.msra.mxu0 %v2911
        %3622 = vmatprep.subr.bf16.mxu0 %v2920
        %3623 = vmatpush1.bf16.msra.mxu0 %v2919
        %3624 = vmatprep.subr.bf16.mxu0 %v2928
        %3625 = vmatpush1.bf16.msra.mxu0 %v2927
        %3626 = vmatprep.subr.bf16.mxu0 %v2936
        %3627 = vmatpush1.bf16.msra.mxu0 %v2935
        %3628 = vmatprep.subr.bf16.mxu0 %v2944
        %3629 = vmatpush1.bf16.msra.mxu0 %v2943
        %3630 = vmatprep.subr.bf16.mxu0 %v2952
        %3631 = vmatpush1.bf16.msra.mxu0 %v2951
        %3632 = vmatprep.mubr.bf16.mxu0 %v902
        %3633 = vmatmul.mubr.bf16.gmra.mrb[0].mxu0 %v901
        %v3634 = vpop.f32.mrb[0].mxu0
        %v3635 = vadd.f32 %v3592, %v3634
        %v3636 = vpop.f32.mrb[0].mxu0
        %v3637 = vadd.f32 %v3594, %v3636
        %v3638 = vpop.f32.mrb[0].mxu0
        %v3639 = vadd.f32 %v3596, %v3638
        %v3640 = vpop.f32.mrb[0].mxu0
        %v3641 = vadd.f32 %v3598, %v3640
        %3642 = vdwg.mxu0
        %3643 = vmatprep.subr.bf16.mxu0 %v2450
        %3644 = vmatpush1.bf16.msra.mxu0 %v2449
        %3645 = vmatprep.subr.bf16.mxu0 %v2458
        %3646 = vmatpush1.bf16.msra.mxu0 %v2457
        %3647 = vmatprep.subr.bf16.mxu0 %v2466
        %3648 = vmatpush1.bf16.msra.mxu0 %v2465
        %3649 = vmatprep.subr.bf16.mxu0 %v2474
        %3650 = vmatpush1.bf16.msra.mxu0 %v2473
        %3651 = vmatprep.subr.bf16.mxu0 %v2482
        %3652 = vmatpush1.bf16.msra.mxu0 %v2481
        %3653 = vmatprep.subr.bf16.mxu0 %v2490
        %3654 = vmatpush1.bf16.msra.mxu0 %v2489
        %3655 = vmatprep.subr.bf16.mxu0 %v2498
        %3656 = vmatpush1.bf16.msra.mxu0 %v2497
        %3657 = vmatprep.subr.bf16.mxu0 %v2506
        %3658 = vmatpush1.bf16.msra.mxu0 %v2505
        %3659 = vmatprep.subr.bf16.mxu0 %v2514
        %3660 = vmatpush1.bf16.msra.mxu0 %v2513
        %3661 = vmatprep.subr.bf16.mxu0 %v2522
        %3662 = vmatpush1.bf16.msra.mxu0 %v2521
        %3663 = vmatprep.subr.bf16.mxu0 %v2530
        %3664 = vmatpush1.bf16.msra.mxu0 %v2529
        %3665 = vmatprep.subr.bf16.mxu0 %v2538
        %3666 = vmatpush1.bf16.msra.mxu0 %v2537
        %3667 = vmatprep.subr.bf16.mxu0 %v2546
        %3668 = vmatpush1.bf16.msra.mxu0 %v2545
        %3669 = vmatprep.subr.bf16.mxu0 %v2554
        %3670 = vmatpush1.bf16.msra.mxu0 %v2553
        %3671 = vmatprep.subr.bf16.mxu0 %v2562
        %3672 = vmatpush1.bf16.msra.mxu0 %v2561
        %3673 = vmatprep.subr.bf16.mxu0 %v2570
        %3674 = vmatpush1.bf16.msra.mxu0 %v2569
        %3675 = vmatprep.mubr.bf16.mxu0 %v896
        %3676 = vmatmul.mubr.bf16.gmra.mrb[0].mxu0 %v895
        %v3677 = vpop.f32.mrb[0].mxu0
        %v3678 = vadd.f32 0.0, %v3677
        %v3679 = vpop.f32.mrb[0].mxu0
        %v3680 = vadd.f32 0.0, %v3679
        %v3681 = vpop.f32.mrb[0].mxu0
        %v3682 = vadd.f32 0.0, %v3681
        %v3683 = vpop.f32.mrb[0].mxu0
        %v3684 = vadd.f32 0.0, %v3683
        %3685 = vdwg.mxu0
        %3686 = vmatprep.subr.bf16.mxu0 %v2578
        %3687 = vmatpush1.bf16.msra.mxu0 %v2577
        %3688 = vmatprep.subr.bf16.mxu0 %v2586
        %3689 = vmatpush1.bf16.msra.mxu0 %v2585
        %3690 = vmatprep.subr.bf16.mxu0 %v2594
        %3691 = vmatpush1.bf16.msra.mxu0 %v2593
        %3692 = vmatprep.subr.bf16.mxu0 %v2602
        %3693 = vmatpush1.bf16.msra.mxu0 %v2601
        %3694 = vmatprep.subr.bf16.mxu0 %v2610
        %3695 = vmatpush1.bf16.msra.mxu0 %v2609
        %3696 = vmatprep.subr.bf16.mxu0 %v2618
        %3697 = vmatpush1.bf16.msra.mxu0 %v2617
        %3698 = vmatprep.subr.bf16.mxu0 %v2626
        %3699 = vmatpush1.bf16.msra.mxu0 %v2625
        %3700 = vmatprep.subr.bf16.mxu0 %v2634
        %3701 = vmatpush1.bf16.msra.mxu0 %v2633
        %3702 = vmatprep.subr.bf16.mxu0 %v2642
        %3703 = vmatpush1.bf16.msra.mxu0 %v2641
        %3704 = vmatprep.subr.bf16.mxu0 %v2650
        %3705 = vmatpush1.bf16.msra.mxu0 %v2649
        %3706 = vmatprep.subr.bf16.mxu0 %v2658
        %3707 = vmatpush1.bf16.msra.mxu0 %v2657
        %3708 = vmatprep.subr.bf16.mxu0 %v2666
        %3709 = vmatpush1.bf16.msra.mxu0 %v2665
        %3710 = vmatprep.subr.bf16.mxu0 %v2674
        %3711 = vmatpush1.bf16.msra.mxu0 %v2673
        %3712 = vmatprep.subr.bf16.mxu0 %v2682
        %3713 = vmatpush1.bf16.msra.mxu0 %v2681
        %3714 = vmatprep.subr.bf16.mxu0 %v2690
        %3715 = vmatpush1.bf16.msra.mxu0 %v2689
        %3716 = vmatprep.subr.bf16.mxu0 %v2698
        %3717 = vmatpush1.bf16.msra.mxu0 %v2697
        %3718 = vmatprep.mubr.bf16.mxu0 %v898
        %3719 = vmatmul.mubr.bf16.gmra.mrb[0].mxu0 %v897
        %v3720 = vpop.f32.mrb[0].mxu0
        %v3721 = vadd.f32 %v3678, %v3720
        %v3722 = vpop.f32.mrb[0].mxu0
        %v3723 = vadd.f32 %v3680, %v3722
        %v3724 = vpop.f32.mrb[0].mxu0
        %v3725 = vadd.f32 %v3682, %v3724
        %v3726 = vpop.f32.mrb[0].mxu0
        %v3727 = vadd.f32 %v3684, %v3726
        %3728 = vdwg.mxu0
        %3729 = vmatprep.subr.bf16.mxu0 %v2706
        %3730 = vmatpush1.bf16.msra.mxu0 %v2705
        %3731 = vmatprep.subr.bf16.mxu0 %v2714
        %3732 = vmatpush1.bf16.msra.mxu0 %v2713
        %3733 = vmatprep.subr.bf16.mxu0 %v2722
        %3734 = vmatpush1.bf16.msra.mxu0 %v2721
        %3735 = vmatprep.subr.bf16.mxu0 %v2730
        %3736 = vmatpush1.bf16.msra.mxu0 %v2729
        %3737 = vmatprep.subr.bf16.mxu0 %v2738
        %3738 = vmatpush1.bf16.msra.mxu0 %v2737
        %3739 = vmatprep.subr.bf16.mxu0 %v2746
        %3740 = vmatpush1.bf16.msra.mxu0 %v2745
        %3741 = vmatprep.subr.bf16.mxu0 %v2754
        %3742 = vmatpush1.bf16.msra.mxu0 %v2753
        %3743 = vmatprep.subr.bf16.mxu0 %v2762
        %3744 = vmatpush1.bf16.msra.mxu0 %v2761
        %3745 = vmatprep.subr.bf16.mxu0 %v2770
        %3746 = vmatpush1.bf16.msra.mxu0 %v2769
        %3747 = vmatprep.subr.bf16.mxu0 %v2778
        %3748 = vmatpush1.bf16.msra.mxu0 %v2777
        %3749 = vmatprep.subr.bf16.mxu0 %v2786
        %3750 = vmatpush1.bf16.msra.mxu0 %v2785
        %3751 = vmatprep.subr.bf16.mxu0 %v2794
        %3752 = vmatpush1.bf16.msra.mxu0 %v2793
        %3753 = vmatprep.subr.bf16.mxu0 %v2802
        %3754 = vmatpush1.bf16.msra.mxu0 %v2801
        %3755 = vmatprep.subr.bf16.mxu0 %v2810
        %3756 = vmatpush1.bf16.msra.mxu0 %v2809
        %3757 = vmatprep.subr.bf16.mxu0 %v2818
        %3758 = vmatpush1.bf16.msra.mxu0 %v2817
        %3759 = vmatprep.subr.bf16.mxu0 %v2826
        %3760 = vmatpush1.bf16.msra.mxu0 %v2825
        %3761 = vmatprep.mubr.bf16.mxu0 %v900
        %3762 = vmatmul.mubr.bf16.gmra.mrb[0].mxu0 %v899
        %v3763 = vpop.f32.mrb[0].mxu0
        %v3764 = vadd.f32 %v3721, %v3763
        %v3765 = vpop.f32.mrb[0].mxu0
        %v3766 = vadd.f32 %v3723, %v3765
        %v3767 = vpop.f32.mrb[0].mxu0
        %v3768 = vadd.f32 %v3725, %v3767
        %v3769 = vpop.f32.mrb[0].mxu0
        %v3770 = vadd.f32 %v3727, %v3769
        %3771 = vdwg.mxu0
        %3772 = vmatprep.subr.bf16.mxu0 %v2834
        %3773 = vmatpush1.bf16.msra.mxu0 %v2833
        %3774 = vmatprep.subr.bf16.mxu0 %v2842
        %3775 = vmatpush1.bf16.msra.mxu0 %v2841
        %3776 = vmatprep.subr.bf16.mxu0 %v2850
        %3777 = vmatpush1.bf16.msra.mxu0 %v2849
        %3778 = vmatprep.subr.bf16.mxu0 %v2858
        %3779 = vmatpush1.bf16.msra.mxu0 %v2857
        %3780 = vmatprep.subr.bf16.mxu0 %v2866
        %3781 = vmatpush1.bf16.msra.mxu0 %v2865
        %3782 = vmatprep.subr.bf16.mxu0 %v2874
        %3783 = vmatpush1.bf16.msra.mxu0 %v2873
        %3784 = vmatprep.subr.bf16.mxu0 %v2882
        %3785 = vmatpush1.bf16.msra.mxu0 %v2881
        %3786 = vmatprep.subr.bf16.mxu0 %v2890
        %3787 = vmatpush1.bf16.msra.mxu0 %v2889
        %3788 = vmatprep.subr.bf16.mxu0 %v2898
        %3789 = vmatpush1.bf16.msra.mxu0 %v2897
        %3790 = vmatprep.subr.bf16.mxu0 %v2906
        %3791 = vmatpush1.bf16.msra.mxu0 %v2905
        %3792 = vmatprep.subr.bf16.mxu0 %v2914
        %3793 = vmatpush1.bf16.msra.mxu0 %v2913
        %3794 = vmatprep.subr.bf16.mxu0 %v2922
        %3795 = vmatpush1.bf16.msra.mxu0 %v2921
        %3796 = vmatprep.subr.bf16.mxu0 %v2930
        %3797 = vmatpush1.bf16.msra.mxu0 %v2929
        %3798 = vmatprep.subr.bf16.mxu0 %v2938
        %3799 = vmatpush1.bf16.msra.mxu0 %v2937
        %3800 = vmatprep.subr.bf16.mxu0 %v2946
        %3801 = vmatpush1.bf16.msra.mxu0 %v2945
        %3802 = vmatprep.subr.bf16.mxu0 %v2954
        %3803 = vmatpush1.bf16.msra.mxu0 %v2953
        %3804 = vmatprep.mubr.bf16.mxu0 %v902
        %3805 = vmatmul.mubr.bf16.gmra.mrb[0].mxu0 %v901
        %v3806 = vpop.f32.mrb[0].mxu0
        %v3807 = vadd.f32 %v3764, %v3806
        %v3808 = vpop.f32.mrb[0].mxu0
        %v3809 = vadd.f32 %v3766, %v3808
        %v3810 = vpop.f32.mrb[0].mxu0
        %v3811 = vadd.f32 %v3768, %v3810
        %v3812 = vpop.f32.mrb[0].mxu0
        %v3813 = vadd.f32 %v3770, %v3812
        %3814 = vdwg.mxu0
        %3815 = vmatprep.subr.bf16.mxu0 %v2452
        %3816 = vmatpush1.bf16.msra.mxu0 %v2451
        %3817 = vmatprep.subr.bf16.mxu0 %v2460
        %3818 = vmatpush1.bf16.msra.mxu0 %v2459
        %3819 = vmatprep.subr.bf16.mxu0 %v2468
        %3820 = vmatpush1.bf16.msra.mxu0 %v2467
        %3821 = vmatprep.subr.bf16.mxu0 %v2476
        %3822 = vmatpush1.bf16.msra.mxu0 %v2475
        %3823 = vmatprep.subr.bf16.mxu0 %v2484
        %3824 = vmatpush1.bf16.msra.mxu0 %v2483
        %3825 = vmatprep.subr.bf16.mxu0 %v2492
        %3826 = vmatpush1.bf16.msra.mxu0 %v2491
        %3827 = vmatprep.subr.bf16.mxu0 %v2500
        %3828 = vmatpush1.bf16.msra.mxu0 %v2499
        %3829 = vmatprep.subr.bf16.mxu0 %v2508
        %3830 = vmatpush1.bf16.msra.mxu0 %v2507
        %3831 = vmatprep.subr.bf16.mxu0 %v2516
        %3832 = vmatpush1.bf16.msra.mxu0 %v2515
        %3833 = vmatprep.subr.bf16.mxu0 %v2524
        %3834 = vmatpush1.bf16.msra.mxu0 %v2523
        %3835 = vmatprep.subr.bf16.mxu0 %v2532
        %3836 = vmatpush1.bf16.msra.mxu0 %v2531
        %3837 = vmatprep.subr.bf16.mxu0 %v2540
        %3838 = vmatpush1.bf16.msra.mxu0 %v2539
        %3839 = vmatprep.subr.bf16.mxu0 %v2548
        %3840 = vmatpush1.bf16.msra.mxu0 %v2547
        %3841 = vmatprep.subr.bf16.mxu0 %v2556
        %3842 = vmatpush1.bf16.msra.mxu0 %v2555
        %3843 = vmatprep.subr.bf16.mxu0 %v2564
        %3844 = vmatpush1.bf16.msra.mxu0 %v2563
        %3845 = vmatprep.subr.bf16.mxu0 %v2572
        %3846 = vmatpush1.bf16.msra.mxu0 %v2571
        %3847 = vmatprep.mubr.bf16.mxu0 %v896
        %3848 = vmatmul.mubr.bf16.gmra.mrb[0].mxu0 %v895
        %v3849 = vpop.f32.mrb[0].mxu0
        %v3850 = vadd.f32 0.0, %v3849
        %v3851 = vpop.f32.mrb[0].mxu0
        %v3852 = vadd.f32 0.0, %v3851
        %v3853 = vpop.f32.mrb[0].mxu0
        %v3854 = vadd.f32 0.0, %v3853
        %v3855 = vpop.f32.mrb[0].mxu0
        %v3856 = vadd.f32 0.0, %v3855
        %3857 = vdwg.mxu0
        %3858 = vmatprep.subr.bf16.mxu0 %v2580
        %3859 = vmatpush1.bf16.msra.mxu0 %v2579
        %3860 = vmatprep.subr.bf16.mxu0 %v2588
        %3861 = vmatpush1.bf16.msra.mxu0 %v2587
        %3862 = vmatprep.subr.bf16.mxu0 %v2596
        %3863 = vmatpush1.bf16.msra.mxu0 %v2595
        %3864 = vmatprep.subr.bf16.mxu0 %v2604
        %3865 = vmatpush1.bf16.msra.mxu0 %v2603
        %3866 = vmatprep.subr.bf16.mxu0 %v2612
        %3867 = vmatpush1.bf16.msra.mxu0 %v2611
        %3868 = vmatprep.subr.bf16.mxu0 %v2620
        %3869 = vmatpush1.bf16.msra.mxu0 %v2619
        %3870 = vmatprep.subr.bf16.mxu0 %v2628
        %3871 = vmatpush1.bf16.msra.mxu0 %v2627
        %3872 = vmatprep.subr.bf16.mxu0 %v2636
        %3873 = vmatpush1.bf16.msra.mxu0 %v2635
        %3874 = vmatprep.subr.bf16.mxu0 %v2644
        %3875 = vmatpush1.bf16.msra.mxu0 %v2643
        %3876 = vmatprep.subr.bf16.mxu0 %v2652
        %3877 = vmatpush1.bf16.msra.mxu0 %v2651
        %3878 = vmatprep.subr.bf16.mxu0 %v2660
        %3879 = vmatpush1.bf16.msra.mxu0 %v2659
        %3880 = vmatprep.subr.bf16.mxu0 %v2668
        %3881 = vmatpush1.bf16.msra.mxu0 %v2667
        %3882 = vmatprep.subr.bf16.mxu0 %v2676
        %3883 = vmatpush1.bf16.msra.mxu0 %v2675
        %3884 = vmatprep.subr.bf16.mxu0 %v2684
        %3885 = vmatpush1.bf16.msra.mxu0 %v2683
        %3886 = vmatprep.subr.bf16.mxu0 %v2692
        %3887 = vmatpush1.bf16.msra.mxu0 %v2691
        %3888 = vmatprep.subr.bf16.mxu0 %v2700
        %3889 = vmatpush1.bf16.msra.mxu0 %v2699
        %3890 = vmatprep.mubr.bf16.mxu0 %v898
        %3891 = vmatmul.mubr.bf16.gmra.mrb[0].mxu0 %v897
        %v3892 = vpop.f32.mrb[0].mxu0
        %v3893 = vadd.f32 %v3850, %v3892
        %v3894 = vpop.f32.mrb[0].mxu0
        %v3895 = vadd.f32 %v3852, %v3894
        %v3896 = vpop.f32.mrb[0].mxu0
        %v3897 = vadd.f32 %v3854, %v3896
        %v3898 = vpop.f32.mrb[0].mxu0
        %v3899 = vadd.f32 %v3856, %v3898
        %3900 = vdwg.mxu0
        %3901 = vmatprep.subr.bf16.mxu0 %v2708
        %3902 = vmatpush1.bf16.msra.mxu0 %v2707
        %3903 = vmatprep.subr.bf16.mxu0 %v2716
        %3904 = vmatpush1.bf16.msra.mxu0 %v2715
        %3905 = vmatprep.subr.bf16.mxu0 %v2724
        %3906 = vmatpush1.bf16.msra.mxu0 %v2723
        %3907 = vmatprep.subr.bf16.mxu0 %v2732
        %3908 = vmatpush1.bf16.msra.mxu0 %v2731
        %3909 = vmatprep.subr.bf16.mxu0 %v2740
        %3910 = vmatpush1.bf16.msra.mxu0 %v2739
        %3911 = vmatprep.subr.bf16.mxu0 %v2748
        %3912 = vmatpush1.bf16.msra.mxu0 %v2747
        %3913 = vmatprep.subr.bf16.mxu0 %v2756
        %3914 = vmatpush1.bf16.msra.mxu0 %v2755
        %3915 = vmatprep.subr.bf16.mxu0 %v2764
        %3916 = vmatpush1.bf16.msra.mxu0 %v2763
        %3917 = vmatprep.subr.bf16.mxu0 %v2772
        %3918 = vmatpush1.bf16.msra.mxu0 %v2771
        %3919 = vmatprep.subr.bf16.mxu0 %v2780
        %3920 = vmatpush1.bf16.msra.mxu0 %v2779
        %3921 = vmatprep.subr.bf16.mxu0 %v2788
        %3922 = vmatpush1.bf16.msra.mxu0 %v2787
        %3923 = vmatprep.subr.bf16.mxu0 %v2796
        %3924 = vmatpush1.bf16.msra.mxu0 %v2795
        %3925 = vmatprep.subr.bf16.mxu0 %v2804
        %3926 = vmatpush1.bf16.msra.mxu0 %v2803
        %3927 = vmatprep.subr.bf16.mxu0 %v2812
        %3928 = vmatpush1.bf16.msra.mxu0 %v2811
        %3929 = vmatprep.subr.bf16.mxu0 %v2820
        %3930 = vmatpush1.bf16.msra.mxu0 %v2819
        %3931 = vmatprep.subr.bf16.mxu0 %v2828
        %3932 = vmatpush1.bf16.msra.mxu0 %v2827
        %3933 = vmatprep.mubr.bf16.mxu0 %v900
        %3934 = vmatmul.mubr.bf16.gmra.mrb[0].mxu0 %v899
        %v3935 = vpop.f32.mrb[0].mxu0
        %v3936 = vadd.f32 %v3893, %v3935
        %v3937 = vpop.f32.mrb[0].mxu0
        %v3938 = vadd.f32 %v3895, %v3937
        %v3939 = vpop.f32.mrb[0].mxu0
        %v3940 = vadd.f32 %v3897, %v3939
        %v3941 = vpop.f32.mrb[0].mxu0
        %v3942 = vadd.f32 %v3899, %v3941
        %3943 = vdwg.mxu0
        %3944 = vmatprep.subr.bf16.mxu0 %v2836
        %3945 = vmatpush1.bf16.msra.mxu0 %v2835
        %3946 = vmatprep.subr.bf16.mxu0 %v2844
        %3947 = vmatpush1.bf16.msra.mxu0 %v2843
        %3948 = vmatprep.subr.bf16.mxu0 %v2852
        %3949 = vmatpush1.bf16.msra.mxu0 %v2851
        %3950 = vmatprep.subr.bf16.mxu0 %v2860
        %3951 = vmatpush1.bf16.msra.mxu0 %v2859
        %3952 = vmatprep.subr.bf16.mxu0 %v2868
        %3953 = vmatpush1.bf16.msra.mxu0 %v2867
        %3954 = vmatprep.subr.bf16.mxu0 %v2876
        %3955 = vmatpush1.bf16.msra.mxu0 %v2875
        %3956 = vmatprep.subr.bf16.mxu0 %v2884
        %3957 = vmatpush1.bf16.msra.mxu0 %v2883
        %3958 = vmatprep.subr.bf16.mxu0 %v2892
        %3959 = vmatpush1.bf16.msra.mxu0 %v2891
        %3960 = vmatprep.subr.bf16.mxu0 %v2900
        %3961 = vmatpush1.bf16.msra.mxu0 %v2899
        %3962 = vmatprep.subr.bf16.mxu0 %v2908
        %3963 = vmatpush1.bf16.msra.mxu0 %v2907
        %3964 = vmatprep.subr.bf16.mxu0 %v2916
        %3965 = vmatpush1.bf16.msra.mxu0 %v2915
        %3966 = vmatprep.subr.bf16.mxu0 %v2924
        %3967 = vmatpush1.bf16.msra.mxu0 %v2923
        %3968 = vmatprep.subr.bf16.mxu0 %v2932
        %3969 = vmatpush1.bf16.msra.mxu0 %v2931
        %3970 = vmatprep.subr.bf16.mxu0 %v2940
        %3971 = vmatpush1.bf16.msra.mxu0 %v2939
        %3972 = vmatprep.subr.bf16.mxu0 %v2948
        %3973 = vmatpush1.bf16.msra.mxu0 %v2947
        %3974 = vmatprep.subr.bf16.mxu0 %v2956
        %3975 = vmatpush1.bf16.msra.mxu0 %v2955
        %3976 = vmatprep.mubr.bf16.mxu0 %v902
        %3977 = vmatmul.mubr.bf16.gmra.mrb[0].mxu0 %v901
        %v3978 = vpop.f32.mrb[0].mxu0
        %v3979 = vadd.f32 %v3936, %v3978
        %v3980 = vpop.f32.mrb[0].mxu0
        %v3981 = vadd.f32 %v3938, %v3980
        %v3982 = vpop.f32.mrb[0].mxu0
        %v3983 = vadd.f32 %v3940, %v3982
        %v3984 = vpop.f32.mrb[0].mxu0
        %v3985 = vadd.f32 %v3942, %v3984
        %3986 = vdwg.mxu0
        %3987 = vmatprep.subr.bf16.mxu0 %v2454
        %3988 = vmatpush1.bf16.msra.mxu0 %v2453
        %3989 = vmatprep.subr.bf16.mxu0 %v2462
        %3990 = vmatpush1.bf16.msra.mxu0 %v2461
        %3991 = vmatprep.subr.bf16.mxu0 %v2470
        %3992 = vmatpush1.bf16.msra.mxu0 %v2469
        %3993 = vmatprep.subr.bf16.mxu0 %v2478
        %3994 = vmatpush1.bf16.msra.mxu0 %v2477
        %3995 = vmatprep.subr.bf16.mxu0 %v2486
        %3996 = vmatpush1.bf16.msra.mxu0 %v2485
        %3997 = vmatprep.subr.bf16.mxu0 %v2494
        %3998 = vmatpush1.bf16.msra.mxu0 %v2493
        %3999 = vmatprep.subr.bf16.mxu0 %v2502
        %4000 = vmatpush1.bf16.msra.mxu0 %v2501
        %4001 = vmatprep.subr.bf16.mxu0 %v2510
        %4002 = vmatpush1.bf16.msra.mxu0 %v2509
        %4003 = vmatprep.subr.bf16.mxu0 %v2518
        %4004 = vmatpush1.bf16.msra.mxu0 %v2517
        %4005 = vmatprep.subr.bf16.mxu0 %v2526
        %4006 = vmatpush1.bf16.msra.mxu0 %v2525
        %4007 = vmatprep.subr.bf16.mxu0 %v2534
        %4008 = vmatpush1.bf16.msra.mxu0 %v2533
        %4009 = vmatprep.subr.bf16.mxu0 %v2542
        %4010 = vmatpush1.bf16.msra.mxu0 %v2541
        %4011 = vmatprep.subr.bf16.mxu0 %v2550
        %4012 = vmatpush1.bf16.msra.mxu0 %v2549
        %4013 = vmatprep.subr.bf16.mxu0 %v2558
        %4014 = vmatpush1.bf16.msra.mxu0 %v2557
        %4015 = vmatprep.subr.bf16.mxu0 %v2566
        %4016 = vmatpush1.bf16.msra.mxu0 %v2565
        %4017 = vmatprep.subr.bf16.mxu0 %v2574
        %4018 = vmatpush1.bf16.msra.mxu0 %v2573
        %4019 = vmatprep.mubr.bf16.mxu0 %v896
        %4020 = vmatmul.mubr.bf16.gmra.mrb[0].mxu0 %v895
        %v4021 = vpop.f32.mrb[0].mxu0
        %v4022 = vadd.f32 0.0, %v4021
        %v4023 = vpop.f32.mrb[0].mxu0
        %v4024 = vadd.f32 0.0, %v4023
        %v4025 = vpop.f32.mrb[0].mxu0
        %v4026 = vadd.f32 0.0, %v4025
        %v4027 = vpop.f32.mrb[0].mxu0
        %v4028 = vadd.f32 0.0, %v4027
        %4029 = vdwg.mxu0
        %4030 = vmatprep.subr.bf16.mxu0 %v2582
        %4031 = vmatpush1.bf16.msra.mxu0 %v2581
        %4032 = vmatprep.subr.bf16.mxu0 %v2590
        %4033 = vmatpush1.bf16.msra.mxu0 %v2589
        %4034 = vmatprep.subr.bf16.mxu0 %v2598
        %4035 = vmatpush1.bf16.msra.mxu0 %v2597
        %4036 = vmatprep.subr.bf16.mxu0 %v2606
        %4037 = vmatpush1.bf16.msra.mxu0 %v2605
        %4038 = vmatprep.subr.bf16.mxu0 %v2614
        %4039 = vmatpush1.bf16.msra.mxu0 %v2613
        %4040 = vmatprep.subr.bf16.mxu0 %v2622
        %4041 = vmatpush1.bf16.msra.mxu0 %v2621
        %4042 = vmatprep.subr.bf16.mxu0 %v2630
        %4043 = vmatpush1.bf16.msra.mxu0 %v2629
        %4044 = vmatprep.subr.bf16.mxu0 %v2638
        %4045 = vmatpush1.bf16.msra.mxu0 %v2637
        %4046 = vmatprep.subr.bf16.mxu0 %v2646
        %4047 = vmatpush1.bf16.msra.mxu0 %v2645
        %4048 = vmatprep.subr.bf16.mxu0 %v2654
        %4049 = vmatpush1.bf16.msra.mxu0 %v2653
        %4050 = vmatprep.subr.bf16.mxu0 %v2662
        %4051 = vmatpush1.bf16.msra.mxu0 %v2661
        %4052 = vmatprep.subr.bf16.mxu0 %v2670
        %4053 = vmatpush1.bf16.msra.mxu0 %v2669
        %4054 = vmatprep.subr.bf16.mxu0 %v2678
        %4055 = vmatpush1.bf16.msra.mxu0 %v2677
        %4056 = vmatprep.subr.bf16.mxu0 %v2686
        %4057 = vmatpush1.bf16.msra.mxu0 %v2685
        %4058 = vmatprep.subr.bf16.mxu0 %v2694
        %4059 = vmatpush1.bf16.msra.mxu0 %v2693
        %4060 = vmatprep.subr.bf16.mxu0 %v2702
        %4061 = vmatpush1.bf16.msra.mxu0 %v2701
        %4062 = vmatprep.mubr.bf16.mxu0 %v898
        %4063 = vmatmul.mubr.bf16.gmra.mrb[0].mxu0 %v897
        %v4064 = vpop.f32.mrb[0].mxu0
        %v4065 = vadd.f32 %v4022, %v4064
        %v4066 = vpop.f32.mrb[0].mxu0
        %v4067 = vadd.f32 %v4024, %v4066
        %v4068 = vpop.f32.mrb[0].mxu0
        %v4069 = vadd.f32 %v4026, %v4068
        %v4070 = vpop.f32.mrb[0].mxu0
        %v4071 = vadd.f32 %v4028, %v4070
        %4072 = vdwg.mxu0
        %4073 = vmatprep.subr.bf16.mxu0 %v2710
        %4074 = vmatpush1.bf16.msra.mxu0 %v2709
        %4075 = vmatprep.subr.bf16.mxu0 %v2718
        %4076 = vmatpush1.bf16.msra.mxu0 %v2717
        %4077 = vmatprep.subr.bf16.mxu0 %v2726
        %4078 = vmatpush1.bf16.msra.mxu0 %v2725
        %4079 = vmatprep.subr.bf16.mxu0 %v2734
        %4080 = vmatpush1.bf16.msra.mxu0 %v2733
        %4081 = vmatprep.subr.bf16.mxu0 %v2742
        %4082 = vmatpush1.bf16.msra.mxu0 %v2741
        %4083 = vmatprep.subr.bf16.mxu0 %v2750
        %4084 = vmatpush1.bf16.msra.mxu0 %v2749
        %4085 = vmatprep.subr.bf16.mxu0 %v2758
        %4086 = vmatpush1.bf16.msra.mxu0 %v2757
        %4087 = vmatprep.subr.bf16.mxu0 %v2766
        %4088 = vmatpush1.bf16.msra.mxu0 %v2765
        %4089 = vmatprep.subr.bf16.mxu0 %v2774
        %4090 = vmatpush1.bf16.msra.mxu0 %v2773
        %4091 = vmatprep.subr.bf16.mxu0 %v2782
        %4092 = vmatpush1.bf16.msra.mxu0 %v2781
        %4093 = vmatprep.subr.bf16.mxu0 %v2790
        %4094 = vmatpush1.bf16.msra.mxu0 %v2789
        %4095 = vmatprep.subr.bf16.mxu0 %v2798
        %4096 = vmatpush1.bf16.msra.mxu0 %v2797
        %4097 = vmatprep.subr.bf16.mxu0 %v2806
        %4098 = vmatpush1.bf16.msra.mxu0 %v2805
        %4099 = vmatprep.subr.bf16.mxu0 %v2814
        %4100 = vmatpush1.bf16.msra.mxu0 %v2813
        %4101 = vmatprep.subr.bf16.mxu0 %v2822
        %4102 = vmatpush1.bf16.msra.mxu0 %v2821
        %4103 = vmatprep.subr.bf16.mxu0 %v2830
        %4104 = vmatpush1.bf16.msra.mxu0 %v2829
        %4105 = vmatprep.mubr.bf16.mxu0 %v900
        %4106 = vmatmul.mubr.bf16.gmra.mrb[0].mxu0 %v899
        %v4107 = vpop.f32.mrb[0].mxu0
        %v4108 = vadd.f32 %v4065, %v4107
        %v4109 = vpop.f32.mrb[0].mxu0
        %v4110 = vadd.f32 %v4067, %v4109
        %v4111 = vpop.f32.mrb[0].mxu0
        %v4112 = vadd.f32 %v4069, %v4111
        %v4113 = vpop.f32.mrb[0].mxu0
        %v4114 = vadd.f32 %v4071, %v4113
        %4115 = vdwg.mxu0
        %4116 = vmatprep.subr.bf16.mxu0 %v2838
        %4117 = vmatpush1.bf16.msra.mxu0 %v2837
        %4118 = vmatprep.subr.bf16.mxu0 %v2846
        %4119 = vmatpush1.bf16.msra.mxu0 %v2845
        %4120 = vmatprep.subr.bf16.mxu0 %v2854
        %4121 = vmatpush1.bf16.msra.mxu0 %v2853
        %4122 = vmatprep.subr.bf16.mxu0 %v2862
        %4123 = vmatpush1.bf16.msra.mxu0 %v2861
        %4124 = vmatprep.subr.bf16.mxu0 %v2870
        %4125 = vmatpush1.bf16.msra.mxu0 %v2869
        %4126 = vmatprep.subr.bf16.mxu0 %v2878
        %4127 = vmatpush1.bf16.msra.mxu0 %v2877
        %4128 = vmatprep.subr.bf16.mxu0 %v2886
        %4129 = vmatpush1.bf16.msra.mxu0 %v2885
        %4130 = vmatprep.subr.bf16.mxu0 %v2894
        %4131 = vmatpush1.bf16.msra.mxu0 %v2893
        %4132 = vmatprep.subr.bf16.mxu0 %v2902
        %4133 = vmatpush1.bf16.msra.mxu0 %v2901
        %4134 = vmatprep.subr.bf16.mxu0 %v2910
        %4135 = vmatpush1.bf16.msra.mxu0 %v2909
        %4136 = vmatprep.subr.bf16.mxu0 %v2918
        %4137 = vmatpush1.bf16.msra.mxu0 %v2917
        %4138 = vmatprep.subr.bf16.mxu0 %v2926
        %4139 = vmatpush1.bf16.msra.mxu0 %v2925
        %4140 = vmatprep.subr.bf16.mxu0 %v2934
        %4141 = vmatpush1.bf16.msra.mxu0 %v2933
        %4142 = vmatprep.subr.bf16.mxu0 %v2942
        %4143 = vmatpush1.bf16.msra.mxu0 %v2941
        %4144 = vmatprep.subr.bf16.mxu0 %v2950
        %4145 = vmatpush1.bf16.msra.mxu0 %v2949
        %4146 = vmatprep.subr.bf16.mxu0 %v2958
        %4147 = vmatpush1.bf16.msra.mxu0 %v2957
        %4148 = vmatprep.mubr.bf16.mxu0 %v902
        %4149 = vmatmul.mubr.bf16.gmra.mrb[0].mxu0 %v901
        %v4150 = vpop.f32.mrb[0].mxu0
        %v4151 = vadd.f32 %v4108, %v4150
        %v4152 = vpop.f32.mrb[0].mxu0
        %v4153 = vadd.f32 %v4110, %v4152
        %v4154 = vpop.f32.mrb[0].mxu0
        %v4155 = vadd.f32 %v4112, %v4154
        %v4156 = vpop.f32.mrb[0].mxu0
        %v4157 = vadd.f32 %v4114, %v4156
        %4158 = vdwg.mxu0
        %4159 = vmatprep.subr.mxu0 0.0
        %4160 = vmatpush1.msra.mxu0 %v229
        %4161 = vmatprep.subr.mxu0 0.0
        %4162 = vmatpush1.msra.mxu0 %v230
        %4163 = vmatprep.subr.mxu0 0.0
        %4164 = vmatpush1.msra.mxu0 %v231
        %4165 = vmatprep.subr.mxu0 0.0
        %4166 = vmatpush1.msra.mxu0 %v232
        %4167 = vmatprep.subr.mxu0 0.0
        %4168 = vmatpush1.msra.mxu0 %v233
        %4169 = vmatprep.subr.mxu0 0.0
        %4170 = vmatpush1.msra.mxu0 %v234
        %4171 = vmatprep.subr.mxu0 0.0
        %4172 = vmatpush1.msra.mxu0 %v235
        %4173 = vmatprep.subr.mxu0 0.0
        %4174 = vmatpush1.msra.mxu0 %v236
        %4175 = vmatprep.subr.mxu0 0.0
        %4176 = vmatpush1.msra.mxu0 %v237
        %4177 = vmatprep.subr.mxu0 0.0
        %4178 = vmatpush1.msra.mxu0 %v238
        %4179 = vmatprep.subr.mxu0 0.0
        %4180 = vmatpush1.msra.mxu0 %v239
        %4181 = vmatprep.subr.mxu0 0.0
        %4182 = vmatpush1.msra.mxu0 %v240
        %4183 = vmatprep.subr.mxu0 0.0
        %4184 = vmatpush1.msra.mxu0 %v241
        %4185 = vmatprep.subr.mxu0 0.0
        %4186 = vmatpush1.msra.mxu0 %v242
        %4187 = vmatprep.subr.mxu0 0.0
        %4188 = vmatpush1.msra.mxu0 %v243
        %4189 = vmatprep.subr.mxu0 0.0
        %4190 = vmatpush1.msra.mxu0 %v244
        %4191 = vmatprep.subr.mxu0 0.0
        %4192 = vmatpush1.msra.mxu0 %v245
        %4193 = vmatprep.subr.mxu0 0.0
        %4194 = vmatpush1.msra.mxu0 %v246
        %4195 = vmatprep.subr.mxu0 0.0
        %4196 = vmatpush1.msra.mxu0 %v247
        %4197 = vmatprep.subr.mxu0 0.0
        %4198 = vmatpush1.msra.mxu0 %v248
        %4199 = vmatprep.subr.mxu0 0.0
        %4200 = vmatpush1.msra.mxu0 %v249
        %4201 = vmatprep.subr.mxu0 0.0
        %4202 = vmatpush1.msra.mxu0 %v250
        %4203 = vmatprep.subr.mxu0 0.0
        %4204 = vmatpush1.msra.mxu0 %v251
        %4205 = vmatprep.subr.mxu0 0.0
        %4206 = vmatpush1.msra.mxu0 %v252
        %4207 = vmatprep.subr.mxu0 0.0
        %4208 = vmatpush1.msra.mxu0 %v253
        %4209 = vmatprep.subr.mxu0 0.0
        %4210 = vmatpush1.msra.mxu0 %v254
        %4211 = vmatprep.subr.mxu0 0.0
        %4212 = vmatpush1.msra.mxu0 %v255
        %4213 = vmatprep.subr.mxu0 0.0
        %4214 = vmatpush1.msra.mxu0 %v256
        %4215 = vmatprep.subr.mxu0 0.0
        %4216 = vmatpush1.msra.mxu0 %v257
        %4217 = vmatprep.subr.mxu0 0.0
        %4218 = vmatpush1.msra.mxu0 %v258
        %4219 = vmatprep.subr.mxu0 0.0
        %4220 = vmatpush1.msra.mxu0 %v259
        %4221 = vmatprep.subr.mxu0 0.0
        %4222 = vmatpush1.msra.mxu0 %v260
        %4223 = vmatprep.mubr.f32.mxu0 %v3637
        %4224 = vmatmul.mubr.f32.gmra.mrb[0].mxu0 %v3635
        %v4225 = vpop.f32.mrb[0].mxu0
        %v4226 = vadd.f32 %v357, %v4225
        %v4227 = vpop.f32.mrb[0].mxu0
        %4228 = vmatprep.mubr.f32.mxu0 %v3641
        %4229 = vmatmul.mubr.f32.gmra.mrb[0].mxu0 %v3639
        %v4230 = vpop.f32.mrb[0].mxu0
        %v4231 = vadd.f32 %v358, %v4230
        %v4232 = vpop.f32.mrb[0].mxu0
        %4233 = vdwg.mxu0
        %4234 = vmatprep.subr.mxu0 0.0
        %4235 = vmatpush1.msra.mxu0 %v261
        %4236 = vmatprep.subr.mxu0 0.0
        %4237 = vmatpush1.msra.mxu0 %v262
        %4238 = vmatprep.subr.mxu0 0.0
        %4239 = vmatpush1.msra.mxu0 %v263
        %4240 = vmatprep.subr.mxu0 0.0
        %4241 = vmatpush1.msra.mxu0 %v264
        %4242 = vmatprep.subr.mxu0 0.0
        %4243 = vmatpush1.msra.mxu0 %v265
        %4244 = vmatprep.subr.mxu0 0.0
        %4245 = vmatpush1.msra.mxu0 %v266
        %4246 = vmatprep.subr.mxu0 0.0
        %4247 = vmatpush1.msra.mxu0 %v267
        %4248 = vmatprep.subr.mxu0 0.0
        %4249 = vmatpush1.msra.mxu0 %v268
        %4250 = vmatprep.subr.mxu0 0.0
        %4251 = vmatpush1.msra.mxu0 %v269
        %4252 = vmatprep.subr.mxu0 0.0
        %4253 = vmatpush1.msra.mxu0 %v270
        %4254 = vmatprep.subr.mxu0 0.0
        %4255 = vmatpush1.msra.mxu0 %v271
        %4256 = vmatprep.subr.mxu0 0.0
        %4257 = vmatpush1.msra.mxu0 %v272
        %4258 = vmatprep.subr.mxu0 0.0
        %4259 = vmatpush1.msra.mxu0 %v273
        %4260 = vmatprep.subr.mxu0 0.0
        %4261 = vmatpush1.msra.mxu0 %v274
        %4262 = vmatprep.subr.mxu0 0.0
        %4263 = vmatpush1.msra.mxu0 %v275
        %4264 = vmatprep.subr.mxu0 0.0
        %4265 = vmatpush1.msra.mxu0 %v276
        %4266 = vmatprep.subr.mxu0 0.0
        %4267 = vmatpush1.msra.mxu0 %v277
        %4268 = vmatprep.subr.mxu0 0.0
        %4269 = vmatpush1.msra.mxu0 %v278
        %4270 = vmatprep.subr.mxu0 0.0
        %4271 = vmatpush1.msra.mxu0 %v279
        %4272 = vmatprep.subr.mxu0 0.0
        %4273 = vmatpush1.msra.mxu0 %v280
        %4274 = vmatprep.subr.mxu0 0.0
        %4275 = vmatpush1.msra.mxu0 %v281
        %4276 = vmatprep.subr.mxu0 0.0
        %4277 = vmatpush1.msra.mxu0 %v282
        %4278 = vmatprep.subr.mxu0 0.0
        %4279 = vmatpush1.msra.mxu0 %v283
        %4280 = vmatprep.subr.mxu0 0.0
        %4281 = vmatpush1.msra.mxu0 %v284
        %4282 = vmatprep.subr.mxu0 0.0
        %4283 = vmatpush1.msra.mxu0 %v285
        %4284 = vmatprep.subr.mxu0 0.0
        %4285 = vmatpush1.msra.mxu0 %v286
        %4286 = vmatprep.subr.mxu0 0.0
        %4287 = vmatpush1.msra.mxu0 %v287
        %4288 = vmatprep.subr.mxu0 0.0
        %4289 = vmatpush1.msra.mxu0 %v288
        %4290 = vmatprep.subr.mxu0 0.0
        %4291 = vmatpush1.msra.mxu0 %v289
        %4292 = vmatprep.subr.mxu0 0.0
        %4293 = vmatpush1.msra.mxu0 %v290
        %4294 = vmatprep.subr.mxu0 0.0
        %4295 = vmatpush1.msra.mxu0 %v291
        %4296 = vmatprep.subr.mxu0 0.0
        %4297 = vmatpush1.msra.mxu0 %v292
        %4298 = vmatprep.mubr.f32.mxu0 %v3809
        %4299 = vmatmul.mubr.f32.gmra.mrb[0].mxu0 %v3807
        %v4300 = vpop.f32.mrb[0].mxu0
        %v4301 = vadd.f32 %v4226, %v4300
        %v4302 = vpop.f32.mrb[0].mxu0
        %4303 = vmatprep.mubr.f32.mxu0 %v3813
        %4304 = vmatmul.mubr.f32.gmra.mrb[0].mxu0 %v3811
        %v4305 = vpop.f32.mrb[0].mxu0
        %v4306 = vadd.f32 %v4231, %v4305
        %v4307 = vpop.f32.mrb[0].mxu0
        %4308 = vdwg.mxu0
        %4309 = vmatprep.subr.mxu0 0.0
        %4310 = vmatpush1.msra.mxu0 %v293
        %4311 = vmatprep.subr.mxu0 0.0
        %4312 = vmatpush1.msra.mxu0 %v294
        %4313 = vmatprep.subr.mxu0 0.0
        %4314 = vmatpush1.msra.mxu0 %v295
        %4315 = vmatprep.subr.mxu0 0.0
        %4316 = vmatpush1.msra.mxu0 %v296
        %4317 = vmatprep.subr.mxu0 0.0
        %4318 = vmatpush1.msra.mxu0 %v297
        %4319 = vmatprep.subr.mxu0 0.0
        %4320 = vmatpush1.msra.mxu0 %v298
        %4321 = vmatprep.subr.mxu0 0.0
        %4322 = vmatpush1.msra.mxu0 %v299
        %4323 = vmatprep.subr.mxu0 0.0
        %4324 = vmatpush1.msra.mxu0 %v300
        %4325 = vmatprep.subr.mxu0 0.0
        %4326 = vmatpush1.msra.mxu0 %v301
        %4327 = vmatprep.subr.mxu0 0.0
        %4328 = vmatpush1.msra.mxu0 %v302
        %4329 = vmatprep.subr.mxu0 0.0
        %4330 = vmatpush1.msra.mxu0 %v303
        %4331 = vmatprep.subr.mxu0 0.0
        %4332 = vmatpush1.msra.mxu0 %v304
        %4333 = vmatprep.subr.mxu0 0.0
        %4334 = vmatpush1.msra.mxu0 %v305
        %4335 = vmatprep.subr.mxu0 0.0
        %4336 = vmatpush1.msra.mxu0 %v306
        %4337 = vmatprep.subr.mxu0 0.0
        %4338 = vmatpush1.msra.mxu0 %v307
        %4339 = vmatprep.subr.mxu0 0.0
        %4340 = vmatpush1.msra.mxu0 %v308
        %4341 = vmatprep.subr.mxu0 0.0
        %4342 = vmatpush1.msra.mxu0 %v309
        %4343 = vmatprep.subr.mxu0 0.0
        %4344 = vmatpush1.msra.mxu0 %v310
        %4345 = vmatprep.subr.mxu0 0.0
        %4346 = vmatpush1.msra.mxu0 %v311
        %4347 = vmatprep.subr.mxu0 0.0
        %4348 = vmatpush1.msra.mxu0 %v312
        %4349 = vmatprep.subr.mxu0 0.0
        %4350 = vmatpush1.msra.mxu0 %v313
        %4351 = vmatprep.subr.mxu0 0.0
        %4352 = vmatpush1.msra.mxu0 %v314
        %4353 = vmatprep.subr.mxu0 0.0
        %4354 = vmatpush1.msra.mxu0 %v315
        %4355 = vmatprep.subr.mxu0 0.0
        %4356 = vmatpush1.msra.mxu0 %v316
        %4357 = vmatprep.subr.mxu0 0.0
        %4358 = vmatpush1.msra.mxu0 %v317
        %4359 = vmatprep.subr.mxu0 0.0
        %4360 = vmatpush1.msra.mxu0 %v318
        %4361 = vmatprep.subr.mxu0 0.0
        %4362 = vmatpush1.msra.mxu0 %v319
        %4363 = vmatprep.subr.mxu0 0.0
        %4364 = vmatpush1.msra.mxu0 %v320
        %4365 = vmatprep.subr.mxu0 0.0
        %4366 = vmatpush1.msra.mxu0 %v321
        %4367 = vmatprep.subr.mxu0 0.0
        %4368 = vmatpush1.msra.mxu0 %v322
        %4369 = vmatprep.subr.mxu0 0.0
        %4370 = vmatpush1.msra.mxu0 %v323
        %4371 = vmatprep.subr.mxu0 0.0
        %4372 = vmatpush1.msra.mxu0 %v324
        %4373 = vmatprep.mubr.f32.mxu0 %v3981
        %4374 = vmatmul.mubr.f32.gmra.mrb[0].mxu0 %v3979
        %v4375 = vpop.f32.mrb[0].mxu0
        %v4376 = vadd.f32 %v4301, %v4375
        %v4377 = vpop.f32.mrb[0].mxu0
        %4378 = vmatprep.mubr.f32.mxu0 %v3985
        %4379 = vmatmul.mubr.f32.gmra.mrb[0].mxu0 %v3983
        %v4380 = vpop.f32.mrb[0].mxu0
        %v4381 = vadd.f32 %v4306, %v4380
        %v4382 = vpop.f32.mrb[0].mxu0
        %4383 = vdwg.mxu0
        %4384 = vmatprep.subr.mxu0 0.0
        %4385 = vmatpush1.msra.mxu0 %v325
        %4386 = vmatprep.subr.mxu0 0.0
        %4387 = vmatpush1.msra.mxu0 %v326
        %4388 = vmatprep.subr.mxu0 0.0
        %4389 = vmatpush1.msra.mxu0 %v327
        %4390 = vmatprep.subr.mxu0 0.0
        %4391 = vmatpush1.msra.mxu0 %v328
        %4392 = vmatprep.subr.mxu0 0.0
        %4393 = vmatpush1.msra.mxu0 %v329
        %4394 = vmatprep.subr.mxu0 0.0
        %4395 = vmatpush1.msra.mxu0 %v330
        %4396 = vmatprep.subr.mxu0 0.0
        %4397 = vmatpush1.msra.mxu0 %v331
        %4398 = vmatprep.subr.mxu0 0.0
        %4399 = vmatpush1.msra.mxu0 %v332
        %4400 = vmatprep.subr.mxu0 0.0
        %4401 = vmatpush1.msra.mxu0 %v333
        %4402 = vmatprep.subr.mxu0 0.0
        %4403 = vmatpush1.msra.mxu0 %v334
        %4404 = vmatprep.subr.mxu0 0.0
        %4405 = vmatpush1.msra.mxu0 %v335
        %4406 = vmatprep.subr.mxu0 0.0
        %4407 = vmatpush1.msra.mxu0 %v336
        %4408 = vmatprep.subr.mxu0 0.0
        %4409 = vmatpush1.msra.mxu0 %v337
        %4410 = vmatprep.subr.mxu0 0.0
        %4411 = vmatpush1.msra.mxu0 %v338
        %4412 = vmatprep.subr.mxu0 0.0
        %4413 = vmatpush1.msra.mxu0 %v339
        %4414 = vmatprep.subr.mxu0 0.0
        %4415 = vmatpush1.msra.mxu0 %v340
        %4416 = vmatprep.subr.mxu0 0.0
        %4417 = vmatpush1.msra.mxu0 %v341
        %4418 = vmatprep.subr.mxu0 0.0
        %4419 = vmatpush1.msra.mxu0 %v342
        %4420 = vmatprep.subr.mxu0 0.0
        %4421 = vmatpush1.msra.mxu0 %v343
        %4422 = vmatprep.subr.mxu0 0.0
        %4423 = vmatpush1.msra.mxu0 %v344
        %4424 = vmatprep.subr.mxu0 0.0
        %4425 = vmatpush1.msra.mxu0 %v345
        %4426 = vmatprep.subr.mxu0 0.0
        %4427 = vmatpush1.msra.mxu0 %v346
        %4428 = vmatprep.subr.mxu0 0.0
        %4429 = vmatpush1.msra.mxu0 %v347
        %4430 = vmatprep.subr.mxu0 0.0
        %4431 = vmatpush1.msra.mxu0 %v348
        %4432 = vmatprep.subr.mxu0 0.0
        %4433 = vmatpush1.msra.mxu0 %v349
        %4434 = vmatprep.subr.mxu0 0.0
        %4435 = vmatpush1.msra.mxu0 %v350
        %4436 = vmatprep.subr.mxu0 0.0
        %4437 = vmatpush1.msra.mxu0 %v351
        %4438 = vmatprep.subr.mxu0 0.0
        %4439 = vmatpush1.msra.mxu0 %v352
        %4440 = vmatprep.subr.mxu0 0.0
        %4441 = vmatpush1.msra.mxu0 %v353
        %4442 = vmatprep.subr.mxu0 0.0
        %4443 = vmatpush1.msra.mxu0 %v354
        %4444 = vmatprep.subr.mxu0 0.0
        %4445 = vmatpush1.msra.mxu0 %v355
        %4446 = vmatprep.subr.mxu0 0.0
        %4447 = vmatpush1.msra.mxu0 %v356
        %4448 = vmatprep.mubr.f32.mxu0 %v4153
        %4449 = vmatmul.mubr.f32.gmra.mrb[0].mxu0 %v4151
        %v4450 = vpop.f32.mrb[0].mxu0
        %v4451 = vadd.f32 %v4376, %v4450
        %v4452 = vpop.f32.mrb[0].mxu0
        %4453 = vmatprep.mubr.f32.mxu0 %v4157
        %4454 = vmatmul.mubr.f32.gmra.mrb[0].mxu0 %v4155
        %v4455 = vpop.f32.mrb[0].mxu0
        %v4456 = vadd.f32 %v4381, %v4455
        %v4457 = vpop.f32.mrb[0].mxu0
        %4458 = vdwg.mxu0
        %vm4459 = vcmask 130048
        %v4460 = vsel %vm4459, %v4451, -inf
        %4461 = vmax.xlane.f32.xlu0 %v4460
        %v4462 = vpop.xlane.xlu0 %4461
        %v4463 = vrot.slane %v4462, 4
        %v4464 = vmax.f32 %v4462, %v4463
        %v4465 = vrot.slane %v4464, 2
        %v4466 = vmax.f32 %v4464, %v4465
        %v4467 = vrot.slane %v4466, 1
        %v4468 = vmax.f32 %v4466, %v4467
        %s4469 = vtos %v4468
        %v4470 = vstv %s4469
        %v4471 = vsel %vm4459, %v4456, -inf
        %4472 = vmax.xlane.f32.xlu0 %v4471
        %v4473 = vpop.xlane.xlu0 %4472
        %v4474 = vrot.slane %v4473, 4
        %v4475 = vmax.f32 %v4473, %v4474
        %v4476 = vrot.slane %v4475, 2
        %v4477 = vmax.f32 %v4475, %v4476
        %v4478 = vrot.slane %v4477, 1
        %v4479 = vmax.f32 %v4477, %v4478
        %s4480 = vtos %v4479
        %v4481 = vstv %s4480
        %vm4482 = vcmask 1040384
        %v4483 = vsel %vm4482, %v4470, %v4481
        %4484 = vst [vmem:[%s219] sm:$0x3] %v4483
        %s4485 = scalar_lea.vmem %s189, 4096 [#allocation2]
        %v4486 = vld [vmem:[%s4485] sm:$0xff]
        %v4487 = vld [vmem:[%s4485 + $0x8] sm:$0xff]
        %v4488 = vld [vmem:[%s4485 + $0x10] sm:$0xff]
        %v4489 = vld [vmem:[%s4485 + $0x18] sm:$0xff]
        %v4490 = vld [vmem:[%s4485 + $0x20] sm:$0xff]
        %v4491 = vld [vmem:[%s4485 + $0x28] sm:$0xff]
        %v4492 = vld [vmem:[%s4485 + $0x30] sm:$0xff]
        %v4493 = vld [vmem:[%s4485 + $0x38] sm:$0xff]
        %v4494 = vld [vmem:[%s4485 + $0x40] sm:$0xff]
        %v4495 = vld [vmem:[%s4485 + $0x48] sm:$0xff]
        %v4496 = vld [vmem:[%s4485 + $0x50] sm:$0xff]
        %v4497 = vld [vmem:[%s4485 + $0x58] sm:$0xff]
        %v4498 = vld [vmem:[%s4485 + $0x60] sm:$0xff]
        %v4499 = vld [vmem:[%s4485 + $0x68] sm:$0xff]
        %v4500 = vld [vmem:[%s4485 + $0x70] sm:$0xff]
        %v4501 = vld [vmem:[%s4485 + $0x78] sm:$0xff]
        %v4502 = vld [vmem:[%s4485 + $0x80] sm:$0xff]
        %v4503 = vld [vmem:[%s4485 + $0x88] sm:$0xff]
        %v4504 = vld [vmem:[%s4485 + $0x90] sm:$0xff]
        %v4505 = vld [vmem:[%s4485 + $0x98] sm:$0xff]
        %v4506 = vld [vmem:[%s4485 + $0xa0] sm:$0xff]
        %v4507 = vld [vmem:[%s4485 + $0xa8] sm:$0xff]
        %v4508 = vld [vmem:[%s4485 + $0xb0] sm:$0xff]
        %v4509 = vld [vmem:[%s4485 + $0xb8] sm:$0xff]
        %v4510 = vld [vmem:[%s4485 + $0xc0] sm:$0xff]
        %v4511 = vld [vmem:[%s4485 + $0xc8] sm:$0xff]
        %v4512 = vld [vmem:[%s4485 + $0xd0] sm:$0xff]
        %v4513 = vld [vmem:[%s4485 + $0xd8] sm:$0xff]
        %v4514 = vld [vmem:[%s4485 + $0xe0] sm:$0xff]
        %v4515 = vld [vmem:[%s4485 + $0xe8] sm:$0xff]
        %v4516 = vld [vmem:[%s4485 + $0xf0] sm:$0xff]
        %v4517 = vld [vmem:[%s4485 + $0xf8] sm:$0xff]
        %v4518 = vld [vmem:[%s4485 + $0x100] sm:$0xff]
        %v4519 = vld [vmem:[%s4485 + $0x108] sm:$0xff]
        %v4520 = vld [vmem:[%s4485 + $0x110] sm:$0xff]
        %v4521 = vld [vmem:[%s4485 + $0x118] sm:$0xff]
        %v4522 = vld [vmem:[%s4485 + $0x120] sm:$0xff]
        %v4523 = vld [vmem:[%s4485 + $0x128] sm:$0xff]
        %v4524 = vld [vmem:[%s4485 + $0x130] sm:$0xff]
        %v4525 = vld [vmem:[%s4485 + $0x138] sm:$0xff]
        %v4526 = vld [vmem:[%s4485 + $0x140] sm:$0xff]
        %v4527 = vld [vmem:[%s4485 + $0x148] sm:$0xff]
        %v4528 = vld [vmem:[%s4485 + $0x150] sm:$0xff]
        %v4529 = vld [vmem:[%s4485 + $0x158] sm:$0xff]
        %v4530 = vld [vmem:[%s4485 + $0x160] sm:$0xff]
        %v4531 = vld [vmem:[%s4485 + $0x168] sm:$0xff]
        %v4532 = vld [vmem:[%s4485 + $0x170] sm:$0xff]
        %v4533 = vld [vmem:[%s4485 + $0x178] sm:$0xff]
        %v4534 = vld [vmem:[%s4485 + $0x180] sm:$0xff]
        %v4535 = vld [vmem:[%s4485 + $0x188] sm:$0xff]
        %v4536 = vld [vmem:[%s4485 + $0x190] sm:$0xff]
        %v4537 = vld [vmem:[%s4485 + $0x198] sm:$0xff]
        %v4538 = vld [vmem:[%s4485 + $0x1a0] sm:$0xff]
        %v4539 = vld [vmem:[%s4485 + $0x1a8] sm:$0xff]
        %v4540 = vld [vmem:[%s4485 + $0x1b0] sm:$0xff]
        %v4541 = vld [vmem:[%s4485 + $0x1b8] sm:$0xff]
        %v4542 = vld [vmem:[%s4485 + $0x1c0] sm:$0xff]
        %v4543 = vld [vmem:[%s4485 + $0x1c8] sm:$0xff]
        %v4544 = vld [vmem:[%s4485 + $0x1d0] sm:$0xff]
        %v4545 = vld [vmem:[%s4485 + $0x1d8] sm:$0xff]
        %v4546 = vld [vmem:[%s4485 + $0x1e0] sm:$0xff]
        %v4547 = vld [vmem:[%s4485 + $0x1e8] sm:$0xff]
        %v4548 = vld [vmem:[%s4485 + $0x1f0] sm:$0xff]
        %v4549 = vld [vmem:[%s4485 + $0x1f8] sm:$0xff]
        %v4550 = vld [vmem:[%s4485 + $0x200] sm:$0xff]
        %v4551 = vld [vmem:[%s4485 + $0x208] sm:$0xff]
        %v4552 = vld [vmem:[%s4485 + $0x210] sm:$0xff]
        %v4553 = vld [vmem:[%s4485 + $0x218] sm:$0xff]
        %v4554 = vld [vmem:[%s4485 + $0x220] sm:$0xff]
        %v4555 = vld [vmem:[%s4485 + $0x228] sm:$0xff]
        %v4556 = vld [vmem:[%s4485 + $0x230] sm:$0xff]
        %v4557 = vld [vmem:[%s4485 + $0x238] sm:$0xff]
        %v4558 = vld [vmem:[%s4485 + $0x240] sm:$0xff]
        %v4559 = vld [vmem:[%s4485 + $0x248] sm:$0xff]
        %v4560 = vld [vmem:[%s4485 + $0x250] sm:$0xff]
        %v4561 = vld [vmem:[%s4485 + $0x258] sm:$0xff]
        %v4562 = vld [vmem:[%s4485 + $0x260] sm:$0xff]
        %v4563 = vld [vmem:[%s4485 + $0x268] sm:$0xff]
        %v4564 = vld [vmem:[%s4485 + $0x270] sm:$0xff]
        %v4565 = vld [vmem:[%s4485 + $0x278] sm:$0xff]
        %v4566 = vld [vmem:[%s4485 + $0x280] sm:$0xff]
        %v4567 = vld [vmem:[%s4485 + $0x288] sm:$0xff]
        %v4568 = vld [vmem:[%s4485 + $0x290] sm:$0xff]
        %v4569 = vld [vmem:[%s4485 + $0x298] sm:$0xff]
        %v4570 = vld [vmem:[%s4485 + $0x2a0] sm:$0xff]
        %v4571 = vld [vmem:[%s4485 + $0x2a8] sm:$0xff]
        %v4572 = vld [vmem:[%s4485 + $0x2b0] sm:$0xff]
        %v4573 = vld [vmem:[%s4485 + $0x2b8] sm:$0xff]
        %v4574 = vld [vmem:[%s4485 + $0x2c0] sm:$0xff]
        %v4575 = vld [vmem:[%s4485 + $0x2c8] sm:$0xff]
        %v4576 = vld [vmem:[%s4485 + $0x2d0] sm:$0xff]
        %v4577 = vld [vmem:[%s4485 + $0x2d8] sm:$0xff]
        %v4578 = vld [vmem:[%s4485 + $0x2e0] sm:$0xff]
        %v4579 = vld [vmem:[%s4485 + $0x2e8] sm:$0xff]
        %v4580 = vld [vmem:[%s4485 + $0x2f0] sm:$0xff]
        %v4581 = vld [vmem:[%s4485 + $0x2f8] sm:$0xff]
        %v4582 = vld [vmem:[%s4485 + $0x300] sm:$0xff]
        %v4583 = vld [vmem:[%s4485 + $0x308] sm:$0xff]
        %v4584 = vld [vmem:[%s4485 + $0x310] sm:$0xff]
        %v4585 = vld [vmem:[%s4485 + $0x318] sm:$0xff]
        %v4586 = vld [vmem:[%s4485 + $0x320] sm:$0xff]
        %v4587 = vld [vmem:[%s4485 + $0x328] sm:$0xff]
        %v4588 = vld [vmem:[%s4485 + $0x330] sm:$0xff]
        %v4589 = vld [vmem:[%s4485 + $0x338] sm:$0xff]
        %v4590 = vld [vmem:[%s4485 + $0x340] sm:$0xff]
        %v4591 = vld [vmem:[%s4485 + $0x348] sm:$0xff]
        %v4592 = vld [vmem:[%s4485 + $0x350] sm:$0xff]
        %v4593 = vld [vmem:[%s4485 + $0x358] sm:$0xff]
        %v4594 = vld [vmem:[%s4485 + $0x360] sm:$0xff]
        %v4595 = vld [vmem:[%s4485 + $0x368] sm:$0xff]
        %v4596 = vld [vmem:[%s4485 + $0x370] sm:$0xff]
        %v4597 = vld [vmem:[%s4485 + $0x378] sm:$0xff]
        %v4598 = vld [vmem:[%s4485 + $0x380] sm:$0xff]
        %v4599 = vld [vmem:[%s4485 + $0x388] sm:$0xff]
        %v4600 = vld [vmem:[%s4485 + $0x390] sm:$0xff]
        %v4601 = vld [vmem:[%s4485 + $0x398] sm:$0xff]
        %v4602 = vld [vmem:[%s4485 + $0x3a0] sm:$0xff]
        %v4603 = vld [vmem:[%s4485 + $0x3a8] sm:$0xff]
        %v4604 = vld [vmem:[%s4485 + $0x3b0] sm:$0xff]
        %v4605 = vld [vmem:[%s4485 + $0x3b8] sm:$0xff]
        %v4606 = vld [vmem:[%s4485 + $0x3c0] sm:$0xff]
        %v4607 = vld [vmem:[%s4485 + $0x3c8] sm:$0xff]
        %v4608 = vld [vmem:[%s4485 + $0x3d0] sm:$0xff]
        %v4609 = vld [vmem:[%s4485 + $0x3d8] sm:$0xff]
        %v4610 = vld [vmem:[%s4485 + $0x3e0] sm:$0xff]
        %v4611 = vld [vmem:[%s4485 + $0x3e8] sm:$0xff]
        %v4612 = vld [vmem:[%s4485 + $0x3f0] sm:$0xff]
        %v4613 = vld [vmem:[%s4485 + $0x3f8] sm:$0xff]
        %v4614 = vld [vmem:[%s4485 + $0x400] sm:$0xff]
        %v4615 = vld [vmem:[%s4485 + $0x408] sm:$0xff]
        %v4616 = vld [vmem:[%s4485 + $0x410] sm:$0xff]
        %v4617 = vld [vmem:[%s4485 + $0x418] sm:$0xff]
        %v4618 = vld [vmem:[%s4485 + $0x420] sm:$0xff]
        %v4619 = vld [vmem:[%s4485 + $0x428] sm:$0xff]
        %v4620 = vld [vmem:[%s4485 + $0x430] sm:$0xff]
        %v4621 = vld [vmem:[%s4485 + $0x438] sm:$0xff]
        %v4622 = vld [vmem:[%s4485 + $0x440] sm:$0xff]
        %v4623 = vld [vmem:[%s4485 + $0x448] sm:$0xff]
        %v4624 = vld [vmem:[%s4485 + $0x450] sm:$0xff]
        %v4625 = vld [vmem:[%s4485 + $0x458] sm:$0xff]
        %v4626 = vld [vmem:[%s4485 + $0x460] sm:$0xff]
        %v4627 = vld [vmem:[%s4485 + $0x468] sm:$0xff]
        %v4628 = vld [vmem:[%s4485 + $0x470] sm:$0xff]
        %v4629 = vld [vmem:[%s4485 + $0x478] sm:$0xff]
        %v4630 = vld [vmem:[%s4485 + $0x480] sm:$0xff]
        %v4631 = vld [vmem:[%s4485 + $0x488] sm:$0xff]
        %v4632 = vld [vmem:[%s4485 + $0x490] sm:$0xff]
        %v4633 = vld [vmem:[%s4485 + $0x498] sm:$0xff]
        %v4634 = vld [vmem:[%s4485 + $0x4a0] sm:$0xff]
        %v4635 = vld [vmem:[%s4485 + $0x4a8] sm:$0xff]
        %v4636 = vld [vmem:[%s4485 + $0x4b0] sm:$0xff]
        %v4637 = vld [vmem:[%s4485 + $0x4b8] sm:$0xff]
        %v4638 = vld [vmem:[%s4485 + $0x4c0] sm:$0xff]
        %v4639 = vld [vmem:[%s4485 + $0x4c8] sm:$0xff]
        %v4640 = vld [vmem:[%s4485 + $0x4d0] sm:$0xff]
        %v4641 = vld [vmem:[%s4485 + $0x4d8] sm:$0xff]
        %v4642 = vld [vmem:[%s4485 + $0x4e0] sm:$0xff]
        %v4643 = vld [vmem:[%s4485 + $0x4e8] sm:$0xff]
        %v4644 = vld [vmem:[%s4485 + $0x4f0] sm:$0xff]
        %v4645 = vld [vmem:[%s4485 + $0x4f8] sm:$0xff]
        %v4646 = vld [vmem:[%s4485 + $0x500] sm:$0xff]
        %v4647 = vld [vmem:[%s4485 + $0x508] sm:$0xff]
        %v4648 = vld [vmem:[%s4485 + $0x510] sm:$0xff]
        %v4649 = vld [vmem:[%s4485 + $0x518] sm:$0xff]
        %v4650 = vld [vmem:[%s4485 + $0x520] sm:$0xff]
        %v4651 = vld [vmem:[%s4485 + $0x528] sm:$0xff]
        %v4652 = vld [vmem:[%s4485 + $0x530] sm:$0xff]
        %v4653 = vld [vmem:[%s4485 + $0x538] sm:$0xff]
        %v4654 = vld [vmem:[%s4485 + $0x540] sm:$0xff]
        %v4655 = vld [vmem:[%s4485 + $0x548] sm:$0xff]
        %v4656 = vld [vmem:[%s4485 + $0x550] sm:$0xff]
        %v4657 = vld [vmem:[%s4485 + $0x558] sm:$0xff]
        %v4658 = vld [vmem:[%s4485 + $0x560] sm:$0xff]
        %v4659 = vld [vmem:[%s4485 + $0x568] sm:$0xff]
        %v4660 = vld [vmem:[%s4485 + $0x570] sm:$0xff]
        %v4661 = vld [vmem:[%s4485 + $0x578] sm:$0xff]
        %v4662 = vld [vmem:[%s4485 + $0x580] sm:$0xff]
        %v4663 = vld [vmem:[%s4485 + $0x588] sm:$0xff]
        %v4664 = vld [vmem:[%s4485 + $0x590] sm:$0xff]
        %v4665 = vld [vmem:[%s4485 + $0x598] sm:$0xff]
        %v4666 = vld [vmem:[%s4485 + $0x5a0] sm:$0xff]
        %v4667 = vld [vmem:[%s4485 + $0x5a8] sm:$0xff]
        %v4668 = vld [vmem:[%s4485 + $0x5b0] sm:$0xff]
        %v4669 = vld [vmem:[%s4485 + $0x5b8] sm:$0xff]
        %v4670 = vld [vmem:[%s4485 + $0x5c0] sm:$0xff]
        %v4671 = vld [vmem:[%s4485 + $0x5c8] sm:$0xff]
        %v4672 = vld [vmem:[%s4485 + $0x5d0] sm:$0xff]
        %v4673 = vld [vmem:[%s4485 + $0x5d8] sm:$0xff]
        %v4674 = vld [vmem:[%s4485 + $0x5e0] sm:$0xff]
        %v4675 = vld [vmem:[%s4485 + $0x5e8] sm:$0xff]
        %v4676 = vld [vmem:[%s4485 + $0x5f0] sm:$0xff]
        %v4677 = vld [vmem:[%s4485 + $0x5f8] sm:$0xff]
        %v4678 = vld [vmem:[%s4485 + $0x600] sm:$0xff]
        %v4679 = vld [vmem:[%s4485 + $0x608] sm:$0xff]
        %v4680 = vld [vmem:[%s4485 + $0x610] sm:$0xff]
        %v4681 = vld [vmem:[%s4485 + $0x618] sm:$0xff]
        %v4682 = vld [vmem:[%s4485 + $0x620] sm:$0xff]
        %v4683 = vld [vmem:[%s4485 + $0x628] sm:$0xff]
        %v4684 = vld [vmem:[%s4485 + $0x630] sm:$0xff]
        %v4685 = vld [vmem:[%s4485 + $0x638] sm:$0xff]
        %v4686 = vld [vmem:[%s4485 + $0x640] sm:$0xff]
        %v4687 = vld [vmem:[%s4485 + $0x648] sm:$0xff]
        %v4688 = vld [vmem:[%s4485 + $0x650] sm:$0xff]
        %v4689 = vld [vmem:[%s4485 + $0x658] sm:$0xff]
        %v4690 = vld [vmem:[%s4485 + $0x660] sm:$0xff]
        %v4691 = vld [vmem:[%s4485 + $0x668] sm:$0xff]
        %v4692 = vld [vmem:[%s4485 + $0x670] sm:$0xff]
        %v4693 = vld [vmem:[%s4485 + $0x678] sm:$0xff]
        %v4694 = vld [vmem:[%s4485 + $0x680] sm:$0xff]
        %v4695 = vld [vmem:[%s4485 + $0x688] sm:$0xff]
        %v4696 = vld [vmem:[%s4485 + $0x690] sm:$0xff]
        %v4697 = vld [vmem:[%s4485 + $0x698] sm:$0xff]
        %v4698 = vld [vmem:[%s4485 + $0x6a0] sm:$0xff]
        %v4699 = vld [vmem:[%s4485 + $0x6a8] sm:$0xff]
        %v4700 = vld [vmem:[%s4485 + $0x6b0] sm:$0xff]
        %v4701 = vld [vmem:[%s4485 + $0x6b8] sm:$0xff]
        %v4702 = vld [vmem:[%s4485 + $0x6c0] sm:$0xff]
        %v4703 = vld [vmem:[%s4485 + $0x6c8] sm:$0xff]
        %v4704 = vld [vmem:[%s4485 + $0x6d0] sm:$0xff]
        %v4705 = vld [vmem:[%s4485 + $0x6d8] sm:$0xff]
        %v4706 = vld [vmem:[%s4485 + $0x6e0] sm:$0xff]
        %v4707 = vld [vmem:[%s4485 + $0x6e8] sm:$0xff]
        %v4708 = vld [vmem:[%s4485 + $0x6f0] sm:$0xff]
        %v4709 = vld [vmem:[%s4485 + $0x6f8] sm:$0xff]
        %v4710 = vld [vmem:[%s4485 + $0x700] sm:$0xff]
        %v4711 = vld [vmem:[%s4485 + $0x708] sm:$0xff]
        %v4712 = vld [vmem:[%s4485 + $0x710] sm:$0xff]
        %v4713 = vld [vmem:[%s4485 + $0x718] sm:$0xff]
        %v4714 = vld [vmem:[%s4485 + $0x720] sm:$0xff]
        %v4715 = vld [vmem:[%s4485 + $0x728] sm:$0xff]
        %v4716 = vld [vmem:[%s4485 + $0x730] sm:$0xff]
        %v4717 = vld [vmem:[%s4485 + $0x738] sm:$0xff]
        %v4718 = vld [vmem:[%s4485 + $0x740] sm:$0xff]
        %v4719 = vld [vmem:[%s4485 + $0x748] sm:$0xff]
        %v4720 = vld [vmem:[%s4485 + $0x750] sm:$0xff]
        %v4721 = vld [vmem:[%s4485 + $0x758] sm:$0xff]
        %v4722 = vld [vmem:[%s4485 + $0x760] sm:$0xff]
        %v4723 = vld [vmem:[%s4485 + $0x768] sm:$0xff]
        %v4724 = vld [vmem:[%s4485 + $0x770] sm:$0xff]
        %v4725 = vld [vmem:[%s4485 + $0x778] sm:$0xff]
        %v4726 = vld [vmem:[%s4485 + $0x780] sm:$0xff]
        %v4727 = vld [vmem:[%s4485 + $0x788] sm:$0xff]
        %v4728 = vld [vmem:[%s4485 + $0x790] sm:$0xff]
        %v4729 = vld [vmem:[%s4485 + $0x798] sm:$0xff]
        %v4730 = vld [vmem:[%s4485 + $0x7a0] sm:$0xff]
        %v4731 = vld [vmem:[%s4485 + $0x7a8] sm:$0xff]
        %v4732 = vld [vmem:[%s4485 + $0x7b0] sm:$0xff]
        %v4733 = vld [vmem:[%s4485 + $0x7b8] sm:$0xff]
        %v4734 = vld [vmem:[%s4485 + $0x7c0] sm:$0xff]
        %v4735 = vld [vmem:[%s4485 + $0x7c8] sm:$0xff]
        %v4736 = vld [vmem:[%s4485 + $0x7d0] sm:$0xff]
        %v4737 = vld [vmem:[%s4485 + $0x7d8] sm:$0xff]
        %v4738 = vld [vmem:[%s4485 + $0x7e0] sm:$0xff]
        %v4739 = vld [vmem:[%s4485 + $0x7e8] sm:$0xff]
        %v4740 = vld [vmem:[%s4485 + $0x7f0] sm:$0xff]
        %v4741 = vld [vmem:[%s4485 + $0x7f8] sm:$0xff]
        %v4742 = vld [vmem:[%s4485 + $0x800] sm:$0xff]
        %v4743 = vld [vmem:[%s4485 + $0x808] sm:$0xff]
        %v4744 = vld [vmem:[%s4485 + $0x810] sm:$0xff]
        %v4745 = vld [vmem:[%s4485 + $0x818] sm:$0xff]
        %v4746 = vld [vmem:[%s4485 + $0x820] sm:$0xff]
        %v4747 = vld [vmem:[%s4485 + $0x828] sm:$0xff]
        %v4748 = vld [vmem:[%s4485 + $0x830] sm:$0xff]
        %v4749 = vld [vmem:[%s4485 + $0x838] sm:$0xff]
        %v4750 = vld [vmem:[%s4485 + $0x840] sm:$0xff]
        %v4751 = vld [vmem:[%s4485 + $0x848] sm:$0xff]
        %v4752 = vld [vmem:[%s4485 + $0x850] sm:$0xff]
        %v4753 = vld [vmem:[%s4485 + $0x858] sm:$0xff]
        %v4754 = vld [vmem:[%s4485 + $0x860] sm:$0xff]
        %v4755 = vld [vmem:[%s4485 + $0x868] sm:$0xff]
        %v4756 = vld [vmem:[%s4485 + $0x870] sm:$0xff]
        %v4757 = vld [vmem:[%s4485 + $0x878] sm:$0xff]
        %v4758 = vld [vmem:[%s4485 + $0x880] sm:$0xff]
        %v4759 = vld [vmem:[%s4485 + $0x888] sm:$0xff]
        %v4760 = vld [vmem:[%s4485 + $0x890] sm:$0xff]
        %v4761 = vld [vmem:[%s4485 + $0x898] sm:$0xff]
        %v4762 = vld [vmem:[%s4485 + $0x8a0] sm:$0xff]
        %v4763 = vld [vmem:[%s4485 + $0x8a8] sm:$0xff]
        %v4764 = vld [vmem:[%s4485 + $0x8b0] sm:$0xff]
        %v4765 = vld [vmem:[%s4485 + $0x8b8] sm:$0xff]
        %v4766 = vld [vmem:[%s4485 + $0x8c0] sm:$0xff]
        %v4767 = vld [vmem:[%s4485 + $0x8c8] sm:$0xff]
        %v4768 = vld [vmem:[%s4485 + $0x8d0] sm:$0xff]
        %v4769 = vld [vmem:[%s4485 + $0x8d8] sm:$0xff]
        %v4770 = vld [vmem:[%s4485 + $0x8e0] sm:$0xff]
        %v4771 = vld [vmem:[%s4485 + $0x8e8] sm:$0xff]
        %v4772 = vld [vmem:[%s4485 + $0x8f0] sm:$0xff]
        %v4773 = vld [vmem:[%s4485 + $0x8f8] sm:$0xff]
        %v4774 = vld [vmem:[%s4485 + $0x900] sm:$0xff]
        %v4775 = vld [vmem:[%s4485 + $0x908] sm:$0xff]
        %v4776 = vld [vmem:[%s4485 + $0x910] sm:$0xff]
        %v4777 = vld [vmem:[%s4485 + $0x918] sm:$0xff]
        %v4778 = vld [vmem:[%s4485 + $0x920] sm:$0xff]
        %v4779 = vld [vmem:[%s4485 + $0x928] sm:$0xff]
        %v4780 = vld [vmem:[%s4485 + $0x930] sm:$0xff]
        %v4781 = vld [vmem:[%s4485 + $0x938] sm:$0xff]
        %v4782 = vld [vmem:[%s4485 + $0x940] sm:$0xff]
        %v4783 = vld [vmem:[%s4485 + $0x948] sm:$0xff]
        %v4784 = vld [vmem:[%s4485 + $0x950] sm:$0xff]
        %v4785 = vld [vmem:[%s4485 + $0x958] sm:$0xff]
        %v4786 = vld [vmem:[%s4485 + $0x960] sm:$0xff]
        %v4787 = vld [vmem:[%s4485 + $0x968] sm:$0xff]
        %v4788 = vld [vmem:[%s4485 + $0x970] sm:$0xff]
        %v4789 = vld [vmem:[%s4485 + $0x978] sm:$0xff]
        %v4790 = vld [vmem:[%s4485 + $0x980] sm:$0xff]
        %v4791 = vld [vmem:[%s4485 + $0x988] sm:$0xff]
        %v4792 = vld [vmem:[%s4485 + $0x990] sm:$0xff]
        %v4793 = vld [vmem:[%s4485 + $0x998] sm:$0xff]
        %v4794 = vld [vmem:[%s4485 + $0x9a0] sm:$0xff]
        %v4795 = vld [vmem:[%s4485 + $0x9a8] sm:$0xff]
        %v4796 = vld [vmem:[%s4485 + $0x9b0] sm:$0xff]
        %v4797 = vld [vmem:[%s4485 + $0x9b8] sm:$0xff]
        %v4798 = vld [vmem:[%s4485 + $0x9c0] sm:$0xff]
        %v4799 = vld [vmem:[%s4485 + $0x9c8] sm:$0xff]
        %v4800 = vld [vmem:[%s4485 + $0x9d0] sm:$0xff]
        %v4801 = vld [vmem:[%s4485 + $0x9d8] sm:$0xff]
        %v4802 = vld [vmem:[%s4485 + $0x9e0] sm:$0xff]
        %v4803 = vld [vmem:[%s4485 + $0x9e8] sm:$0xff]
        %v4804 = vld [vmem:[%s4485 + $0x9f0] sm:$0xff]
        %v4805 = vld [vmem:[%s4485 + $0x9f8] sm:$0xff]
        %v4806 = vld [vmem:[%s4485 + $0xa00] sm:$0xff]
        %v4807 = vld [vmem:[%s4485 + $0xa08] sm:$0xff]
        %v4808 = vld [vmem:[%s4485 + $0xa10] sm:$0xff]
        %v4809 = vld [vmem:[%s4485 + $0xa18] sm:$0xff]
        %v4810 = vld [vmem:[%s4485 + $0xa20] sm:$0xff]
        %v4811 = vld [vmem:[%s4485 + $0xa28] sm:$0xff]
        %v4812 = vld [vmem:[%s4485 + $0xa30] sm:$0xff]
        %v4813 = vld [vmem:[%s4485 + $0xa38] sm:$0xff]
        %v4814 = vld [vmem:[%s4485 + $0xa40] sm:$0xff]
        %v4815 = vld [vmem:[%s4485 + $0xa48] sm:$0xff]
        %v4816 = vld [vmem:[%s4485 + $0xa50] sm:$0xff]
        %v4817 = vld [vmem:[%s4485 + $0xa58] sm:$0xff]
        %v4818 = vld [vmem:[%s4485 + $0xa60] sm:$0xff]
        %v4819 = vld [vmem:[%s4485 + $0xa68] sm:$0xff]
        %v4820 = vld [vmem:[%s4485 + $0xa70] sm:$0xff]
        %v4821 = vld [vmem:[%s4485 + $0xa78] sm:$0xff]
        %v4822 = vld [vmem:[%s4485 + $0xa80] sm:$0xff]
        %v4823 = vld [vmem:[%s4485 + $0xa88] sm:$0xff]
        %v4824 = vld [vmem:[%s4485 + $0xa90] sm:$0xff]
        %v4825 = vld [vmem:[%s4485 + $0xa98] sm:$0xff]
        %v4826 = vld [vmem:[%s4485 + $0xaa0] sm:$0xff]
        %v4827 = vld [vmem:[%s4485 + $0xaa8] sm:$0xff]
        %v4828 = vld [vmem:[%s4485 + $0xab0] sm:$0xff]
        %v4829 = vld [vmem:[%s4485 + $0xab8] sm:$0xff]
        %v4830 = vld [vmem:[%s4485 + $0xac0] sm:$0xff]
        %v4831 = vld [vmem:[%s4485 + $0xac8] sm:$0xff]
        %v4832 = vld [vmem:[%s4485 + $0xad0] sm:$0xff]
        %v4833 = vld [vmem:[%s4485 + $0xad8] sm:$0xff]
        %v4834 = vld [vmem:[%s4485 + $0xae0] sm:$0xff]
        %v4835 = vld [vmem:[%s4485 + $0xae8] sm:$0xff]
        %v4836 = vld [vmem:[%s4485 + $0xaf0] sm:$0xff]
        %v4837 = vld [vmem:[%s4485 + $0xaf8] sm:$0xff]
        %v4838 = vld [vmem:[%s4485 + $0xb00] sm:$0xff]
        %v4839 = vld [vmem:[%s4485 + $0xb08] sm:$0xff]
        %v4840 = vld [vmem:[%s4485 + $0xb10] sm:$0xff]
        %v4841 = vld [vmem:[%s4485 + $0xb18] sm:$0xff]
        %v4842 = vld [vmem:[%s4485 + $0xb20] sm:$0xff]
        %v4843 = vld [vmem:[%s4485 + $0xb28] sm:$0xff]
        %v4844 = vld [vmem:[%s4485 + $0xb30] sm:$0xff]
        %v4845 = vld [vmem:[%s4485 + $0xb38] sm:$0xff]
        %v4846 = vld [vmem:[%s4485 + $0xb40] sm:$0xff]
        %v4847 = vld [vmem:[%s4485 + $0xb48] sm:$0xff]
        %v4848 = vld [vmem:[%s4485 + $0xb50] sm:$0xff]
        %v4849 = vld [vmem:[%s4485 + $0xb58] sm:$0xff]
        %v4850 = vld [vmem:[%s4485 + $0xb60] sm:$0xff]
        %v4851 = vld [vmem:[%s4485 + $0xb68] sm:$0xff]
        %v4852 = vld [vmem:[%s4485 + $0xb70] sm:$0xff]
        %v4853 = vld [vmem:[%s4485 + $0xb78] sm:$0xff]
        %v4854 = vld [vmem:[%s4485 + $0xb80] sm:$0xff]
        %v4855 = vld [vmem:[%s4485 + $0xb88] sm:$0xff]
        %v4856 = vld [vmem:[%s4485 + $0xb90] sm:$0xff]
        %v4857 = vld [vmem:[%s4485 + $0xb98] sm:$0xff]
        %v4858 = vld [vmem:[%s4485 + $0xba0] sm:$0xff]
        %v4859 = vld [vmem:[%s4485 + $0xba8] sm:$0xff]
        %v4860 = vld [vmem:[%s4485 + $0xbb0] sm:$0xff]
        %v4861 = vld [vmem:[%s4485 + $0xbb8] sm:$0xff]
        %v4862 = vld [vmem:[%s4485 + $0xbc0] sm:$0xff]
        %v4863 = vld [vmem:[%s4485 + $0xbc8] sm:$0xff]
        %v4864 = vld [vmem:[%s4485 + $0xbd0] sm:$0xff]
        %v4865 = vld [vmem:[%s4485 + $0xbd8] sm:$0xff]
        %v4866 = vld [vmem:[%s4485 + $0xbe0] sm:$0xff]
        %v4867 = vld [vmem:[%s4485 + $0xbe8] sm:$0xff]
        %v4868 = vld [vmem:[%s4485 + $0xbf0] sm:$0xff]
        %v4869 = vld [vmem:[%s4485 + $0xbf8] sm:$0xff]
        %v4870 = vld [vmem:[%s4485 + $0xc00] sm:$0xff]
        %v4871 = vld [vmem:[%s4485 + $0xc08] sm:$0xff]
        %v4872 = vld [vmem:[%s4485 + $0xc10] sm:$0xff]
        %v4873 = vld [vmem:[%s4485 + $0xc18] sm:$0xff]
        %v4874 = vld [vmem:[%s4485 + $0xc20] sm:$0xff]
        %v4875 = vld [vmem:[%s4485 + $0xc28] sm:$0xff]
        %v4876 = vld [vmem:[%s4485 + $0xc30] sm:$0xff]
        %v4877 = vld [vmem:[%s4485 + $0xc38] sm:$0xff]
        %v4878 = vld [vmem:[%s4485 + $0xc40] sm:$0xff]
        %v4879 = vld [vmem:[%s4485 + $0xc48] sm:$0xff]
        %v4880 = vld [vmem:[%s4485 + $0xc50] sm:$0xff]
        %v4881 = vld [vmem:[%s4485 + $0xc58] sm:$0xff]
        %v4882 = vld [vmem:[%s4485 + $0xc60] sm:$0xff]
        %v4883 = vld [vmem:[%s4485 + $0xc68] sm:$0xff]
        %v4884 = vld [vmem:[%s4485 + $0xc70] sm:$0xff]
        %v4885 = vld [vmem:[%s4485 + $0xc78] sm:$0xff]
        %v4886 = vld [vmem:[%s4485 + $0xc80] sm:$0xff]
        %v4887 = vld [vmem:[%s4485 + $0xc88] sm:$0xff]
        %v4888 = vld [vmem:[%s4485 + $0xc90] sm:$0xff]
        %v4889 = vld [vmem:[%s4485 + $0xc98] sm:$0xff]
        %v4890 = vld [vmem:[%s4485 + $0xca0] sm:$0xff]
        %v4891 = vld [vmem:[%s4485 + $0xca8] sm:$0xff]
        %v4892 = vld [vmem:[%s4485 + $0xcb0] sm:$0xff]
        %v4893 = vld [vmem:[%s4485 + $0xcb8] sm:$0xff]
        %v4894 = vld [vmem:[%s4485 + $0xcc0] sm:$0xff]
        %v4895 = vld [vmem:[%s4485 + $0xcc8] sm:$0xff]
        %v4896 = vld [vmem:[%s4485 + $0xcd0] sm:$0xff]
        %v4897 = vld [vmem:[%s4485 + $0xcd8] sm:$0xff]
        %v4898 = vld [vmem:[%s4485 + $0xce0] sm:$0xff]
        %v4899 = vld [vmem:[%s4485 + $0xce8] sm:$0xff]
        %v4900 = vld [vmem:[%s4485 + $0xcf0] sm:$0xff]
        %v4901 = vld [vmem:[%s4485 + $0xcf8] sm:$0xff]
        %v4902 = vld [vmem:[%s4485 + $0xd00] sm:$0xff]
        %v4903 = vld [vmem:[%s4485 + $0xd08] sm:$0xff]
        %v4904 = vld [vmem:[%s4485 + $0xd10] sm:$0xff]
        %v4905 = vld [vmem:[%s4485 + $0xd18] sm:$0xff]
        %v4906 = vld [vmem:[%s4485 + $0xd20] sm:$0xff]
        %v4907 = vld [vmem:[%s4485 + $0xd28] sm:$0xff]
        %v4908 = vld [vmem:[%s4485 + $0xd30] sm:$0xff]
        %v4909 = vld [vmem:[%s4485 + $0xd38] sm:$0xff]
        %v4910 = vld [vmem:[%s4485 + $0xd40] sm:$0xff]
        %v4911 = vld [vmem:[%s4485 + $0xd48] sm:$0xff]
        %v4912 = vld [vmem:[%s4485 + $0xd50] sm:$0xff]
        %v4913 = vld [vmem:[%s4485 + $0xd58] sm:$0xff]
        %v4914 = vld [vmem:[%s4485 + $0xd60] sm:$0xff]
        %v4915 = vld [vmem:[%s4485 + $0xd68] sm:$0xff]
        %v4916 = vld [vmem:[%s4485 + $0xd70] sm:$0xff]
        %v4917 = vld [vmem:[%s4485 + $0xd78] sm:$0xff]
        %v4918 = vld [vmem:[%s4485 + $0xd80] sm:$0xff]
        %v4919 = vld [vmem:[%s4485 + $0xd88] sm:$0xff]
        %v4920 = vld [vmem:[%s4485 + $0xd90] sm:$0xff]
        %v4921 = vld [vmem:[%s4485 + $0xd98] sm:$0xff]
        %v4922 = vld [vmem:[%s4485 + $0xda0] sm:$0xff]
        %v4923 = vld [vmem:[%s4485 + $0xda8] sm:$0xff]
        %v4924 = vld [vmem:[%s4485 + $0xdb0] sm:$0xff]
        %v4925 = vld [vmem:[%s4485 + $0xdb8] sm:$0xff]
        %v4926 = vld [vmem:[%s4485 + $0xdc0] sm:$0xff]
        %v4927 = vld [vmem:[%s4485 + $0xdc8] sm:$0xff]
        %v4928 = vld [vmem:[%s4485 + $0xdd0] sm:$0xff]
        %v4929 = vld [vmem:[%s4485 + $0xdd8] sm:$0xff]
        %v4930 = vld [vmem:[%s4485 + $0xde0] sm:$0xff]
        %v4931 = vld [vmem:[%s4485 + $0xde8] sm:$0xff]
        %v4932 = vld [vmem:[%s4485 + $0xdf0] sm:$0xff]
        %v4933 = vld [vmem:[%s4485 + $0xdf8] sm:$0xff]
        %v4934 = vld [vmem:[%s4485 + $0xe00] sm:$0xff]
        %v4935 = vld [vmem:[%s4485 + $0xe08] sm:$0xff]
        %v4936 = vld [vmem:[%s4485 + $0xe10] sm:$0xff]
        %v4937 = vld [vmem:[%s4485 + $0xe18] sm:$0xff]
        %v4938 = vld [vmem:[%s4485 + $0xe20] sm:$0xff]
        %v4939 = vld [vmem:[%s4485 + $0xe28] sm:$0xff]
        %v4940 = vld [vmem:[%s4485 + $0xe30] sm:$0xff]
        %v4941 = vld [vmem:[%s4485 + $0xe38] sm:$0xff]
        %v4942 = vld [vmem:[%s4485 + $0xe40] sm:$0xff]
        %v4943 = vld [vmem:[%s4485 + $0xe48] sm:$0xff]
        %v4944 = vld [vmem:[%s4485 + $0xe50] sm:$0xff]
        %v4945 = vld [vmem:[%s4485 + $0xe58] sm:$0xff]
        %v4946 = vld [vmem:[%s4485 + $0xe60] sm:$0xff]
        %v4947 = vld [vmem:[%s4485 + $0xe68] sm:$0xff]
        %v4948 = vld [vmem:[%s4485 + $0xe70] sm:$0xff]
        %v4949 = vld [vmem:[%s4485 + $0xe78] sm:$0xff]
        %v4950 = vld [vmem:[%s4485 + $0xe80] sm:$0xff]
        %v4951 = vld [vmem:[%s4485 + $0xe88] sm:$0xff]
        %v4952 = vld [vmem:[%s4485 + $0xe90] sm:$0xff]
        %v4953 = vld [vmem:[%s4485 + $0xe98] sm:$0xff]
        %v4954 = vld [vmem:[%s4485 + $0xea0] sm:$0xff]
        %v4955 = vld [vmem:[%s4485 + $0xea8] sm:$0xff]
        %v4956 = vld [vmem:[%s4485 + $0xeb0] sm:$0xff]
        %v4957 = vld [vmem:[%s4485 + $0xeb8] sm:$0xff]
        %v4958 = vld [vmem:[%s4485 + $0xec0] sm:$0xff]
        %v4959 = vld [vmem:[%s4485 + $0xec8] sm:$0xff]
        %v4960 = vld [vmem:[%s4485 + $0xed0] sm:$0xff]
        %v4961 = vld [vmem:[%s4485 + $0xed8] sm:$0xff]
        %v4962 = vld [vmem:[%s4485 + $0xee0] sm:$0xff]
        %v4963 = vld [vmem:[%s4485 + $0xee8] sm:$0xff]
        %v4964 = vld [vmem:[%s4485 + $0xef0] sm:$0xff]
        %v4965 = vld [vmem:[%s4485 + $0xef8] sm:$0xff]
        %v4966 = vld [vmem:[%s4485 + $0xf00] sm:$0xff]
        %v4967 = vld [vmem:[%s4485 + $0xf08] sm:$0xff]
        %v4968 = vld [vmem:[%s4485 + $0xf10] sm:$0xff]
        %v4969 = vld [vmem:[%s4485 + $0xf18] sm:$0xff]
        %v4970 = vld [vmem:[%s4485 + $0xf20] sm:$0xff]
        %v4971 = vld [vmem:[%s4485 + $0xf28] sm:$0xff]
        %v4972 = vld [vmem:[%s4485 + $0xf30] sm:$0xff]
        %v4973 = vld [vmem:[%s4485 + $0xf38] sm:$0xff]
        %v4974 = vld [vmem:[%s4485 + $0xf40] sm:$0xff]
        %v4975 = vld [vmem:[%s4485 + $0xf48] sm:$0xff]
        %v4976 = vld [vmem:[%s4485 + $0xf50] sm:$0xff]
        %v4977 = vld [vmem:[%s4485 + $0xf58] sm:$0xff]
        %v4978 = vld [vmem:[%s4485 + $0xf60] sm:$0xff]
        %v4979 = vld [vmem:[%s4485 + $0xf68] sm:$0xff]
        %v4980 = vld [vmem:[%s4485 + $0xf70] sm:$0xff]
        %v4981 = vld [vmem:[%s4485 + $0xf78] sm:$0xff]
        %v4982 = vld [vmem:[%s4485 + $0xf80] sm:$0xff]
        %v4983 = vld [vmem:[%s4485 + $0xf88] sm:$0xff]
        %v4984 = vld [vmem:[%s4485 + $0xf90] sm:$0xff]
        %v4985 = vld [vmem:[%s4485 + $0xf98] sm:$0xff]
        %v4986 = vld [vmem:[%s4485 + $0xfa0] sm:$0xff]
        %v4987 = vld [vmem:[%s4485 + $0xfa8] sm:$0xff]
        %v4988 = vld [vmem:[%s4485 + $0xfb0] sm:$0xff]
        %v4989 = vld [vmem:[%s4485 + $0xfb8] sm:$0xff]
        %v4990 = vld [vmem:[%s4485 + $0xfc0] sm:$0xff]
        %v4991 = vld [vmem:[%s4485 + $0xfc8] sm:$0xff]
        %v4992 = vld [vmem:[%s4485 + $0xfd0] sm:$0xff]
        %v4993 = vld [vmem:[%s4485 + $0xfd8] sm:$0xff]
        %v4994 = vld [vmem:[%s4485 + $0xfe0] sm:$0xff]
        %v4995 = vld [vmem:[%s4485 + $0xfe8] sm:$0xff]
        %v4996 = vld [vmem:[%s4485 + $0xff0] sm:$0xff]
        %v4997 = vld [vmem:[%s4485 + $0xff8] sm:$0xff]
        %v5510 = vunpack.c.l.b16 %v4486
        %v5511 = vunpack.c.h.b16 %v4486
        %v5512 = vunpack.c.l.b16 %v4487
        %v5513 = vunpack.c.h.b16 %v4487
        %v5514 = vunpack.c.l.b16 %v4488
        %v5515 = vunpack.c.h.b16 %v4488
        %v5516 = vunpack.c.l.b16 %v4489
        %v5517 = vunpack.c.h.b16 %v4489
        %v5518 = vunpack.c.l.b16 %v4490
        %v5519 = vunpack.c.h.b16 %v4490
        %v5520 = vunpack.c.l.b16 %v4491
        %v5521 = vunpack.c.h.b16 %v4491
        %v5522 = vunpack.c.l.b16 %v4492
        %v5523 = vunpack.c.h.b16 %v4492
        %v5524 = vunpack.c.l.b16 %v4493
        %v5525 = vunpack.c.h.b16 %v4493
        %v5526 = vunpack.c.l.b16 %v4494
        %v5527 = vunpack.c.h.b16 %v4494
        %v5528 = vunpack.c.l.b16 %v4495
        %v5529 = vunpack.c.h.b16 %v4495
        %v5530 = vunpack.c.l.b16 %v4496
        %v5531 = vunpack.c.h.b16 %v4496
        %v5532 = vunpack.c.l.b16 %v4497
        %v5533 = vunpack.c.h.b16 %v4497
        %v5534 = vunpack.c.l.b16 %v4498
        %v5535 = vunpack.c.h.b16 %v4498
        %v5536 = vunpack.c.l.b16 %v4499
        %v5537 = vunpack.c.h.b16 %v4499
        %v5538 = vunpack.c.l.b16 %v4500
        %v5539 = vunpack.c.h.b16 %v4500
        %v5540 = vunpack.c.l.b16 %v4501
        %v5541 = vunpack.c.h.b16 %v4501
        %v5542 = vunpack.c.l.b16 %v4502
        %v5543 = vunpack.c.h.b16 %v4502
        %v5544 = vunpack.c.l.b16 %v4503
        %v5545 = vunpack.c.h.b16 %v4503
        %v5546 = vunpack.c.l.b16 %v4504
        %v5547 = vunpack.c.h.b16 %v4504
        %v5548 = vunpack.c.l.b16 %v4505
        %v5549 = vunpack.c.h.b16 %v4505
        %v5550 = vunpack.c.l.b16 %v4506
        %v5551 = vunpack.c.h.b16 %v4506
        %v5552 = vunpack.c.l.b16 %v4507
        %v5553 = vunpack.c.h.b16 %v4507
        %v5554 = vunpack.c.l.b16 %v4508
        %v5555 = vunpack.c.h.b16 %v4508
        %v5556 = vunpack.c.l.b16 %v4509
        %v5557 = vunpack.c.h.b16 %v4509
        %v5558 = vunpack.c.l.b16 %v4510
        %v5559 = vunpack.c.h.b16 %v4510
        %v5560 = vunpack.c.l.b16 %v4511
        %v5561 = vunpack.c.h.b16 %v4511
        %v5562 = vunpack.c.l.b16 %v4512
        %v5563 = vunpack.c.h.b16 %v4512
        %v5564 = vunpack.c.l.b16 %v4513
        %v5565 = vunpack.c.h.b16 %v4513
        %v5566 = vunpack.c.l.b16 %v4514
        %v5567 = vunpack.c.h.b16 %v4514
        %v5568 = vunpack.c.l.b16 %v4515
        %v5569 = vunpack.c.h.b16 %v4515
        %v5570 = vunpack.c.l.b16 %v4516
        %v5571 = vunpack.c.h.b16 %v4516
        %v5572 = vunpack.c.l.b16 %v4517
        %v5573 = vunpack.c.h.b16 %v4517
        %v5574 = vunpack.c.l.b16 %v4518
        %v5575 = vunpack.c.h.b16 %v4518
        %v5576 = vunpack.c.l.b16 %v4519
        %v5577 = vunpack.c.h.b16 %v4519
        %v5578 = vunpack.c.l.b16 %v4520
        %v5579 = vunpack.c.h.b16 %v4520
        %v5580 = vunpack.c.l.b16 %v4521
        %v5581 = vunpack.c.h.b16 %v4521
        %v5582 = vunpack.c.l.b16 %v4522
        %v5583 = vunpack.c.h.b16 %v4522
        %v5584 = vunpack.c.l.b16 %v4523
        %v5585 = vunpack.c.h.b16 %v4523
        %v5586 = vunpack.c.l.b16 %v4524
        %v5587 = vunpack.c.h.b16 %v4524
        %v5588 = vunpack.c.l.b16 %v4525
        %v5589 = vunpack.c.h.b16 %v4525
        %v5590 = vunpack.c.l.b16 %v4526
        %v5591 = vunpack.c.h.b16 %v4526
        %v5592 = vunpack.c.l.b16 %v4527
        %v5593 = vunpack.c.h.b16 %v4527
        %v5594 = vunpack.c.l.b16 %v4528
        %v5595 = vunpack.c.h.b16 %v4528
        %v5596 = vunpack.c.l.b16 %v4529
        %v5597 = vunpack.c.h.b16 %v4529
        %v5598 = vunpack.c.l.b16 %v4530
        %v5599 = vunpack.c.h.b16 %v4530
        %v5600 = vunpack.c.l.b16 %v4531
        %v5601 = vunpack.c.h.b16 %v4531
        %v5602 = vunpack.c.l.b16 %v4532
        %v5603 = vunpack.c.h.b16 %v4532
        %v5604 = vunpack.c.l.b16 %v4533
        %v5605 = vunpack.c.h.b16 %v4533
        %v5606 = vunpack.c.l.b16 %v4534
        %v5607 = vunpack.c.h.b16 %v4534
        %v5608 = vunpack.c.l.b16 %v4535
        %v5609 = vunpack.c.h.b16 %v4535
        %v5610 = vunpack.c.l.b16 %v4536
        %v5611 = vunpack.c.h.b16 %v4536
        %v5612 = vunpack.c.l.b16 %v4537
        %v5613 = vunpack.c.h.b16 %v4537
        %v5614 = vunpack.c.l.b16 %v4538
        %v5615 = vunpack.c.h.b16 %v4538
        %v5616 = vunpack.c.l.b16 %v4539
        %v5617 = vunpack.c.h.b16 %v4539
        %v5618 = vunpack.c.l.b16 %v4540
        %v5619 = vunpack.c.h.b16 %v4540
        %v5620 = vunpack.c.l.b16 %v4541
        %v5621 = vunpack.c.h.b16 %v4541
        %v5622 = vunpack.c.l.b16 %v4542
        %v5623 = vunpack.c.h.b16 %v4542
        %v5624 = vunpack.c.l.b16 %v4543
        %v5625 = vunpack.c.h.b16 %v4543
        %v5626 = vunpack.c.l.b16 %v4544
        %v5627 = vunpack.c.h.b16 %v4544
        %v5628 = vunpack.c.l.b16 %v4545
        %v5629 = vunpack.c.h.b16 %v4545
        %v5630 = vunpack.c.l.b16 %v4546
        %v5631 = vunpack.c.h.b16 %v4546
        %v5632 = vunpack.c.l.b16 %v4547
        %v5633 = vunpack.c.h.b16 %v4547
        %v5634 = vunpack.c.l.b16 %v4548
        %v5635 = vunpack.c.h.b16 %v4548
        %v5636 = vunpack.c.l.b16 %v4549
        %v5637 = vunpack.c.h.b16 %v4549
        %v5638 = vunpack.c.l.b16 %v4550
        %v5639 = vunpack.c.h.b16 %v4550
        %v5640 = vunpack.c.l.b16 %v4551
        %v5641 = vunpack.c.h.b16 %v4551
        %v5642 = vunpack.c.l.b16 %v4552
        %v5643 = vunpack.c.h.b16 %v4552
        %v5644 = vunpack.c.l.b16 %v4553
        %v5645 = vunpack.c.h.b16 %v4553
        %v5646 = vunpack.c.l.b16 %v4554
        %v5647 = vunpack.c.h.b16 %v4554
        %v5648 = vunpack.c.l.b16 %v4555
        %v5649 = vunpack.c.h.b16 %v4555
        %v5650 = vunpack.c.l.b16 %v4556
        %v5651 = vunpack.c.h.b16 %v4556
        %v5652 = vunpack.c.l.b16 %v4557
        %v5653 = vunpack.c.h.b16 %v4557
        %v5654 = vunpack.c.l.b16 %v4558
        %v5655 = vunpack.c.h.b16 %v4558
        %v5656 = vunpack.c.l.b16 %v4559
        %v5657 = vunpack.c.h.b16 %v4559
        %v5658 = vunpack.c.l.b16 %v4560
        %v5659 = vunpack.c.h.b16 %v4560
        %v5660 = vunpack.c.l.b16 %v4561
        %v5661 = vunpack.c.h.b16 %v4561
        %v5662 = vunpack.c.l.b16 %v4562
        %v5663 = vunpack.c.h.b16 %v4562
        %v5664 = vunpack.c.l.b16 %v4563
        %v5665 = vunpack.c.h.b16 %v4563
        %v5666 = vunpack.c.l.b16 %v4564
        %v5667 = vunpack.c.h.b16 %v4564
        %v5668 = vunpack.c.l.b16 %v4565
        %v5669 = vunpack.c.h.b16 %v4565
        %v5670 = vunpack.c.l.b16 %v4566
        %v5671 = vunpack.c.h.b16 %v4566
        %v5672 = vunpack.c.l.b16 %v4567
        %v5673 = vunpack.c.h.b16 %v4567
        %v5674 = vunpack.c.l.b16 %v4568
        %v5675 = vunpack.c.h.b16 %v4568
        %v5676 = vunpack.c.l.b16 %v4569
        %v5677 = vunpack.c.h.b16 %v4569
        %v5678 = vunpack.c.l.b16 %v4570
        %v5679 = vunpack.c.h.b16 %v4570
        %v5680 = vunpack.c.l.b16 %v4571
        %v5681 = vunpack.c.h.b16 %v4571
        %v5682 = vunpack.c.l.b16 %v4572
        %v5683 = vunpack.c.h.b16 %v4572
        %v5684 = vunpack.c.l.b16 %v4573
        %v5685 = vunpack.c.h.b16 %v4573
        %v5686 = vunpack.c.l.b16 %v4574
        %v5687 = vunpack.c.h.b16 %v4574
        %v5688 = vunpack.c.l.b16 %v4575
        %v5689 = vunpack.c.h.b16 %v4575
        %v5690 = vunpack.c.l.b16 %v4576
        %v5691 = vunpack.c.h.b16 %v4576
        %v5692 = vunpack.c.l.b16 %v4577
        %v5693 = vunpack.c.h.b16 %v4577
        %v5694 = vunpack.c.l.b16 %v4578
        %v5695 = vunpack.c.h.b16 %v4578
        %v5696 = vunpack.c.l.b16 %v4579
        %v5697 = vunpack.c.h.b16 %v4579
        %v5698 = vunpack.c.l.b16 %v4580
        %v5699 = vunpack.c.h.b16 %v4580
        %v5700 = vunpack.c.l.b16 %v4581
        %v5701 = vunpack.c.h.b16 %v4581
        %v5702 = vunpack.c.l.b16 %v4582
        %v5703 = vunpack.c.h.b16 %v4582
        %v5704 = vunpack.c.l.b16 %v4583
        %v5705 = vunpack.c.h.b16 %v4583
        %v5706 = vunpack.c.l.b16 %v4584
        %v5707 = vunpack.c.h.b16 %v4584
        %v5708 = vunpack.c.l.b16 %v4585
        %v5709 = vunpack.c.h.b16 %v4585
        %v5710 = vunpack.c.l.b16 %v4586
        %v5711 = vunpack.c.h.b16 %v4586
        %v5712 = vunpack.c.l.b16 %v4587
        %v5713 = vunpack.c.h.b16 %v4587
        %v5714 = vunpack.c.l.b16 %v4588
        %v5715 = vunpack.c.h.b16 %v4588
        %v5716 = vunpack.c.l.b16 %v4589
        %v5717 = vunpack.c.h.b16 %v4589
        %v5718 = vunpack.c.l.b16 %v4590
        %v5719 = vunpack.c.h.b16 %v4590
        %v5720 = vunpack.c.l.b16 %v4591
        %v5721 = vunpack.c.h.b16 %v4591
        %v5722 = vunpack.c.l.b16 %v4592
        %v5723 = vunpack.c.h.b16 %v4592
        %v5724 = vunpack.c.l.b16 %v4593
        %v5725 = vunpack.c.h.b16 %v4593
        %v5726 = vunpack.c.l.b16 %v4594
        %v5727 = vunpack.c.h.b16 %v4594
        %v5728 = vunpack.c.l.b16 %v4595
        %v5729 = vunpack.c.h.b16 %v4595
        %v5730 = vunpack.c.l.b16 %v4596
        %v5731 = vunpack.c.h.b16 %v4596
        %v5732 = vunpack.c.l.b16 %v4597
        %v5733 = vunpack.c.h.b16 %v4597
        %v5734 = vunpack.c.l.b16 %v4598
        %v5735 = vunpack.c.h.b16 %v4598
        %v5736 = vunpack.c.l.b16 %v4599
        %v5737 = vunpack.c.h.b16 %v4599
        %v5738 = vunpack.c.l.b16 %v4600
        %v5739 = vunpack.c.h.b16 %v4600
        %v5740 = vunpack.c.l.b16 %v4601
        %v5741 = vunpack.c.h.b16 %v4601
        %v5742 = vunpack.c.l.b16 %v4602
        %v5743 = vunpack.c.h.b16 %v4602
        %v5744 = vunpack.c.l.b16 %v4603
        %v5745 = vunpack.c.h.b16 %v4603
        %v5746 = vunpack.c.l.b16 %v4604
        %v5747 = vunpack.c.h.b16 %v4604
        %v5748 = vunpack.c.l.b16 %v4605
        %v5749 = vunpack.c.h.b16 %v4605
        %v5750 = vunpack.c.l.b16 %v4606
        %v5751 = vunpack.c.h.b16 %v4606
        %v5752 = vunpack.c.l.b16 %v4607
        %v5753 = vunpack.c.h.b16 %v4607
        %v5754 = vunpack.c.l.b16 %v4608
        %v5755 = vunpack.c.h.b16 %v4608
        %v5756 = vunpack.c.l.b16 %v4609
        %v5757 = vunpack.c.h.b16 %v4609
        %v5758 = vunpack.c.l.b16 %v4610
        %v5759 = vunpack.c.h.b16 %v4610
        %v5760 = vunpack.c.l.b16 %v4611
        %v5761 = vunpack.c.h.b16 %v4611
        %v5762 = vunpack.c.l.b16 %v4612
        %v5763 = vunpack.c.h.b16 %v4612
        %v5764 = vunpack.c.l.b16 %v4613
        %v5765 = vunpack.c.h.b16 %v4613
        %v5766 = vunpack.c.l.b16 %v4614
        %v5767 = vunpack.c.h.b16 %v4614
        %v5768 = vunpack.c.l.b16 %v4615
        %v5769 = vunpack.c.h.b16 %v4615
        %v5770 = vunpack.c.l.b16 %v4616
        %v5771 = vunpack.c.h.b16 %v4616
        %v5772 = vunpack.c.l.b16 %v4617
        %v5773 = vunpack.c.h.b16 %v4617
        %v5774 = vunpack.c.l.b16 %v4618
        %v5775 = vunpack.c.h.b16 %v4618
        %v5776 = vunpack.c.l.b16 %v4619
        %v5777 = vunpack.c.h.b16 %v4619
        %v5778 = vunpack.c.l.b16 %v4620
        %v5779 = vunpack.c.h.b16 %v4620
        %v5780 = vunpack.c.l.b16 %v4621
        %v5781 = vunpack.c.h.b16 %v4621
        %v5782 = vunpack.c.l.b16 %v4622
        %v5783 = vunpack.c.h.b16 %v4622
        %v5784 = vunpack.c.l.b16 %v4623
        %v5785 = vunpack.c.h.b16 %v4623
        %v5786 = vunpack.c.l.b16 %v4624
        %v5787 = vunpack.c.h.b16 %v4624
        %v5788 = vunpack.c.l.b16 %v4625
        %v5789 = vunpack.c.h.b16 %v4625
        %v5790 = vunpack.c.l.b16 %v4626
        %v5791 = vunpack.c.h.b16 %v4626
        %v5792 = vunpack.c.l.b16 %v4627
        %v5793 = vunpack.c.h.b16 %v4627
        %v5794 = vunpack.c.l.b16 %v4628
        %v5795 = vunpack.c.h.b16 %v4628
        %v5796 = vunpack.c.l.b16 %v4629
        %v5797 = vunpack.c.h.b16 %v4629
        %v5798 = vunpack.c.l.b16 %v4630
        %v5799 = vunpack.c.h.b16 %v4630
        %v5800 = vunpack.c.l.b16 %v4631
        %v5801 = vunpack.c.h.b16 %v4631
        %v5802 = vunpack.c.l.b16 %v4632
        %v5803 = vunpack.c.h.b16 %v4632
        %v5804 = vunpack.c.l.b16 %v4633
        %v5805 = vunpack.c.h.b16 %v4633
        %v5806 = vunpack.c.l.b16 %v4634
        %v5807 = vunpack.c.h.b16 %v4634
        %v5808 = vunpack.c.l.b16 %v4635
        %v5809 = vunpack.c.h.b16 %v4635
        %v5810 = vunpack.c.l.b16 %v4636
        %v5811 = vunpack.c.h.b16 %v4636
        %v5812 = vunpack.c.l.b16 %v4637
        %v5813 = vunpack.c.h.b16 %v4637
        %v5814 = vunpack.c.l.b16 %v4638
        %v5815 = vunpack.c.h.b16 %v4638
        %v5816 = vunpack.c.l.b16 %v4639
        %v5817 = vunpack.c.h.b16 %v4639
        %v5818 = vunpack.c.l.b16 %v4640
        %v5819 = vunpack.c.h.b16 %v4640
        %v5820 = vunpack.c.l.b16 %v4641
        %v5821 = vunpack.c.h.b16 %v4641
        %v5822 = vunpack.c.l.b16 %v4642
        %v5823 = vunpack.c.h.b16 %v4642
        %v5824 = vunpack.c.l.b16 %v4643
        %v5825 = vunpack.c.h.b16 %v4643
        %v5826 = vunpack.c.l.b16 %v4644
        %v5827 = vunpack.c.h.b16 %v4644
        %v5828 = vunpack.c.l.b16 %v4645
        %v5829 = vunpack.c.h.b16 %v4645
        %v5830 = vunpack.c.l.b16 %v4646
        %v5831 = vunpack.c.h.b16 %v4646
        %v5832 = vunpack.c.l.b16 %v4647
        %v5833 = vunpack.c.h.b16 %v4647
        %v5834 = vunpack.c.l.b16 %v4648
        %v5835 = vunpack.c.h.b16 %v4648
        %v5836 = vunpack.c.l.b16 %v4649
        %v5837 = vunpack.c.h.b16 %v4649
        %v5838 = vunpack.c.l.b16 %v4650
        %v5839 = vunpack.c.h.b16 %v4650
        %v5840 = vunpack.c.l.b16 %v4651
        %v5841 = vunpack.c.h.b16 %v4651
        %v5842 = vunpack.c.l.b16 %v4652
        %v5843 = vunpack.c.h.b16 %v4652
        %v5844 = vunpack.c.l.b16 %v4653
        %v5845 = vunpack.c.h.b16 %v4653
        %v5846 = vunpack.c.l.b16 %v4654
        %v5847 = vunpack.c.h.b16 %v4654
        %v5848 = vunpack.c.l.b16 %v4655
        %v5849 = vunpack.c.h.b16 %v4655
        %v5850 = vunpack.c.l.b16 %v4656
        %v5851 = vunpack.c.h.b16 %v4656
        %v5852 = vunpack.c.l.b16 %v4657
        %v5853 = vunpack.c.h.b16 %v4657
        %v5854 = vunpack.c.l.b16 %v4658
        %v5855 = vunpack.c.h.b16 %v4658
        %v5856 = vunpack.c.l.b16 %v4659
        %v5857 = vunpack.c.h.b16 %v4659
        %v5858 = vunpack.c.l.b16 %v4660
        %v5859 = vunpack.c.h.b16 %v4660
        %v5860 = vunpack.c.l.b16 %v4661
        %v5861 = vunpack.c.h.b16 %v4661
        %v5862 = vunpack.c.l.b16 %v4662
        %v5863 = vunpack.c.h.b16 %v4662
        %v5864 = vunpack.c.l.b16 %v4663
        %v5865 = vunpack.c.h.b16 %v4663
        %v5866 = vunpack.c.l.b16 %v4664
        %v5867 = vunpack.c.h.b16 %v4664
        %v5868 = vunpack.c.l.b16 %v4665
        %v5869 = vunpack.c.h.b16 %v4665
        %v5870 = vunpack.c.l.b16 %v4666
        %v5871 = vunpack.c.h.b16 %v4666
        %v5872 = vunpack.c.l.b16 %v4667
        %v5873 = vunpack.c.h.b16 %v4667
        %v5874 = vunpack.c.l.b16 %v4668
        %v5875 = vunpack.c.h.b16 %v4668
        %v5876 = vunpack.c.l.b16 %v4669
        %v5877 = vunpack.c.h.b16 %v4669
        %v5878 = vunpack.c.l.b16 %v4670
        %v5879 = vunpack.c.h.b16 %v4670
        %v5880 = vunpack.c.l.b16 %v4671
        %v5881 = vunpack.c.h.b16 %v4671
        %v5882 = vunpack.c.l.b16 %v4672
        %v5883 = vunpack.c.h.b16 %v4672
        %v5884 = vunpack.c.l.b16 %v4673
        %v5885 = vunpack.c.h.b16 %v4673
        %v5886 = vunpack.c.l.b16 %v4674
        %v5887 = vunpack.c.h.b16 %v4674
        %v5888 = vunpack.c.l.b16 %v4675
        %v5889 = vunpack.c.h.b16 %v4675
        %v5890 = vunpack.c.l.b16 %v4676
        %v5891 = vunpack.c.h.b16 %v4676
        %v5892 = vunpack.c.l.b16 %v4677
        %v5893 = vunpack.c.h.b16 %v4677
        %v5894 = vunpack.c.l.b16 %v4678
        %v5895 = vunpack.c.h.b16 %v4678
        %v5896 = vunpack.c.l.b16 %v4679
        %v5897 = vunpack.c.h.b16 %v4679
        %v5898 = vunpack.c.l.b16 %v4680
        %v5899 = vunpack.c.h.b16 %v4680
        %v5900 = vunpack.c.l.b16 %v4681
        %v5901 = vunpack.c.h.b16 %v4681
        %v5902 = vunpack.c.l.b16 %v4682
        %v5903 = vunpack.c.h.b16 %v4682
        %v5904 = vunpack.c.l.b16 %v4683
        %v5905 = vunpack.c.h.b16 %v4683
        %v5906 = vunpack.c.l.b16 %v4684
        %v5907 = vunpack.c.h.b16 %v4684
        %v5908 = vunpack.c.l.b16 %v4685
        %v5909 = vunpack.c.h.b16 %v4685
        %v5910 = vunpack.c.l.b16 %v4686
        %v5911 = vunpack.c.h.b16 %v4686
        %v5912 = vunpack.c.l.b16 %v4687
        %v5913 = vunpack.c.h.b16 %v4687
        %v5914 = vunpack.c.l.b16 %v4688
        %v5915 = vunpack.c.h.b16 %v4688
        %v5916 = vunpack.c.l.b16 %v4689
        %v5917 = vunpack.c.h.b16 %v4689
        %v5918 = vunpack.c.l.b16 %v4690
        %v5919 = vunpack.c.h.b16 %v4690
        %v5920 = vunpack.c.l.b16 %v4691
        %v5921 = vunpack.c.h.b16 %v4691
        %v5922 = vunpack.c.l.b16 %v4692
        %v5923 = vunpack.c.h.b16 %v4692
        %v5924 = vunpack.c.l.b16 %v4693
        %v5925 = vunpack.c.h.b16 %v4693
        %v5926 = vunpack.c.l.b16 %v4694
        %v5927 = vunpack.c.h.b16 %v4694
        %v5928 = vunpack.c.l.b16 %v4695
        %v5929 = vunpack.c.h.b16 %v4695
        %v5930 = vunpack.c.l.b16 %v4696
        %v5931 = vunpack.c.h.b16 %v4696
        %v5932 = vunpack.c.l.b16 %v4697
        %v5933 = vunpack.c.h.b16 %v4697
        %v5934 = vunpack.c.l.b16 %v4698
        %v5935 = vunpack.c.h.b16 %v4698
        %v5936 = vunpack.c.l.b16 %v4699
        %v5937 = vunpack.c.h.b16 %v4699
        %v5938 = vunpack.c.l.b16 %v4700
        %v5939 = vunpack.c.h.b16 %v4700
        %v5940 = vunpack.c.l.b16 %v4701
        %v5941 = vunpack.c.h.b16 %v4701
        %v5942 = vunpack.c.l.b16 %v4702
        %v5943 = vunpack.c.h.b16 %v4702
        %v5944 = vunpack.c.l.b16 %v4703
        %v5945 = vunpack.c.h.b16 %v4703
        %v5946 = vunpack.c.l.b16 %v4704
        %v5947 = vunpack.c.h.b16 %v4704
        %v5948 = vunpack.c.l.b16 %v4705
        %v5949 = vunpack.c.h.b16 %v4705
        %v5950 = vunpack.c.l.b16 %v4706
        %v5951 = vunpack.c.h.b16 %v4706
        %v5952 = vunpack.c.l.b16 %v4707
        %v5953 = vunpack.c.h.b16 %v4707
        %v5954 = vunpack.c.l.b16 %v4708
        %v5955 = vunpack.c.h.b16 %v4708
        %v5956 = vunpack.c.l.b16 %v4709
        %v5957 = vunpack.c.h.b16 %v4709
        %v5958 = vunpack.c.l.b16 %v4710
        %v5959 = vunpack.c.h.b16 %v4710
        %v5960 = vunpack.c.l.b16 %v4711
        %v5961 = vunpack.c.h.b16 %v4711
        %v5962 = vunpack.c.l.b16 %v4712
        %v5963 = vunpack.c.h.b16 %v4712
        %v5964 = vunpack.c.l.b16 %v4713
        %v5965 = vunpack.c.h.b16 %v4713
        %v5966 = vunpack.c.l.b16 %v4714
        %v5967 = vunpack.c.h.b16 %v4714
        %v5968 = vunpack.c.l.b16 %v4715
        %v5969 = vunpack.c.h.b16 %v4715
        %v5970 = vunpack.c.l.b16 %v4716
        %v5971 = vunpack.c.h.b16 %v4716
        %v5972 = vunpack.c.l.b16 %v4717
        %v5973 = vunpack.c.h.b16 %v4717
        %v5974 = vunpack.c.l.b16 %v4718
        %v5975 = vunpack.c.h.b16 %v4718
        %v5976 = vunpack.c.l.b16 %v4719
        %v5977 = vunpack.c.h.b16 %v4719
        %v5978 = vunpack.c.l.b16 %v4720
        %v5979 = vunpack.c.h.b16 %v4720
        %v5980 = vunpack.c.l.b16 %v4721
        %v5981 = vunpack.c.h.b16 %v4721
        %v5982 = vunpack.c.l.b16 %v4722
        %v5983 = vunpack.c.h.b16 %v4722
        %v5984 = vunpack.c.l.b16 %v4723
        %v5985 = vunpack.c.h.b16 %v4723
        %v5986 = vunpack.c.l.b16 %v4724
        %v5987 = vunpack.c.h.b16 %v4724
        %v5988 = vunpack.c.l.b16 %v4725
        %v5989 = vunpack.c.h.b16 %v4725
        %v5990 = vunpack.c.l.b16 %v4726
        %v5991 = vunpack.c.h.b16 %v4726
        %v5992 = vunpack.c.l.b16 %v4727
        %v5993 = vunpack.c.h.b16 %v4727
        %v5994 = vunpack.c.l.b16 %v4728
        %v5995 = vunpack.c.h.b16 %v4728
        %v5996 = vunpack.c.l.b16 %v4729
        %v5997 = vunpack.c.h.b16 %v4729
        %v5998 = vunpack.c.l.b16 %v4730
        %v5999 = vunpack.c.h.b16 %v4730
        %v6000 = vunpack.c.l.b16 %v4731
        %v6001 = vunpack.c.h.b16 %v4731
        %v6002 = vunpack.c.l.b16 %v4732
        %v6003 = vunpack.c.h.b16 %v4732
        %v6004 = vunpack.c.l.b16 %v4733
        %v6005 = vunpack.c.h.b16 %v4733
        %v6006 = vunpack.c.l.b16 %v4734
        %v6007 = vunpack.c.h.b16 %v4734
        %v6008 = vunpack.c.l.b16 %v4735
        %v6009 = vunpack.c.h.b16 %v4735
        %v6010 = vunpack.c.l.b16 %v4736
        %v6011 = vunpack.c.h.b16 %v4736
        %v6012 = vunpack.c.l.b16 %v4737
        %v6013 = vunpack.c.h.b16 %v4737
        %v6014 = vunpack.c.l.b16 %v4738
        %v6015 = vunpack.c.h.b16 %v4738
        %v6016 = vunpack.c.l.b16 %v4739
        %v6017 = vunpack.c.h.b16 %v4739
        %v6018 = vunpack.c.l.b16 %v4740
        %v6019 = vunpack.c.h.b16 %v4740
        %v6020 = vunpack.c.l.b16 %v4741
        %v6021 = vunpack.c.h.b16 %v4741
        %v6022 = vunpack.c.l.b16 %v4742
        %v6023 = vunpack.c.h.b16 %v4742
        %v6024 = vunpack.c.l.b16 %v4743
        %v6025 = vunpack.c.h.b16 %v4743
        %v6026 = vunpack.c.l.b16 %v4744
        %v6027 = vunpack.c.h.b16 %v4744
        %v6028 = vunpack.c.l.b16 %v4745
        %v6029 = vunpack.c.h.b16 %v4745
        %v6030 = vunpack.c.l.b16 %v4746
        %v6031 = vunpack.c.h.b16 %v4746
        %v6032 = vunpack.c.l.b16 %v4747
        %v6033 = vunpack.c.h.b16 %v4747
        %v6034 = vunpack.c.l.b16 %v4748
        %v6035 = vunpack.c.h.b16 %v4748
        %v6036 = vunpack.c.l.b16 %v4749
        %v6037 = vunpack.c.h.b16 %v4749
        %v6038 = vunpack.c.l.b16 %v4750
        %v6039 = vunpack.c.h.b16 %v4750
        %v6040 = vunpack.c.l.b16 %v4751
        %v6041 = vunpack.c.h.b16 %v4751
        %v6042 = vunpack.c.l.b16 %v4752
        %v6043 = vunpack.c.h.b16 %v4752
        %v6044 = vunpack.c.l.b16 %v4753
        %v6045 = vunpack.c.h.b16 %v4753
        %v6046 = vunpack.c.l.b16 %v4754
        %v6047 = vunpack.c.h.b16 %v4754
        %v6048 = vunpack.c.l.b16 %v4755
        %v6049 = vunpack.c.h.b16 %v4755
        %v6050 = vunpack.c.l.b16 %v4756
        %v6051 = vunpack.c.h.b16 %v4756
        %v6052 = vunpack.c.l.b16 %v4757
        %v6053 = vunpack.c.h.b16 %v4757
        %v6054 = vunpack.c.l.b16 %v4758
        %v6055 = vunpack.c.h.b16 %v4758
        %v6056 = vunpack.c.l.b16 %v4759
        %v6057 = vunpack.c.h.b16 %v4759
        %v6058 = vunpack.c.l.b16 %v4760
        %v6059 = vunpack.c.h.b16 %v4760
        %v6060 = vunpack.c.l.b16 %v4761
        %v6061 = vunpack.c.h.b16 %v4761
        %v6062 = vunpack.c.l.b16 %v4762
        %v6063 = vunpack.c.h.b16 %v4762
        %v6064 = vunpack.c.l.b16 %v4763
        %v6065 = vunpack.c.h.b16 %v4763
        %v6066 = vunpack.c.l.b16 %v4764
        %v6067 = vunpack.c.h.b16 %v4764
        %v6068 = vunpack.c.l.b16 %v4765
        %v6069 = vunpack.c.h.b16 %v4765
        %v6070 = vunpack.c.l.b16 %v4766
        %v6071 = vunpack.c.h.b16 %v4766
        %v6072 = vunpack.c.l.b16 %v4767
        %v6073 = vunpack.c.h.b16 %v4767
        %v6074 = vunpack.c.l.b16 %v4768
        %v6075 = vunpack.c.h.b16 %v4768
        %v6076 = vunpack.c.l.b16 %v4769
        %v6077 = vunpack.c.h.b16 %v4769
        %v6078 = vunpack.c.l.b16 %v4770
        %v6079 = vunpack.c.h.b16 %v4770
        %v6080 = vunpack.c.l.b16 %v4771
        %v6081 = vunpack.c.h.b16 %v4771
        %v6082 = vunpack.c.l.b16 %v4772
        %v6083 = vunpack.c.h.b16 %v4772
        %v6084 = vunpack.c.l.b16 %v4773
        %v6085 = vunpack.c.h.b16 %v4773
        %v6086 = vunpack.c.l.b16 %v4774
        %v6087 = vunpack.c.h.b16 %v4774
        %v6088 = vunpack.c.l.b16 %v4775
        %v6089 = vunpack.c.h.b16 %v4775
        %v6090 = vunpack.c.l.b16 %v4776
        %v6091 = vunpack.c.h.b16 %v4776
        %v6092 = vunpack.c.l.b16 %v4777
        %v6093 = vunpack.c.h.b16 %v4777
        %v6094 = vunpack.c.l.b16 %v4778
        %v6095 = vunpack.c.h.b16 %v4778
        %v6096 = vunpack.c.l.b16 %v4779
        %v6097 = vunpack.c.h.b16 %v4779
        %v6098 = vunpack.c.l.b16 %v4780
        %v6099 = vunpack.c.h.b16 %v4780
        %v6100 = vunpack.c.l.b16 %v4781
        %v6101 = vunpack.c.h.b16 %v4781
        %v6102 = vunpack.c.l.b16 %v4782
        %v6103 = vunpack.c.h.b16 %v4782
        %v6104 = vunpack.c.l.b16 %v4783
        %v6105 = vunpack.c.h.b16 %v4783
        %v6106 = vunpack.c.l.b16 %v4784
        %v6107 = vunpack.c.h.b16 %v4784
        %v6108 = vunpack.c.l.b16 %v4785
        %v6109 = vunpack.c.h.b16 %v4785
        %v6110 = vunpack.c.l.b16 %v4786
        %v6111 = vunpack.c.h.b16 %v4786
        %v6112 = vunpack.c.l.b16 %v4787
        %v6113 = vunpack.c.h.b16 %v4787
        %v6114 = vunpack.c.l.b16 %v4788
        %v6115 = vunpack.c.h.b16 %v4788
        %v6116 = vunpack.c.l.b16 %v4789
        %v6117 = vunpack.c.h.b16 %v4789
        %v6118 = vunpack.c.l.b16 %v4790
        %v6119 = vunpack.c.h.b16 %v4790
        %v6120 = vunpack.c.l.b16 %v4791
        %v6121 = vunpack.c.h.b16 %v4791
        %v6122 = vunpack.c.l.b16 %v4792
        %v6123 = vunpack.c.h.b16 %v4792
        %v6124 = vunpack.c.l.b16 %v4793
        %v6125 = vunpack.c.h.b16 %v4793
        %v6126 = vunpack.c.l.b16 %v4794
        %v6127 = vunpack.c.h.b16 %v4794
        %v6128 = vunpack.c.l.b16 %v4795
        %v6129 = vunpack.c.h.b16 %v4795
        %v6130 = vunpack.c.l.b16 %v4796
        %v6131 = vunpack.c.h.b16 %v4796
        %v6132 = vunpack.c.l.b16 %v4797
        %v6133 = vunpack.c.h.b16 %v4797
        %v6134 = vunpack.c.l.b16 %v4798
        %v6135 = vunpack.c.h.b16 %v4798
        %v6136 = vunpack.c.l.b16 %v4799
        %v6137 = vunpack.c.h.b16 %v4799
        %v6138 = vunpack.c.l.b16 %v4800
        %v6139 = vunpack.c.h.b16 %v4800
        %v6140 = vunpack.c.l.b16 %v4801
        %v6141 = vunpack.c.h.b16 %v4801
        %v6142 = vunpack.c.l.b16 %v4802
        %v6143 = vunpack.c.h.b16 %v4802
        %v6144 = vunpack.c.l.b16 %v4803
        %v6145 = vunpack.c.h.b16 %v4803
        %v6146 = vunpack.c.l.b16 %v4804
        %v6147 = vunpack.c.h.b16 %v4804
        %v6148 = vunpack.c.l.b16 %v4805
        %v6149 = vunpack.c.h.b16 %v4805
        %v6150 = vunpack.c.l.b16 %v4806
        %v6151 = vunpack.c.h.b16 %v4806
        %v6152 = vunpack.c.l.b16 %v4807
        %v6153 = vunpack.c.h.b16 %v4807
        %v6154 = vunpack.c.l.b16 %v4808
        %v6155 = vunpack.c.h.b16 %v4808
        %v6156 = vunpack.c.l.b16 %v4809
        %v6157 = vunpack.c.h.b16 %v4809
        %v6158 = vunpack.c.l.b16 %v4810
        %v6159 = vunpack.c.h.b16 %v4810
        %v6160 = vunpack.c.l.b16 %v4811
        %v6161 = vunpack.c.h.b16 %v4811
        %v6162 = vunpack.c.l.b16 %v4812
        %v6163 = vunpack.c.h.b16 %v4812
        %v6164 = vunpack.c.l.b16 %v4813
        %v6165 = vunpack.c.h.b16 %v4813
        %v6166 = vunpack.c.l.b16 %v4814
        %v6167 = vunpack.c.h.b16 %v4814
        %v6168 = vunpack.c.l.b16 %v4815
        %v6169 = vunpack.c.h.b16 %v4815
        %v6170 = vunpack.c.l.b16 %v4816
        %v6171 = vunpack.c.h.b16 %v4816
        %v6172 = vunpack.c.l.b16 %v4817
        %v6173 = vunpack.c.h.b16 %v4817
        %v6174 = vunpack.c.l.b16 %v4818
        %v6175 = vunpack.c.h.b16 %v4818
        %v6176 = vunpack.c.l.b16 %v4819
        %v6177 = vunpack.c.h.b16 %v4819
        %v6178 = vunpack.c.l.b16 %v4820
        %v6179 = vunpack.c.h.b16 %v4820
        %v6180 = vunpack.c.l.b16 %v4821
        %v6181 = vunpack.c.h.b16 %v4821
        %v6182 = vunpack.c.l.b16 %v4822
        %v6183 = vunpack.c.h.b16 %v4822
        %v6184 = vunpack.c.l.b16 %v4823
        %v6185 = vunpack.c.h.b16 %v4823
        %v6186 = vunpack.c.l.b16 %v4824
        %v6187 = vunpack.c.h.b16 %v4824
        %v6188 = vunpack.c.l.b16 %v4825
        %v6189 = vunpack.c.h.b16 %v4825
        %v6190 = vunpack.c.l.b16 %v4826
        %v6191 = vunpack.c.h.b16 %v4826
        %v6192 = vunpack.c.l.b16 %v4827
        %v6193 = vunpack.c.h.b16 %v4827
        %v6194 = vunpack.c.l.b16 %v4828
        %v6195 = vunpack.c.h.b16 %v4828
        %v6196 = vunpack.c.l.b16 %v4829
        %v6197 = vunpack.c.h.b16 %v4829
        %v6198 = vunpack.c.l.b16 %v4830
        %v6199 = vunpack.c.h.b16 %v4830
        %v6200 = vunpack.c.l.b16 %v4831
        %v6201 = vunpack.c.h.b16 %v4831
        %v6202 = vunpack.c.l.b16 %v4832
        %v6203 = vunpack.c.h.b16 %v4832
        %v6204 = vunpack.c.l.b16 %v4833
        %v6205 = vunpack.c.h.b16 %v4833
        %v6206 = vunpack.c.l.b16 %v4834
        %v6207 = vunpack.c.h.b16 %v4834
        %v6208 = vunpack.c.l.b16 %v4835
        %v6209 = vunpack.c.h.b16 %v4835
        %v6210 = vunpack.c.l.b16 %v4836
        %v6211 = vunpack.c.h.b16 %v4836
        %v6212 = vunpack.c.l.b16 %v4837
        %v6213 = vunpack.c.h.b16 %v4837
        %v6214 = vunpack.c.l.b16 %v4838
        %v6215 = vunpack.c.h.b16 %v4838
        %v6216 = vunpack.c.l.b16 %v4839
        %v6217 = vunpack.c.h.b16 %v4839
        %v6218 = vunpack.c.l.b16 %v4840
        %v6219 = vunpack.c.h.b16 %v4840
        %v6220 = vunpack.c.l.b16 %v4841
        %v6221 = vunpack.c.h.b16 %v4841
        %v6222 = vunpack.c.l.b16 %v4842
        %v6223 = vunpack.c.h.b16 %v4842
        %v6224 = vunpack.c.l.b16 %v4843
        %v6225 = vunpack.c.h.b16 %v4843
        %v6226 = vunpack.c.l.b16 %v4844
        %v6227 = vunpack.c.h.b16 %v4844
        %v6228 = vunpack.c.l.b16 %v4845
        %v6229 = vunpack.c.h.b16 %v4845
        %v6230 = vunpack.c.l.b16 %v4846
        %v6231 = vunpack.c.h.b16 %v4846
        %v6232 = vunpack.c.l.b16 %v4847
        %v6233 = vunpack.c.h.b16 %v4847
        %v6234 = vunpack.c.l.b16 %v4848
        %v6235 = vunpack.c.h.b16 %v4848
        %v6236 = vunpack.c.l.b16 %v4849
        %v6237 = vunpack.c.h.b16 %v4849
        %v6238 = vunpack.c.l.b16 %v4850
        %v6239 = vunpack.c.h.b16 %v4850
        %v6240 = vunpack.c.l.b16 %v4851
        %v6241 = vunpack.c.h.b16 %v4851
        %v6242 = vunpack.c.l.b16 %v4852
        %v6243 = vunpack.c.h.b16 %v4852
        %v6244 = vunpack.c.l.b16 %v4853
        %v6245 = vunpack.c.h.b16 %v4853
        %v6246 = vunpack.c.l.b16 %v4854
        %v6247 = vunpack.c.h.b16 %v4854
        %v6248 = vunpack.c.l.b16 %v4855
        %v6249 = vunpack.c.h.b16 %v4855
        %v6250 = vunpack.c.l.b16 %v4856
        %v6251 = vunpack.c.h.b16 %v4856
        %v6252 = vunpack.c.l.b16 %v4857
        %v6253 = vunpack.c.h.b16 %v4857
        %v6254 = vunpack.c.l.b16 %v4858
        %v6255 = vunpack.c.h.b16 %v4858
        %v6256 = vunpack.c.l.b16 %v4859
        %v6257 = vunpack.c.h.b16 %v4859
        %v6258 = vunpack.c.l.b16 %v4860
        %v6259 = vunpack.c.h.b16 %v4860
        %v6260 = vunpack.c.l.b16 %v4861
        %v6261 = vunpack.c.h.b16 %v4861
        %v6262 = vunpack.c.l.b16 %v4862
        %v6263 = vunpack.c.h.b16 %v4862
        %v6264 = vunpack.c.l.b16 %v4863
        %v6265 = vunpack.c.h.b16 %v4863
        %v6266 = vunpack.c.l.b16 %v4864
        %v6267 = vunpack.c.h.b16 %v4864
        %v6268 = vunpack.c.l.b16 %v4865
        %v6269 = vunpack.c.h.b16 %v4865
        %v6270 = vunpack.c.l.b16 %v4866
        %v6271 = vunpack.c.h.b16 %v4866
        %v6272 = vunpack.c.l.b16 %v4867
        %v6273 = vunpack.c.h.b16 %v4867
        %v6274 = vunpack.c.l.b16 %v4868
        %v6275 = vunpack.c.h.b16 %v4868
        %v6276 = vunpack.c.l.b16 %v4869
        %v6277 = vunpack.c.h.b16 %v4869
        %v6278 = vunpack.c.l.b16 %v4870
        %v6279 = vunpack.c.h.b16 %v4870
        %v6280 = vunpack.c.l.b16 %v4871
        %v6281 = vunpack.c.h.b16 %v4871
        %v6282 = vunpack.c.l.b16 %v4872
        %v6283 = vunpack.c.h.b16 %v4872
        %v6284 = vunpack.c.l.b16 %v4873
        %v6285 = vunpack.c.h.b16 %v4873
        %v6286 = vunpack.c.l.b16 %v4874
        %v6287 = vunpack.c.h.b16 %v4874
        %v6288 = vunpack.c.l.b16 %v4875
        %v6289 = vunpack.c.h.b16 %v4875
        %v6290 = vunpack.c.l.b16 %v4876
        %v6291 = vunpack.c.h.b16 %v4876
        %v6292 = vunpack.c.l.b16 %v4877
        %v6293 = vunpack.c.h.b16 %v4877
        %v6294 = vunpack.c.l.b16 %v4878
        %v6295 = vunpack.c.h.b16 %v4878
        %v6296 = vunpack.c.l.b16 %v4879
        %v6297 = vunpack.c.h.b16 %v4879
        %v6298 = vunpack.c.l.b16 %v4880
        %v6299 = vunpack.c.h.b16 %v4880
        %v6300 = vunpack.c.l.b16 %v4881
        %v6301 = vunpack.c.h.b16 %v4881
        %v6302 = vunpack.c.l.b16 %v4882
        %v6303 = vunpack.c.h.b16 %v4882
        %v6304 = vunpack.c.l.b16 %v4883
        %v6305 = vunpack.c.h.b16 %v4883
        %v6306 = vunpack.c.l.b16 %v4884
        %v6307 = vunpack.c.h.b16 %v4884
        %v6308 = vunpack.c.l.b16 %v4885
        %v6309 = vunpack.c.h.b16 %v4885
        %v6310 = vunpack.c.l.b16 %v4886
        %v6311 = vunpack.c.h.b16 %v4886
        %v6312 = vunpack.c.l.b16 %v4887
        %v6313 = vunpack.c.h.b16 %v4887
        %v6314 = vunpack.c.l.b16 %v4888
        %v6315 = vunpack.c.h.b16 %v4888
        %v6316 = vunpack.c.l.b16 %v4889
        %v6317 = vunpack.c.h.b16 %v4889
        %v6318 = vunpack.c.l.b16 %v4890
        %v6319 = vunpack.c.h.b16 %v4890
        %v6320 = vunpack.c.l.b16 %v4891
        %v6321 = vunpack.c.h.b16 %v4891
        %v6322 = vunpack.c.l.b16 %v4892
        %v6323 = vunpack.c.h.b16 %v4892
        %v6324 = vunpack.c.l.b16 %v4893
        %v6325 = vunpack.c.h.b16 %v4893
        %v6326 = vunpack.c.l.b16 %v4894
        %v6327 = vunpack.c.h.b16 %v4894
        %v6328 = vunpack.c.l.b16 %v4895
        %v6329 = vunpack.c.h.b16 %v4895
        %v6330 = vunpack.c.l.b16 %v4896
        %v6331 = vunpack.c.h.b16 %v4896
        %v6332 = vunpack.c.l.b16 %v4897
        %v6333 = vunpack.c.h.b16 %v4897
        %v6334 = vunpack.c.l.b16 %v4898
        %v6335 = vunpack.c.h.b16 %v4898
        %v6336 = vunpack.c.l.b16 %v4899
        %v6337 = vunpack.c.h.b16 %v4899
        %v6338 = vunpack.c.l.b16 %v4900
        %v6339 = vunpack.c.h.b16 %v4900
        %v6340 = vunpack.c.l.b16 %v4901
        %v6341 = vunpack.c.h.b16 %v4901
        %v6342 = vunpack.c.l.b16 %v4902
        %v6343 = vunpack.c.h.b16 %v4902
        %v6344 = vunpack.c.l.b16 %v4903
        %v6345 = vunpack.c.h.b16 %v4903
        %v6346 = vunpack.c.l.b16 %v4904
        %v6347 = vunpack.c.h.b16 %v4904
        %v6348 = vunpack.c.l.b16 %v4905
        %v6349 = vunpack.c.h.b16 %v4905
        %v6350 = vunpack.c.l.b16 %v4906
        %v6351 = vunpack.c.h.b16 %v4906
        %v6352 = vunpack.c.l.b16 %v4907
        %v6353 = vunpack.c.h.b16 %v4907
        %v6354 = vunpack.c.l.b16 %v4908
        %v6355 = vunpack.c.h.b16 %v4908
        %v6356 = vunpack.c.l.b16 %v4909
        %v6357 = vunpack.c.h.b16 %v4909
        %v6358 = vunpack.c.l.b16 %v4910
        %v6359 = vunpack.c.h.b16 %v4910
        %v6360 = vunpack.c.l.b16 %v4911
        %v6361 = vunpack.c.h.b16 %v4911
        %v6362 = vunpack.c.l.b16 %v4912
        %v6363 = vunpack.c.h.b16 %v4912
        %v6364 = vunpack.c.l.b16 %v4913
        %v6365 = vunpack.c.h.b16 %v4913
        %v6366 = vunpack.c.l.b16 %v4914
        %v6367 = vunpack.c.h.b16 %v4914
        %v6368 = vunpack.c.l.b16 %v4915
        %v6369 = vunpack.c.h.b16 %v4915
        %v6370 = vunpack.c.l.b16 %v4916
        %v6371 = vunpack.c.h.b16 %v4916
        %v6372 = vunpack.c.l.b16 %v4917
        %v6373 = vunpack.c.h.b16 %v4917
        %v6374 = vunpack.c.l.b16 %v4918
        %v6375 = vunpack.c.h.b16 %v4918
        %v6376 = vunpack.c.l.b16 %v4919
        %v6377 = vunpack.c.h.b16 %v4919
        %v6378 = vunpack.c.l.b16 %v4920
        %v6379 = vunpack.c.h.b16 %v4920
        %v6380 = vunpack.c.l.b16 %v4921
        %v6381 = vunpack.c.h.b16 %v4921
        %v6382 = vunpack.c.l.b16 %v4922
        %v6383 = vunpack.c.h.b16 %v4922
        %v6384 = vunpack.c.l.b16 %v4923
        %v6385 = vunpack.c.h.b16 %v4923
        %v6386 = vunpack.c.l.b16 %v4924
        %v6387 = vunpack.c.h.b16 %v4924
        %v6388 = vunpack.c.l.b16 %v4925
        %v6389 = vunpack.c.h.b16 %v4925
        %v6390 = vunpack.c.l.b16 %v4926
        %v6391 = vunpack.c.h.b16 %v4926
        %v6392 = vunpack.c.l.b16 %v4927
        %v6393 = vunpack.c.h.b16 %v4927
        %v6394 = vunpack.c.l.b16 %v4928
        %v6395 = vunpack.c.h.b16 %v4928
        %v6396 = vunpack.c.l.b16 %v4929
        %v6397 = vunpack.c.h.b16 %v4929
        %v6398 = vunpack.c.l.b16 %v4930
        %v6399 = vunpack.c.h.b16 %v4930
        %v6400 = vunpack.c.l.b16 %v4931
        %v6401 = vunpack.c.h.b16 %v4931
        %v6402 = vunpack.c.l.b16 %v4932
        %v6403 = vunpack.c.h.b16 %v4932
        %v6404 = vunpack.c.l.b16 %v4933
        %v6405 = vunpack.c.h.b16 %v4933
        %v6406 = vunpack.c.l.b16 %v4934
        %v6407 = vunpack.c.h.b16 %v4934
        %v6408 = vunpack.c.l.b16 %v4935
        %v6409 = vunpack.c.h.b16 %v4935
        %v6410 = vunpack.c.l.b16 %v4936
        %v6411 = vunpack.c.h.b16 %v4936
        %v6412 = vunpack.c.l.b16 %v4937
        %v6413 = vunpack.c.h.b16 %v4937
        %v6414 = vunpack.c.l.b16 %v4938
        %v6415 = vunpack.c.h.b16 %v4938
        %v6416 = vunpack.c.l.b16 %v4939
        %v6417 = vunpack.c.h.b16 %v4939
        %v6418 = vunpack.c.l.b16 %v4940
        %v6419 = vunpack.c.h.b16 %v4940
        %v6420 = vunpack.c.l.b16 %v4941
        %v6421 = vunpack.c.h.b16 %v4941
        %v6422 = vunpack.c.l.b16 %v4942
        %v6423 = vunpack.c.h.b16 %v4942
        %v6424 = vunpack.c.l.b16 %v4943
        %v6425 = vunpack.c.h.b16 %v4943
        %v6426 = vunpack.c.l.b16 %v4944
        %v6427 = vunpack.c.h.b16 %v4944
        %v6428 = vunpack.c.l.b16 %v4945
        %v6429 = vunpack.c.h.b16 %v4945
        %v6430 = vunpack.c.l.b16 %v4946
        %v6431 = vunpack.c.h.b16 %v4946
        %v6432 = vunpack.c.l.b16 %v4947
        %v6433 = vunpack.c.h.b16 %v4947
        %v6434 = vunpack.c.l.b16 %v4948
        %v6435 = vunpack.c.h.b16 %v4948
        %v6436 = vunpack.c.l.b16 %v4949
        %v6437 = vunpack.c.h.b16 %v4949
        %v6438 = vunpack.c.l.b16 %v4950
        %v6439 = vunpack.c.h.b16 %v4950
        %v6440 = vunpack.c.l.b16 %v4951
        %v6441 = vunpack.c.h.b16 %v4951
        %v6442 = vunpack.c.l.b16 %v4952
        %v6443 = vunpack.c.h.b16 %v4952
        %v6444 = vunpack.c.l.b16 %v4953
        %v6445 = vunpack.c.h.b16 %v4953
        %v6446 = vunpack.c.l.b16 %v4954
        %v6447 = vunpack.c.h.b16 %v4954
        %v6448 = vunpack.c.l.b16 %v4955
        %v6449 = vunpack.c.h.b16 %v4955
        %v6450 = vunpack.c.l.b16 %v4956
        %v6451 = vunpack.c.h.b16 %v4956
        %v6452 = vunpack.c.l.b16 %v4957
        %v6453 = vunpack.c.h.b16 %v4957
        %v6454 = vunpack.c.l.b16 %v4958
        %v6455 = vunpack.c.h.b16 %v4958
        %v6456 = vunpack.c.l.b16 %v4959
        %v6457 = vunpack.c.h.b16 %v4959
        %v6458 = vunpack.c.l.b16 %v4960
        %v6459 = vunpack.c.h.b16 %v4960
        %v6460 = vunpack.c.l.b16 %v4961
        %v6461 = vunpack.c.h.b16 %v4961
        %v6462 = vunpack.c.l.b16 %v4962
        %v6463 = vunpack.c.h.b16 %v4962
        %v6464 = vunpack.c.l.b16 %v4963
        %v6465 = vunpack.c.h.b16 %v4963
        %v6466 = vunpack.c.l.b16 %v4964
        %v6467 = vunpack.c.h.b16 %v4964
        %v6468 = vunpack.c.l.b16 %v4965
        %v6469 = vunpack.c.h.b16 %v4965
        %v6470 = vunpack.c.l.b16 %v4966
        %v6471 = vunpack.c.h.b16 %v4966
        %v6472 = vunpack.c.l.b16 %v4967
        %v6473 = vunpack.c.h.b16 %v4967
        %v6474 = vunpack.c.l.b16 %v4968
        %v6475 = vunpack.c.h.b16 %v4968
        %v6476 = vunpack.c.l.b16 %v4969
        %v6477 = vunpack.c.h.b16 %v4969
        %v6478 = vunpack.c.l.b16 %v4970
        %v6479 = vunpack.c.h.b16 %v4970
        %v6480 = vunpack.c.l.b16 %v4971
        %v6481 = vunpack.c.h.b16 %v4971
        %v6482 = vunpack.c.l.b16 %v4972
        %v6483 = vunpack.c.h.b16 %v4972
        %v6484 = vunpack.c.l.b16 %v4973
        %v6485 = vunpack.c.h.b16 %v4973
        %v6486 = vunpack.c.l.b16 %v4974
        %v6487 = vunpack.c.h.b16 %v4974
        %v6488 = vunpack.c.l.b16 %v4975
        %v6489 = vunpack.c.h.b16 %v4975
        %v6490 = vunpack.c.l.b16 %v4976
        %v6491 = vunpack.c.h.b16 %v4976
        %v6492 = vunpack.c.l.b16 %v4977
        %v6493 = vunpack.c.h.b16 %v4977
        %v6494 = vunpack.c.l.b16 %v4978
        %v6495 = vunpack.c.h.b16 %v4978
        %v6496 = vunpack.c.l.b16 %v4979
        %v6497 = vunpack.c.h.b16 %v4979
        %v6498 = vunpack.c.l.b16 %v4980
        %v6499 = vunpack.c.h.b16 %v4980
        %v6500 = vunpack.c.l.b16 %v4981
        %v6501 = vunpack.c.h.b16 %v4981
        %v6502 = vunpack.c.l.b16 %v4982
        %v6503 = vunpack.c.h.b16 %v4982
        %v6504 = vunpack.c.l.b16 %v4983
        %v6505 = vunpack.c.h.b16 %v4983
        %v6506 = vunpack.c.l.b16 %v4984
        %v6507 = vunpack.c.h.b16 %v4984
        %v6508 = vunpack.c.l.b16 %v4985
        %v6509 = vunpack.c.h.b16 %v4985
        %v6510 = vunpack.c.l.b16 %v4986
        %v6511 = vunpack.c.h.b16 %v4986
        %v6512 = vunpack.c.l.b16 %v4987
        %v6513 = vunpack.c.h.b16 %v4987
        %v6514 = vunpack.c.l.b16 %v4988
        %v6515 = vunpack.c.h.b16 %v4988
        %v6516 = vunpack.c.l.b16 %v4989
        %v6517 = vunpack.c.h.b16 %v4989
        %v6518 = vunpack.c.l.b16 %v4990
        %v6519 = vunpack.c.h.b16 %v4990
        %v6520 = vunpack.c.l.b16 %v4991
        %v6521 = vunpack.c.h.b16 %v4991
        %v6522 = vunpack.c.l.b16 %v4992
        %v6523 = vunpack.c.h.b16 %v4992
        %v6524 = vunpack.c.l.b16 %v4993
        %v6525 = vunpack.c.h.b16 %v4993
        %v6526 = vunpack.c.l.b16 %v4994
        %v6527 = vunpack.c.h.b16 %v4994
        %v6528 = vunpack.c.l.b16 %v4995
        %v6529 = vunpack.c.h.b16 %v4995
        %v6530 = vunpack.c.l.b16 %v4996
        %v6531 = vunpack.c.h.b16 %v4996
        %v6532 = vunpack.c.l.b16 %v4997
        %v6533 = vunpack.c.h.b16 %v4997
        %v6534 = vpack.c.b16 %v5518, %v5510
        %v6535 = vpack.c.b16 %v5519, %v5511
        %v6536 = vpack.c.b16 %v5520, %v5512
        %v6537 = vpack.c.b16 %v5521, %v5513
        %v6538 = vpack.c.b16 %v5522, %v5514
        %v6539 = vpack.c.b16 %v5523, %v5515
        %v6540 = vpack.c.b16 %v5524, %v5516
        %v6541 = vpack.c.b16 %v5525, %v5517
        %v6542 = vpack.c.b16 %v5534, %v5526
        %v6543 = vpack.c.b16 %v5535, %v5527
        %v6544 = vpack.c.b16 %v5536, %v5528
        %v6545 = vpack.c.b16 %v5537, %v5529
        %v6546 = vpack.c.b16 %v5538, %v5530
        %v6547 = vpack.c.b16 %v5539, %v5531
        %v6548 = vpack.c.b16 %v5540, %v5532
        %v6549 = vpack.c.b16 %v5541, %v5533
        %v6550 = vpack.c.b16 %v5550, %v5542
        %v6551 = vpack.c.b16 %v5551, %v5543
        %v6552 = vpack.c.b16 %v5552, %v5544
        %v6553 = vpack.c.b16 %v5553, %v5545
        %v6554 = vpack.c.b16 %v5554, %v5546
        %v6555 = vpack.c.b16 %v5555, %v5547
        %v6556 = vpack.c.b16 %v5556, %v5548
        %v6557 = vpack.c.b16 %v5557, %v5549
        %v6558 = vpack.c.b16 %v5566, %v5558
        %v6559 = vpack.c.b16 %v5567, %v5559
        %v6560 = vpack.c.b16 %v5568, %v5560
        %v6561 = vpack.c.b16 %v5569, %v5561
        %v6562 = vpack.c.b16 %v5570, %v5562
        %v6563 = vpack.c.b16 %v5571, %v5563
        %v6564 = vpack.c.b16 %v5572, %v5564
        %v6565 = vpack.c.b16 %v5573, %v5565
        %v6566 = vpack.c.b16 %v5582, %v5574
        %v6567 = vpack.c.b16 %v5583, %v5575
        %v6568 = vpack.c.b16 %v5584, %v5576
        %v6569 = vpack.c.b16 %v5585, %v5577
        %v6570 = vpack.c.b16 %v5586, %v5578
        %v6571 = vpack.c.b16 %v5587, %v5579
        %v6572 = vpack.c.b16 %v5588, %v5580
        %v6573 = vpack.c.b16 %v5589, %v5581
        %v6574 = vpack.c.b16 %v5598, %v5590
        %v6575 = vpack.c.b16 %v5599, %v5591
        %v6576 = vpack.c.b16 %v5600, %v5592
        %v6577 = vpack.c.b16 %v5601, %v5593
        %v6578 = vpack.c.b16 %v5602, %v5594
        %v6579 = vpack.c.b16 %v5603, %v5595
        %v6580 = vpack.c.b16 %v5604, %v5596
        %v6581 = vpack.c.b16 %v5605, %v5597
        %v6582 = vpack.c.b16 %v5614, %v5606
        %v6583 = vpack.c.b16 %v5615, %v5607
        %v6584 = vpack.c.b16 %v5616, %v5608
        %v6585 = vpack.c.b16 %v5617, %v5609
        %v6586 = vpack.c.b16 %v5618, %v5610
        %v6587 = vpack.c.b16 %v5619, %v5611
        %v6588 = vpack.c.b16 %v5620, %v5612
        %v6589 = vpack.c.b16 %v5621, %v5613
        %v6590 = vpack.c.b16 %v5630, %v5622
        %v6591 = vpack.c.b16 %v5631, %v5623
        %v6592 = vpack.c.b16 %v5632, %v5624
        %v6593 = vpack.c.b16 %v5633, %v5625
        %v6594 = vpack.c.b16 %v5634, %v5626
        %v6595 = vpack.c.b16 %v5635, %v5627
        %v6596 = vpack.c.b16 %v5636, %v5628
        %v6597 = vpack.c.b16 %v5637, %v5629
        %v6598 = vpack.c.b16 %v5646, %v5638
        %v6599 = vpack.c.b16 %v5647, %v5639
        %v6600 = vpack.c.b16 %v5648, %v5640
        %v6601 = vpack.c.b16 %v5649, %v5641
        %v6602 = vpack.c.b16 %v5650, %v5642
        %v6603 = vpack.c.b16 %v5651, %v5643
        %v6604 = vpack.c.b16 %v5652, %v5644
        %v6605 = vpack.c.b16 %v5653, %v5645
        %v6606 = vpack.c.b16 %v5662, %v5654
        %v6607 = vpack.c.b16 %v5663, %v5655
        %v6608 = vpack.c.b16 %v5664, %v5656
        %v6609 = vpack.c.b16 %v5665, %v5657
        %v6610 = vpack.c.b16 %v5666, %v5658
        %v6611 = vpack.c.b16 %v5667, %v5659
        %v6612 = vpack.c.b16 %v5668, %v5660
        %v6613 = vpack.c.b16 %v5669, %v5661
        %v6614 = vpack.c.b16 %v5678, %v5670
        %v6615 = vpack.c.b16 %v5679, %v5671
        %v6616 = vpack.c.b16 %v5680, %v5672
        %v6617 = vpack.c.b16 %v5681, %v5673
        %v6618 = vpack.c.b16 %v5682, %v5674
        %v6619 = vpack.c.b16 %v5683, %v5675
        %v6620 = vpack.c.b16 %v5684, %v5676
        %v6621 = vpack.c.b16 %v5685, %v5677
        %v6622 = vpack.c.b16 %v5694, %v5686
        %v6623 = vpack.c.b16 %v5695, %v5687
        %v6624 = vpack.c.b16 %v5696, %v5688
        %v6625 = vpack.c.b16 %v5697, %v5689
        %v6626 = vpack.c.b16 %v5698, %v5690
        %v6627 = vpack.c.b16 %v5699, %v5691
        %v6628 = vpack.c.b16 %v5700, %v5692
        %v6629 = vpack.c.b16 %v5701, %v5693
        %v6630 = vpack.c.b16 %v5710, %v5702
        %v6631 = vpack.c.b16 %v5711, %v5703
        %v6632 = vpack.c.b16 %v5712, %v5704
        %v6633 = vpack.c.b16 %v5713, %v5705
        %v6634 = vpack.c.b16 %v5714, %v5706
        %v6635 = vpack.c.b16 %v5715, %v5707
        %v6636 = vpack.c.b16 %v5716, %v5708
        %v6637 = vpack.c.b16 %v5717, %v5709
        %v6638 = vpack.c.b16 %v5726, %v5718
        %v6639 = vpack.c.b16 %v5727, %v5719
        %v6640 = vpack.c.b16 %v5728, %v5720
        %v6641 = vpack.c.b16 %v5729, %v5721
        %v6642 = vpack.c.b16 %v5730, %v5722
        %v6643 = vpack.c.b16 %v5731, %v5723
        %v6644 = vpack.c.b16 %v5732, %v5724
        %v6645 = vpack.c.b16 %v5733, %v5725
        %v6646 = vpack.c.b16 %v5742, %v5734
        %v6647 = vpack.c.b16 %v5743, %v5735
        %v6648 = vpack.c.b16 %v5744, %v5736
        %v6649 = vpack.c.b16 %v5745, %v5737
        %v6650 = vpack.c.b16 %v5746, %v5738
        %v6651 = vpack.c.b16 %v5747, %v5739
        %v6652 = vpack.c.b16 %v5748, %v5740
        %v6653 = vpack.c.b16 %v5749, %v5741
        %v6654 = vpack.c.b16 %v5758, %v5750
        %v6655 = vpack.c.b16 %v5759, %v5751
        %v6656 = vpack.c.b16 %v5760, %v5752
        %v6657 = vpack.c.b16 %v5761, %v5753
        %v6658 = vpack.c.b16 %v5762, %v5754
        %v6659 = vpack.c.b16 %v5763, %v5755
        %v6660 = vpack.c.b16 %v5764, %v5756
        %v6661 = vpack.c.b16 %v5765, %v5757
        %v6662 = vpack.c.b16 %v5774, %v5766
        %v6663 = vpack.c.b16 %v5775, %v5767
        %v6664 = vpack.c.b16 %v5776, %v5768
        %v6665 = vpack.c.b16 %v5777, %v5769
        %v6666 = vpack.c.b16 %v5778, %v5770
        %v6667 = vpack.c.b16 %v5779, %v5771
        %v6668 = vpack.c.b16 %v5780, %v5772
        %v6669 = vpack.c.b16 %v5781, %v5773
        %v6670 = vpack.c.b16 %v5790, %v5782
        %v6671 = vpack.c.b16 %v5791, %v5783
        %v6672 = vpack.c.b16 %v5792, %v5784
        %v6673 = vpack.c.b16 %v5793, %v5785
        %v6674 = vpack.c.b16 %v5794, %v5786
        %v6675 = vpack.c.b16 %v5795, %v5787
        %v6676 = vpack.c.b16 %v5796, %v5788
        %v6677 = vpack.c.b16 %v5797, %v5789
        %v6678 = vpack.c.b16 %v5806, %v5798
        %v6679 = vpack.c.b16 %v5807, %v5799
        %v6680 = vpack.c.b16 %v5808, %v5800
        %v6681 = vpack.c.b16 %v5809, %v5801
        %v6682 = vpack.c.b16 %v5810, %v5802
        %v6683 = vpack.c.b16 %v5811, %v5803
        %v6684 = vpack.c.b16 %v5812, %v5804
        %v6685 = vpack.c.b16 %v5813, %v5805
        %v6686 = vpack.c.b16 %v5822, %v5814
        %v6687 = vpack.c.b16 %v5823, %v5815
        %v6688 = vpack.c.b16 %v5824, %v5816
        %v6689 = vpack.c.b16 %v5825, %v5817
        %v6690 = vpack.c.b16 %v5826, %v5818
        %v6691 = vpack.c.b16 %v5827, %v5819
        %v6692 = vpack.c.b16 %v5828, %v5820
        %v6693 = vpack.c.b16 %v5829, %v5821
        %v6694 = vpack.c.b16 %v5838, %v5830
        %v6695 = vpack.c.b16 %v5839, %v5831
        %v6696 = vpack.c.b16 %v5840, %v5832
        %v6697 = vpack.c.b16 %v5841, %v5833
        %v6698 = vpack.c.b16 %v5842, %v5834
        %v6699 = vpack.c.b16 %v5843, %v5835
        %v6700 = vpack.c.b16 %v5844, %v5836
        %v6701 = vpack.c.b16 %v5845, %v5837
        %v6702 = vpack.c.b16 %v5854, %v5846
        %v6703 = vpack.c.b16 %v5855, %v5847
        %v6704 = vpack.c.b16 %v5856, %v5848
        %v6705 = vpack.c.b16 %v5857, %v5849
        %v6706 = vpack.c.b16 %v5858, %v5850
        %v6707 = vpack.c.b16 %v5859, %v5851
        %v6708 = vpack.c.b16 %v5860, %v5852
        %v6709 = vpack.c.b16 %v5861, %v5853
        %v6710 = vpack.c.b16 %v5870, %v5862
        %v6711 = vpack.c.b16 %v5871, %v5863
        %v6712 = vpack.c.b16 %v5872, %v5864
        %v6713 = vpack.c.b16 %v5873, %v5865
        %v6714 = vpack.c.b16 %v5874, %v5866
        %v6715 = vpack.c.b16 %v5875, %v5867
        %v6716 = vpack.c.b16 %v5876, %v5868
        %v6717 = vpack.c.b16 %v5877, %v5869
        %v6718 = vpack.c.b16 %v5886, %v5878
        %v6719 = vpack.c.b16 %v5887, %v5879
        %v6720 = vpack.c.b16 %v5888, %v5880
        %v6721 = vpack.c.b16 %v5889, %v5881
        %v6722 = vpack.c.b16 %v5890, %v5882
        %v6723 = vpack.c.b16 %v5891, %v5883
        %v6724 = vpack.c.b16 %v5892, %v5884
        %v6725 = vpack.c.b16 %v5893, %v5885
        %v6726 = vpack.c.b16 %v5902, %v5894
        %v6727 = vpack.c.b16 %v5903, %v5895
        %v6728 = vpack.c.b16 %v5904, %v5896
        %v6729 = vpack.c.b16 %v5905, %v5897
        %v6730 = vpack.c.b16 %v5906, %v5898
        %v6731 = vpack.c.b16 %v5907, %v5899
        %v6732 = vpack.c.b16 %v5908, %v5900
        %v6733 = vpack.c.b16 %v5909, %v5901
        %v6734 = vpack.c.b16 %v5918, %v5910
        %v6735 = vpack.c.b16 %v5919, %v5911
        %v6736 = vpack.c.b16 %v5920, %v5912
        %v6737 = vpack.c.b16 %v5921, %v5913
        %v6738 = vpack.c.b16 %v5922, %v5914
        %v6739 = vpack.c.b16 %v5923, %v5915
        %v6740 = vpack.c.b16 %v5924, %v5916
        %v6741 = vpack.c.b16 %v5925, %v5917
        %v6742 = vpack.c.b16 %v5934, %v5926
        %v6743 = vpack.c.b16 %v5935, %v5927
        %v6744 = vpack.c.b16 %v5936, %v5928
        %v6745 = vpack.c.b16 %v5937, %v5929
        %v6746 = vpack.c.b16 %v5938, %v5930
        %v6747 = vpack.c.b16 %v5939, %v5931
        %v6748 = vpack.c.b16 %v5940, %v5932
        %v6749 = vpack.c.b16 %v5941, %v5933
        %v6750 = vpack.c.b16 %v5950, %v5942
        %v6751 = vpack.c.b16 %v5951, %v5943
        %v6752 = vpack.c.b16 %v5952, %v5944
        %v6753 = vpack.c.b16 %v5953, %v5945
        %v6754 = vpack.c.b16 %v5954, %v5946
        %v6755 = vpack.c.b16 %v5955, %v5947
        %v6756 = vpack.c.b16 %v5956, %v5948
        %v6757 = vpack.c.b16 %v5957, %v5949
        %v6758 = vpack.c.b16 %v5966, %v5958
        %v6759 = vpack.c.b16 %v5967, %v5959
        %v6760 = vpack.c.b16 %v5968, %v5960
        %v6761 = vpack.c.b16 %v5969, %v5961
        %v6762 = vpack.c.b16 %v5970, %v5962
        %v6763 = vpack.c.b16 %v5971, %v5963
        %v6764 = vpack.c.b16 %v5972, %v5964
        %v6765 = vpack.c.b16 %v5973, %v5965
        %v6766 = vpack.c.b16 %v5982, %v5974
        %v6767 = vpack.c.b16 %v5983, %v5975
        %v6768 = vpack.c.b16 %v5984, %v5976
        %v6769 = vpack.c.b16 %v5985, %v5977
        %v6770 = vpack.c.b16 %v5986, %v5978
        %v6771 = vpack.c.b16 %v5987, %v5979
        %v6772 = vpack.c.b16 %v5988, %v5980
        %v6773 = vpack.c.b16 %v5989, %v5981
        %v6774 = vpack.c.b16 %v5998, %v5990
        %v6775 = vpack.c.b16 %v5999, %v5991
        %v6776 = vpack.c.b16 %v6000, %v5992
        %v6777 = vpack.c.b16 %v6001, %v5993
        %v6778 = vpack.c.b16 %v6002, %v5994
        %v6779 = vpack.c.b16 %v6003, %v5995
        %v6780 = vpack.c.b16 %v6004, %v5996
        %v6781 = vpack.c.b16 %v6005, %v5997
        %v6782 = vpack.c.b16 %v6014, %v6006
        %v6783 = vpack.c.b16 %v6015, %v6007
        %v6784 = vpack.c.b16 %v6016, %v6008
        %v6785 = vpack.c.b16 %v6017, %v6009
        %v6786 = vpack.c.b16 %v6018, %v6010
        %v6787 = vpack.c.b16 %v6019, %v6011
        %v6788 = vpack.c.b16 %v6020, %v6012
        %v6789 = vpack.c.b16 %v6021, %v6013
        %v6790 = vpack.c.b16 %v6030, %v6022
        %v6791 = vpack.c.b16 %v6031, %v6023
        %v6792 = vpack.c.b16 %v6032, %v6024
        %v6793 = vpack.c.b16 %v6033, %v6025
        %v6794 = vpack.c.b16 %v6034, %v6026
        %v6795 = vpack.c.b16 %v6035, %v6027
        %v6796 = vpack.c.b16 %v6036, %v6028
        %v6797 = vpack.c.b16 %v6037, %v6029
        %v6798 = vpack.c.b16 %v6046, %v6038
        %v6799 = vpack.c.b16 %v6047, %v6039
        %v6800 = vpack.c.b16 %v6048, %v6040
        %v6801 = vpack.c.b16 %v6049, %v6041
        %v6802 = vpack.c.b16 %v6050, %v6042
        %v6803 = vpack.c.b16 %v6051, %v6043
        %v6804 = vpack.c.b16 %v6052, %v6044
        %v6805 = vpack.c.b16 %v6053, %v6045
        %v6806 = vpack.c.b16 %v6062, %v6054
        %v6807 = vpack.c.b16 %v6063, %v6055
        %v6808 = vpack.c.b16 %v6064, %v6056
        %v6809 = vpack.c.b16 %v6065, %v6057
        %v6810 = vpack.c.b16 %v6066, %v6058
        %v6811 = vpack.c.b16 %v6067, %v6059
        %v6812 = vpack.c.b16 %v6068, %v6060
        %v6813 = vpack.c.b16 %v6069, %v6061
        %v6814 = vpack.c.b16 %v6078, %v6070
        %v6815 = vpack.c.b16 %v6079, %v6071
        %v6816 = vpack.c.b16 %v6080, %v6072
        %v6817 = vpack.c.b16 %v6081, %v6073
        %v6818 = vpack.c.b16 %v6082, %v6074
        %v6819 = vpack.c.b16 %v6083, %v6075
        %v6820 = vpack.c.b16 %v6084, %v6076
        %v6821 = vpack.c.b16 %v6085, %v6077
        %v6822 = vpack.c.b16 %v6094, %v6086
        %v6823 = vpack.c.b16 %v6095, %v6087
        %v6824 = vpack.c.b16 %v6096, %v6088
        %v6825 = vpack.c.b16 %v6097, %v6089
        %v6826 = vpack.c.b16 %v6098, %v6090
        %v6827 = vpack.c.b16 %v6099, %v6091
        %v6828 = vpack.c.b16 %v6100, %v6092
        %v6829 = vpack.c.b16 %v6101, %v6093
        %v6830 = vpack.c.b16 %v6110, %v6102
        %v6831 = vpack.c.b16 %v6111, %v6103
        %v6832 = vpack.c.b16 %v6112, %v6104
        %v6833 = vpack.c.b16 %v6113, %v6105
        %v6834 = vpack.c.b16 %v6114, %v6106
        %v6835 = vpack.c.b16 %v6115, %v6107
        %v6836 = vpack.c.b16 %v6116, %v6108
        %v6837 = vpack.c.b16 %v6117, %v6109
        %v6838 = vpack.c.b16 %v6126, %v6118
        %v6839 = vpack.c.b16 %v6127, %v6119
        %v6840 = vpack.c.b16 %v6128, %v6120
        %v6841 = vpack.c.b16 %v6129, %v6121
        %v6842 = vpack.c.b16 %v6130, %v6122
        %v6843 = vpack.c.b16 %v6131, %v6123
        %v6844 = vpack.c.b16 %v6132, %v6124
        %v6845 = vpack.c.b16 %v6133, %v6125
        %v6846 = vpack.c.b16 %v6142, %v6134
        %v6847 = vpack.c.b16 %v6143, %v6135
        %v6848 = vpack.c.b16 %v6144, %v6136
        %v6849 = vpack.c.b16 %v6145, %v6137
        %v6850 = vpack.c.b16 %v6146, %v6138
        %v6851 = vpack.c.b16 %v6147, %v6139
        %v6852 = vpack.c.b16 %v6148, %v6140
        %v6853 = vpack.c.b16 %v6149, %v6141
        %v6854 = vpack.c.b16 %v6158, %v6150
        %v6855 = vpack.c.b16 %v6159, %v6151
        %v6856 = vpack.c.b16 %v6160, %v6152
        %v6857 = vpack.c.b16 %v6161, %v6153
        %v6858 = vpack.c.b16 %v6162, %v6154
        %v6859 = vpack.c.b16 %v6163, %v6155
        %v6860 = vpack.c.b16 %v6164, %v6156
        %v6861 = vpack.c.b16 %v6165, %v6157
        %v6862 = vpack.c.b16 %v6174, %v6166
        %v6863 = vpack.c.b16 %v6175, %v6167
        %v6864 = vpack.c.b16 %v6176, %v6168
        %v6865 = vpack.c.b16 %v6177, %v6169
        %v6866 = vpack.c.b16 %v6178, %v6170
        %v6867 = vpack.c.b16 %v6179, %v6171
        %v6868 = vpack.c.b16 %v6180, %v6172
        %v6869 = vpack.c.b16 %v6181, %v6173
        %v6870 = vpack.c.b16 %v6190, %v6182
        %v6871 = vpack.c.b16 %v6191, %v6183
        %v6872 = vpack.c.b16 %v6192, %v6184
        %v6873 = vpack.c.b16 %v6193, %v6185
        %v6874 = vpack.c.b16 %v6194, %v6186
        %v6875 = vpack.c.b16 %v6195, %v6187
        %v6876 = vpack.c.b16 %v6196, %v6188
        %v6877 = vpack.c.b16 %v6197, %v6189
        %v6878 = vpack.c.b16 %v6206, %v6198
        %v6879 = vpack.c.b16 %v6207, %v6199
        %v6880 = vpack.c.b16 %v6208, %v6200
        %v6881 = vpack.c.b16 %v6209, %v6201
        %v6882 = vpack.c.b16 %v6210, %v6202
        %v6883 = vpack.c.b16 %v6211, %v6203
        %v6884 = vpack.c.b16 %v6212, %v6204
        %v6885 = vpack.c.b16 %v6213, %v6205
        %v6886 = vpack.c.b16 %v6222, %v6214
        %v6887 = vpack.c.b16 %v6223, %v6215
        %v6888 = vpack.c.b16 %v6224, %v6216
        %v6889 = vpack.c.b16 %v6225, %v6217
        %v6890 = vpack.c.b16 %v6226, %v6218
        %v6891 = vpack.c.b16 %v6227, %v6219
        %v6892 = vpack.c.b16 %v6228, %v6220
        %v6893 = vpack.c.b16 %v6229, %v6221
        %v6894 = vpack.c.b16 %v6238, %v6230
        %v6895 = vpack.c.b16 %v6239, %v6231
        %v6896 = vpack.c.b16 %v6240, %v6232
        %v6897 = vpack.c.b16 %v6241, %v6233
        %v6898 = vpack.c.b16 %v6242, %v6234
        %v6899 = vpack.c.b16 %v6243, %v6235
        %v6900 = vpack.c.b16 %v6244, %v6236
        %v6901 = vpack.c.b16 %v6245, %v6237
        %v6902 = vpack.c.b16 %v6254, %v6246
        %v6903 = vpack.c.b16 %v6255, %v6247
        %v6904 = vpack.c.b16 %v6256, %v6248
        %v6905 = vpack.c.b16 %v6257, %v6249
        %v6906 = vpack.c.b16 %v6258, %v6250
        %v6907 = vpack.c.b16 %v6259, %v6251
        %v6908 = vpack.c.b16 %v6260, %v6252
        %v6909 = vpack.c.b16 %v6261, %v6253
        %v6910 = vpack.c.b16 %v6270, %v6262
        %v6911 = vpack.c.b16 %v6271, %v6263
        %v6912 = vpack.c.b16 %v6272, %v6264
        %v6913 = vpack.c.b16 %v6273, %v6265
        %v6914 = vpack.c.b16 %v6274, %v6266
        %v6915 = vpack.c.b16 %v6275, %v6267
        %v6916 = vpack.c.b16 %v6276, %v6268
        %v6917 = vpack.c.b16 %v6277, %v6269
        %v6918 = vpack.c.b16 %v6286, %v6278
        %v6919 = vpack.c.b16 %v6287, %v6279
        %v6920 = vpack.c.b16 %v6288, %v6280
        %v6921 = vpack.c.b16 %v6289, %v6281
        %v6922 = vpack.c.b16 %v6290, %v6282
        %v6923 = vpack.c.b16 %v6291, %v6283
        %v6924 = vpack.c.b16 %v6292, %v6284
        %v6925 = vpack.c.b16 %v6293, %v6285
        %v6926 = vpack.c.b16 %v6302, %v6294
        %v6927 = vpack.c.b16 %v6303, %v6295
        %v6928 = vpack.c.b16 %v6304, %v6296
        %v6929 = vpack.c.b16 %v6305, %v6297
        %v6930 = vpack.c.b16 %v6306, %v6298
        %v6931 = vpack.c.b16 %v6307, %v6299
        %v6932 = vpack.c.b16 %v6308, %v6300
        %v6933 = vpack.c.b16 %v6309, %v6301
        %v6934 = vpack.c.b16 %v6318, %v6310
        %v6935 = vpack.c.b16 %v6319, %v6311
        %v6936 = vpack.c.b16 %v6320, %v6312
        %v6937 = vpack.c.b16 %v6321, %v6313
        %v6938 = vpack.c.b16 %v6322, %v6314
        %v6939 = vpack.c.b16 %v6323, %v6315
        %v6940 = vpack.c.b16 %v6324, %v6316
        %v6941 = vpack.c.b16 %v6325, %v6317
        %v6942 = vpack.c.b16 %v6334, %v6326
        %v6943 = vpack.c.b16 %v6335, %v6327
        %v6944 = vpack.c.b16 %v6336, %v6328
        %v6945 = vpack.c.b16 %v6337, %v6329
        %v6946 = vpack.c.b16 %v6338, %v6330
        %v6947 = vpack.c.b16 %v6339, %v6331
        %v6948 = vpack.c.b16 %v6340, %v6332
        %v6949 = vpack.c.b16 %v6341, %v6333
        %v6950 = vpack.c.b16 %v6350, %v6342
        %v6951 = vpack.c.b16 %v6351, %v6343
        %v6952 = vpack.c.b16 %v6352, %v6344
        %v6953 = vpack.c.b16 %v6353, %v6345
        %v6954 = vpack.c.b16 %v6354, %v6346
        %v6955 = vpack.c.b16 %v6355, %v6347
        %v6956 = vpack.c.b16 %v6356, %v6348
        %v6957 = vpack.c.b16 %v6357, %v6349
        %v6958 = vpack.c.b16 %v6366, %v6358
        %v6959 = vpack.c.b16 %v6367, %v6359
        %v6960 = vpack.c.b16 %v6368, %v6360
        %v6961 = vpack.c.b16 %v6369, %v6361
        %v6962 = vpack.c.b16 %v6370, %v6362
        %v6963 = vpack.c.b16 %v6371, %v6363
        %v6964 = vpack.c.b16 %v6372, %v6364
        %v6965 = vpack.c.b16 %v6373, %v6365
        %v6966 = vpack.c.b16 %v6382, %v6374
        %v6967 = vpack.c.b16 %v6383, %v6375
        %v6968 = vpack.c.b16 %v6384, %v6376
        %v6969 = vpack.c.b16 %v6385, %v6377
        %v6970 = vpack.c.b16 %v6386, %v6378
        %v6971 = vpack.c.b16 %v6387, %v6379
        %v6972 = vpack.c.b16 %v6388, %v6380
        %v6973 = vpack.c.b16 %v6389, %v6381
        %v6974 = vpack.c.b16 %v6398, %v6390
        %v6975 = vpack.c.b16 %v6399, %v6391
        %v6976 = vpack.c.b16 %v6400, %v6392
        %v6977 = vpack.c.b16 %v6401, %v6393
        %v6978 = vpack.c.b16 %v6402, %v6394
        %v6979 = vpack.c.b16 %v6403, %v6395
        %v6980 = vpack.c.b16 %v6404, %v6396
        %v6981 = vpack.c.b16 %v6405, %v6397
        %v6982 = vpack.c.b16 %v6414, %v6406
        %v6983 = vpack.c.b16 %v6415, %v6407
        %v6984 = vpack.c.b16 %v6416, %v6408
        %v6985 = vpack.c.b16 %v6417, %v6409
        %v6986 = vpack.c.b16 %v6418, %v6410
        %v6987 = vpack.c.b16 %v6419, %v6411
        %v6988 = vpack.c.b16 %v6420, %v6412
        %v6989 = vpack.c.b16 %v6421, %v6413
        %v6990 = vpack.c.b16 %v6430, %v6422
        %v6991 = vpack.c.b16 %v6431, %v6423
        %v6992 = vpack.c.b16 %v6432, %v6424
        %v6993 = vpack.c.b16 %v6433, %v6425
        %v6994 = vpack.c.b16 %v6434, %v6426
        %v6995 = vpack.c.b16 %v6435, %v6427
        %v6996 = vpack.c.b16 %v6436, %v6428
        %v6997 = vpack.c.b16 %v6437, %v6429
        %v6998 = vpack.c.b16 %v6446, %v6438
        %v6999 = vpack.c.b16 %v6447, %v6439
        %v7000 = vpack.c.b16 %v6448, %v6440
        %v7001 = vpack.c.b16 %v6449, %v6441
        %v7002 = vpack.c.b16 %v6450, %v6442
        %v7003 = vpack.c.b16 %v6451, %v6443
        %v7004 = vpack.c.b16 %v6452, %v6444
        %v7005 = vpack.c.b16 %v6453, %v6445
        %v7006 = vpack.c.b16 %v6462, %v6454
        %v7007 = vpack.c.b16 %v6463, %v6455
        %v7008 = vpack.c.b16 %v6464, %v6456
        %v7009 = vpack.c.b16 %v6465, %v6457
        %v7010 = vpack.c.b16 %v6466, %v6458
        %v7011 = vpack.c.b16 %v6467, %v6459
        %v7012 = vpack.c.b16 %v6468, %v6460
        %v7013 = vpack.c.b16 %v6469, %v6461
        %v7014 = vpack.c.b16 %v6478, %v6470
        %v7015 = vpack.c.b16 %v6479, %v6471
        %v7016 = vpack.c.b16 %v6480, %v6472
        %v7017 = vpack.c.b16 %v6481, %v6473
        %v7018 = vpack.c.b16 %v6482, %v6474
        %v7019 = vpack.c.b16 %v6483, %v6475
        %v7020 = vpack.c.b16 %v6484, %v6476
        %v7021 = vpack.c.b16 %v6485, %v6477
        %v7022 = vpack.c.b16 %v6494, %v6486
        %v7023 = vpack.c.b16 %v6495, %v6487
        %v7024 = vpack.c.b16 %v6496, %v6488
        %v7025 = vpack.c.b16 %v6497, %v6489
        %v7026 = vpack.c.b16 %v6498, %v6490
        %v7027 = vpack.c.b16 %v6499, %v6491
        %v7028 = vpack.c.b16 %v6500, %v6492
        %v7029 = vpack.c.b16 %v6501, %v6493
        %v7030 = vpack.c.b16 %v6510, %v6502
        %v7031 = vpack.c.b16 %v6511, %v6503
        %v7032 = vpack.c.b16 %v6512, %v6504
        %v7033 = vpack.c.b16 %v6513, %v6505
        %v7034 = vpack.c.b16 %v6514, %v6506
        %v7035 = vpack.c.b16 %v6515, %v6507
        %v7036 = vpack.c.b16 %v6516, %v6508
        %v7037 = vpack.c.b16 %v6517, %v6509
        %v7038 = vpack.c.b16 %v6526, %v6518
        %v7039 = vpack.c.b16 %v6527, %v6519
        %v7040 = vpack.c.b16 %v6528, %v6520
        %v7041 = vpack.c.b16 %v6529, %v6521
        %v7042 = vpack.c.b16 %v6530, %v6522
        %v7043 = vpack.c.b16 %v6531, %v6523
        %v7044 = vpack.c.b16 %v6532, %v6524
        %v7045 = vpack.c.b16 %v6533, %v6525
        %7558 = vmatprep.subr.bf16.mxu0 %v6535
        %7559 = vmatpush1.bf16.msra.mxu0 %v6534
        %7560 = vmatprep.subr.bf16.mxu0 %v6543
        %7561 = vmatpush1.bf16.msra.mxu0 %v6542
        %7562 = vmatprep.subr.bf16.mxu0 %v6551
        %7563 = vmatpush1.bf16.msra.mxu0 %v6550
        %7564 = vmatprep.subr.bf16.mxu0 %v6559
        %7565 = vmatpush1.bf16.msra.mxu0 %v6558
        %7566 = vmatprep.subr.bf16.mxu0 %v6567
        %7567 = vmatpush1.bf16.msra.mxu0 %v6566
        %7568 = vmatprep.subr.bf16.mxu0 %v6575
        %7569 = vmatpush1.bf16.msra.mxu0 %v6574
        %7570 = vmatprep.subr.bf16.mxu0 %v6583
        %7571 = vmatpush1.bf16.msra.mxu0 %v6582
        %7572 = vmatprep.subr.bf16.mxu0 %v6591
        %7573 = vmatpush1.bf16.msra.mxu0 %v6590
        %7574 = vmatprep.subr.bf16.mxu0 %v6599
        %7575 = vmatpush1.bf16.msra.mxu0 %v6598
        %7576 = vmatprep.subr.bf16.mxu0 %v6607
        %7577 = vmatpush1.bf16.msra.mxu0 %v6606
        %7578 = vmatprep.subr.bf16.mxu0 %v6615
        %7579 = vmatpush1.bf16.msra.mxu0 %v6614
        %7580 = vmatprep.subr.bf16.mxu0 %v6623
        %7581 = vmatpush1.bf16.msra.mxu0 %v6622
        %7582 = vmatprep.subr.bf16.mxu0 %v6631
        %7583 = vmatpush1.bf16.msra.mxu0 %v6630
        %7584 = vmatprep.subr.bf16.mxu0 %v6639
        %7585 = vmatpush1.bf16.msra.mxu0 %v6638
        %7586 = vmatprep.subr.bf16.mxu0 %v6647
        %7587 = vmatpush1.bf16.msra.mxu0 %v6646
        %7588 = vmatprep.subr.bf16.mxu0 %v6655
        %7589 = vmatpush1.bf16.msra.mxu0 %v6654
        %7590 = vmatprep.mubr.bf16.mxu0 %v896
        %7591 = vmatmul.mubr.bf16.gmra.mrb[0].mxu0 %v895
        %v7592 = vpop.f32.mrb[0].mxu0
        %v7593 = vadd.f32 0.0, %v7592
        %v7594 = vpop.f32.mrb[0].mxu0
        %v7595 = vadd.f32 0.0, %v7594
        %v7596 = vpop.f32.mrb[0].mxu0
        %v7597 = vadd.f32 0.0, %v7596
        %v7598 = vpop.f32.mrb[0].mxu0
        %v7599 = vadd.f32 0.0, %v7598
        %7600 = vdwg.mxu0
        %7601 = vmatprep.subr.bf16.mxu0 %v6663
        %7602 = vmatpush1.bf16.msra.mxu0 %v6662
        %7603 = vmatprep.subr.bf16.mxu0 %v6671
        %7604 = vmatpush1.bf16.msra.mxu0 %v6670
        %7605 = vmatprep.subr.bf16.mxu0 %v6679
        %7606 = vmatpush1.bf16.msra.mxu0 %v6678
        %7607 = vmatprep.subr.bf16.mxu0 %v6687
        %7608 = vmatpush1.bf16.msra.mxu0 %v6686
        %7609 = vmatprep.subr.bf16.mxu0 %v6695
        %7610 = vmatpush1.bf16.msra.mxu0 %v6694
        %7611 = vmatprep.subr.bf16.mxu0 %v6703
        %7612 = vmatpush1.bf16.msra.mxu0 %v6702
        %7613 = vmatprep.subr.bf16.mxu0 %v6711
        %7614 = vmatpush1.bf16.msra.mxu0 %v6710
        %7615 = vmatprep.subr.bf16.mxu0 %v6719
        %7616 = vmatpush1.bf16.msra.mxu0 %v6718
        %7617 = vmatprep.subr.bf16.mxu0 %v6727
        %7618 = vmatpush1.bf16.msra.mxu0 %v6726
        %7619 = vmatprep.subr.bf16.mxu0 %v6735
        %7620 = vmatpush1.bf16.msra.mxu0 %v6734
        %7621 = vmatprep.subr.bf16.mxu0 %v6743
        %7622 = vmatpush1.bf16.msra.mxu0 %v6742
        %7623 = vmatprep.subr.bf16.mxu0 %v6751
        %7624 = vmatpush1.bf16.msra.mxu0 %v6750
        %7625 = vmatprep.subr.bf16.mxu0 %v6759
        %7626 = vmatpush1.bf16.msra.mxu0 %v6758
        %7627 = vmatprep.subr.bf16.mxu0 %v6767
        %7628 = vmatpush1.bf16.msra.mxu0 %v6766
        %7629 = vmatprep.subr.bf16.mxu0 %v6775
        %7630 = vmatpush1.bf16.msra.mxu0 %v6774
        %7631 = vmatprep.subr.bf16.mxu0 %v6783
        %7632 = vmatpush1.bf16.msra.mxu0 %v6782
        %7633 = vmatprep.mubr.bf16.mxu0 %v898
        %7634 = vmatmul.mubr.bf16.gmra.mrb[0].mxu0 %v897
        %v7635 = vpop.f32.mrb[0].mxu0
        %v7636 = vadd.f32 %v7593, %v7635
        %v7637 = vpop.f32.mrb[0].mxu0
        %v7638 = vadd.f32 %v7595, %v7637
        %v7639 = vpop.f32.mrb[0].mxu0
        %v7640 = vadd.f32 %v7597, %v7639
        %v7641 = vpop.f32.mrb[0].mxu0
        %v7642 = vadd.f32 %v7599, %v7641
        %7643 = vdwg.mxu0
        %7644 = vmatprep.subr.bf16.mxu0 %v6791
        %7645 = vmatpush1.bf16.msra.mxu0 %v6790
        %7646 = vmatprep.subr.bf16.mxu0 %v6799
        %7647 = vmatpush1.bf16.msra.mxu0 %v6798
        %7648 = vmatprep.subr.bf16.mxu0 %v6807
        %7649 = vmatpush1.bf16.msra.mxu0 %v6806
        %7650 = vmatprep.subr.bf16.mxu0 %v6815
        %7651 = vmatpush1.bf16.msra.mxu0 %v6814
        %7652 = vmatprep.subr.bf16.mxu0 %v6823
        %7653 = vmatpush1.bf16.msra.mxu0 %v6822
        %7654 = vmatprep.subr.bf16.mxu0 %v6831
        %7655 = vmatpush1.bf16.msra.mxu0 %v6830
        %7656 = vmatprep.subr.bf16.mxu0 %v6839
        %7657 = vmatpush1.bf16.msra.mxu0 %v6838
        %7658 = vmatprep.subr.bf16.mxu0 %v6847
        %7659 = vmatpush1.bf16.msra.mxu0 %v6846
        %7660 = vmatprep.subr.bf16.mxu0 %v6855
        %7661 = vmatpush1.bf16.msra.mxu0 %v6854
        %7662 = vmatprep.subr.bf16.mxu0 %v6863
        %7663 = vmatpush1.bf16.msra.mxu0 %v6862
        %7664 = vmatprep.subr.bf16.mxu0 %v6871
        %7665 = vmatpush1.bf16.msra.mxu0 %v6870
        %7666 = vmatprep.subr.bf16.mxu0 %v6879
        %7667 = vmatpush1.bf16.msra.mxu0 %v6878
        %7668 = vmatprep.subr.bf16.mxu0 %v6887
        %7669 = vmatpush1.bf16.msra.mxu0 %v6886
        %7670 = vmatprep.subr.bf16.mxu0 %v6895
        %7671 = vmatpush1.bf16.msra.mxu0 %v6894
        %7672 = vmatprep.subr.bf16.mxu0 %v6903
        %7673 = vmatpush1.bf16.msra.mxu0 %v6902
        %7674 = vmatprep.subr.bf16.mxu0 %v6911
        %7675 = vmatpush1.bf16.msra.mxu0 %v6910
        %7676 = vmatprep.mubr.bf16.mxu0 %v900
        %7677 = vmatmul.mubr.bf16.gmra.mrb[0].mxu0 %v899
        %v7678 = vpop.f32.mrb[0].mxu0
        %v7679 = vadd.f32 %v7636, %v7678
        %v7680 = vpop.f32.mrb[0].mxu0
        %v7681 = vadd.f32 %v7638, %v7680
        %v7682 = vpop.f32.mrb[0].mxu0
        %v7683 = vadd.f32 %v7640, %v7682
        %v7684 = vpop.f32.mrb[0].mxu0
        %v7685 = vadd.f32 %v7642, %v7684
        %7686 = vdwg.mxu0
        %7687 = vmatprep.subr.bf16.mxu0 %v6919
        %7688 = vmatpush1.bf16.msra.mxu0 %v6918
        %7689 = vmatprep.subr.bf16.mxu0 %v6927
        %7690 = vmatpush1.bf16.msra.mxu0 %v6926
        %7691 = vmatprep.subr.bf16.mxu0 %v6935
        %7692 = vmatpush1.bf16.msra.mxu0 %v6934
        %7693 = vmatprep.subr.bf16.mxu0 %v6943
        %7694 = vmatpush1.bf16.msra.mxu0 %v6942
        %7695 = vmatprep.subr.bf16.mxu0 %v6951
        %7696 = vmatpush1.bf16.msra.mxu0 %v6950
        %7697 = vmatprep.subr.bf16.mxu0 %v6959
        %7698 = vmatpush1.bf16.msra.mxu0 %v6958
        %7699 = vmatprep.subr.bf16.mxu0 %v6967
        %7700 = vmatpush1.bf16.msra.mxu0 %v6966
        %7701 = vmatprep.subr.bf16.mxu0 %v6975
        %7702 = vmatpush1.bf16.msra.mxu0 %v6974
        %7703 = vmatprep.subr.bf16.mxu0 %v6983
        %7704 = vmatpush1.bf16.msra.mxu0 %v6982
        %7705 = vmatprep.subr.bf16.mxu0 %v6991
        %7706 = vmatpush1.bf16.msra.mxu0 %v6990
        %7707 = vmatprep.subr.bf16.mxu0 %v6999
        %7708 = vmatpush1.bf16.msra.mxu0 %v6998
        %7709 = vmatprep.subr.bf16.mxu0 %v7007
        %7710 = vmatpush1.bf16.msra.mxu0 %v7006
        %7711 = vmatprep.subr.bf16.mxu0 %v7015
        %7712 = vmatpush1.bf16.msra.mxu0 %v7014
        %7713 = vmatprep.subr.bf16.mxu0 %v7023
        %7714 = vmatpush1.bf16.msra.mxu0 %v7022
        %7715 = vmatprep.subr.bf16.mxu0 %v7031
        %7716 = vmatpush1.bf16.msra.mxu0 %v7030
        %7717 = vmatprep.subr.bf16.mxu0 %v7039
        %7718 = vmatpush1.bf16.msra.mxu0 %v7038
        %7719 = vmatprep.mubr.bf16.mxu0 %v902
        %7720 = vmatmul.mubr.bf16.gmra.mrb[0].mxu0 %v901
        %v7721 = vpop.f32.mrb[0].mxu0
        %v7722 = vadd.f32 %v7679, %v7721
        %v7723 = vpop.f32.mrb[0].mxu0
        %v7724 = vadd.f32 %v7681, %v7723
        %v7725 = vpop.f32.mrb[0].mxu0
        %v7726 = vadd.f32 %v7683, %v7725
        %v7727 = vpop.f32.mrb[0].mxu0
        %v7728 = vadd.f32 %v7685, %v7727
        %7729 = vdwg.mxu0
        %7730 = vmatprep.subr.bf16.mxu0 %v6537
        %7731 = vmatpush1.bf16.msra.mxu0 %v6536
        %7732 = vmatprep.subr.bf16.mxu0 %v6545
        %7733 = vmatpush1.bf16.msra.mxu0 %v6544
        %7734 = vmatprep.subr.bf16.mxu0 %v6553
        %7735 = vmatpush1.bf16.msra.mxu0 %v6552
        %7736 = vmatprep.subr.bf16.mxu0 %v6561
        %7737 = vmatpush1.bf16.msra.mxu0 %v6560
        %7738 = vmatprep.subr.bf16.mxu0 %v6569
        %7739 = vmatpush1.bf16.msra.mxu0 %v6568
        %7740 = vmatprep.subr.bf16.mxu0 %v6577
        %7741 = vmatpush1.bf16.msra.mxu0 %v6576
        %7742 = vmatprep.subr.bf16.mxu0 %v6585
        %7743 = vmatpush1.bf16.msra.mxu0 %v6584
        %7744 = vmatprep.subr.bf16.mxu0 %v6593
        %7745 = vmatpush1.bf16.msra.mxu0 %v6592
        %7746 = vmatprep.subr.bf16.mxu0 %v6601
        %7747 = vmatpush1.bf16.msra.mxu0 %v6600
        %7748 = vmatprep.subr.bf16.mxu0 %v6609
        %7749 = vmatpush1.bf16.msra.mxu0 %v6608
        %7750 = vmatprep.subr.bf16.mxu0 %v6617
        %7751 = vmatpush1.bf16.msra.mxu0 %v6616
        %7752 = vmatprep.subr.bf16.mxu0 %v6625
        %7753 = vmatpush1.bf16.msra.mxu0 %v6624
        %7754 = vmatprep.subr.bf16.mxu0 %v6633
        %7755 = vmatpush1.bf16.msra.mxu0 %v6632
        %7756 = vmatprep.subr.bf16.mxu0 %v6641
        %7757 = vmatpush1.bf16.msra.mxu0 %v6640
        %7758 = vmatprep.subr.bf16.mxu0 %v6649
        %7759 = vmatpush1.bf16.msra.mxu0 %v6648
        %7760 = vmatprep.subr.bf16.mxu0 %v6657
        %7761 = vmatpush1.bf16.msra.mxu0 %v6656
        %7762 = vmatprep.mubr.bf16.mxu0 %v896
        %7763 = vmatmul.mubr.bf16.gmra.mrb[0].mxu0 %v895
        %v7764 = vpop.f32.mrb[0].mxu0
        %v7765 = vadd.f32 0.0, %v7764
        %v7766 = vpop.f32.mrb[0].mxu0
        %v7767 = vadd.f32 0.0, %v7766
        %v7768 = vpop.f32.mrb[0].mxu0
        %v7769 = vadd.f32 0.0, %v7768
        %v7770 = vpop.f32.mrb[0].mxu0
        %v7771 = vadd.f32 0.0, %v7770
        %7772 = vdwg.mxu0
        %7773 = vmatprep.subr.bf16.mxu0 %v6665
        %7774 = vmatpush1.bf16.msra.mxu0 %v6664
        %7775 = vmatprep.subr.bf16.mxu0 %v6673
        %7776 = vmatpush1.bf16.msra.mxu0 %v6672
        %7777 = vmatprep.subr.bf16.mxu0 %v6681
        %7778 = vmatpush1.bf16.msra.mxu0 %v6680
        %7779 = vmatprep.subr.bf16.mxu0 %v6689
        %7780 = vmatpush1.bf16.msra.mxu0 %v6688
        %7781 = vmatprep.subr.bf16.mxu0 %v6697
        %7782 = vmatpush1.bf16.msra.mxu0 %v6696
        %7783 = vmatprep.subr.bf16.mxu0 %v6705
        %7784 = vmatpush1.bf16.msra.mxu0 %v6704
        %7785 = vmatprep.subr.bf16.mxu0 %v6713
        %7786 = vmatpush1.bf16.msra.mxu0 %v6712
        %7787 = vmatprep.subr.bf16.mxu0 %v6721
        %7788 = vmatpush1.bf16.msra.mxu0 %v6720
        %7789 = vmatprep.subr.bf16.mxu0 %v6729
        %7790 = vmatpush1.bf16.msra.mxu0 %v6728
        %7791 = vmatprep.subr.bf16.mxu0 %v6737
        %7792 = vmatpush1.bf16.msra.mxu0 %v6736
        %7793 = vmatprep.subr.bf16.mxu0 %v6745
        %7794 = vmatpush1.bf16.msra.mxu0 %v6744
        %7795 = vmatprep.subr.bf16.mxu0 %v6753
        %7796 = vmatpush1.bf16.msra.mxu0 %v6752
        %7797 = vmatprep.subr.bf16.mxu0 %v6761
        %7798 = vmatpush1.bf16.msra.mxu0 %v6760
        %7799 = vmatprep.subr.bf16.mxu0 %v6769
        %7800 = vmatpush1.bf16.msra.mxu0 %v6768
        %7801 = vmatprep.subr.bf16.mxu0 %v6777
        %7802 = vmatpush1.bf16.msra.mxu0 %v6776
        %7803 = vmatprep.subr.bf16.mxu0 %v6785
        %7804 = vmatpush1.bf16.msra.mxu0 %v6784
        %7805 = vmatprep.mubr.bf16.mxu0 %v898
        %7806 = vmatmul.mubr.bf16.gmra.mrb[0].mxu0 %v897
        %v7807 = vpop.f32.mrb[0].mxu0
        %v7808 = vadd.f32 %v7765, %v7807
        %v7809 = vpop.f32.mrb[0].mxu0
        %v7810 = vadd.f32 %v7767, %v7809
        %v7811 = vpop.f32.mrb[0].mxu0
        %v7812 = vadd.f32 %v7769, %v7811
        %v7813 = vpop.f32.mrb[0].mxu0
        %v7814 = vadd.f32 %v7771, %v7813
        %7815 = vdwg.mxu0
        %7816 = vmatprep.subr.bf16.mxu0 %v6793
        %7817 = vmatpush1.bf16.msra.mxu0 %v6792
        %7818 = vmatprep.subr.bf16.mxu0 %v6801
        %7819 = vmatpush1.bf16.msra.mxu0 %v6800
        %7820 = vmatprep.subr.bf16.mxu0 %v6809
        %7821 = vmatpush1.bf16.msra.mxu0 %v6808
        %7822 = vmatprep.subr.bf16.mxu0 %v6817
        %7823 = vmatpush1.bf16.msra.mxu0 %v6816
        %7824 = vmatprep.subr.bf16.mxu0 %v6825
        %7825 = vmatpush1.bf16.msra.mxu0 %v6824
        %7826 = vmatprep.subr.bf16.mxu0 %v6833
        %7827 = vmatpush1.bf16.msra.mxu0 %v6832
        %7828 = vmatprep.subr.bf16.mxu0 %v6841
        %7829 = vmatpush1.bf16.msra.mxu0 %v6840
        %7830 = vmatprep.subr.bf16.mxu0 %v6849
        %7831 = vmatpush1.bf16.msra.mxu0 %v6848
        %7832 = vmatprep.subr.bf16.mxu0 %v6857
        %7833 = vmatpush1.bf16.msra.mxu0 %v6856
        %7834 = vmatprep.subr.bf16.mxu0 %v6865
        %7835 = vmatpush1.bf16.msra.mxu0 %v6864
        %7836 = vmatprep.subr.bf16.mxu0 %v6873
        %7837 = vmatpush1.bf16.msra.mxu0 %v6872
        %7838 = vmatprep.subr.bf16.mxu0 %v6881
        %7839 = vmatpush1.bf16.msra.mxu0 %v6880
        %7840 = vmatprep.subr.bf16.mxu0 %v6889
        %7841 = vmatpush1.bf16.msra.mxu0 %v6888
        %7842 = vmatprep.subr.bf16.mxu0 %v6897
        %7843 = vmatpush1.bf16.msra.mxu0 %v6896
        %7844 = vmatprep.subr.bf16.mxu0 %v6905
        %7845 = vmatpush1.bf16.msra.mxu0 %v6904
        %7846 = vmatprep.subr.bf16.mxu0 %v6913
        %7847 = vmatpush1.bf16.msra.mxu0 %v6912
        %7848 = vmatprep.mubr.bf16.mxu0 %v900
        %7849 = vmatmul.mubr.bf16.gmra.mrb[0].mxu0 %v899
        %v7850 = vpop.f32.mrb[0].mxu0
        %v7851 = vadd.f32 %v7808, %v7850
        %v7852 = vpop.f32.mrb[0].mxu0
        %v7853 = vadd.f32 %v7810, %v7852
        %v7854 = vpop.f32.mrb[0].mxu0
        %v7855 = vadd.f32 %v7812, %v7854
        %v7856 = vpop.f32.mrb[0].mxu0
        %v7857 = vadd.f32 %v7814, %v7856
        %7858 = vdwg.mxu0
        %7859 = vmatprep.subr.bf16.mxu0 %v6921
        %7860 = vmatpush1.bf16.msra.mxu0 %v6920
        %7861 = vmatprep.subr.bf16.mxu0 %v6929
        %7862 = vmatpush1.bf16.msra.mxu0 %v6928
        %7863 = vmatprep.subr.bf16.mxu0 %v6937
        %7864 = vmatpush1.bf16.msra.mxu0 %v6936
        %7865 = vmatprep.subr.bf16.mxu0 %v6945
        %7866 = vmatpush1.bf16.msra.mxu0 %v6944
        %7867 = vmatprep.subr.bf16.mxu0 %v6953
        %7868 = vmatpush1.bf16.msra.mxu0 %v6952
        %7869 = vmatprep.subr.bf16.mxu0 %v6961
        %7870 = vmatpush1.bf16.msra.mxu0 %v6960
        %7871 = vmatprep.subr.bf16.mxu0 %v6969
        %7872 = vmatpush1.bf16.msra.mxu0 %v6968
        %7873 = vmatprep.subr.bf16.mxu0 %v6977
        %7874 = vmatpush1.bf16.msra.mxu0 %v6976
        %7875 = vmatprep.subr.bf16.mxu0 %v6985
        %7876 = vmatpush1.bf16.msra.mxu0 %v6984
        %7877 = vmatprep.subr.bf16.mxu0 %v6993
        %7878 = vmatpush1.bf16.msra.mxu0 %v6992
        %7879 = vmatprep.subr.bf16.mxu0 %v7001
        %7880 = vmatpush1.bf16.msra.mxu0 %v7000
        %7881 = vmatprep.subr.bf16.mxu0 %v7009
        %7882 = vmatpush1.bf16.msra.mxu0 %v7008
        %7883 = vmatprep.subr.bf16.mxu0 %v7017
        %7884 = vmatpush1.bf16.msra.mxu0 %v7016
        %7885 = vmatprep.subr.bf16.mxu0 %v7025
        %7886 = vmatpush1.bf16.msra.mxu0 %v7024
        %7887 = vmatprep.subr.bf16.mxu0 %v7033
        %7888 = vmatpush1.bf16.msra.mxu0 %v7032
        %7889 = vmatprep.subr.bf16.mxu0 %v7041
        %7890 = vmatpush1.bf16.msra.mxu0 %v7040
        %7891 = vmatprep.mubr.bf16.mxu0 %v902
        %7892 = vmatmul.mubr.bf16.gmra.mrb[0].mxu0 %v901
        %v7893 = vpop.f32.mrb[0].mxu0
        %v7894 = vadd.f32 %v7851, %v7893
        %v7895 = vpop.f32.mrb[0].mxu0
        %v7896 = vadd.f32 %v7853, %v7895
        %v7897 = vpop.f32.mrb[0].mxu0
        %v7898 = vadd.f32 %v7855, %v7897
        %v7899 = vpop.f32.mrb[0].mxu0
        %v7900 = vadd.f32 %v7857, %v7899
        %7901 = vdwg.mxu0
        %7902 = vmatprep.subr.bf16.mxu0 %v6539
        %7903 = vmatpush1.bf16.msra.mxu0 %v6538
        %7904 = vmatprep.subr.bf16.mxu0 %v6547
        %7905 = vmatpush1.bf16.msra.mxu0 %v6546
        %7906 = vmatprep.subr.bf16.mxu0 %v6555
        %7907 = vmatpush1.bf16.msra.mxu0 %v6554
        %7908 = vmatprep.subr.bf16.mxu0 %v6563
        %7909 = vmatpush1.bf16.msra.mxu0 %v6562
        %7910 = vmatprep.subr.bf16.mxu0 %v6571
        %7911 = vmatpush1.bf16.msra.mxu0 %v6570
        %7912 = vmatprep.subr.bf16.mxu0 %v6579
        %7913 = vmatpush1.bf16.msra.mxu0 %v6578
        %7914 = vmatprep.subr.bf16.mxu0 %v6587
        %7915 = vmatpush1.bf16.msra.mxu0 %v6586
        %7916 = vmatprep.subr.bf16.mxu0 %v6595
        %7917 = vmatpush1.bf16.msra.mxu0 %v6594
        %7918 = vmatprep.subr.bf16.mxu0 %v6603
        %7919 = vmatpush1.bf16.msra.mxu0 %v6602
        %7920 = vmatprep.subr.bf16.mxu0 %v6611
        %7921 = vmatpush1.bf16.msra.mxu0 %v6610
        %7922 = vmatprep.subr.bf16.mxu0 %v6619
        %7923 = vmatpush1.bf16.msra.mxu0 %v6618
        %7924 = vmatprep.subr.bf16.mxu0 %v6627
        %7925 = vmatpush1.bf16.msra.mxu0 %v6626
        %7926 = vmatprep.subr.bf16.mxu0 %v6635
        %7927 = vmatpush1.bf16.msra.mxu0 %v6634
        %7928 = vmatprep.subr.bf16.mxu0 %v6643
        %7929 = vmatpush1.bf16.msra.mxu0 %v6642
        %7930 = vmatprep.subr.bf16.mxu0 %v6651
        %7931 = vmatpush1.bf16.msra.mxu0 %v6650
        %7932 = vmatprep.subr.bf16.mxu0 %v6659
        %7933 = vmatpush1.bf16.msra.mxu0 %v6658
        %7934 = vmatprep.mubr.bf16.mxu0 %v896
        %7935 = vmatmul.mubr.bf16.gmra.mrb[0].mxu0 %v895
        %v7936 = vpop.f32.mrb[0].mxu0
        %v7937 = vadd.f32 0.0, %v7936
        %v7938 = vpop.f32.mrb[0].mxu0
        %v7939 = vadd.f32 0.0, %v7938
        %v7940 = vpop.f32.mrb[0].mxu0
        %v7941 = vadd.f32 0.0, %v7940
        %v7942 = vpop.f32.mrb[0].mxu0
        %v7943 = vadd.f32 0.0, %v7942
        %7944 = vdwg.mxu0
        %7945 = vmatprep.subr.bf16.mxu0 %v6667
        %7946 = vmatpush1.bf16.msra.mxu0 %v6666
        %7947 = vmatprep.subr.bf16.mxu0 %v6675
        %7948 = vmatpush1.bf16.msra.mxu0 %v6674
        %7949 = vmatprep.subr.bf16.mxu0 %v6683
        %7950 = vmatpush1.bf16.msra.mxu0 %v6682
        %7951 = vmatprep.subr.bf16.mxu0 %v6691
        %7952 = vmatpush1.bf16.msra.mxu0 %v6690
        %7953 = vmatprep.subr.bf16.mxu0 %v6699
        %7954 = vmatpush1.bf16.msra.mxu0 %v6698
        %7955 = vmatprep.subr.bf16.mxu0 %v6707
        %7956 = vmatpush1.bf16.msra.mxu0 %v6706
        %7957 = vmatprep.subr.bf16.mxu0 %v6715
        %7958 = vmatpush1.bf16.msra.mxu0 %v6714
        %7959 = vmatprep.subr.bf16.mxu0 %v6723
        %7960 = vmatpush1.bf16.msra.mxu0 %v6722
        %7961 = vmatprep.subr.bf16.mxu0 %v6731
        %7962 = vmatpush1.bf16.msra.mxu0 %v6730
        %7963 = vmatprep.subr.bf16.mxu0 %v6739
        %7964 = vmatpush1.bf16.msra.mxu0 %v6738
        %7965 = vmatprep.subr.bf16.mxu0 %v6747
        %7966 = vmatpush1.bf16.msra.mxu0 %v6746
        %7967 = vmatprep.subr.bf16.mxu0 %v6755
        %7968 = vmatpush1.bf16.msra.mxu0 %v6754
        %7969 = vmatprep.subr.bf16.mxu0 %v6763
        %7970 = vmatpush1.bf16.msra.mxu0 %v6762
        %7971 = vmatprep.subr.bf16.mxu0 %v6771
        %7972 = vmatpush1.bf16.msra.mxu0 %v6770
        %7973 = vmatprep.subr.bf16.mxu0 %v6779
        %7974 = vmatpush1.bf16.msra.mxu0 %v6778
        %7975 = vmatprep.subr.bf16.mxu0 %v6787
        %7976 = vmatpush1.bf16.msra.mxu0 %v6786
        %7977 = vmatprep.mubr.bf16.mxu0 %v898
        %7978 = vmatmul.mubr.bf16.gmra.mrb[0].mxu0 %v897
        %v7979 = vpop.f32.mrb[0].mxu0
        %v7980 = vadd.f32 %v7937, %v7979
        %v7981 = vpop.f32.mrb[0].mxu0
        %v7982 = vadd.f32 %v7939, %v7981
        %v7983 = vpop.f32.mrb[0].mxu0
        %v7984 = vadd.f32 %v7941, %v7983
        %v7985 = vpop.f32.mrb[0].mxu0
        %v7986 = vadd.f32 %v7943, %v7985
        %7987 = vdwg.mxu0
        %7988 = vmatprep.subr.bf16.mxu0 %v6795
        %7989 = vmatpush1.bf16.msra.mxu0 %v6794
        %7990 = vmatprep.subr.bf16.mxu0 %v6803
        %7991 = vmatpush1.bf16.msra.mxu0 %v6802
        %7992 = vmatprep.subr.bf16.mxu0 %v6811
        %7993 = vmatpush1.bf16.msra.mxu0 %v6810
        %7994 = vmatprep.subr.bf16.mxu0 %v6819
        %7995 = vmatpush1.bf16.msra.mxu0 %v6818
        %7996 = vmatprep.subr.bf16.mxu0 %v6827
        %7997 = vmatpush1.bf16.msra.mxu0 %v6826
        %7998 = vmatprep.subr.bf16.mxu0 %v6835
        %7999 = vmatpush1.bf16.msra.mxu0 %v6834
        %8000 = vmatprep.subr.bf16.mxu0 %v6843
        %8001 = vmatpush1.bf16.msra.mxu0 %v6842
        %8002 = vmatprep.subr.bf16.mxu0 %v6851
        %8003 = vmatpush1.bf16.msra.mxu0 %v6850
        %8004 = vmatprep.subr.bf16.mxu0 %v6859
        %8005 = vmatpush1.bf16.msra.mxu0 %v6858
        %8006 = vmatprep.subr.bf16.mxu0 %v6867
        %8007 = vmatpush1.bf16.msra.mxu0 %v6866
        %8008 = vmatprep.subr.bf16.mxu0 %v6875
        %8009 = vmatpush1.bf16.msra.mxu0 %v6874
        %8010 = vmatprep.subr.bf16.mxu0 %v6883
        %8011 = vmatpush1.bf16.msra.mxu0 %v6882
        %8012 = vmatprep.subr.bf16.mxu0 %v6891
        %8013 = vmatpush1.bf16.msra.mxu0 %v6890
        %8014 = vmatprep.subr.bf16.mxu0 %v6899
        %8015 = vmatpush1.bf16.msra.mxu0 %v6898
        %8016 = vmatprep.subr.bf16.mxu0 %v6907
        %8017 = vmatpush1.bf16.msra.mxu0 %v6906
        %8018 = vmatprep.subr.bf16.mxu0 %v6915
        %8019 = vmatpush1.bf16.msra.mxu0 %v6914
        %8020 = vmatprep.mubr.bf16.mxu0 %v900
        %8021 = vmatmul.mubr.bf16.gmra.mrb[0].mxu0 %v899
        %v8022 = vpop.f32.mrb[0].mxu0
        %v8023 = vadd.f32 %v7980, %v8022
        %v8024 = vpop.f32.mrb[0].mxu0
        %v8025 = vadd.f32 %v7982, %v8024
        %v8026 = vpop.f32.mrb[0].mxu0
        %v8027 = vadd.f32 %v7984, %v8026
        %v8028 = vpop.f32.mrb[0].mxu0
        %v8029 = vadd.f32 %v7986, %v8028
        %8030 = vdwg.mxu0
        %8031 = vmatprep.subr.bf16.mxu0 %v6923
        %8032 = vmatpush1.bf16.msra.mxu0 %v6922
        %8033 = vmatprep.subr.bf16.mxu0 %v6931
        %8034 = vmatpush1.bf16.msra.mxu0 %v6930
        %8035 = vmatprep.subr.bf16.mxu0 %v6939
        %8036 = vmatpush1.bf16.msra.mxu0 %v6938
        %8037 = vmatprep.subr.bf16.mxu0 %v6947
        %8038 = vmatpush1.bf16.msra.mxu0 %v6946
        %8039 = vmatprep.subr.bf16.mxu0 %v6955
        %8040 = vmatpush1.bf16.msra.mxu0 %v6954
        %8041 = vmatprep.subr.bf16.mxu0 %v6963
        %8042 = vmatpush1.bf16.msra.mxu0 %v6962
        %8043 = vmatprep.subr.bf16.mxu0 %v6971
        %8044 = vmatpush1.bf16.msra.mxu0 %v6970
        %8045 = vmatprep.subr.bf16.mxu0 %v6979
        %8046 = vmatpush1.bf16.msra.mxu0 %v6978
        %8047 = vmatprep.subr.bf16.mxu0 %v6987
        %8048 = vmatpush1.bf16.msra.mxu0 %v6986
        %8049 = vmatprep.subr.bf16.mxu0 %v6995
        %8050 = vmatpush1.bf16.msra.mxu0 %v6994
        %8051 = vmatprep.subr.bf16.mxu0 %v7003
        %8052 = vmatpush1.bf16.msra.mxu0 %v7002
        %8053 = vmatprep.subr.bf16.mxu0 %v7011
        %8054 = vmatpush1.bf16.msra.mxu0 %v7010
        %8055 = vmatprep.subr.bf16.mxu0 %v7019
        %8056 = vmatpush1.bf16.msra.mxu0 %v7018
        %8057 = vmatprep.subr.bf16.mxu0 %v7027
        %8058 = vmatpush1.bf16.msra.mxu0 %v7026
        %8059 = vmatprep.subr.bf16.mxu0 %v7035
        %8060 = vmatpush1.bf16.msra.mxu0 %v7034
        %8061 = vmatprep.subr.bf16.mxu0 %v7043
        %8062 = vmatpush1.bf16.msra.mxu0 %v7042
        %8063 = vmatprep.mubr.bf16.mxu0 %v902
        %8064 = vmatmul.mubr.bf16.gmra.mrb[0].mxu0 %v901
        %v8065 = vpop.f32.mrb[0].mxu0
        %v8066 = vadd.f32 %v8023, %v8065
        %v8067 = vpop.f32.mrb[0].mxu0
        %v8068 = vadd.f32 %v8025, %v8067
        %v8069 = vpop.f32.mrb[0].mxu0
        %v8070 = vadd.f32 %v8027, %v8069
        %v8071 = vpop.f32.mrb[0].mxu0
        %v8072 = vadd.f32 %v8029, %v8071
        %8073 = vdwg.mxu0
        %8074 = vmatprep.subr.bf16.mxu0 %v6541
        %8075 = vmatpush1.bf16.msra.mxu0 %v6540
        %8076 = vmatprep.subr.bf16.mxu0 %v6549
        %8077 = vmatpush1.bf16.msra.mxu0 %v6548
        %8078 = vmatprep.subr.bf16.mxu0 %v6557
        %8079 = vmatpush1.bf16.msra.mxu0 %v6556
        %8080 = vmatprep.subr.bf16.mxu0 %v6565
        %8081 = vmatpush1.bf16.msra.mxu0 %v6564
        %8082 = vmatprep.subr.bf16.mxu0 %v6573
        %8083 = vmatpush1.bf16.msra.mxu0 %v6572
        %8084 = vmatprep.subr.bf16.mxu0 %v6581
        %8085 = vmatpush1.bf16.msra.mxu0 %v6580
        %8086 = vmatprep.subr.bf16.mxu0 %v6589
        %8087 = vmatpush1.bf16.msra.mxu0 %v6588
        %8088 = vmatprep.subr.bf16.mxu0 %v6597
        %8089 = vmatpush1.bf16.msra.mxu0 %v6596
        %8090 = vmatprep.subr.bf16.mxu0 %v6605
        %8091 = vmatpush1.bf16.msra.mxu0 %v6604
        %8092 = vmatprep.subr.bf16.mxu0 %v6613
        %8093 = vmatpush1.bf16.msra.mxu0 %v6612
        %8094 = vmatprep.subr.bf16.mxu0 %v6621
        %8095 = vmatpush1.bf16.msra.mxu0 %v6620
        %8096 = vmatprep.subr.bf16.mxu0 %v6629
        %8097 = vmatpush1.bf16.msra.mxu0 %v6628
        %8098 = vmatprep.subr.bf16.mxu0 %v6637
        %8099 = vmatpush1.bf16.msra.mxu0 %v6636
        %8100 = vmatprep.subr.bf16.mxu0 %v6645
        %8101 = vmatpush1.bf16.msra.mxu0 %v6644
        %8102 = vmatprep.subr.bf16.mxu0 %v6653
        %8103 = vmatpush1.bf16.msra.mxu0 %v6652
        %8104 = vmatprep.subr.bf16.mxu0 %v6661
        %8105 = vmatpush1.bf16.msra.mxu0 %v6660
        %8106 = vmatprep.mubr.bf16.mxu0 %v896
        %8107 = vmatmul.mubr.bf16.gmra.mrb[0].mxu0 %v895
        %v8108 = vpop.f32.mrb[0].mxu0
        %v8109 = vadd.f32 0.0, %v8108
        %v8110 = vpop.f32.mrb[0].mxu0
        %v8111 = vadd.f32 0.0, %v8110
        %v8112 = vpop.f32.mrb[0].mxu0
        %v8113 = vadd.f32 0.0, %v8112
        %v8114 = vpop.f32.mrb[0].mxu0
        %v8115 = vadd.f32 0.0, %v8114
        %8116 = vdwg.mxu0
        %8117 = vmatprep.subr.bf16.mxu0 %v6669
        %8118 = vmatpush1.bf16.msra.mxu0 %v6668
        %8119 = vmatprep.subr.bf16.mxu0 %v6677
        %8120 = vmatpush1.bf16.msra.mxu0 %v6676
        %8121 = vmatprep.subr.bf16.mxu0 %v6685
        %8122 = vmatpush1.bf16.msra.mxu0 %v6684
        %8123 = vmatprep.subr.bf16.mxu0 %v6693
        %8124 = vmatpush1.bf16.msra.mxu0 %v6692
        %8125 = vmatprep.subr.bf16.mxu0 %v6701
        %8126 = vmatpush1.bf16.msra.mxu0 %v6700
        %8127 = vmatprep.subr.bf16.mxu0 %v6709
        %8128 = vmatpush1.bf16.msra.mxu0 %v6708
        %8129 = vmatprep.subr.bf16.mxu0 %v6717
        %8130 = vmatpush1.bf16.msra.mxu0 %v6716
        %8131 = vmatprep.subr.bf16.mxu0 %v6725
        %8132 = vmatpush1.bf16.msra.mxu0 %v6724
        %8133 = vmatprep.subr.bf16.mxu0 %v6733
        %8134 = vmatpush1.bf16.msra.mxu0 %v6732
        %8135 = vmatprep.subr.bf16.mxu0 %v6741
        %8136 = vmatpush1.bf16.msra.mxu0 %v6740
        %8137 = vmatprep.subr.bf16.mxu0 %v6749
        %8138 = vmatpush1.bf16.msra.mxu0 %v6748
        %8139 = vmatprep.subr.bf16.mxu0 %v6757
        %8140 = vmatpush1.bf16.msra.mxu0 %v6756
        %8141 = vmatprep.subr.bf16.mxu0 %v6765
        %8142 = vmatpush1.bf16.msra.mxu0 %v6764
        %8143 = vmatprep.subr.bf16.mxu0 %v6773
        %8144 = vmatpush1.bf16.msra.mxu0 %v6772
        %8145 = vmatprep.subr.bf16.mxu0 %v6781
        %8146 = vmatpush1.bf16.msra.mxu0 %v6780
        %8147 = vmatprep.subr.bf16.mxu0 %v6789
        %8148 = vmatpush1.bf16.msra.mxu0 %v6788
        %8149 = vmatprep.mubr.bf16.mxu0 %v898
        %8150 = vmatmul.mubr.bf16.gmra.mrb[0].mxu0 %v897
        %v8151 = vpop.f32.mrb[0].mxu0
        %v8152 = vadd.f32 %v8109, %v8151
        %v8153 = vpop.f32.mrb[0].mxu0
        %v8154 = vadd.f32 %v8111, %v8153
        %v8155 = vpop.f32.mrb[0].mxu0
        %v8156 = vadd.f32 %v8113, %v8155
        %v8157 = vpop.f32.mrb[0].mxu0
        %v8158 = vadd.f32 %v8115, %v8157
        %8159 = vdwg.mxu0
        %8160 = vmatprep.subr.bf16.mxu0 %v6797
        %8161 = vmatpush1.bf16.msra.mxu0 %v6796
        %8162 = vmatprep.subr.bf16.mxu0 %v6805
        %8163 = vmatpush1.bf16.msra.mxu0 %v6804
        %8164 = vmatprep.subr.bf16.mxu0 %v6813
        %8165 = vmatpush1.bf16.msra.mxu0 %v6812
        %8166 = vmatprep.subr.bf16.mxu0 %v6821
        %8167 = vmatpush1.bf16.msra.mxu0 %v6820
        %8168 = vmatprep.subr.bf16.mxu0 %v6829
        %8169 = vmatpush1.bf16.msra.mxu0 %v6828
        %8170 = vmatprep.subr.bf16.mxu0 %v6837
        %8171 = vmatpush1.bf16.msra.mxu0 %v6836
        %8172 = vmatprep.subr.bf16.mxu0 %v6845
        %8173 = vmatpush1.bf16.msra.mxu0 %v6844
        %8174 = vmatprep.subr.bf16.mxu0 %v6853
        %8175 = vmatpush1.bf16.msra.mxu0 %v6852
        %8176 = vmatprep.subr.bf16.mxu0 %v6861
        %8177 = vmatpush1.bf16.msra.mxu0 %v6860
        %8178 = vmatprep.subr.bf16.mxu0 %v6869
        %8179 = vmatpush1.bf16.msra.mxu0 %v6868
        %8180 = vmatprep.subr.bf16.mxu0 %v6877
        %8181 = vmatpush1.bf16.msra.mxu0 %v6876
        %8182 = vmatprep.subr.bf16.mxu0 %v6885
        %8183 = vmatpush1.bf16.msra.mxu0 %v6884
        %8184 = vmatprep.subr.bf16.mxu0 %v6893
        %8185 = vmatpush1.bf16.msra.mxu0 %v6892
        %8186 = vmatprep.subr.bf16.mxu0 %v6901
        %8187 = vmatpush1.bf16.msra.mxu0 %v6900
        %8188 = vmatprep.subr.bf16.mxu0 %v6909
        %8189 = vmatpush1.bf16.msra.mxu0 %v6908
        %8190 = vmatprep.subr.bf16.mxu0 %v6917
        %8191 = vmatpush1.bf16.msra.mxu0 %v6916
        %8192 = vmatprep.mubr.bf16.mxu0 %v900
        %8193 = vmatmul.mubr.bf16.gmra.mrb[0].mxu0 %v899
        %v8194 = vpop.f32.mrb[0].mxu0
        %v8195 = vadd.f32 %v8152, %v8194
        %v8196 = vpop.f32.mrb[0].mxu0
        %v8197 = vadd.f32 %v8154, %v8196
        %v8198 = vpop.f32.mrb[0].mxu0
        %v8199 = vadd.f32 %v8156, %v8198
        %v8200 = vpop.f32.mrb[0].mxu0
        %v8201 = vadd.f32 %v8158, %v8200
        %8202 = vdwg.mxu0
        %8203 = vmatprep.subr.bf16.mxu0 %v6925
        %8204 = vmatpush1.bf16.msra.mxu0 %v6924
        %8205 = vmatprep.subr.bf16.mxu0 %v6933
        %8206 = vmatpush1.bf16.msra.mxu0 %v6932
        %8207 = vmatprep.subr.bf16.mxu0 %v6941
        %8208 = vmatpush1.bf16.msra.mxu0 %v6940
        %8209 = vmatprep.subr.bf16.mxu0 %v6949
        %8210 = vmatpush1.bf16.msra.mxu0 %v6948
        %8211 = vmatprep.subr.bf16.mxu0 %v6957
        %8212 = vmatpush1.bf16.msra.mxu0 %v6956
        %8213 = vmatprep.subr.bf16.mxu0 %v6965
        %8214 = vmatpush1.bf16.msra.mxu0 %v6964
        %8215 = vmatprep.subr.bf16.mxu0 %v6973
        %8216 = vmatpush1.bf16.msra.mxu0 %v6972
        %8217 = vmatprep.subr.bf16.mxu0 %v6981
        %8218 = vmatpush1.bf16.msra.mxu0 %v6980
        %8219 = vmatprep.subr.bf16.mxu0 %v6989
        %8220 = vmatpush1.bf16.msra.mxu0 %v6988
        %8221 = vmatprep.subr.bf16.mxu0 %v6997
        %8222 = vmatpush1.bf16.msra.mxu0 %v6996
        %8223 = vmatprep.subr.bf16.mxu0 %v7005
        %8224 = vmatpush1.bf16.msra.mxu0 %v7004
        %8225 = vmatprep.subr.bf16.mxu0 %v7013
        %8226 = vmatpush1.bf16.msra.mxu0 %v7012
        %8227 = vmatprep.subr.bf16.mxu0 %v7021
        %8228 = vmatpush1.bf16.msra.mxu0 %v7020
        %8229 = vmatprep.subr.bf16.mxu0 %v7029
        %8230 = vmatpush1.bf16.msra.mxu0 %v7028
        %8231 = vmatprep.subr.bf16.mxu0 %v7037
        %8232 = vmatpush1.bf16.msra.mxu0 %v7036
        %8233 = vmatprep.subr.bf16.mxu0 %v7045
        %8234 = vmatpush1.bf16.msra.mxu0 %v7044
        %8235 = vmatprep.mubr.bf16.mxu0 %v902
        %8236 = vmatmul.mubr.bf16.gmra.mrb[0].mxu0 %v901
        %v8237 = vpop.f32.mrb[0].mxu0
        %v8238 = vadd.f32 %v8195, %v8237
        %v8239 = vpop.f32.mrb[0].mxu0
        %v8240 = vadd.f32 %v8197, %v8239
        %v8241 = vpop.f32.mrb[0].mxu0
        %v8242 = vadd.f32 %v8199, %v8241
        %v8243 = vpop.f32.mrb[0].mxu0
        %v8244 = vadd.f32 %v8201, %v8243
        %8245 = vdwg.mxu0
        %8246 = vmatprep.subr.mxu0 0.0
        %8247 = vmatpush1.msra.mxu0 %v229
        %8248 = vmatprep.subr.mxu0 0.0
        %8249 = vmatpush1.msra.mxu0 %v230
        %8250 = vmatprep.subr.mxu0 0.0
        %8251 = vmatpush1.msra.mxu0 %v231
        %8252 = vmatprep.subr.mxu0 0.0
        %8253 = vmatpush1.msra.mxu0 %v232
        %8254 = vmatprep.subr.mxu0 0.0
        %8255 = vmatpush1.msra.mxu0 %v233
        %8256 = vmatprep.subr.mxu0 0.0
        %8257 = vmatpush1.msra.mxu0 %v234
        %8258 = vmatprep.subr.mxu0 0.0
        %8259 = vmatpush1.msra.mxu0 %v235
        %8260 = vmatprep.subr.mxu0 0.0
        %8261 = vmatpush1.msra.mxu0 %v236
        %8262 = vmatprep.subr.mxu0 0.0
        %8263 = vmatpush1.msra.mxu0 %v237
        %8264 = vmatprep.subr.mxu0 0.0
        %8265 = vmatpush1.msra.mxu0 %v238
        %8266 = vmatprep.subr.mxu0 0.0
        %8267 = vmatpush1.msra.mxu0 %v239
        %8268 = vmatprep.subr.mxu0 0.0
        %8269 = vmatpush1.msra.mxu0 %v240
        %8270 = vmatprep.subr.mxu0 0.0
        %8271 = vmatpush1.msra.mxu0 %v241
        %8272 = vmatprep.subr.mxu0 0.0
        %8273 = vmatpush1.msra.mxu0 %v242
        %8274 = vmatprep.subr.mxu0 0.0
        %8275 = vmatpush1.msra.mxu0 %v243
        %8276 = vmatprep.subr.mxu0 0.0
        %8277 = vmatpush1.msra.mxu0 %v244
        %8278 = vmatprep.subr.mxu0 0.0
        %8279 = vmatpush1.msra.mxu0 %v245
        %8280 = vmatprep.subr.mxu0 0.0
        %8281 = vmatpush1.msra.mxu0 %v246
        %8282 = vmatprep.subr.mxu0 0.0
        %8283 = vmatpush1.msra.mxu0 %v247
        %8284 = vmatprep.subr.mxu0 0.0
        %8285 = vmatpush1.msra.mxu0 %v248
        %8286 = vmatprep.subr.mxu0 0.0
        %8287 = vmatpush1.msra.mxu0 %v249
        %8288 = vmatprep.subr.mxu0 0.0
        %8289 = vmatpush1.msra.mxu0 %v250
        %8290 = vmatprep.subr.mxu0 0.0
        %8291 = vmatpush1.msra.mxu0 %v251
        %8292 = vmatprep.subr.mxu0 0.0
        %8293 = vmatpush1.msra.mxu0 %v252
        %8294 = vmatprep.subr.mxu0 0.0
        %8295 = vmatpush1.msra.mxu0 %v253
        %8296 = vmatprep.subr.mxu0 0.0
        %8297 = vmatpush1.msra.mxu0 %v254
        %8298 = vmatprep.subr.mxu0 0.0
        %8299 = vmatpush1.msra.mxu0 %v255
        %8300 = vmatprep.subr.mxu0 0.0
        %8301 = vmatpush1.msra.mxu0 %v256
        %8302 = vmatprep.subr.mxu0 0.0
        %8303 = vmatpush1.msra.mxu0 %v257
        %8304 = vmatprep.subr.mxu0 0.0
        %8305 = vmatpush1.msra.mxu0 %v258
        %8306 = vmatprep.subr.mxu0 0.0
        %8307 = vmatpush1.msra.mxu0 %v259
        %8308 = vmatprep.subr.mxu0 0.0
        %8309 = vmatpush1.msra.mxu0 %v260
        %8310 = vmatprep.mubr.f32.mxu0 %v7724
        %8311 = vmatmul.mubr.f32.gmra.mrb[0].mxu0 %v7722
        %v8312 = vpop.f32.mrb[0].mxu0
        %v8313 = vadd.f32 %v357, %v8312
        %v8314 = vpop.f32.mrb[0].mxu0
        %8315 = vmatprep.mubr.f32.mxu0 %v7728
        %8316 = vmatmul.mubr.f32.gmra.mrb[0].mxu0 %v7726
        %v8317 = vpop.f32.mrb[0].mxu0
        %v8318 = vadd.f32 %v358, %v8317
        %v8319 = vpop.f32.mrb[0].mxu0
        %8320 = vdwg.mxu0
        %8321 = vmatprep.subr.mxu0 0.0
        %8322 = vmatpush1.msra.mxu0 %v261
        %8323 = vmatprep.subr.mxu0 0.0
        %8324 = vmatpush1.msra.mxu0 %v262
        %8325 = vmatprep.subr.mxu0 0.0
        %8326 = vmatpush1.msra.mxu0 %v263
        %8327 = vmatprep.subr.mxu0 0.0
        %8328 = vmatpush1.msra.mxu0 %v264
        %8329 = vmatprep.subr.mxu0 0.0
        %8330 = vmatpush1.msra.mxu0 %v265
        %8331 = vmatprep.subr.mxu0 0.0
        %8332 = vmatpush1.msra.mxu0 %v266
        %8333 = vmatprep.subr.mxu0 0.0
        %8334 = vmatpush1.msra.mxu0 %v267
        %8335 = vmatprep.subr.mxu0 0.0
        %8336 = vmatpush1.msra.mxu0 %v268
        %8337 = vmatprep.subr.mxu0 0.0
        %8338 = vmatpush1.msra.mxu0 %v269
        %8339 = vmatprep.subr.mxu0 0.0
        %8340 = vmatpush1.msra.mxu0 %v270
        %8341 = vmatprep.subr.mxu0 0.0
        %8342 = vmatpush1.msra.mxu0 %v271
        %8343 = vmatprep.subr.mxu0 0.0
        %8344 = vmatpush1.msra.mxu0 %v272
        %8345 = vmatprep.subr.mxu0 0.0
        %8346 = vmatpush1.msra.mxu0 %v273
        %8347 = vmatprep.subr.mxu0 0.0
        %8348 = vmatpush1.msra.mxu0 %v274
        %8349 = vmatprep.subr.mxu0 0.0
        %8350 = vmatpush1.msra.mxu0 %v275
        %8351 = vmatprep.subr.mxu0 0.0
        %8352 = vmatpush1.msra.mxu0 %v276
        %8353 = vmatprep.subr.mxu0 0.0
        %8354 = vmatpush1.msra.mxu0 %v277
        %8355 = vmatprep.subr.mxu0 0.0
        %8356 = vmatpush1.msra.mxu0 %v278
        %8357 = vmatprep.subr.mxu0 0.0
        %8358 = vmatpush1.msra.mxu0 %v279
        %8359 = vmatprep.subr.mxu0 0.0
        %8360 = vmatpush1.msra.mxu0 %v280
        %8361 = vmatprep.subr.mxu0 0.0
        %8362 = vmatpush1.msra.mxu0 %v281
        %8363 = vmatprep.subr.mxu0 0.0
        %8364 = vmatpush1.msra.mxu0 %v282
        %8365 = vmatprep.subr.mxu0 0.0
        %8366 = vmatpush1.msra.mxu0 %v283
        %8367 = vmatprep.subr.mxu0 0.0
        %8368 = vmatpush1.msra.mxu0 %v284
        %8369 = vmatprep.subr.mxu0 0.0
        %8370 = vmatpush1.msra.mxu0 %v285
        %8371 = vmatprep.subr.mxu0 0.0
        %8372 = vmatpush1.msra.mxu0 %v286
        %8373 = vmatprep.subr.mxu0 0.0
        %8374 = vmatpush1.msra.mxu0 %v287
        %8375 = vmatprep.subr.mxu0 0.0
        %8376 = vmatpush1.msra.mxu0 %v288
        %8377 = vmatprep.subr.mxu0 0.0
        %8378 = vmatpush1.msra.mxu0 %v289
        %8379 = vmatprep.subr.mxu0 0.0
        %8380 = vmatpush1.msra.mxu0 %v290
        %8381 = vmatprep.subr.mxu0 0.0
        %8382 = vmatpush1.msra.mxu0 %v291
        %8383 = vmatprep.subr.mxu0 0.0
        %8384 = vmatpush1.msra.mxu0 %v292
        %8385 = vmatprep.mubr.f32.mxu0 %v7896
        %8386 = vmatmul.mubr.f32.gmra.mrb[0].mxu0 %v7894
        %v8387 = vpop.f32.mrb[0].mxu0
        %v8388 = vadd.f32 %v8313, %v8387
        %v8389 = vpop.f32.mrb[0].mxu0
        %8390 = vmatprep.mubr.f32.mxu0 %v7900
        %8391 = vmatmul.mubr.f32.gmra.mrb[0].mxu0 %v7898
        %v8392 = vpop.f32.mrb[0].mxu0
        %v8393 = vadd.f32 %v8318, %v8392
        %v8394 = vpop.f32.mrb[0].mxu0
        %8395 = vdwg.mxu0
        %8396 = vmatprep.subr.mxu0 0.0
        %8397 = vmatpush1.msra.mxu0 %v293
        %8398 = vmatprep.subr.mxu0 0.0
        %8399 = vmatpush1.msra.mxu0 %v294
        %8400 = vmatprep.subr.mxu0 0.0
        %8401 = vmatpush1.msra.mxu0 %v295
        %8402 = vmatprep.subr.mxu0 0.0
        %8403 = vmatpush1.msra.mxu0 %v296
        %8404 = vmatprep.subr.mxu0 0.0
        %8405 = vmatpush1.msra.mxu0 %v297
        %8406 = vmatprep.subr.mxu0 0.0
        %8407 = vmatpush1.msra.mxu0 %v298
        %8408 = vmatprep.subr.mxu0 0.0
        %8409 = vmatpush1.msra.mxu0 %v299
        %8410 = vmatprep.subr.mxu0 0.0
        %8411 = vmatpush1.msra.mxu0 %v300
        %8412 = vmatprep.subr.mxu0 0.0
        %8413 = vmatpush1.msra.mxu0 %v301
        %8414 = vmatprep.subr.mxu0 0.0
        %8415 = vmatpush1.msra.mxu0 %v302
        %8416 = vmatprep.subr.mxu0 0.0
        %8417 = vmatpush1.msra.mxu0 %v303
        %8418 = vmatprep.subr.mxu0 0.0
        %8419 = vmatpush1.msra.mxu0 %v304
        %8420 = vmatprep.subr.mxu0 0.0
        %8421 = vmatpush1.msra.mxu0 %v305
        %8422 = vmatprep.subr.mxu0 0.0
        %8423 = vmatpush1.msra.mxu0 %v306
        %8424 = vmatprep.subr.mxu0 0.0
        %8425 = vmatpush1.msra.mxu0 %v307
        %8426 = vmatprep.subr.mxu0 0.0
        %8427 = vmatpush1.msra.mxu0 %v308
        %8428 = vmatprep.subr.mxu0 0.0
        %8429 = vmatpush1.msra.mxu0 %v309
        %8430 = vmatprep.subr.mxu0 0.0
        %8431 = vmatpush1.msra.mxu0 %v310
        %8432 = vmatprep.subr.mxu0 0.0
        %8433 = vmatpush1.msra.mxu0 %v311
        %8434 = vmatprep.subr.mxu0 0.0
        %8435 = vmatpush1.msra.mxu0 %v312
        %8436 = vmatprep.subr.mxu0 0.0
        %8437 = vmatpush1.msra.mxu0 %v313
        %8438 = vmatprep.subr.mxu0 0.0
        %8439 = vmatpush1.msra.mxu0 %v314
        %8440 = vmatprep.subr.mxu0 0.0
        %8441 = vmatpush1.msra.mxu0 %v315
        %8442 = vmatprep.subr.mxu0 0.0
        %8443 = vmatpush1.msra.mxu0 %v316
        %8444 = vmatprep.subr.mxu0 0.0
        %8445 = vmatpush1.msra.mxu0 %v317
        %8446 = vmatprep.subr.mxu0 0.0
        %8447 = vmatpush1.msra.mxu0 %v318
        %8448 = vmatprep.subr.mxu0 0.0
        %8449 = vmatpush1.msra.mxu0 %v319
        %8450 = vmatprep.subr.mxu0 0.0
        %8451 = vmatpush1.msra.mxu0 %v320
        %8452 = vmatprep.subr.mxu0 0.0
        %8453 = vmatpush1.msra.mxu0 %v321
        %8454 = vmatprep.subr.mxu0 0.0
        %8455 = vmatpush1.msra.mxu0 %v322
        %8456 = vmatprep.subr.mxu0 0.0
        %8457 = vmatpush1.msra.mxu0 %v323
        %8458 = vmatprep.subr.mxu0 0.0
        %8459 = vmatpush1.msra.mxu0 %v324
        %8460 = vmatprep.mubr.f32.mxu0 %v8068
        %8461 = vmatmul.mubr.f32.gmra.mrb[0].mxu0 %v8066
        %v8462 = vpop.f32.mrb[0].mxu0
        %v8463 = vadd.f32 %v8388, %v8462
        %v8464 = vpop.f32.mrb[0].mxu0
        %8465 = vmatprep.mubr.f32.mxu0 %v8072
        %8466 = vmatmul.mubr.f32.gmra.mrb[0].mxu0 %v8070
        %v8467 = vpop.f32.mrb[0].mxu0
        %v8468 = vadd.f32 %v8393, %v8467
        %v8469 = vpop.f32.mrb[0].mxu0
        %8470 = vdwg.mxu0
        %8471 = vmatprep.subr.mxu0 0.0
        %8472 = vmatpush1.msra.mxu0 %v325
        %8473 = vmatprep.subr.mxu0 0.0
        %8474 = vmatpush1.msra.mxu0 %v326
        %8475 = vmatprep.subr.mxu0 0.0
        %8476 = vmatpush1.msra.mxu0 %v327
        %8477 = vmatprep.subr.mxu0 0.0
        %8478 = vmatpush1.msra.mxu0 %v328
        %8479 = vmatprep.subr.mxu0 0.0
        %8480 = vmatpush1.msra.mxu0 %v329
        %8481 = vmatprep.subr.mxu0 0.0
        %8482 = vmatpush1.msra.mxu0 %v330
        %8483 = vmatprep.subr.mxu0 0.0
        %8484 = vmatpush1.msra.mxu0 %v331
        %8485 = vmatprep.subr.mxu0 0.0
        %8486 = vmatpush1.msra.mxu0 %v332
        %8487 = vmatprep.subr.mxu0 0.0
        %8488 = vmatpush1.msra.mxu0 %v333
        %8489 = vmatprep.subr.mxu0 0.0
        %8490 = vmatpush1.msra.mxu0 %v334
        %8491 = vmatprep.subr.mxu0 0.0
        %8492 = vmatpush1.msra.mxu0 %v335
        %8493 = vmatprep.subr.mxu0 0.0
        %8494 = vmatpush1.msra.mxu0 %v336
        %8495 = vmatprep.subr.mxu0 0.0
        %8496 = vmatpush1.msra.mxu0 %v337
        %8497 = vmatprep.subr.mxu0 0.0
        %8498 = vmatpush1.msra.mxu0 %v338
        %8499 = vmatprep.subr.mxu0 0.0
        %8500 = vmatpush1.msra.mxu0 %v339
        %8501 = vmatprep.subr.mxu0 0.0
        %8502 = vmatpush1.msra.mxu0 %v340
        %8503 = vmatprep.subr.mxu0 0.0
        %8504 = vmatpush1.msra.mxu0 %v341
        %8505 = vmatprep.subr.mxu0 0.0
        %8506 = vmatpush1.msra.mxu0 %v342
        %8507 = vmatprep.subr.mxu0 0.0
        %8508 = vmatpush1.msra.mxu0 %v343
        %8509 = vmatprep.subr.mxu0 0.0
        %8510 = vmatpush1.msra.mxu0 %v344
        %8511 = vmatprep.subr.mxu0 0.0
        %8512 = vmatpush1.msra.mxu0 %v345
        %8513 = vmatprep.subr.mxu0 0.0
        %8514 = vmatpush1.msra.mxu0 %v346
        %8515 = vmatprep.subr.mxu0 0.0
        %8516 = vmatpush1.msra.mxu0 %v347
        %8517 = vmatprep.subr.mxu0 0.0
        %8518 = vmatpush1.msra.mxu0 %v348
        %8519 = vmatprep.subr.mxu0 0.0
        %8520 = vmatpush1.msra.mxu0 %v349
        %8521 = vmatprep.subr.mxu0 0.0
        %8522 = vmatpush1.msra.mxu0 %v350
        %8523 = vmatprep.subr.mxu0 0.0
        %8524 = vmatpush1.msra.mxu0 %v351
        %8525 = vmatprep.subr.mxu0 0.0
        %8526 = vmatpush1.msra.mxu0 %v352
        %8527 = vmatprep.subr.mxu0 0.0
        %8528 = vmatpush1.msra.mxu0 %v353
        %8529 = vmatprep.subr.mxu0 0.0
        %8530 = vmatpush1.msra.mxu0 %v354
        %8531 = vmatprep.subr.mxu0 0.0
        %8532 = vmatpush1.msra.mxu0 %v355
        %8533 = vmatprep.subr.mxu0 0.0
        %8534 = vmatpush1.msra.mxu0 %v356
        %8535 = vmatprep.mubr.f32.mxu0 %v8240
        %8536 = vmatmul.mubr.f32.gmra.mrb[0].mxu0 %v8238
        %v8537 = vpop.f32.mrb[0].mxu0
        %v8538 = vadd.f32 %v8463, %v8537
        %v8539 = vpop.f32.mrb[0].mxu0
        %8540 = vmatprep.mubr.f32.mxu0 %v8244
        %8541 = vmatmul.mubr.f32.gmra.mrb[0].mxu0 %v8242
        %v8542 = vpop.f32.mrb[0].mxu0
        %v8543 = vadd.f32 %v8468, %v8542
        %v8544 = vpop.f32.mrb[0].mxu0
        %8545 = vdwg.mxu0
        %v8546 = vsel %vm4459, %v8538, -inf
        %8547 = vmax.xlane.f32.xlu0 %v8546
        %v8548 = vpop.xlane.xlu0 %8547
        %v8549 = vrot.slane %v8548, 4
        %v8550 = vmax.f32 %v8548, %v8549
        %v8551 = vrot.slane %v8550, 2
        %v8552 = vmax.f32 %v8550, %v8551
        %v8553 = vrot.slane %v8552, 1
        %v8554 = vmax.f32 %v8552, %v8553
        %s8555 = vtos %v8554
        %v8556 = vstv %s8555
        %v8557 = vsel %vm4459, %v8543, -inf
        %8558 = vmax.xlane.f32.xlu0 %v8557
        %v8559 = vpop.xlane.xlu0 %8558
        %v8560 = vrot.slane %v8559, 4
        %v8561 = vmax.f32 %v8559, %v8560
        %v8562 = vrot.slane %v8561, 2
        %v8563 = vmax.f32 %v8561, %v8562
        %v8564 = vrot.slane %v8563, 1
        %v8565 = vmax.f32 %v8563, %v8564
        %s8566 = vtos %v8565
        %v8567 = vstv %s8566
        %v8568 = vsel %vm4482, %v8556, %v8567
        %s8569 = scalar_lea.vmem %s219, 2
        %8570 = vst [vmem:[%s8569] sm:$0x3] %v8568
        %s8571 = smul.u32 2, %s18
        %p8572 = scmp.lt.s32.totalorder %s8571, 15
        %s8573 = scalar_select %p8572, %s8571, 15
        %s8574 = smul.addr %s8573, 2
        %s8575 = scalar_lea.vmem %s4, %s8574
        // Predicated region
        $region41: #{model_forward.1} parent=35 // pred_check
          %p8576 = pneg %p125
        $region42: #{model_forward.1} parent=35 // pred_check_branch
          %8578 = sbr.rel (%p8576) target = $region44
        $region43: #{model_forward.1} parent=35 // pred_region
          %s8579 = smul.u32 2, %s18
        $region44: #{model_forward.1} parent=35 // pred_fallthru
          _
      $region36: #{model_forward.1} parent=5 // pred_fallthru
        _
      %p8580 = scmp.le.s32.totalorder 2, %s13
      // Predicated region
      $region45: #{model_forward.1} parent=5 // pred_check
        %p8581 = pneg %p8580
      $region46: #{model_forward.1} parent=5 // pred_check_branch
        %8583 = sbr.rel (%p8581) target = $region48
      $region47: #{model_forward.1} parent=5 // pred_region
        %s8584 = ssub.s32 %s13, 2
        // Predicated region
        $region49: #{model_forward.1} parent=47 // pred_check
          %p8585 = pneg %p131
        $region50: #{model_forward.1} parent=47 // pred_check_branch
          %8587 = sbr.rel (%p8585) target = $region52
        $region51: #{model_forward.1} parent=47 // pred_region
          %s8588 = smul.u32 2, %s19
          %p8589 = scmp.lt.s32.totalorder %s8588, 15
          %s8590 = scalar_select %p8589, %s8588, 15
          %s8591 = smul.addr %s8590, 2
          %s8592 = scalar_lea.vmem %s4, %s8591
        $region52: #{model_forward.1} parent=47 // pred_fallthru
          _
      $region48: #{model_forward.1} parent=5 // pred_fallthru
        _
    $region6: #{model_forward.1} parent=1 // loop_footer
      %s17 = sadd.s32 1, %s13
    $region7: #{model_forward.1} parent=1 // loop_footer_branch
      %12 = sbr.rel target = $region3
    $region8: #{model_forward.1} parent=1 // loop_exit
      _
    %8593 = vsyncpa [#allocation3], 1
    %s8594 = scalar_lea.sflag [#allocation3], 1
    %8595 = vsyncpa %s8594, 1

</llo_original>
